<compile_context>
chip_gen: v6e
topology: v6e:2x2x1
jax: 0.10.0
libtpu: 0.0.40
codegen_flags: <defaults>
</compile_context>

<pallas_src>
import functools

import jax
import jax.numpy as jnp
from jax.experimental import pallas as pl
from jax.experimental.pallas import tpu as pltpu


def _round_up(x: int, m: int) -> int:
    return ((x + m - 1) // m) * m


def _inr_kernel(coords_ref, w_in_ref, b_in_ref, w_cn_ref, b_cn_ref,
                w_net_ref, b_net_ref, w_out_ref, b_out_ref, o_ref, *,
                num_channels: int, in_feats: int,
                coord_hidden_layers: int, hidden_layers: int):
    # coords_ref: (C, tile_m, F)      o_ref: (tile_m, out_features)
    x = coords_ref[...]
    w_in = w_in_ref[...]      # (C, F, H)
    b_in = b_in_ref[...]      # (C, 1, H)
    w_cn = w_cn_ref[...]      # (Lc, H, H)  shared across channels
    b_cn = b_cn_ref[...]      # (Lc, 1, H)
    w_net = w_net_ref[...]    # (Ln, H, H)
    b_net = b_net_ref[...]    # (Ln, 1, H)

    h_fused = None
    for c in range(num_channels):
        xc = x[c]                                  # (tile_m, F)
        # Input linear: F is tiny (=2) -> broadcast FMAs on the VPU.
        hc = jnp.broadcast_to(b_in[c], (xc.shape[0], b_in.shape[-1]))
        for f in range(in_feats):
            hc = hc + xc[:, f:f + 1] * w_in[c, f:f + 1, :]
        # Shared coord hidden layers: ReLU(Linear(H, H)) on the MXU.
        for l in range(coord_hidden_layers):
            hc = jnp.maximum(
                jnp.dot(hc, w_cn[l], preferred_element_type=jnp.float32)
                + b_cn[l], 0.0)
        h_fused = hc if h_fused is None else h_fused * hc   # 'prod' fusion

    h = h_fused
    for l in range(hidden_layers):
        h = jnp.maximum(
            jnp.dot(h, w_net[l], preferred_element_type=jnp.float32)
            + b_net[l], 0.0)

    out = jnp.dot(h, w_out_ref[...], preferred_element_type=jnp.float32)
    out = out + b_out_ref[...]
    o_ref[...] = out.astype(o_ref.dtype)


def inr_forward(coords, params, *, tile_m: int = 512):
    """Pallas INR forward.

    coords: (C, ..., F) -- per-channel coordinate tensors stacked on dim 0
            (equivalent to iterating `for coord in coords` in PyTorch).
    Returns (M, out_features) with M = prod of the flattened point dims,
    matching `h.reshape(-1, out_features)` in the PyTorch forward.
    """
    (w_in, b_in, w_cn, b_cn, w_net, b_net, w_out, b_out) = params
    C = coords.shape[0]
    F = coords.shape[-1]
    H = w_in.shape[-1]
    out_features = w_out.shape[-1]

    flat = coords.reshape(C, -1, F)            # (C, M, F)
    M = flat.shape[1]

    # Tile of points: multiple of 8 sublanes; pad M so every tile is full
    # (keeps pipelining + bounded VMEM instead of one giant fallback tile).
    tm = min(tile_m, _round_up(M, 8))
    tm = _round_up(tm, 8)
    M_pad = _round_up(M, tm)
    if M_pad != M:
        flat = jnp.pad(flat, ((0, 0), (0, M_pad - M), (0, 0)))

    grid = (M_pad // tm,)

    kernel = functools.partial(
        _inr_kernel,
        num_channels=C,
        in_feats=F,
        coord_hidden_layers=w_cn.shape[0],
        hidden_layers=w_net.shape[0],
    )

    def full_spec(shape):
        # Weight stays resident: constant block index across all grid steps.
        return pl.BlockSpec(shape, lambda i, _n=len(shape): (0,) * _n)

    out = pl.pallas_call(
        kernel,
        out_shape=jax.ShapeDtypeStruct((M_pad, out_features), coords.dtype),
        grid=grid,
        in_specs=[
            pl.BlockSpec((C, tm, F), lambda i: (0, i, 0)),
            full_spec(w_in.shape), full_spec(b_in.shape),
            full_spec(w_cn.shape), full_spec(b_cn.shape),
            full_spec(w_net.shape), full_spec(b_net.shape),
            full_spec(w_out.shape), full_spec(b_out.shape),
        ],
        out_specs=pl.BlockSpec((tm, out_features), lambda i: (i, 0)),
        compiler_params=pltpu.CompilerParams(
            dimension_semantics=("parallel",)),
    )(flat, w_in, b_in, w_cn, b_cn, w_net, b_net, w_out, b_out)

    return out[:M]


def init_params(key, *, feat_per_channel=(2, 2), hidden_features=256,
                coord_hidden_layers=2, hidden_layers=2, out_features=3,
                dtype=jnp.float32):
    """PyTorch-Linear-style uniform init; weights stored as (in, out)."""
    C = len(feat_per_channel)
    F = feat_per_channel[0]
    assert all(f == F for f in feat_per_channel)
    ks = jax.random.split(key, 8)

    def lin(k, fan_in, shape):
        bound = 1.0 / (fan_in ** 0.5)
        return jax.random.uniform(k, shape, dtype, -bound, bound)

    H = hidden_features
    w_in = lin(ks[0], F, (C, F, H))
    b_in = lin(ks[1], F, (C, 1, H))
    w_cn = lin(ks[2], H, (coord_hidden_layers, H, H))
    b_cn = lin(ks[3], H, (coord_hidden_layers, 1, H))
    w_net = lin(ks[4], H, (hidden_layers, H, H))
    b_net = lin(ks[5], H, (hidden_layers, 1, H))
    w_out = lin(ks[6], H, (H, out_features))
    b_out = lin(ks[7], H, (1, out_features))
    return (w_in, b_in, w_cn, b_cn, w_net, b_net, w_out, b_out)


def inr_forward_ref(coords, params):
    """Pure-JAX reference mirroring the PyTorch INR.forward."""
    (w_in, b_in, w_cn, b_cn, w_net, b_net, w_out, b_out) = params
    C = coords.shape[0]
    dot = functools.partial(jnp.dot, precision=jax.lax.Precision.HIGHEST)

    hs = []
    for c in range(C):                                # forward_coord
        h = dot(coords[c], w_in[c]) + b_in[c, 0]
        for l in range(w_cn.shape[0]):
            h = jnp.maximum(dot(h, w_cn[l]) + b_cn[l, 0], 0.0)
        hs.append(h)

    h = hs[0]                                         # forward_fusion (prod)
    for hc in hs[1:]:
        h = h * hc
    for l in range(w_net.shape[0]):
        h = jnp.maximum(dot(h, w_net[l]) + b_net[l, 0], 0.0)
    h = dot(h, w_out) + b_out[0]
    return h.reshape(-1, h.shape[-1])


if __name__ == "__main__":
    key = jax.random.PRNGKey(0)
    kp, kc = jax.random.split(key)

    # Module-implied shapes: feat_per_channel=[2,2] -> 2 channels of 2-D
    # coords; small batch of points.
    C, F = 2, 2
    B, N = 2, 1024                     # -> M = 2048 points after flatten
    hidden_features = 256
    out_features = 3

    params = init_params(kp, feat_per_channel=(F,) * C,
                         hidden_features=hidden_features,
                         coord_hidden_layers=2, hidden_layers=2,
                         out_features=out_features)

    coords = jax.random.uniform(kc, (C, B, N, F), jnp.float32,
                                minval=-1.0, maxval=1.0)

    out = inr_forward(coords, params, tile_m=512)
    out = jax.block_until_ready(out)

    ref = inr_forward_ref(coords, params)
    ref = jax.block_until_ready(ref)

    assert out.shape == ref.shape, (out.shape, ref.shape)
    assert jnp.allclose(out, ref, atol=1e-3, rtol=1e-3), "mismatch vs reference"

    print("KERNEL_OK")
</pallas_src>

<mosaic_0001>
module attributes {stable_mosaic.version = 11 : i64} {
  func.func @_inr_kernel(%arg0: i32, %arg1: memref<2x512x2xf32, #tpu.memory_space<vmem>>, %arg2: memref<2x2x256xf32, #tpu.memory_space<vmem>>, %arg3: memref<2x1x256xf32, #tpu.memory_space<vmem>>, %arg4: memref<2x256x256xf32, #tpu.memory_space<vmem>>, %arg5: memref<2x1x256xf32, #tpu.memory_space<vmem>>, %arg6: memref<2x256x256xf32, #tpu.memory_space<vmem>>, %arg7: memref<2x1x256xf32, #tpu.memory_space<vmem>>, %arg8: memref<256x3xf32, #tpu.memory_space<vmem>>, %arg9: memref<1x3xf32, #tpu.memory_space<vmem>>, %arg10: memref<512x3xf32, #tpu.memory_space<vmem>>) attributes {dimension_semantics = [#tpu.dimension_semantics<parallel>], iteration_bounds = array<i64: 4>, scalar_prefetch = 0 : i64, scratch_operands = 0 : i64, tpu.core_type = #tpu.core_type<tc>, window_params = [{transform_indices = @transform_0, window_bounds = array<i64: 2, 512, 2>}, {pipeline_mode = #tpu.pipeline_mode<synchronous>, transform_indices = @transform_1, window_bounds = array<i64: 2, 2, 256>}, {pipeline_mode = #tpu.pipeline_mode<synchronous>, transform_indices = @transform_2, window_bounds = array<i64: 2, 1, 256>}, {pipeline_mode = #tpu.pipeline_mode<synchronous>, transform_indices = @transform_3, window_bounds = array<i64: 2, 256, 256>}, {pipeline_mode = #tpu.pipeline_mode<synchronous>, transform_indices = @transform_4, window_bounds = array<i64: 2, 1, 256>}, {pipeline_mode = #tpu.pipeline_mode<synchronous>, transform_indices = @transform_5, window_bounds = array<i64: 2, 256, 256>}, {pipeline_mode = #tpu.pipeline_mode<synchronous>, transform_indices = @transform_6, window_bounds = array<i64: 2, 1, 256>}, {pipeline_mode = #tpu.pipeline_mode<synchronous>, transform_indices = @transform_7, window_bounds = array<i64: 256, 3>}, {pipeline_mode = #tpu.pipeline_mode<synchronous>, transform_indices = @transform_8, window_bounds = array<i64: 1, 3>}, {transform_indices = @transform_9, window_bounds = array<i64: 512, 3>}]} {
    %c0 = arith.constant 0 : index
    %c0_0 = arith.constant 0 : index
    %c0_1 = arith.constant 0 : index
    %0 = vector.load %arg1[%c0, %c0_0, %c0_1] : memref<2x512x2xf32, #tpu.memory_space<vmem>>, vector<2x512x2xf32>
    %c0_2 = arith.constant 0 : index
    %c0_3 = arith.constant 0 : index
    %c0_4 = arith.constant 0 : index
    %1 = vector.load %arg2[%c0_2, %c0_3, %c0_4] : memref<2x2x256xf32, #tpu.memory_space<vmem>>, vector<2x2x256xf32>
    %c0_5 = arith.constant 0 : index
    %c0_6 = arith.constant 0 : index
    %c0_7 = arith.constant 0 : index
    %2 = vector.load %arg3[%c0_5, %c0_6, %c0_7] : memref<2x1x256xf32, #tpu.memory_space<vmem>>, vector<2x1x256xf32>
    %c0_8 = arith.constant 0 : index
    %c0_9 = arith.constant 0 : index
    %c0_10 = arith.constant 0 : index
    %3 = vector.load %arg4[%c0_8, %c0_9, %c0_10] : memref<2x256x256xf32, #tpu.memory_space<vmem>>, vector<2x256x256xf32>
    %c0_11 = arith.constant 0 : index
    %c0_12 = arith.constant 0 : index
    %c0_13 = arith.constant 0 : index
    %4 = vector.load %arg5[%c0_11, %c0_12, %c0_13] : memref<2x1x256xf32, #tpu.memory_space<vmem>>, vector<2x1x256xf32>
    %c0_14 = arith.constant 0 : index
    %c0_15 = arith.constant 0 : index
    %c0_16 = arith.constant 0 : index
    %5 = vector.load %arg6[%c0_14, %c0_15, %c0_16] : memref<2x256x256xf32, #tpu.memory_space<vmem>>, vector<2x256x256xf32>
    %c0_17 = arith.constant 0 : index
    %c0_18 = arith.constant 0 : index
    %c0_19 = arith.constant 0 : index
    %6 = vector.load %arg7[%c0_17, %c0_18, %c0_19] : memref<2x1x256xf32, #tpu.memory_space<vmem>>, vector<2x1x256xf32>
    %7 = vector.extract_strided_slice %0 {offsets = [0, 0, 0], sizes = [1, 512, 2], strides = [1, 1, 1]} : vector<2x512x2xf32> to vector<1x512x2xf32>
    %8 = vector.shape_cast %7 : vector<1x512x2xf32> to vector<512x2xf32>
    %9 = vector.extract_strided_slice %2 {offsets = [0, 0, 0], sizes = [1, 1, 256], strides = [1, 1, 1]} : vector<2x1x256xf32> to vector<1x1x256xf32>
    %10 = vector.shape_cast %9 : vector<1x1x256xf32> to vector<1x256xf32>
    %11 = vector.shape_cast %10 : vector<1x256xf32> to vector<1x256xf32>
    %12 = vector.broadcast %11 : vector<1x256xf32> to vector<512x256xf32>
    %13 = vector.extract_strided_slice %8 {offsets = [0, 0], sizes = [512, 1], strides = [1, 1]} : vector<512x2xf32> to vector<512x1xf32>
    %14 = vector.extract_strided_slice %1 {offsets = [0, 0, 0], sizes = [1, 1, 256], strides = [1, 1, 1]} : vector<2x2x256xf32> to vector<1x1x256xf32>
    %15 = vector.shape_cast %14 : vector<1x1x256xf32> to vector<1x256xf32>
    %16 = vector.broadcast %13 : vector<512x1xf32> to vector<512x256xf32>
    %17 = vector.broadcast %15 : vector<1x256xf32> to vector<512x256xf32>
    %18 = arith.mulf %16, %17 : vector<512x256xf32>
    %19 = arith.addf %12, %18 : vector<512x256xf32>
    %20 = vector.extract_strided_slice %8 {offsets = [0, 1], sizes = [512, 1], strides = [1, 1]} : vector<512x2xf32> to vector<512x1xf32>
    %21 = vector.extract_strided_slice %1 {offsets = [0, 1, 0], sizes = [1, 1, 256], strides = [1, 1, 1]} : vector<2x2x256xf32> to vector<1x1x256xf32>
    %22 = vector.shape_cast %21 : vector<1x1x256xf32> to vector<1x256xf32>
    %23 = vector.broadcast %20 : vector<512x1xf32> to vector<512x256xf32>
    %24 = vector.broadcast %22 : vector<1x256xf32> to vector<512x256xf32>
    %25 = arith.mulf %23, %24 : vector<512x256xf32>
    %26 = arith.addf %19, %25 : vector<512x256xf32>
    %27 = vector.extract_strided_slice %3 {offsets = [0, 0, 0], sizes = [1, 256, 256], strides = [1, 1, 1]} : vector<2x256x256xf32> to vector<1x256x256xf32>
    %28 = vector.shape_cast %27 : vector<1x256x256xf32> to vector<256x256xf32>
    %cst = arith.constant dense<0.000000e+00> : vector<512x256xf32>
    %29 = tpu.matmul %26, %28, %cst {dimension_numbers = #tpu.dot_dimension_numbers<[1], [0], [0], [1], [0, 0, 1, 1], [], []>} : vector<512x256xf32>, vector<256x256xf32>, vector<512x256xf32> -> vector<512x256xf32>
    %30 = vector.extract_strided_slice %4 {offsets = [0, 0, 0], sizes = [1, 1, 256], strides = [1, 1, 1]} : vector<2x1x256xf32> to vector<1x1x256xf32>
    %31 = vector.shape_cast %30 : vector<1x1x256xf32> to vector<1x256xf32>
    %32 = vector.broadcast %31 : vector<1x256xf32> to vector<512x256xf32>
    %33 = arith.addf %29, %32 : vector<512x256xf32>
    %cst_20 = arith.constant 0.000000e+00 : f32
    %34 = vector.broadcast %cst_20 : f32 to vector<512x256xf32>
    %35 = arith.maximumf %33, %34 : vector<512x256xf32>
    %36 = vector.extract_strided_slice %3 {offsets = [1, 0, 0], sizes = [1, 256, 256], strides = [1, 1, 1]} : vector<2x256x256xf32> to vector<1x256x256xf32>
    %37 = vector.shape_cast %36 : vector<1x256x256xf32> to vector<256x256xf32>
    %cst_21 = arith.constant dense<0.000000e+00> : vector<512x256xf32>
    %38 = tpu.matmul %35, %37, %cst_21 {dimension_numbers = #tpu.dot_dimension_numbers<[1], [0], [0], [1], [0, 0, 1, 1], [], []>} : vector<512x256xf32>, vector<256x256xf32>, vector<512x256xf32> -> vector<512x256xf32>
    %39 = vector.extract_strided_slice %4 {offsets = [1, 0, 0], sizes = [1, 1, 256], strides = [1, 1, 1]} : vector<2x1x256xf32> to vector<1x1x256xf32>
    %40 = vector.shape_cast %39 : vector<1x1x256xf32> to vector<1x256xf32>
    %41 = vector.broadcast %40 : vector<1x256xf32> to vector<512x256xf32>
    %42 = arith.addf %38, %41 : vector<512x256xf32>
    %cst_22 = arith.constant 0.000000e+00 : f32
    %43 = vector.broadcast %cst_22 : f32 to vector<512x256xf32>
    %44 = arith.maximumf %42, %43 : vector<512x256xf32>
    %45 = vector.extract_strided_slice %0 {offsets = [1, 0, 0], sizes = [1, 512, 2], strides = [1, 1, 1]} : vector<2x512x2xf32> to vector<1x512x2xf32>
    %46 = vector.shape_cast %45 : vector<1x512x2xf32> to vector<512x2xf32>
    %47 = vector.extract_strided_slice %2 {offsets = [1, 0, 0], sizes = [1, 1, 256], strides = [1, 1, 1]} : vector<2x1x256xf32> to vector<1x1x256xf32>
    %48 = vector.shape_cast %47 : vector<1x1x256xf32> to vector<1x256xf32>
    %49 = vector.shape_cast %48 : vector<1x256xf32> to vector<1x256xf32>
    %50 = vector.broadcast %49 : vector<1x256xf32> to vector<512x256xf32>
    %51 = vector.extract_strided_slice %46 {offsets = [0, 0], sizes = [512, 1], strides = [1, 1]} : vector<512x2xf32> to vector<512x1xf32>
    %52 = vector.extract_strided_slice %1 {offsets = [1, 0, 0], sizes = [1, 1, 256], strides = [1, 1, 1]} : vector<2x2x256xf32> to vector<1x1x256xf32>
    %53 = vector.shape_cast %52 : vector<1x1x256xf32> to vector<1x256xf32>
    %54 = vector.broadcast %51 : vector<512x1xf32> to vector<512x256xf32>
    %55 = vector.broadcast %53 : vector<1x256xf32> to vector<512x256xf32>
    %56 = arith.mulf %54, %55 : vector<512x256xf32>
    %57 = arith.addf %50, %56 : vector<512x256xf32>
    %58 = vector.extract_strided_slice %46 {offsets = [0, 1], sizes = [512, 1], strides = [1, 1]} : vector<512x2xf32> to vector<512x1xf32>
    %59 = vector.extract_strided_slice %1 {offsets = [1, 1, 0], sizes = [1, 1, 256], strides = [1, 1, 1]} : vector<2x2x256xf32> to vector<1x1x256xf32>
    %60 = vector.shape_cast %59 : vector<1x1x256xf32> to vector<1x256xf32>
    %61 = vector.broadcast %58 : vector<512x1xf32> to vector<512x256xf32>
    %62 = vector.broadcast %60 : vector<1x256xf32> to vector<512x256xf32>
    %63 = arith.mulf %61, %62 : vector<512x256xf32>
    %64 = arith.addf %57, %63 : vector<512x256xf32>
    %65 = vector.extract_strided_slice %3 {offsets = [0, 0, 0], sizes = [1, 256, 256], strides = [1, 1, 1]} : vector<2x256x256xf32> to vector<1x256x256xf32>
    %66 = vector.shape_cast %65 : vector<1x256x256xf32> to vector<256x256xf32>
    %cst_23 = arith.constant dense<0.000000e+00> : vector<512x256xf32>
    %67 = tpu.matmul %64, %66, %cst_23 {dimension_numbers = #tpu.dot_dimension_numbers<[1], [0], [0], [1], [0, 0, 1, 1], [], []>} : vector<512x256xf32>, vector<256x256xf32>, vector<512x256xf32> -> vector<512x256xf32>
    %68 = vector.extract_strided_slice %4 {offsets = [0, 0, 0], sizes = [1, 1, 256], strides = [1, 1, 1]} : vector<2x1x256xf32> to vector<1x1x256xf32>
    %69 = vector.shape_cast %68 : vector<1x1x256xf32> to vector<1x256xf32>
    %70 = vector.broadcast %69 : vector<1x256xf32> to vector<512x256xf32>
    %71 = arith.addf %67, %70 : vector<512x256xf32>
    %cst_24 = arith.constant 0.000000e+00 : f32
    %72 = vector.broadcast %cst_24 : f32 to vector<512x256xf32>
    %73 = arith.maximumf %71, %72 : vector<512x256xf32>
    %74 = vector.extract_strided_slice %3 {offsets = [1, 0, 0], sizes = [1, 256, 256], strides = [1, 1, 1]} : vector<2x256x256xf32> to vector<1x256x256xf32>
    %75 = vector.shape_cast %74 : vector<1x256x256xf32> to vector<256x256xf32>
    %cst_25 = arith.constant dense<0.000000e+00> : vector<512x256xf32>
    %76 = tpu.matmul %73, %75, %cst_25 {dimension_numbers = #tpu.dot_dimension_numbers<[1], [0], [0], [1], [0, 0, 1, 1], [], []>} : vector<512x256xf32>, vector<256x256xf32>, vector<512x256xf32> -> vector<512x256xf32>
    %77 = vector.extract_strided_slice %4 {offsets = [1, 0, 0], sizes = [1, 1, 256], strides = [1, 1, 1]} : vector<2x1x256xf32> to vector<1x1x256xf32>
    %78 = vector.shape_cast %77 : vector<1x1x256xf32> to vector<1x256xf32>
    %79 = vector.broadcast %78 : vector<1x256xf32> to vector<512x256xf32>
    %80 = arith.addf %76, %79 : vector<512x256xf32>
    %cst_26 = arith.constant 0.000000e+00 : f32
    %81 = vector.broadcast %cst_26 : f32 to vector<512x256xf32>
    %82 = arith.maximumf %80, %81 : vector<512x256xf32>
    %83 = arith.mulf %44, %82 : vector<512x256xf32>
    %84 = vector.extract_strided_slice %5 {offsets = [0, 0, 0], sizes = [1, 256, 256], strides = [1, 1, 1]} : vector<2x256x256xf32> to vector<1x256x256xf32>
    %85 = vector.shape_cast %84 : vector<1x256x256xf32> to vector<256x256xf32>
    %cst_27 = arith.constant dense<0.000000e+00> : vector<512x256xf32>
    %86 = tpu.matmul %83, %85, %cst_27 {dimension_numbers = #tpu.dot_dimension_numbers<[1], [0], [0], [1], [0, 0, 1, 1], [], []>} : vector<512x256xf32>, vector<256x256xf32>, vector<512x256xf32> -> vector<512x256xf32>
    %87 = vector.extract_strided_slice %6 {offsets = [0, 0, 0], sizes = [1, 1, 256], strides = [1, 1, 1]} : vector<2x1x256xf32> to vector<1x1x256xf32>
    %88 = vector.shape_cast %87 : vector<1x1x256xf32> to vector<1x256xf32>
    %89 = vector.broadcast %88 : vector<1x256xf32> to vector<512x256xf32>
    %90 = arith.addf %86, %89 : vector<512x256xf32>
    %cst_28 = arith.constant 0.000000e+00 : f32
    %91 = vector.broadcast %cst_28 : f32 to vector<512x256xf32>
    %92 = arith.maximumf %90, %91 : vector<512x256xf32>
    %93 = vector.extract_strided_slice %5 {offsets = [1, 0, 0], sizes = [1, 256, 256], strides = [1, 1, 1]} : vector<2x256x256xf32> to vector<1x256x256xf32>
    %94 = vector.shape_cast %93 : vector<1x256x256xf32> to vector<256x256xf32>
    %cst_29 = arith.constant dense<0.000000e+00> : vector<512x256xf32>
    %95 = tpu.matmul %92, %94, %cst_29 {dimension_numbers = #tpu.dot_dimension_numbers<[1], [0], [0], [1], [0, 0, 1, 1], [], []>} : vector<512x256xf32>, vector<256x256xf32>, vector<512x256xf32> -> vector<512x256xf32>
    %96 = vector.extract_strided_slice %6 {offsets = [1, 0, 0], sizes = [1, 1, 256], strides = [1, 1, 1]} : vector<2x1x256xf32> to vector<1x1x256xf32>
    %97 = vector.shape_cast %96 : vector<1x1x256xf32> to vector<1x256xf32>
    %98 = vector.broadcast %97 : vector<1x256xf32> to vector<512x256xf32>
    %99 = arith.addf %95, %98 : vector<512x256xf32>
    %cst_30 = arith.constant 0.000000e+00 : f32
    %100 = vector.broadcast %cst_30 : f32 to vector<512x256xf32>
    %101 = arith.maximumf %99, %100 : vector<512x256xf32>
    %c0_31 = arith.constant 0 : index
    %c0_32 = arith.constant 0 : index
    %102 = vector.load %arg8[%c0_31, %c0_32] : memref<256x3xf32, #tpu.memory_space<vmem>>, vector<256x3xf32>
    %cst_33 = arith.constant dense<0.000000e+00> : vector<512x3xf32>
    %103 = tpu.matmul %101, %102, %cst_33 {dimension_numbers = #tpu.dot_dimension_numbers<[1], [0], [0], [1], [0, 0, 1, 1], [], []>} : vector<512x256xf32>, vector<256x3xf32>, vector<512x3xf32> -> vector<512x3xf32>
    %c0_34 = arith.constant 0 : index
    %c0_35 = arith.constant 0 : index
    %104 = vector.load %arg9[%c0_34, %c0_35] : memref<1x3xf32, #tpu.memory_space<vmem>>, vector<1x3xf32>
    %105 = vector.broadcast %104 : vector<1x3xf32> to vector<512x3xf32>
    %106 = arith.addf %103, %105 : vector<512x3xf32>
    %c0_36 = arith.constant 0 : index
    %c0_37 = arith.constant 0 : index
    %107 = vector.load %arg10[%c0_36, %c0_37] : memref<512x3xf32, #tpu.memory_space<vmem>>, vector<512x3xf32>
    tpu.vector_store %arg10[%c0_36, %c0_37], %106 {strides = array<i32>} : memref<512x3xf32, #tpu.memory_space<vmem>>, vector<512x3xf32>,
    return
  }
  func.func @transform_0(%arg0: i32) -> (i32, i32, i32) {
    %c0_i32 = arith.constant 0 : i32
    %c0_i32_0 = arith.constant 0 : i32
    %c0_i32_1 = arith.constant 0 : i32
    return %c0_i32, %arg0, %c0_i32_0 : i32, i32, i32
  }
  func.func @transform_1(%arg0: i32) -> (i32, i32, i32) {
    %c0_i32 = arith.constant 0 : i32
    %c0_i32_0 = arith.constant 0 : i32
    %c0_i32_1 = arith.constant 0 : i32
    %c0_i32_2 = arith.constant 0 : i32
    return %c0_i32, %c0_i32_0, %c0_i32_1 : i32, i32, i32
  }
  func.func @transform_2(%arg0: i32) -> (i32, i32, i32) {
    %c0_i32 = arith.constant 0 : i32
    %c0_i32_0 = arith.constant 0 : i32
    %c0_i32_1 = arith.constant 0 : i32
    %c0_i32_2 = arith.constant 0 : i32
    return %c0_i32, %c0_i32_0, %c0_i32_1 : i32, i32, i32
  }
  func.func @transform_3(%arg0: i32) -> (i32, i32, i32) {
    %c0_i32 = arith.constant 0 : i32
    %c0_i32_0 = arith.constant 0 : i32
    %c0_i32_1 = arith.constant 0 : i32
    %c0_i32_2 = arith.constant 0 : i32
    return %c0_i32, %c0_i32_0, %c0_i32_1 : i32, i32, i32
  }
  func.func @transform_4(%arg0: i32) -> (i32, i32, i32) {
    %c0_i32 = arith.constant 0 : i32
    %c0_i32_0 = arith.constant 0 : i32
    %c0_i32_1 = arith.constant 0 : i32
    %c0_i32_2 = arith.constant 0 : i32
    return %c0_i32, %c0_i32_0, %c0_i32_1 : i32, i32, i32
  }
  func.func @transform_5(%arg0: i32) -> (i32, i32, i32) {
    %c0_i32 = arith.constant 0 : i32
    %c0_i32_0 = arith.constant 0 : i32
    %c0_i32_1 = arith.constant 0 : i32
    %c0_i32_2 = arith.constant 0 : i32
    return %c0_i32, %c0_i32_0, %c0_i32_1 : i32, i32, i32
  }
  func.func @transform_6(%arg0: i32) -> (i32, i32, i32) {
    %c0_i32 = arith.constant 0 : i32
    %c0_i32_0 = arith.constant 0 : i32
    %c0_i32_1 = arith.constant 0 : i32
    %c0_i32_2 = arith.constant 0 : i32
    return %c0_i32, %c0_i32_0, %c0_i32_1 : i32, i32, i32
  }
  func.func @transform_7(%arg0: i32) -> (i32, i32) {
    %c0_i32 = arith.constant 0 : i32
    %c0_i32_0 = arith.constant 0 : i32
    %c0_i32_1 = arith.constant 0 : i32
    return %c0_i32, %c0_i32_0 : i32, i32
  }
  func.func @transform_8(%arg0: i32) -> (i32, i32) {
    %c0_i32 = arith.constant 0 : i32
    %c0_i32_0 = arith.constant 0 : i32
    %c0_i32_1 = arith.constant 0 : i32
    return %c0_i32, %c0_i32_0 : i32, i32
  }
  func.func @transform_9(%arg0: i32) -> (i32, i32) {
    %c0_i32 = arith.constant 0 : i32
    %c0_i32_0 = arith.constant 0 : i32
    return %arg0, %c0_i32 : i32, i32
  }
}

</mosaic_0001>

<llo_original>
// kernel: tpu_custom_call.1
$region0: #{tpu_custom_call.1}
  #allocation0 [shape = 'u32[]', space=smem, size = 0x4, offset = 0x4, fixed_abs, tag = 'smem constant byte address 0x4 - core index']
  #allocation1 [shape = 'u32[144,128]{1,0:T(1,128)}', space=vmem, size = 0x12000, scoped, tag = 'internal scratch']
  %s0 = inlined_call_operand.vmem [shape: f32[2,2048,2], index: 0, kind: input, shape index: {}]
  %s1 = inlined_call_operand.vmem [shape: f32[2,2,256], index: 1, kind: input, shape index: {}]
  %s2 = inlined_call_operand.vmem [shape: f32[2,1,256], index: 2, kind: input, shape index: {}]
  %s3 = inlined_call_operand.vmem [shape: f32[2,256,256], index: 3, kind: input, shape index: {}]
  %s4 = inlined_call_operand.vmem [shape: f32[2,1,256], index: 4, kind: input, shape index: {}]
  %s5 = inlined_call_operand.vmem [shape: f32[2,256,256], index: 5, kind: input, shape index: {}]
  %s6 = inlined_call_operand.vmem [shape: f32[2,1,256], index: 6, kind: input, shape index: {}]
  %s7 = inlined_call_operand.vmem [shape: f32[256,3], index: 7, kind: input, shape index: {}]
  %s8 = inlined_call_operand.vmem [shape: f32[1,3], index: 8, kind: input, shape index: {}]
  %s9 = inlined_call_operand.vmem [shape: f32[2048,3], index: 9, kind: output, shape index: {}]
  %s10 = sld [smem:[#allocation0]]
  $region107: #{tpu_custom_call.1} parent=0
    _
  %s12 = ssub.s32 1, %s10
  %s13 = scalar_select 0, %s12, %s10
  $region1: #{tpu_custom_call.1} parent=0
    #allocation2 [shape = 'u8[1048576]{0}', space=vmem, size = 0x100000, scoped, tag = 'input window, operand 0']
    loop: start=0, step=1, limit=6
    $region2: #{tpu_custom_call.1} parent=1 // loop_pre_header
      _
    $region3: #{tpu_custom_call.1} parent=1 // loop_header
      %s15 = sphi 0, %s19
      %p16 = scmp.ge.s32.totalorder %s15, 6
      %s25 = sphi 0, %s27
      %s28 = sphi 0, %s25
      %s29 = sphi 0, %s28
      %s45 = sphi 0, %s29
      %s49 = sphi 0, %s49
      %s51 = sphi 0, %s49
      %s52 = sphi 0, %s51
      %s66 = sphi 0, %s52
      %s70 = sphi 0, %s70
      %s72 = sphi 0, %s70
      %s73 = sphi 0, %s72
      %s87 = sphi 0, %s73
      %s91 = sphi 0, %s91
      %s93 = sphi 0, %s91
      %s94 = sphi 0, %s93
      %s108 = sphi 0, %s94
      %s112 = sphi 0, %s112
      %s114 = sphi 0, %s112
      %s115 = sphi 0, %s114
      %s129 = sphi 0, %s115
      %s133 = sphi 0, %s133
      %s135 = sphi 0, %s133
      %s136 = sphi 0, %s135
      %s150 = sphi 0, %s136
      %s154 = sphi 0, %s154
      %s156 = sphi 0, %s154
      %s157 = sphi 0, %s156
      %s171 = sphi 0, %s157
      %s175 = sphi 0, %s175
      %s177 = sphi 0, %s175
      %s178 = sphi 0, %s177
      %s192 = sphi 0, %s178
      %s196 = sphi 0, %s196
      %s198 = sphi 0, %s196
      %s199 = sphi 0, %s198
      %s213 = sphi 0, %s199
      %s219 = sphi 0, %s221
      %s222 = sphi 0, %s219
      %s223 = sphi 0, %s222
      %s239 = sphi 0, %s223
    $region4: #{tpu_custom_call.1} parent=1 // loop_header_branch
      %18 = sbr.rel (%p16) target = $region8
    $region5: #{tpu_custom_call.1} parent=1 // loop_body
      %s20 = ssub.s32 %s15, 1
      %s21 = ssub.s32 %s15, 2
      %s22 = sadd.s32 %s15, 1
      %s23 = ssub.s32 %s15, %s22
      %p24 = scmp.eq.s32.totalorder %s23, 0
      %s26 = sadd.s32 %s25, 1
      %s27 = scalar_select %p24, %s25, %s26
      %p30 = pneg %p24
      %p31 = scmp.eq.s32.totalorder %s15, 3
      %p32 = por %p30, %p31
      %p33 = scmp.ne.s32.totalorder %s25, %s28
      %p34 = scmp.eq.s32.totalorder %s15, 0
      %p35 = por %p33, %p34
      %p36 = scmp.ne.s32.totalorder %s25, %s28
      %p37 = scmp.eq.s32.totalorder %s20, 3
      %p38 = por %p36, %p37
      %p39 = scmp.ne.s32.totalorder %s28, %s29
      %p40 = scmp.eq.s32.totalorder %s20, 0
      %p41 = por %p39, %p40
      %p42 = scmp.ne.s32.totalorder %s28, %s29
      %p43 = scmp.eq.s32.totalorder %s21, 3
      %p44 = por %p42, %p43
      %p46 = scmp.ne.s32.totalorder %s29, %s45
      %p47 = scmp.eq.s32.totalorder %s21, 0
      %p48 = por %p46, %p47
      %s50 = sadd.s32 %s49, 1
      %p53 = scmp.eq.s32.totalorder %s15, 3
      %p54 = scmp.ne.s32.totalorder %s49, %s51
      %p55 = scmp.eq.s32.totalorder %s15, 0
      %p56 = por %p54, %p55
      %p57 = scmp.ne.s32.totalorder %s49, %s51
      %p58 = scmp.eq.s32.totalorder %s20, 3
      %p59 = por %p57, %p58
      %p60 = scmp.ne.s32.totalorder %s51, %s52
      %p61 = scmp.eq.s32.totalorder %s20, 0
      %p62 = por %p60, %p61
      %p63 = scmp.ne.s32.totalorder %s51, %s52
      %p64 = scmp.eq.s32.totalorder %s21, 3
      %p65 = por %p63, %p64
      %p67 = scmp.ne.s32.totalorder %s52, %s66
      %p68 = scmp.eq.s32.totalorder %s21, 0
      %p69 = por %p67, %p68
      %s71 = sadd.s32 %s70, 1
      %p74 = scmp.eq.s32.totalorder %s15, 3
      %p75 = scmp.ne.s32.totalorder %s70, %s72
      %p76 = scmp.eq.s32.totalorder %s15, 0
      %p77 = por %p75, %p76
      %p78 = scmp.ne.s32.totalorder %s70, %s72
      %p79 = scmp.eq.s32.totalorder %s20, 3
      %p80 = por %p78, %p79
      %p81 = scmp.ne.s32.totalorder %s72, %s73
      %p82 = scmp.eq.s32.totalorder %s20, 0
      %p83 = por %p81, %p82
      %p84 = scmp.ne.s32.totalorder %s72, %s73
      %p85 = scmp.eq.s32.totalorder %s21, 3
      %p86 = por %p84, %p85
      %p88 = scmp.ne.s32.totalorder %s73, %s87
      %p89 = scmp.eq.s32.totalorder %s21, 0
      %p90 = por %p88, %p89
      %s92 = sadd.s32 %s91, 1
      %p95 = scmp.eq.s32.totalorder %s15, 3
      %p96 = scmp.ne.s32.totalorder %s91, %s93
      %p97 = scmp.eq.s32.totalorder %s15, 0
      %p98 = por %p96, %p97
      %p99 = scmp.ne.s32.totalorder %s91, %s93
      %p100 = scmp.eq.s32.totalorder %s20, 3
      %p101 = por %p99, %p100
      %p102 = scmp.ne.s32.totalorder %s93, %s94
      %p103 = scmp.eq.s32.totalorder %s20, 0
      %p104 = por %p102, %p103
      %p105 = scmp.ne.s32.totalorder %s93, %s94
      %p106 = scmp.eq.s32.totalorder %s21, 3
      %p107 = por %p105, %p106
      %p109 = scmp.ne.s32.totalorder %s94, %s108
      %p110 = scmp.eq.s32.totalorder %s21, 0
      %p111 = por %p109, %p110
      %s113 = sadd.s32 %s112, 1
      %p116 = scmp.eq.s32.totalorder %s15, 3
      %p117 = scmp.ne.s32.totalorder %s112, %s114
      %p118 = scmp.eq.s32.totalorder %s15, 0
      %p119 = por %p117, %p118
      %p120 = scmp.ne.s32.totalorder %s112, %s114
      %p121 = scmp.eq.s32.totalorder %s20, 3
      %p122 = por %p120, %p121
      %p123 = scmp.ne.s32.totalorder %s114, %s115
      %p124 = scmp.eq.s32.totalorder %s20, 0
      %p125 = por %p123, %p124
      %p126 = scmp.ne.s32.totalorder %s114, %s115
      %p127 = scmp.eq.s32.totalorder %s21, 3
      %p128 = por %p126, %p127
      %p130 = scmp.ne.s32.totalorder %s115, %s129
      %p131 = scmp.eq.s32.totalorder %s21, 0
      %p132 = por %p130, %p131
      %s134 = sadd.s32 %s133, 1
      %p137 = scmp.eq.s32.totalorder %s15, 3
      %p138 = scmp.ne.s32.totalorder %s133, %s135
      %p139 = scmp.eq.s32.totalorder %s15, 0
      %p140 = por %p138, %p139
      %p141 = scmp.ne.s32.totalorder %s133, %s135
      %p142 = scmp.eq.s32.totalorder %s20, 3
      %p143 = por %p141, %p142
      %p144 = scmp.ne.s32.totalorder %s135, %s136
      %p145 = scmp.eq.s32.totalorder %s20, 0
      %p146 = por %p144, %p145
      %p147 = scmp.ne.s32.totalorder %s135, %s136
      %p148 = scmp.eq.s32.totalorder %s21, 3
      %p149 = por %p147, %p148
      %p151 = scmp.ne.s32.totalorder %s136, %s150
      %p152 = scmp.eq.s32.totalorder %s21, 0
      %p153 = por %p151, %p152
      %s155 = sadd.s32 %s154, 1
      %p158 = scmp.eq.s32.totalorder %s15, 3
      %p159 = scmp.ne.s32.totalorder %s154, %s156
      %p160 = scmp.eq.s32.totalorder %s15, 0
      %p161 = por %p159, %p160
      %p162 = scmp.ne.s32.totalorder %s154, %s156
      %p163 = scmp.eq.s32.totalorder %s20, 3
      %p164 = por %p162, %p163
      %p165 = scmp.ne.s32.totalorder %s156, %s157
      %p166 = scmp.eq.s32.totalorder %s20, 0
      %p167 = por %p165, %p166
      %p168 = scmp.ne.s32.totalorder %s156, %s157
      %p169 = scmp.eq.s32.totalorder %s21, 3
      %p170 = por %p168, %p169
      %p172 = scmp.ne.s32.totalorder %s157, %s171
      %p173 = scmp.eq.s32.totalorder %s21, 0
      %p174 = por %p172, %p173
      %s176 = sadd.s32 %s175, 1
      %p179 = scmp.eq.s32.totalorder %s15, 3
      %p180 = scmp.ne.s32.totalorder %s175, %s177
      %p181 = scmp.eq.s32.totalorder %s15, 0
      %p182 = por %p180, %p181
      %p183 = scmp.ne.s32.totalorder %s175, %s177
      %p184 = scmp.eq.s32.totalorder %s20, 3
      %p185 = por %p183, %p184
      %p186 = scmp.ne.s32.totalorder %s177, %s178
      %p187 = scmp.eq.s32.totalorder %s20, 0
      %p188 = por %p186, %p187
      %p189 = scmp.ne.s32.totalorder %s177, %s178
      %p190 = scmp.eq.s32.totalorder %s21, 3
      %p191 = por %p189, %p190
      %p193 = scmp.ne.s32.totalorder %s178, %s192
      %p194 = scmp.eq.s32.totalorder %s21, 0
      %p195 = por %p193, %p194
      %s197 = sadd.s32 %s196, 1
      %p200 = scmp.eq.s32.totalorder %s15, 3
      %p201 = scmp.ne.s32.totalorder %s196, %s198
      %p202 = scmp.eq.s32.totalorder %s15, 0
      %p203 = por %p201, %p202
      %p204 = scmp.ne.s32.totalorder %s196, %s198
      %p205 = scmp.eq.s32.totalorder %s20, 3
      %p206 = por %p204, %p205
      %p207 = scmp.ne.s32.totalorder %s198, %s199
      %p208 = scmp.eq.s32.totalorder %s20, 0
      %p209 = por %p207, %p208
      %p210 = scmp.ne.s32.totalorder %s198, %s199
      %p211 = scmp.eq.s32.totalorder %s21, 3
      %p212 = por %p210, %p211
      %p214 = scmp.ne.s32.totalorder %s199, %s213
      %p215 = scmp.eq.s32.totalorder %s21, 0
      %p216 = por %p214, %p215
      %s217 = ssub.s32 %s15, %s22
      %p218 = scmp.eq.s32.totalorder %s217, 0
      %s220 = sadd.s32 %s219, 1
      %s221 = scalar_select %p218, %s219, %s220
      %p224 = pneg %p218
      %p225 = scmp.eq.s32.totalorder %s15, 3
      %p226 = por %p224, %p225
      %p227 = scmp.ne.s32.totalorder %s219, %s222
      %p228 = scmp.eq.s32.totalorder %s15, 0
      %p229 = por %p227, %p228
      %p230 = scmp.ne.s32.totalorder %s219, %s222
      %p231 = scmp.eq.s32.totalorder %s20, 3
      %p232 = por %p230, %p231
      %p233 = scmp.ne.s32.totalorder %s222, %s223
      %p234 = scmp.eq.s32.totalorder %s20, 0
      %p235 = por %p233, %p234
      %p236 = scmp.ne.s32.totalorder %s222, %s223
      %p237 = scmp.eq.s32.totalorder %s21, 3
      %p238 = por %p236, %p237
      %p240 = scmp.ne.s32.totalorder %s223, %s239
      %p241 = scmp.eq.s32.totalorder %s21, 0
      %p242 = por %p240, %p241
      %p243 = scmp.le.s32.totalorder 1, %s15
      %p244 = scmp.lt.s32.totalorder %s15, 5
      %p245 = pnand %p243, %p244
      %p246 = pneg %p245
      // Predicated region
      $region9: #{tpu_custom_call.1} parent=5 // pred_check
        _
      $region10: #{tpu_custom_call.1} parent=5 // pred_check_branch
        %248 = sbr.rel (%p245) target = $region12
      $region11: #{tpu_custom_call.1} parent=5 // pred_region
        %s249 = ssub.s32 %s15, 1
        // Predicated region
        $region13: #{tpu_custom_call.1} parent=11 // pred_check
          %p250 = pneg %p62
        $region14: #{tpu_custom_call.1} parent=11 // pred_check_branch
          %252 = sbr.rel (%p250) target = $region16
        $region15: #{tpu_custom_call.1} parent=11 // pred_region
          _
        $region16: #{tpu_custom_call.1} parent=11 // pred_fallthru
          _
        // Predicated region
        $region17: #{tpu_custom_call.1} parent=11 // pred_check
          %p253 = pneg %p83
        $region18: #{tpu_custom_call.1} parent=11 // pred_check_branch
          %255 = sbr.rel (%p253) target = $region20
        $region19: #{tpu_custom_call.1} parent=11 // pred_region
          _
        $region20: #{tpu_custom_call.1} parent=11 // pred_fallthru
          _
        // Predicated region
        $region21: #{tpu_custom_call.1} parent=11 // pred_check
          %p256 = pneg %p104
        $region22: #{tpu_custom_call.1} parent=11 // pred_check_branch
          %258 = sbr.rel (%p256) target = $region24
        $region23: #{tpu_custom_call.1} parent=11 // pred_region
          _
        $region24: #{tpu_custom_call.1} parent=11 // pred_fallthru
          _
        // Predicated region
        $region25: #{tpu_custom_call.1} parent=11 // pred_check
          %p259 = pneg %p125
        $region26: #{tpu_custom_call.1} parent=11 // pred_check_branch
          %261 = sbr.rel (%p259) target = $region28
        $region27: #{tpu_custom_call.1} parent=11 // pred_region
          _
        $region28: #{tpu_custom_call.1} parent=11 // pred_fallthru
          _
        // Predicated region
        $region29: #{tpu_custom_call.1} parent=11 // pred_check
          %p262 = pneg %p146
        $region30: #{tpu_custom_call.1} parent=11 // pred_check_branch
          %264 = sbr.rel (%p262) target = $region32
        $region31: #{tpu_custom_call.1} parent=11 // pred_region
          _
        $region32: #{tpu_custom_call.1} parent=11 // pred_fallthru
          _
        // Predicated region
        $region33: #{tpu_custom_call.1} parent=11 // pred_check
          %p265 = pneg %p167
        $region34: #{tpu_custom_call.1} parent=11 // pred_check_branch
          %267 = sbr.rel (%p265) target = $region36
        $region35: #{tpu_custom_call.1} parent=11 // pred_region
          _
        $region36: #{tpu_custom_call.1} parent=11 // pred_fallthru
          _
        // Predicated region
        $region37: #{tpu_custom_call.1} parent=11 // pred_check
          %p268 = pneg %p188
        $region38: #{tpu_custom_call.1} parent=11 // pred_check_branch
          %270 = sbr.rel (%p268) target = $region40
        $region39: #{tpu_custom_call.1} parent=11 // pred_region
          _
        $region40: #{tpu_custom_call.1} parent=11 // pred_fallthru
          _
        // Predicated region
        $region41: #{tpu_custom_call.1} parent=11 // pred_check
          %p271 = pneg %p209
        $region42: #{tpu_custom_call.1} parent=11 // pred_check_branch
          %273 = sbr.rel (%p271) target = $region44
        $region43: #{tpu_custom_call.1} parent=11 // pred_region
          _
        $region44: #{tpu_custom_call.1} parent=11 // pred_fallthru
          _
      $region12: #{tpu_custom_call.1} parent=5 // pred_fallthru
        _
      %p274 = scmp.lt.s32.totalorder %s15, 4
      // Predicated region
      $region45: #{tpu_custom_call.1} parent=5 // pred_check
        %p275 = pneg %p274
      $region46: #{tpu_custom_call.1} parent=5 // pred_check_branch
        %277 = sbr.rel (%p275) target = $region48
      $region47: #{tpu_custom_call.1} parent=5 // pred_region
        // Predicated region
        $region49: #{tpu_custom_call.1} parent=47 // pred_check
          %p278 = pneg %p35
        $region50: #{tpu_custom_call.1} parent=47 // pred_check_branch
          %280 = sbr.rel (%p278) target = $region52
        $region51: #{tpu_custom_call.1} parent=47 // pred_region
          %s281 = sand.u32 %s25, 1
          %s282 = sand.u32 %s25, 1
          %s283 = smul.addr %s282, 1024
          %s284 = scalar_lea.vmem [#allocation2], %s283
          %s285 = smul.u32 64, %s15
          %s286 = smul.addr %s285, 8
          %s287 = scalar_lea.vmem %s0, %s286
          // Predicated region
          $region53: #{tpu_custom_call.1} parent=51 // pred_check
            _
          $region54: #{tpu_custom_call.1} parent=51 // pred_check_branch
            %289 = sbr.rel (0) target = $region56
          $region55: #{tpu_custom_call.1} parent=51 // pred_region
            // Predicated region
            $region57: #{tpu_custom_call.1} parent=55 // pred_check
              _
            $region58: #{tpu_custom_call.1} parent=55 // pred_check_branch
              %291 = sbr.rel (0) target = $region60
            $region59: #{tpu_custom_call.1} parent=55 // pred_region
              // Predicated region
              $region72: #{tpu_custom_call.1} parent=59 // pred_check
                _
              $region73: #{tpu_custom_call.1} parent=59 // pred_check_branch
                %561 = sbr.rel (0) target = $region75
              $region74: #{tpu_custom_call.1} parent=59 // pred_region
                loop: start=0, step=1, limit=1
                $region76: #{tpu_custom_call.1} parent=74 // loop_pre_header
                  _
                $region77: #{tpu_custom_call.1} parent=74 // loop_header
                  %s563 = sphi 0, %s567
                  %p564 = scmp.ge.s32.totalorder %s563, 1
                  %s568 = sphi %s287, %s287
                  %s569 = sphi %s284, %s284
                $region78: #{tpu_custom_call.1} parent=74 // loop_header_branch
                  %566 = sbr.rel (%p564) target = $region82
                $region79: #{tpu_custom_call.1} parent=74 // loop_body
                  %v570 = vld [vmem:[%s568] sm:$0xff]
                  %571 = vst [vmem:[%s569] sm:$0xff] %v570
                  %v572 = vld [vmem:[%s568 + $0x8] sm:$0xff]
                  %573 = vst [vmem:[%s569 + $0x8] sm:$0xff] %v572
                  %v574 = vld [vmem:[%s568 + $0x10] sm:$0xff]
                  %575 = vst [vmem:[%s569 + $0x10] sm:$0xff] %v574
                  %v576 = vld [vmem:[%s568 + $0x18] sm:$0xff]
                  %577 = vst [vmem:[%s569 + $0x18] sm:$0xff] %v576
                  %v578 = vld [vmem:[%s568 + $0x20] sm:$0xff]
                  %579 = vst [vmem:[%s569 + $0x20] sm:$0xff] %v578
                  %v580 = vld [vmem:[%s568 + $0x28] sm:$0xff]
                  %581 = vst [vmem:[%s569 + $0x28] sm:$0xff] %v580
                  %v582 = vld [vmem:[%s568 + $0x30] sm:$0xff]
                  %583 = vst [vmem:[%s569 + $0x30] sm:$0xff] %v582
                  %v584 = vld [vmem:[%s568 + $0x38] sm:$0xff]
                  %585 = vst [vmem:[%s569 + $0x38] sm:$0xff] %v584
                  %v586 = vld [vmem:[%s568 + $0x40] sm:$0xff]
                  %587 = vst [vmem:[%s569 + $0x40] sm:$0xff] %v586
                  %v588 = vld [vmem:[%s568 + $0x48] sm:$0xff]
                  %589 = vst [vmem:[%s569 + $0x48] sm:$0xff] %v588
                  %v590 = vld [vmem:[%s568 + $0x50] sm:$0xff]
                  %591 = vst [vmem:[%s569 + $0x50] sm:$0xff] %v590
                  %v592 = vld [vmem:[%s568 + $0x58] sm:$0xff]
                  %593 = vst [vmem:[%s569 + $0x58] sm:$0xff] %v592
                  %v594 = vld [vmem:[%s568 + $0x60] sm:$0xff]
                  %595 = vst [vmem:[%s569 + $0x60] sm:$0xff] %v594
                  %v596 = vld [vmem:[%s568 + $0x68] sm:$0xff]
                  %597 = vst [vmem:[%s569 + $0x68] sm:$0xff] %v596
                  %v598 = vld [vmem:[%s568 + $0x70] sm:$0xff]
                  %599 = vst [vmem:[%s569 + $0x70] sm:$0xff] %v598
                  %v600 = vld [vmem:[%s568 + $0x78] sm:$0xff]
                  %601 = vst [vmem:[%s569 + $0x78] sm:$0xff] %v600
                  %v602 = vld [vmem:[%s568 + $0x80] sm:$0xff]
                  %603 = vst [vmem:[%s569 + $0x80] sm:$0xff] %v602
                  %v604 = vld [vmem:[%s568 + $0x88] sm:$0xff]
                  %605 = vst [vmem:[%s569 + $0x88] sm:$0xff] %v604
                  %v606 = vld [vmem:[%s568 + $0x90] sm:$0xff]
                  %607 = vst [vmem:[%s569 + $0x90] sm:$0xff] %v606
                  %v608 = vld [vmem:[%s568 + $0x98] sm:$0xff]
                  %609 = vst [vmem:[%s569 + $0x98] sm:$0xff] %v608
                  %v610 = vld [vmem:[%s568 + $0xa0] sm:$0xff]
                  %611 = vst [vmem:[%s569 + $0xa0] sm:$0xff] %v610
                  %v612 = vld [vmem:[%s568 + $0xa8] sm:$0xff]
                  %613 = vst [vmem:[%s569 + $0xa8] sm:$0xff] %v612
                  %v614 = vld [vmem:[%s568 + $0xb0] sm:$0xff]
                  %615 = vst [vmem:[%s569 + $0xb0] sm:$0xff] %v614
                  %v616 = vld [vmem:[%s568 + $0xb8] sm:$0xff]
                  %617 = vst [vmem:[%s569 + $0xb8] sm:$0xff] %v616
                  %v618 = vld [vmem:[%s568 + $0xc0] sm:$0xff]
                  %619 = vst [vmem:[%s569 + $0xc0] sm:$0xff] %v618
                  %v620 = vld [vmem:[%s568 + $0xc8] sm:$0xff]
                  %621 = vst [vmem:[%s569 + $0xc8] sm:$0xff] %v620
                  %v622 = vld [vmem:[%s568 + $0xd0] sm:$0xff]
                  %623 = vst [vmem:[%s569 + $0xd0] sm:$0xff] %v622
                  %v624 = vld [vmem:[%s568 + $0xd8] sm:$0xff]
                  %625 = vst [vmem:[%s569 + $0xd8] sm:$0xff] %v624
                  %v626 = vld [vmem:[%s568 + $0xe0] sm:$0xff]
                  %627 = vst [vmem:[%s569 + $0xe0] sm:$0xff] %v626
                  %v628 = vld [vmem:[%s568 + $0xe8] sm:$0xff]
                  %629 = vst [vmem:[%s569 + $0xe8] sm:$0xff] %v628
                  %v630 = vld [vmem:[%s568 + $0xf0] sm:$0xff]
                  %631 = vst [vmem:[%s569 + $0xf0] sm:$0xff] %v630
                  %v632 = vld [vmem:[%s568 + $0xf8] sm:$0xff]
                  %633 = vst [vmem:[%s569 + $0xf8] sm:$0xff] %v632
                  %v634 = vld [vmem:[%s568 + $0x100] sm:$0xff]
                  %635 = vst [vmem:[%s569 + $0x100] sm:$0xff] %v634
                  %v636 = vld [vmem:[%s568 + $0x108] sm:$0xff]
                  %637 = vst [vmem:[%s569 + $0x108] sm:$0xff] %v636
                  %v638 = vld [vmem:[%s568 + $0x110] sm:$0xff]
                  %639 = vst [vmem:[%s569 + $0x110] sm:$0xff] %v638
                  %v640 = vld [vmem:[%s568 + $0x118] sm:$0xff]
                  %641 = vst [vmem:[%s569 + $0x118] sm:$0xff] %v640
                  %v642 = vld [vmem:[%s568 + $0x120] sm:$0xff]
                  %643 = vst [vmem:[%s569 + $0x120] sm:$0xff] %v642
                  %v644 = vld [vmem:[%s568 + $0x128] sm:$0xff]
                  %645 = vst [vmem:[%s569 + $0x128] sm:$0xff] %v644
                  %v646 = vld [vmem:[%s568 + $0x130] sm:$0xff]
                  %647 = vst [vmem:[%s569 + $0x130] sm:$0xff] %v646
                  %v648 = vld [vmem:[%s568 + $0x138] sm:$0xff]
                  %649 = vst [vmem:[%s569 + $0x138] sm:$0xff] %v648
                  %v650 = vld [vmem:[%s568 + $0x140] sm:$0xff]
                  %651 = vst [vmem:[%s569 + $0x140] sm:$0xff] %v650
                  %v652 = vld [vmem:[%s568 + $0x148] sm:$0xff]
                  %653 = vst [vmem:[%s569 + $0x148] sm:$0xff] %v652
                  %v654 = vld [vmem:[%s568 + $0x150] sm:$0xff]
                  %655 = vst [vmem:[%s569 + $0x150] sm:$0xff] %v654
                  %v656 = vld [vmem:[%s568 + $0x158] sm:$0xff]
                  %657 = vst [vmem:[%s569 + $0x158] sm:$0xff] %v656
                  %v658 = vld [vmem:[%s568 + $0x160] sm:$0xff]
                  %659 = vst [vmem:[%s569 + $0x160] sm:$0xff] %v658
                  %v660 = vld [vmem:[%s568 + $0x168] sm:$0xff]
                  %661 = vst [vmem:[%s569 + $0x168] sm:$0xff] %v660
                  %v662 = vld [vmem:[%s568 + $0x170] sm:$0xff]
                  %663 = vst [vmem:[%s569 + $0x170] sm:$0xff] %v662
                  %v664 = vld [vmem:[%s568 + $0x178] sm:$0xff]
                  %665 = vst [vmem:[%s569 + $0x178] sm:$0xff] %v664
                  %v666 = vld [vmem:[%s568 + $0x180] sm:$0xff]
                  %667 = vst [vmem:[%s569 + $0x180] sm:$0xff] %v666
                  %v668 = vld [vmem:[%s568 + $0x188] sm:$0xff]
                  %669 = vst [vmem:[%s569 + $0x188] sm:$0xff] %v668
                  %v670 = vld [vmem:[%s568 + $0x190] sm:$0xff]
                  %671 = vst [vmem:[%s569 + $0x190] sm:$0xff] %v670
                  %v672 = vld [vmem:[%s568 + $0x198] sm:$0xff]
                  %673 = vst [vmem:[%s569 + $0x198] sm:$0xff] %v672
                  %v674 = vld [vmem:[%s568 + $0x1a0] sm:$0xff]
                  %675 = vst [vmem:[%s569 + $0x1a0] sm:$0xff] %v674
                  %v676 = vld [vmem:[%s568 + $0x1a8] sm:$0xff]
                  %677 = vst [vmem:[%s569 + $0x1a8] sm:$0xff] %v676
                  %v678 = vld [vmem:[%s568 + $0x1b0] sm:$0xff]
                  %679 = vst [vmem:[%s569 + $0x1b0] sm:$0xff] %v678
                  %v680 = vld [vmem:[%s568 + $0x1b8] sm:$0xff]
                  %681 = vst [vmem:[%s569 + $0x1b8] sm:$0xff] %v680
                  %v682 = vld [vmem:[%s568 + $0x1c0] sm:$0xff]
                  %683 = vst [vmem:[%s569 + $0x1c0] sm:$0xff] %v682
                  %v684 = vld [vmem:[%s568 + $0x1c8] sm:$0xff]
                  %685 = vst [vmem:[%s569 + $0x1c8] sm:$0xff] %v684
                  %v686 = vld [vmem:[%s568 + $0x1d0] sm:$0xff]
                  %687 = vst [vmem:[%s569 + $0x1d0] sm:$0xff] %v686
                  %v688 = vld [vmem:[%s568 + $0x1d8] sm:$0xff]
                  %689 = vst [vmem:[%s569 + $0x1d8] sm:$0xff] %v688
                  %v690 = vld [vmem:[%s568 + $0x1e0] sm:$0xff]
                  %691 = vst [vmem:[%s569 + $0x1e0] sm:$0xff] %v690
                  %v692 = vld [vmem:[%s568 + $0x1e8] sm:$0xff]
                  %693 = vst [vmem:[%s569 + $0x1e8] sm:$0xff] %v692
                  %v694 = vld [vmem:[%s568 + $0x1f0] sm:$0xff]
                  %695 = vst [vmem:[%s569 + $0x1f0] sm:$0xff] %v694
                  %v696 = vld [vmem:[%s568 + $0x1f8] sm:$0xff]
                  %697 = vst [vmem:[%s569 + $0x1f8] sm:$0xff] %v696
                  %v698 = vld [vmem:[%s568 + $0x800] sm:$0xff]
                  %699 = vst [vmem:[%s569 + $0x200] sm:$0xff] %v698
                  %v700 = vld [vmem:[%s568 + $0x808] sm:$0xff]
                  %701 = vst [vmem:[%s569 + $0x208] sm:$0xff] %v700
                  %v702 = vld [vmem:[%s568 + $0x810] sm:$0xff]
                  %703 = vst [vmem:[%s569 + $0x210] sm:$0xff] %v702
                  %v704 = vld [vmem:[%s568 + $0x818] sm:$0xff]
                  %705 = vst [vmem:[%s569 + $0x218] sm:$0xff] %v704
                  %v706 = vld [vmem:[%s568 + $0x820] sm:$0xff]
                  %707 = vst [vmem:[%s569 + $0x220] sm:$0xff] %v706
                  %v708 = vld [vmem:[%s568 + $0x828] sm:$0xff]
                  %709 = vst [vmem:[%s569 + $0x228] sm:$0xff] %v708
                  %v710 = vld [vmem:[%s568 + $0x830] sm:$0xff]
                  %711 = vst [vmem:[%s569 + $0x230] sm:$0xff] %v710
                  %v712 = vld [vmem:[%s568 + $0x838] sm:$0xff]
                  %713 = vst [vmem:[%s569 + $0x238] sm:$0xff] %v712
                  %v714 = vld [vmem:[%s568 + $0x840] sm:$0xff]
                  %715 = vst [vmem:[%s569 + $0x240] sm:$0xff] %v714
                  %v716 = vld [vmem:[%s568 + $0x848] sm:$0xff]
                  %717 = vst [vmem:[%s569 + $0x248] sm:$0xff] %v716
                  %v718 = vld [vmem:[%s568 + $0x850] sm:$0xff]
                  %719 = vst [vmem:[%s569 + $0x250] sm:$0xff] %v718
                  %v720 = vld [vmem:[%s568 + $0x858] sm:$0xff]
                  %721 = vst [vmem:[%s569 + $0x258] sm:$0xff] %v720
                  %v722 = vld [vmem:[%s568 + $0x860] sm:$0xff]
                  %723 = vst [vmem:[%s569 + $0x260] sm:$0xff] %v722
                  %v724 = vld [vmem:[%s568 + $0x868] sm:$0xff]
                  %725 = vst [vmem:[%s569 + $0x268] sm:$0xff] %v724
                  %v726 = vld [vmem:[%s568 + $0x870] sm:$0xff]
                  %727 = vst [vmem:[%s569 + $0x270] sm:$0xff] %v726
                  %v728 = vld [vmem:[%s568 + $0x878] sm:$0xff]
                  %729 = vst [vmem:[%s569 + $0x278] sm:$0xff] %v728
                  %v730 = vld [vmem:[%s568 + $0x880] sm:$0xff]
                  %731 = vst [vmem:[%s569 + $0x280] sm:$0xff] %v730
                  %v732 = vld [vmem:[%s568 + $0x888] sm:$0xff]
                  %733 = vst [vmem:[%s569 + $0x288] sm:$0xff] %v732
                  %v734 = vld [vmem:[%s568 + $0x890] sm:$0xff]
                  %735 = vst [vmem:[%s569 + $0x290] sm:$0xff] %v734
                  %v736 = vld [vmem:[%s568 + $0x898] sm:$0xff]
                  %737 = vst [vmem:[%s569 + $0x298] sm:$0xff] %v736
                  %v738 = vld [vmem:[%s568 + $0x8a0] sm:$0xff]
                  %739 = vst [vmem:[%s569 + $0x2a0] sm:$0xff] %v738
                  %v740 = vld [vmem:[%s568 + $0x8a8] sm:$0xff]
                  %741 = vst [vmem:[%s569 + $0x2a8] sm:$0xff] %v740
                  %v742 = vld [vmem:[%s568 + $0x8b0] sm:$0xff]
                  %743 = vst [vmem:[%s569 + $0x2b0] sm:$0xff] %v742
                  %v744 = vld [vmem:[%s568 + $0x8b8] sm:$0xff]
                  %745 = vst [vmem:[%s569 + $0x2b8] sm:$0xff] %v744
                  %v746 = vld [vmem:[%s568 + $0x8c0] sm:$0xff]
                  %747 = vst [vmem:[%s569 + $0x2c0] sm:$0xff] %v746
                  %v748 = vld [vmem:[%s568 + $0x8c8] sm:$0xff]
                  %749 = vst [vmem:[%s569 + $0x2c8] sm:$0xff] %v748
                  %v750 = vld [vmem:[%s568 + $0x8d0] sm:$0xff]
                  %751 = vst [vmem:[%s569 + $0x2d0] sm:$0xff] %v750
                  %v752 = vld [vmem:[%s568 + $0x8d8] sm:$0xff]
                  %753 = vst [vmem:[%s569 + $0x2d8] sm:$0xff] %v752
                  %v754 = vld [vmem:[%s568 + $0x8e0] sm:$0xff]
                  %755 = vst [vmem:[%s569 + $0x2e0] sm:$0xff] %v754
                  %v756 = vld [vmem:[%s568 + $0x8e8] sm:$0xff]
                  %757 = vst [vmem:[%s569 + $0x2e8] sm:$0xff] %v756
                  %v758 = vld [vmem:[%s568 + $0x8f0] sm:$0xff]
                  %759 = vst [vmem:[%s569 + $0x2f0] sm:$0xff] %v758
                  %v760 = vld [vmem:[%s568 + $0x8f8] sm:$0xff]
                  %761 = vst [vmem:[%s569 + $0x2f8] sm:$0xff] %v760
                  %v762 = vld [vmem:[%s568 + $0x900] sm:$0xff]
                  %763 = vst [vmem:[%s569 + $0x300] sm:$0xff] %v762
                  %v764 = vld [vmem:[%s568 + $0x908] sm:$0xff]
                  %765 = vst [vmem:[%s569 + $0x308] sm:$0xff] %v764
                  %v766 = vld [vmem:[%s568 + $0x910] sm:$0xff]
                  %767 = vst [vmem:[%s569 + $0x310] sm:$0xff] %v766
                  %v768 = vld [vmem:[%s568 + $0x918] sm:$0xff]
                  %769 = vst [vmem:[%s569 + $0x318] sm:$0xff] %v768
                  %v770 = vld [vmem:[%s568 + $0x920] sm:$0xff]
                  %771 = vst [vmem:[%s569 + $0x320] sm:$0xff] %v770
                  %v772 = vld [vmem:[%s568 + $0x928] sm:$0xff]
                  %773 = vst [vmem:[%s569 + $0x328] sm:$0xff] %v772
                  %v774 = vld [vmem:[%s568 + $0x930] sm:$0xff]
                  %775 = vst [vmem:[%s569 + $0x330] sm:$0xff] %v774
                  %v776 = vld [vmem:[%s568 + $0x938] sm:$0xff]
                  %777 = vst [vmem:[%s569 + $0x338] sm:$0xff] %v776
                  %v778 = vld [vmem:[%s568 + $0x940] sm:$0xff]
                  %779 = vst [vmem:[%s569 + $0x340] sm:$0xff] %v778
                  %v780 = vld [vmem:[%s568 + $0x948] sm:$0xff]
                  %781 = vst [vmem:[%s569 + $0x348] sm:$0xff] %v780
                  %v782 = vld [vmem:[%s568 + $0x950] sm:$0xff]
                  %783 = vst [vmem:[%s569 + $0x350] sm:$0xff] %v782
                  %v784 = vld [vmem:[%s568 + $0x958] sm:$0xff]
                  %785 = vst [vmem:[%s569 + $0x358] sm:$0xff] %v784
                  %v786 = vld [vmem:[%s568 + $0x960] sm:$0xff]
                  %787 = vst [vmem:[%s569 + $0x360] sm:$0xff] %v786
                  %v788 = vld [vmem:[%s568 + $0x968] sm:$0xff]
                  %789 = vst [vmem:[%s569 + $0x368] sm:$0xff] %v788
                  %v790 = vld [vmem:[%s568 + $0x970] sm:$0xff]
                  %791 = vst [vmem:[%s569 + $0x370] sm:$0xff] %v790
                  %v792 = vld [vmem:[%s568 + $0x978] sm:$0xff]
                  %793 = vst [vmem:[%s569 + $0x378] sm:$0xff] %v792
                  %v794 = vld [vmem:[%s568 + $0x980] sm:$0xff]
                  %795 = vst [vmem:[%s569 + $0x380] sm:$0xff] %v794
                  %v796 = vld [vmem:[%s568 + $0x988] sm:$0xff]
                  %797 = vst [vmem:[%s569 + $0x388] sm:$0xff] %v796
                  %v798 = vld [vmem:[%s568 + $0x990] sm:$0xff]
                  %799 = vst [vmem:[%s569 + $0x390] sm:$0xff] %v798
                  %v800 = vld [vmem:[%s568 + $0x998] sm:$0xff]
                  %801 = vst [vmem:[%s569 + $0x398] sm:$0xff] %v800
                  %v802 = vld [vmem:[%s568 + $0x9a0] sm:$0xff]
                  %803 = vst [vmem:[%s569 + $0x3a0] sm:$0xff] %v802
                  %v804 = vld [vmem:[%s568 + $0x9a8] sm:$0xff]
                  %805 = vst [vmem:[%s569 + $0x3a8] sm:$0xff] %v804
                  %v806 = vld [vmem:[%s568 + $0x9b0] sm:$0xff]
                  %807 = vst [vmem:[%s569 + $0x3b0] sm:$0xff] %v806
                  %v808 = vld [vmem:[%s568 + $0x9b8] sm:$0xff]
                  %809 = vst [vmem:[%s569 + $0x3b8] sm:$0xff] %v808
                  %v810 = vld [vmem:[%s568 + $0x9c0] sm:$0xff]
                  %811 = vst [vmem:[%s569 + $0x3c0] sm:$0xff] %v810
                  %v812 = vld [vmem:[%s568 + $0x9c8] sm:$0xff]
                  %813 = vst [vmem:[%s569 + $0x3c8] sm:$0xff] %v812
                  %v814 = vld [vmem:[%s568 + $0x9d0] sm:$0xff]
                  %815 = vst [vmem:[%s569 + $0x3d0] sm:$0xff] %v814
                  %v816 = vld [vmem:[%s568 + $0x9d8] sm:$0xff]
                  %817 = vst [vmem:[%s569 + $0x3d8] sm:$0xff] %v816
                  %v818 = vld [vmem:[%s568 + $0x9e0] sm:$0xff]
                  %819 = vst [vmem:[%s569 + $0x3e0] sm:$0xff] %v818
                  %v820 = vld [vmem:[%s568 + $0x9e8] sm:$0xff]
                  %821 = vst [vmem:[%s569 + $0x3e8] sm:$0xff] %v820
                  %v822 = vld [vmem:[%s568 + $0x9f0] sm:$0xff]
                  %823 = vst [vmem:[%s569 + $0x3f0] sm:$0xff] %v822
                  %v824 = vld [vmem:[%s568 + $0x9f8] sm:$0xff]
                  %825 = vst [vmem:[%s569 + $0x3f8] sm:$0xff] %v824
                $region80: #{tpu_custom_call.1} parent=74 // loop_footer
                  %s567 = sadd.s32 1, %s563
                $region81: #{tpu_custom_call.1} parent=74 // loop_footer_branch
                  %562 = sbr.rel target = $region77
                $region82: #{tpu_custom_call.1} parent=74 // loop_exit
                  _
              $region75: #{tpu_custom_call.1} parent=59 // pred_fallthru
                _
              // Predicated region
              $region83: #{tpu_custom_call.1} parent=59 // pred_check
                _
              $region84: #{tpu_custom_call.1} parent=59 // pred_check_branch
                %827 = sbr.rel target = $region86
              $region85: #{tpu_custom_call.1} parent=59 // pred_region
                _
              $region86: #{tpu_custom_call.1} parent=59 // pred_fallthru
                _
            $region60: #{tpu_custom_call.1} parent=55 // pred_fallthru
              _
            // Predicated region
            $region61: #{tpu_custom_call.1} parent=55 // pred_check
              _
            $region62: #{tpu_custom_call.1} parent=55 // pred_check_branch
              %293 = sbr.rel target = $region64
            $region63: #{tpu_custom_call.1} parent=55 // pred_region
              %s295 = ssub.s32 256, 1
              loop: start=0, step=1, limit=1
              $region65: #{tpu_custom_call.1} parent=63 // loop_pre_header
                _
              $region66: #{tpu_custom_call.1} parent=63 // loop_header
                %s297 = sphi 0, %s301
                %p298 = scmp.ge.s32.totalorder %s297, 1
                %s302 = sphi %s287, %s287
                %s303 = sphi %s284, %s284
              $region67: #{tpu_custom_call.1} parent=63 // loop_header_branch
                %300 = sbr.rel (%p298) target = $region71
              $region68: #{tpu_custom_call.1} parent=63 // loop_body
                %v304 = vld [vmem:[%s302] sm:%s295]
                %305 = vst [vmem:[%s303] sm:%s295] %v304
                %v306 = vld [vmem:[%s302 + $0x8] sm:%s295]
                %307 = vst [vmem:[%s303 + $0x8] sm:%s295] %v306
                %v308 = vld [vmem:[%s302 + $0x10] sm:%s295]
                %309 = vst [vmem:[%s303 + $0x10] sm:%s295] %v308
                %v310 = vld [vmem:[%s302 + $0x18] sm:%s295]
                %311 = vst [vmem:[%s303 + $0x18] sm:%s295] %v310
                %v312 = vld [vmem:[%s302 + $0x20] sm:%s295]
                %313 = vst [vmem:[%s303 + $0x20] sm:%s295] %v312
                %v314 = vld [vmem:[%s302 + $0x28] sm:%s295]
                %315 = vst [vmem:[%s303 + $0x28] sm:%s295] %v314
                %v316 = vld [vmem:[%s302 + $0x30] sm:%s295]
                %317 = vst [vmem:[%s303 + $0x30] sm:%s295] %v316
                %v318 = vld [vmem:[%s302 + $0x38] sm:%s295]
                %319 = vst [vmem:[%s303 + $0x38] sm:%s295] %v318
                %v320 = vld [vmem:[%s302 + $0x40] sm:%s295]
                %321 = vst [vmem:[%s303 + $0x40] sm:%s295] %v320
                %v322 = vld [vmem:[%s302 + $0x48] sm:%s295]
                %323 = vst [vmem:[%s303 + $0x48] sm:%s295] %v322
                %v324 = vld [vmem:[%s302 + $0x50] sm:%s295]
                %325 = vst [vmem:[%s303 + $0x50] sm:%s295] %v324
                %v326 = vld [vmem:[%s302 + $0x58] sm:%s295]
                %327 = vst [vmem:[%s303 + $0x58] sm:%s295] %v326
                %v328 = vld [vmem:[%s302 + $0x60] sm:%s295]
                %329 = vst [vmem:[%s303 + $0x60] sm:%s295] %v328
                %v330 = vld [vmem:[%s302 + $0x68] sm:%s295]
                %331 = vst [vmem:[%s303 + $0x68] sm:%s295] %v330
                %v332 = vld [vmem:[%s302 + $0x70] sm:%s295]
                %333 = vst [vmem:[%s303 + $0x70] sm:%s295] %v332
                %v334 = vld [vmem:[%s302 + $0x78] sm:%s295]
                %335 = vst [vmem:[%s303 + $0x78] sm:%s295] %v334
                %v336 = vld [vmem:[%s302 + $0x80] sm:%s295]
                %337 = vst [vmem:[%s303 + $0x80] sm:%s295] %v336
                %v338 = vld [vmem:[%s302 + $0x88] sm:%s295]
                %339 = vst [vmem:[%s303 + $0x88] sm:%s295] %v338
                %v340 = vld [vmem:[%s302 + $0x90] sm:%s295]
                %341 = vst [vmem:[%s303 + $0x90] sm:%s295] %v340
                %v342 = vld [vmem:[%s302 + $0x98] sm:%s295]
                %343 = vst [vmem:[%s303 + $0x98] sm:%s295] %v342
                %v344 = vld [vmem:[%s302 + $0xa0] sm:%s295]
                %345 = vst [vmem:[%s303 + $0xa0] sm:%s295] %v344
                %v346 = vld [vmem:[%s302 + $0xa8] sm:%s295]
                %347 = vst [vmem:[%s303 + $0xa8] sm:%s295] %v346
                %v348 = vld [vmem:[%s302 + $0xb0] sm:%s295]
                %349 = vst [vmem:[%s303 + $0xb0] sm:%s295] %v348
                %v350 = vld [vmem:[%s302 + $0xb8] sm:%s295]
                %351 = vst [vmem:[%s303 + $0xb8] sm:%s295] %v350
                %v352 = vld [vmem:[%s302 + $0xc0] sm:%s295]
                %353 = vst [vmem:[%s303 + $0xc0] sm:%s295] %v352
                %v354 = vld [vmem:[%s302 + $0xc8] sm:%s295]
                %355 = vst [vmem:[%s303 + $0xc8] sm:%s295] %v354
                %v356 = vld [vmem:[%s302 + $0xd0] sm:%s295]
                %357 = vst [vmem:[%s303 + $0xd0] sm:%s295] %v356
                %v358 = vld [vmem:[%s302 + $0xd8] sm:%s295]
                %359 = vst [vmem:[%s303 + $0xd8] sm:%s295] %v358
                %v360 = vld [vmem:[%s302 + $0xe0] sm:%s295]
                %361 = vst [vmem:[%s303 + $0xe0] sm:%s295] %v360
                %v362 = vld [vmem:[%s302 + $0xe8] sm:%s295]
                %363 = vst [vmem:[%s303 + $0xe8] sm:%s295] %v362
                %v364 = vld [vmem:[%s302 + $0xf0] sm:%s295]
                %365 = vst [vmem:[%s303 + $0xf0] sm:%s295] %v364
                %v366 = vld [vmem:[%s302 + $0xf8] sm:%s295]
                %367 = vst [vmem:[%s303 + $0xf8] sm:%s295] %v366
                %v368 = vld [vmem:[%s302 + $0x100] sm:%s295]
                %369 = vst [vmem:[%s303 + $0x100] sm:%s295] %v368
                %v370 = vld [vmem:[%s302 + $0x108] sm:%s295]
                %371 = vst [vmem:[%s303 + $0x108] sm:%s295] %v370
                %v372 = vld [vmem:[%s302 + $0x110] sm:%s295]
                %373 = vst [vmem:[%s303 + $0x110] sm:%s295] %v372
                %v374 = vld [vmem:[%s302 + $0x118] sm:%s295]
                %375 = vst [vmem:[%s303 + $0x118] sm:%s295] %v374
                %v376 = vld [vmem:[%s302 + $0x120] sm:%s295]
                %377 = vst [vmem:[%s303 + $0x120] sm:%s295] %v376
                %v378 = vld [vmem:[%s302 + $0x128] sm:%s295]
                %379 = vst [vmem:[%s303 + $0x128] sm:%s295] %v378
                %v380 = vld [vmem:[%s302 + $0x130] sm:%s295]
                %381 = vst [vmem:[%s303 + $0x130] sm:%s295] %v380
                %v382 = vld [vmem:[%s302 + $0x138] sm:%s295]
                %383 = vst [vmem:[%s303 + $0x138] sm:%s295] %v382
                %v384 = vld [vmem:[%s302 + $0x140] sm:%s295]
                %385 = vst [vmem:[%s303 + $0x140] sm:%s295] %v384
                %v386 = vld [vmem:[%s302 + $0x148] sm:%s295]
                %387 = vst [vmem:[%s303 + $0x148] sm:%s295] %v386
                %v388 = vld [vmem:[%s302 + $0x150] sm:%s295]
                %389 = vst [vmem:[%s303 + $0x150] sm:%s295] %v388
                %v390 = vld [vmem:[%s302 + $0x158] sm:%s295]
                %391 = vst [vmem:[%s303 + $0x158] sm:%s295] %v390
                %v392 = vld [vmem:[%s302 + $0x160] sm:%s295]
                %393 = vst [vmem:[%s303 + $0x160] sm:%s295] %v392
                %v394 = vld [vmem:[%s302 + $0x168] sm:%s295]
                %395 = vst [vmem:[%s303 + $0x168] sm:%s295] %v394
                %v396 = vld [vmem:[%s302 + $0x170] sm:%s295]
                %397 = vst [vmem:[%s303 + $0x170] sm:%s295] %v396
                %v398 = vld [vmem:[%s302 + $0x178] sm:%s295]
                %399 = vst [vmem:[%s303 + $0x178] sm:%s295] %v398
                %v400 = vld [vmem:[%s302 + $0x180] sm:%s295]
                %401 = vst [vmem:[%s303 + $0x180] sm:%s295] %v400
                %v402 = vld [vmem:[%s302 + $0x188] sm:%s295]
                %403 = vst [vmem:[%s303 + $0x188] sm:%s295] %v402
                %v404 = vld [vmem:[%s302 + $0x190] sm:%s295]
                %405 = vst [vmem:[%s303 + $0x190] sm:%s295] %v404
                %v406 = vld [vmem:[%s302 + $0x198] sm:%s295]
                %407 = vst [vmem:[%s303 + $0x198] sm:%s295] %v406
                %v408 = vld [vmem:[%s302 + $0x1a0] sm:%s295]
                %409 = vst [vmem:[%s303 + $0x1a0] sm:%s295] %v408
                %v410 = vld [vmem:[%s302 + $0x1a8] sm:%s295]
                %411 = vst [vmem:[%s303 + $0x1a8] sm:%s295] %v410
                %v412 = vld [vmem:[%s302 + $0x1b0] sm:%s295]
                %413 = vst [vmem:[%s303 + $0x1b0] sm:%s295] %v412
                %v414 = vld [vmem:[%s302 + $0x1b8] sm:%s295]
                %415 = vst [vmem:[%s303 + $0x1b8] sm:%s295] %v414
                %v416 = vld [vmem:[%s302 + $0x1c0] sm:%s295]
                %417 = vst [vmem:[%s303 + $0x1c0] sm:%s295] %v416
                %v418 = vld [vmem:[%s302 + $0x1c8] sm:%s295]
                %419 = vst [vmem:[%s303 + $0x1c8] sm:%s295] %v418
                %v420 = vld [vmem:[%s302 + $0x1d0] sm:%s295]
                %421 = vst [vmem:[%s303 + $0x1d0] sm:%s295] %v420
                %v422 = vld [vmem:[%s302 + $0x1d8] sm:%s295]
                %423 = vst [vmem:[%s303 + $0x1d8] sm:%s295] %v422
                %v424 = vld [vmem:[%s302 + $0x1e0] sm:%s295]
                %425 = vst [vmem:[%s303 + $0x1e0] sm:%s295] %v424
                %v426 = vld [vmem:[%s302 + $0x1e8] sm:%s295]
                %427 = vst [vmem:[%s303 + $0x1e8] sm:%s295] %v426
                %v428 = vld [vmem:[%s302 + $0x1f0] sm:%s295]
                %429 = vst [vmem:[%s303 + $0x1f0] sm:%s295] %v428
                %v430 = vld [vmem:[%s302 + $0x1f8] sm:%s295]
                %431 = vst [vmem:[%s303 + $0x1f8] sm:%s295] %v430
                %v432 = vld [vmem:[%s302 + $0x800] sm:%s295]
                %433 = vst [vmem:[%s303 + $0x200] sm:%s295] %v432
                %v434 = vld [vmem:[%s302 + $0x808] sm:%s295]
                %435 = vst [vmem:[%s303 + $0x208] sm:%s295] %v434
                %v436 = vld [vmem:[%s302 + $0x810] sm:%s295]
                %437 = vst [vmem:[%s303 + $0x210] sm:%s295] %v436
                %v438 = vld [vmem:[%s302 + $0x818] sm:%s295]
                %439 = vst [vmem:[%s303 + $0x218] sm:%s295] %v438
                %v440 = vld [vmem:[%s302 + $0x820] sm:%s295]
                %441 = vst [vmem:[%s303 + $0x220] sm:%s295] %v440
                %v442 = vld [vmem:[%s302 + $0x828] sm:%s295]
                %443 = vst [vmem:[%s303 + $0x228] sm:%s295] %v442
                %v444 = vld [vmem:[%s302 + $0x830] sm:%s295]
                %445 = vst [vmem:[%s303 + $0x230] sm:%s295] %v444
                %v446 = vld [vmem:[%s302 + $0x838] sm:%s295]
                %447 = vst [vmem:[%s303 + $0x238] sm:%s295] %v446
                %v448 = vld [vmem:[%s302 + $0x840] sm:%s295]
                %449 = vst [vmem:[%s303 + $0x240] sm:%s295] %v448
                %v450 = vld [vmem:[%s302 + $0x848] sm:%s295]
                %451 = vst [vmem:[%s303 + $0x248] sm:%s295] %v450
                %v452 = vld [vmem:[%s302 + $0x850] sm:%s295]
                %453 = vst [vmem:[%s303 + $0x250] sm:%s295] %v452
                %v454 = vld [vmem:[%s302 + $0x858] sm:%s295]
                %455 = vst [vmem:[%s303 + $0x258] sm:%s295] %v454
                %v456 = vld [vmem:[%s302 + $0x860] sm:%s295]
                %457 = vst [vmem:[%s303 + $0x260] sm:%s295] %v456
                %v458 = vld [vmem:[%s302 + $0x868] sm:%s295]
                %459 = vst [vmem:[%s303 + $0x268] sm:%s295] %v458
                %v460 = vld [vmem:[%s302 + $0x870] sm:%s295]
                %461 = vst [vmem:[%s303 + $0x270] sm:%s295] %v460
                %v462 = vld [vmem:[%s302 + $0x878] sm:%s295]
                %463 = vst [vmem:[%s303 + $0x278] sm:%s295] %v462
                %v464 = vld [vmem:[%s302 + $0x880] sm:%s295]
                %465 = vst [vmem:[%s303 + $0x280] sm:%s295] %v464
                %v466 = vld [vmem:[%s302 + $0x888] sm:%s295]
                %467 = vst [vmem:[%s303 + $0x288] sm:%s295] %v466
                %v468 = vld [vmem:[%s302 + $0x890] sm:%s295]
                %469 = vst [vmem:[%s303 + $0x290] sm:%s295] %v468
                %v470 = vld [vmem:[%s302 + $0x898] sm:%s295]
                %471 = vst [vmem:[%s303 + $0x298] sm:%s295] %v470
                %v472 = vld [vmem:[%s302 + $0x8a0] sm:%s295]
                %473 = vst [vmem:[%s303 + $0x2a0] sm:%s295] %v472
                %v474 = vld [vmem:[%s302 + $0x8a8] sm:%s295]
                %475 = vst [vmem:[%s303 + $0x2a8] sm:%s295] %v474
                %v476 = vld [vmem:[%s302 + $0x8b0] sm:%s295]
                %477 = vst [vmem:[%s303 + $0x2b0] sm:%s295] %v476
                %v478 = vld [vmem:[%s302 + $0x8b8] sm:%s295]
                %479 = vst [vmem:[%s303 + $0x2b8] sm:%s295] %v478
                %v480 = vld [vmem:[%s302 + $0x8c0] sm:%s295]
                %481 = vst [vmem:[%s303 + $0x2c0] sm:%s295] %v480
                %v482 = vld [vmem:[%s302 + $0x8c8] sm:%s295]
                %483 = vst [vmem:[%s303 + $0x2c8] sm:%s295] %v482
                %v484 = vld [vmem:[%s302 + $0x8d0] sm:%s295]
                %485 = vst [vmem:[%s303 + $0x2d0] sm:%s295] %v484
                %v486 = vld [vmem:[%s302 + $0x8d8] sm:%s295]
                %487 = vst [vmem:[%s303 + $0x2d8] sm:%s295] %v486
                %v488 = vld [vmem:[%s302 + $0x8e0] sm:%s295]
                %489 = vst [vmem:[%s303 + $0x2e0] sm:%s295] %v488
                %v490 = vld [vmem:[%s302 + $0x8e8] sm:%s295]
                %491 = vst [vmem:[%s303 + $0x2e8] sm:%s295] %v490
                %v492 = vld [vmem:[%s302 + $0x8f0] sm:%s295]
                %493 = vst [vmem:[%s303 + $0x2f0] sm:%s295] %v492
                %v494 = vld [vmem:[%s302 + $0x8f8] sm:%s295]
                %495 = vst [vmem:[%s303 + $0x2f8] sm:%s295] %v494
                %v496 = vld [vmem:[%s302 + $0x900] sm:%s295]
                %497 = vst [vmem:[%s303 + $0x300] sm:%s295] %v496
                %v498 = vld [vmem:[%s302 + $0x908] sm:%s295]
                %499 = vst [vmem:[%s303 + $0x308] sm:%s295] %v498
                %v500 = vld [vmem:[%s302 + $0x910] sm:%s295]
                %501 = vst [vmem:[%s303 + $0x310] sm:%s295] %v500
                %v502 = vld [vmem:[%s302 + $0x918] sm:%s295]
                %503 = vst [vmem:[%s303 + $0x318] sm:%s295] %v502
                %v504 = vld [vmem:[%s302 + $0x920] sm:%s295]
                %505 = vst [vmem:[%s303 + $0x320] sm:%s295] %v504
                %v506 = vld [vmem:[%s302 + $0x928] sm:%s295]
                %507 = vst [vmem:[%s303 + $0x328] sm:%s295] %v506
                %v508 = vld [vmem:[%s302 + $0x930] sm:%s295]
                %509 = vst [vmem:[%s303 + $0x330] sm:%s295] %v508
                %v510 = vld [vmem:[%s302 + $0x938] sm:%s295]
                %511 = vst [vmem:[%s303 + $0x338] sm:%s295] %v510
                %v512 = vld [vmem:[%s302 + $0x940] sm:%s295]
                %513 = vst [vmem:[%s303 + $0x340] sm:%s295] %v512
                %v514 = vld [vmem:[%s302 + $0x948] sm:%s295]
                %515 = vst [vmem:[%s303 + $0x348] sm:%s295] %v514
                %v516 = vld [vmem:[%s302 + $0x950] sm:%s295]
                %517 = vst [vmem:[%s303 + $0x350] sm:%s295] %v516
                %v518 = vld [vmem:[%s302 + $0x958] sm:%s295]
                %519 = vst [vmem:[%s303 + $0x358] sm:%s295] %v518
                %v520 = vld [vmem:[%s302 + $0x960] sm:%s295]
                %521 = vst [vmem:[%s303 + $0x360] sm:%s295] %v520
                %v522 = vld [vmem:[%s302 + $0x968] sm:%s295]
                %523 = vst [vmem:[%s303 + $0x368] sm:%s295] %v522
                %v524 = vld [vmem:[%s302 + $0x970] sm:%s295]
                %525 = vst [vmem:[%s303 + $0x370] sm:%s295] %v524
                %v526 = vld [vmem:[%s302 + $0x978] sm:%s295]
                %527 = vst [vmem:[%s303 + $0x378] sm:%s295] %v526
                %v528 = vld [vmem:[%s302 + $0x980] sm:%s295]
                %529 = vst [vmem:[%s303 + $0x380] sm:%s295] %v528
                %v530 = vld [vmem:[%s302 + $0x988] sm:%s295]
                %531 = vst [vmem:[%s303 + $0x388] sm:%s295] %v530
                %v532 = vld [vmem:[%s302 + $0x990] sm:%s295]
                %533 = vst [vmem:[%s303 + $0x390] sm:%s295] %v532
                %v534 = vld [vmem:[%s302 + $0x998] sm:%s295]
                %535 = vst [vmem:[%s303 + $0x398] sm:%s295] %v534
                %v536 = vld [vmem:[%s302 + $0x9a0] sm:%s295]
                %537 = vst [vmem:[%s303 + $0x3a0] sm:%s295] %v536
                %v538 = vld [vmem:[%s302 + $0x9a8] sm:%s295]
                %539 = vst [vmem:[%s303 + $0x3a8] sm:%s295] %v538
                %v540 = vld [vmem:[%s302 + $0x9b0] sm:%s295]
                %541 = vst [vmem:[%s303 + $0x3b0] sm:%s295] %v540
                %v542 = vld [vmem:[%s302 + $0x9b8] sm:%s295]
                %543 = vst [vmem:[%s303 + $0x3b8] sm:%s295] %v542
                %v544 = vld [vmem:[%s302 + $0x9c0] sm:%s295]
                %545 = vst [vmem:[%s303 + $0x3c0] sm:%s295] %v544
                %v546 = vld [vmem:[%s302 + $0x9c8] sm:%s295]
                %547 = vst [vmem:[%s303 + $0x3c8] sm:%s295] %v546
                %v548 = vld [vmem:[%s302 + $0x9d0] sm:%s295]
                %549 = vst [vmem:[%s303 + $0x3d0] sm:%s295] %v548
                %v550 = vld [vmem:[%s302 + $0x9d8] sm:%s295]
                %551 = vst [vmem:[%s303 + $0x3d8] sm:%s295] %v550
                %v552 = vld [vmem:[%s302 + $0x9e0] sm:%s295]
                %553 = vst [vmem:[%s303 + $0x3e0] sm:%s295] %v552
                %v554 = vld [vmem:[%s302 + $0x9e8] sm:%s295]
                %555 = vst [vmem:[%s303 + $0x3e8] sm:%s295] %v554
                %v556 = vld [vmem:[%s302 + $0x9f0] sm:%s295]
                %557 = vst [vmem:[%s303 + $0x3f0] sm:%s295] %v556
                %v558 = vld [vmem:[%s302 + $0x9f8] sm:%s295]
                %559 = vst [vmem:[%s303 + $0x3f8] sm:%s295] %v558
              $region69: #{tpu_custom_call.1} parent=63 // loop_footer
                %s301 = sadd.s32 1, %s297
              $region70: #{tpu_custom_call.1} parent=63 // loop_footer_branch
                %296 = sbr.rel target = $region66
              $region71: #{tpu_custom_call.1} parent=63 // loop_exit
                _
            $region64: #{tpu_custom_call.1} parent=55 // pred_fallthru
              _
          $region56: #{tpu_custom_call.1} parent=51 // pred_fallthru
            _
          %828 = vnop
        $region52: #{tpu_custom_call.1} parent=47 // pred_fallthru
          _
      $region48: #{tpu_custom_call.1} parent=5 // pred_fallthru
        _
      %p829 = scmp.le.s32.totalorder 1, %s15
      %p830 = scmp.lt.s32.totalorder %s15, 5
      %p831 = pnand %p829, %p830
      %p832 = pneg %p831
      // Predicated region
      $region87: #{tpu_custom_call.1} parent=5 // pred_check
        _
      $region88: #{tpu_custom_call.1} parent=5 // pred_check_branch
        %834 = sbr.rel (%p831) target = $region90
      $region89: #{tpu_custom_call.1} parent=5 // pred_region
        %s835 = ssub.s32 %s15, 1
        %s836 = sand.u32 %s28, 1
        %s837 = sand.u32 %s28, 1
        %s838 = smul.addr %s837, 1024
        %s839 = scalar_lea.vmem [#allocation2], %s838
        // Predicated region
        $region91: #{tpu_custom_call.1} parent=89 // pred_check
          %p840 = pneg %p41
        $region92: #{tpu_custom_call.1} parent=89 // pred_check_branch
          %842 = sbr.rel (%p840) target = $region94
        $region93: #{tpu_custom_call.1} parent=89 // pred_region
          _
        $region94: #{tpu_custom_call.1} parent=89 // pred_fallthru
          _
        %s843 = sand.u32 %s28, 1
        %s844 = sand.u32 %s28, 1
        %s845 = smul.addr %s844, 1024
        %s846 = scalar_lea.vmem [#allocation2], %s845
        %p847 = pneg %p41
        %p848 = pneg %p38
        %p849 = pneg %p62
        %p850 = pneg %p59
        %p851 = pneg %p83
        %p852 = pneg %p80
        %p853 = pneg %p104
        %p854 = pneg %p101
        %p855 = pneg %p125
        %p856 = pneg %p122
        %p857 = pneg %p146
        %p858 = pneg %p143
        %p859 = pneg %p167
        %p860 = pneg %p164
        %p861 = pneg %p188
        %p862 = pneg %p185
        %p863 = pneg %p209
        %p864 = pneg %p206
        %p865 = pneg %p235
        %p866 = pneg %p232
        %s867 = smul.u32 64, %s20
        %p868 = scmp.lt.s32.totalorder %s867, 255
        %s869 = scalar_select %p868, %s867, 255
        %s870 = smul.addr %s869, 8
        %s871 = scalar_lea.vmem %s9, %s870
        %s872 = smul.u32 64, %s20
        %s873 = smul.u32 64, %s20
        %p874 = scmp.lt.s32.totalorder %s873, 255
        %s875 = scalar_select %p874, %s873, 255
        %s876 = smul.addr %s875, 8
        %s877 = scalar_lea.vmem %s9, %s876
        %s878 = smul.u32 64, %s20
        %v879 = vld [vmem:[%s839] sm:$0xff]
        %v880 = vld [vmem:[%s839 + $0x8] sm:$0xff]
        %v881 = vld [vmem:[%s839 + $0x10] sm:$0xff]
        %v882 = vld [vmem:[%s839 + $0x18] sm:$0xff]
        %v883 = vld [vmem:[%s839 + $0x20] sm:$0xff]
        %v884 = vld [vmem:[%s839 + $0x28] sm:$0xff]
        %v885 = vld [vmem:[%s839 + $0x30] sm:$0xff]
        %v886 = vld [vmem:[%s839 + $0x38] sm:$0xff]
        %v887 = vld [vmem:[%s839 + $0x40] sm:$0xff]
        %v888 = vld [vmem:[%s839 + $0x48] sm:$0xff]
        %v889 = vld [vmem:[%s839 + $0x50] sm:$0xff]
        %v890 = vld [vmem:[%s839 + $0x58] sm:$0xff]
        %v891 = vld [vmem:[%s839 + $0x60] sm:$0xff]
        %v892 = vld [vmem:[%s839 + $0x68] sm:$0xff]
        %v893 = vld [vmem:[%s839 + $0x70] sm:$0xff]
        %v894 = vld [vmem:[%s839 + $0x78] sm:$0xff]
        %v895 = vld [vmem:[%s839 + $0x80] sm:$0xff]
        %v896 = vld [vmem:[%s839 + $0x88] sm:$0xff]
        %v897 = vld [vmem:[%s839 + $0x90] sm:$0xff]
        %v898 = vld [vmem:[%s839 + $0x98] sm:$0xff]
        %v899 = vld [vmem:[%s839 + $0xa0] sm:$0xff]
        %v900 = vld [vmem:[%s839 + $0xa8] sm:$0xff]
        %v901 = vld [vmem:[%s839 + $0xb0] sm:$0xff]
        %v902 = vld [vmem:[%s839 + $0xb8] sm:$0xff]
        %v903 = vld [vmem:[%s839 + $0xc0] sm:$0xff]
        %v904 = vld [vmem:[%s839 + $0xc8] sm:$0xff]
        %v905 = vld [vmem:[%s839 + $0xd0] sm:$0xff]
        %v906 = vld [vmem:[%s839 + $0xd8] sm:$0xff]
        %v907 = vld [vmem:[%s839 + $0xe0] sm:$0xff]
        %v908 = vld [vmem:[%s839 + $0xe8] sm:$0xff]
        %v909 = vld [vmem:[%s839 + $0xf0] sm:$0xff]
        %v910 = vld [vmem:[%s839 + $0xf8] sm:$0xff]
        %v911 = vld [vmem:[%s839 + $0x100] sm:$0xff]
        %v912 = vld [vmem:[%s839 + $0x108] sm:$0xff]
        %v913 = vld [vmem:[%s839 + $0x110] sm:$0xff]
        %v914 = vld [vmem:[%s839 + $0x118] sm:$0xff]
        %v915 = vld [vmem:[%s839 + $0x120] sm:$0xff]
        %v916 = vld [vmem:[%s839 + $0x128] sm:$0xff]
        %v917 = vld [vmem:[%s839 + $0x130] sm:$0xff]
        %v918 = vld [vmem:[%s839 + $0x138] sm:$0xff]
        %v919 = vld [vmem:[%s839 + $0x140] sm:$0xff]
        %v920 = vld [vmem:[%s839 + $0x148] sm:$0xff]
        %v921 = vld [vmem:[%s839 + $0x150] sm:$0xff]
        %v922 = vld [vmem:[%s839 + $0x158] sm:$0xff]
        %v923 = vld [vmem:[%s839 + $0x160] sm:$0xff]
        %v924 = vld [vmem:[%s839 + $0x168] sm:$0xff]
        %v925 = vld [vmem:[%s839 + $0x170] sm:$0xff]
        %v926 = vld [vmem:[%s839 + $0x178] sm:$0xff]
        %v927 = vld [vmem:[%s839 + $0x180] sm:$0xff]
        %v928 = vld [vmem:[%s839 + $0x188] sm:$0xff]
        %v929 = vld [vmem:[%s839 + $0x190] sm:$0xff]
        %v930 = vld [vmem:[%s839 + $0x198] sm:$0xff]
        %v931 = vld [vmem:[%s839 + $0x1a0] sm:$0xff]
        %v932 = vld [vmem:[%s839 + $0x1a8] sm:$0xff]
        %v933 = vld [vmem:[%s839 + $0x1b0] sm:$0xff]
        %v934 = vld [vmem:[%s839 + $0x1b8] sm:$0xff]
        %v935 = vld [vmem:[%s839 + $0x1c0] sm:$0xff]
        %v936 = vld [vmem:[%s839 + $0x1c8] sm:$0xff]
        %v937 = vld [vmem:[%s839 + $0x1d0] sm:$0xff]
        %v938 = vld [vmem:[%s839 + $0x1d8] sm:$0xff]
        %v939 = vld [vmem:[%s839 + $0x1e0] sm:$0xff]
        %v940 = vld [vmem:[%s839 + $0x1e8] sm:$0xff]
        %v941 = vld [vmem:[%s839 + $0x1f0] sm:$0xff]
        %v942 = vld [vmem:[%s839 + $0x1f8] sm:$0xff]
        %v943 = vld [vmem:[%s839 + $0x200] sm:$0xff]
        %v944 = vld [vmem:[%s839 + $0x208] sm:$0xff]
        %v945 = vld [vmem:[%s839 + $0x210] sm:$0xff]
        %v946 = vld [vmem:[%s839 + $0x218] sm:$0xff]
        %v947 = vld [vmem:[%s839 + $0x220] sm:$0xff]
        %v948 = vld [vmem:[%s839 + $0x228] sm:$0xff]
        %v949 = vld [vmem:[%s839 + $0x230] sm:$0xff]
        %v950 = vld [vmem:[%s839 + $0x238] sm:$0xff]
        %v951 = vld [vmem:[%s839 + $0x240] sm:$0xff]
        %v952 = vld [vmem:[%s839 + $0x248] sm:$0xff]
        %v953 = vld [vmem:[%s839 + $0x250] sm:$0xff]
        %v954 = vld [vmem:[%s839 + $0x258] sm:$0xff]
        %v955 = vld [vmem:[%s839 + $0x260] sm:$0xff]
        %v956 = vld [vmem:[%s839 + $0x268] sm:$0xff]
        %v957 = vld [vmem:[%s839 + $0x270] sm:$0xff]
        %v958 = vld [vmem:[%s839 + $0x278] sm:$0xff]
        %v959 = vld [vmem:[%s839 + $0x280] sm:$0xff]
        %v960 = vld [vmem:[%s839 + $0x288] sm:$0xff]
        %v961 = vld [vmem:[%s839 + $0x290] sm:$0xff]
        %v962 = vld [vmem:[%s839 + $0x298] sm:$0xff]
        %v963 = vld [vmem:[%s839 + $0x2a0] sm:$0xff]
        %v964 = vld [vmem:[%s839 + $0x2a8] sm:$0xff]
        %v965 = vld [vmem:[%s839 + $0x2b0] sm:$0xff]
        %v966 = vld [vmem:[%s839 + $0x2b8] sm:$0xff]
        %v967 = vld [vmem:[%s839 + $0x2c0] sm:$0xff]
        %v968 = vld [vmem:[%s839 + $0x2c8] sm:$0xff]
        %v969 = vld [vmem:[%s839 + $0x2d0] sm:$0xff]
        %v970 = vld [vmem:[%s839 + $0x2d8] sm:$0xff]
        %v971 = vld [vmem:[%s839 + $0x2e0] sm:$0xff]
        %v972 = vld [vmem:[%s839 + $0x2e8] sm:$0xff]
        %v973 = vld [vmem:[%s839 + $0x2f0] sm:$0xff]
        %v974 = vld [vmem:[%s839 + $0x2f8] sm:$0xff]
        %v975 = vld [vmem:[%s839 + $0x300] sm:$0xff]
        %v976 = vld [vmem:[%s839 + $0x308] sm:$0xff]
        %v977 = vld [vmem:[%s839 + $0x310] sm:$0xff]
        %v978 = vld [vmem:[%s839 + $0x318] sm:$0xff]
        %v979 = vld [vmem:[%s839 + $0x320] sm:$0xff]
        %v980 = vld [vmem:[%s839 + $0x328] sm:$0xff]
        %v981 = vld [vmem:[%s839 + $0x330] sm:$0xff]
        %v982 = vld [vmem:[%s839 + $0x338] sm:$0xff]
        %v983 = vld [vmem:[%s839 + $0x340] sm:$0xff]
        %v984 = vld [vmem:[%s839 + $0x348] sm:$0xff]
        %v985 = vld [vmem:[%s839 + $0x350] sm:$0xff]
        %v986 = vld [vmem:[%s839 + $0x358] sm:$0xff]
        %v987 = vld [vmem:[%s839 + $0x360] sm:$0xff]
        %v988 = vld [vmem:[%s839 + $0x368] sm:$0xff]
        %v989 = vld [vmem:[%s839 + $0x370] sm:$0xff]
        %v990 = vld [vmem:[%s839 + $0x378] sm:$0xff]
        %v991 = vld [vmem:[%s839 + $0x380] sm:$0xff]
        %v992 = vld [vmem:[%s839 + $0x388] sm:$0xff]
        %v993 = vld [vmem:[%s839 + $0x390] sm:$0xff]
        %v994 = vld [vmem:[%s839 + $0x398] sm:$0xff]
        %v995 = vld [vmem:[%s839 + $0x3a0] sm:$0xff]
        %v996 = vld [vmem:[%s839 + $0x3a8] sm:$0xff]
        %v997 = vld [vmem:[%s839 + $0x3b0] sm:$0xff]
        %v998 = vld [vmem:[%s839 + $0x3b8] sm:$0xff]
        %v999 = vld [vmem:[%s839 + $0x3c0] sm:$0xff]
        %v1000 = vld [vmem:[%s839 + $0x3c8] sm:$0xff]
        %v1001 = vld [vmem:[%s839 + $0x3d0] sm:$0xff]
        %v1002 = vld [vmem:[%s839 + $0x3d8] sm:$0xff]
        %v1003 = vld [vmem:[%s839 + $0x3e0] sm:$0xff]
        %v1004 = vld [vmem:[%s839 + $0x3e8] sm:$0xff]
        %v1005 = vld [vmem:[%s839 + $0x3f0] sm:$0xff]
        %v1006 = vld [vmem:[%s839 + $0x3f8] sm:$0xff]
        %v1007 = vld [vmem:[%s1] sm:$0xf]
        %v1008 = vld [vmem:[%s1 + $0x4] sm:$0xf]
        %v1009 = vld [vmem:[%s2] sm:$0x3]
        %v1010 = vld [vmem:[%s2 + $0x2] sm:$0x3]
        %v1011 = vld [vmem:[%s3] sm:$0xff]
        %v1012 = vld [vmem:[%s3 + $0x8] sm:$0xff]
        %v1013 = vld [vmem:[%s3 + $0x10] sm:$0xff]
        %v1014 = vld [vmem:[%s3 + $0x18] sm:$0xff]
        %v1015 = vld [vmem:[%s3 + $0x20] sm:$0xff]
        %v1016 = vld [vmem:[%s3 + $0x28] sm:$0xff]
        %v1017 = vld [vmem:[%s3 + $0x30] sm:$0xff]
        %v1018 = vld [vmem:[%s3 + $0x38] sm:$0xff]
        %v1019 = vld [vmem:[%s3 + $0x40] sm:$0xff]
        %v1020 = vld [vmem:[%s3 + $0x48] sm:$0xff]
        %v1021 = vld [vmem:[%s3 + $0x50] sm:$0xff]
        %v1022 = vld [vmem:[%s3 + $0x58] sm:$0xff]
        %v1023 = vld [vmem:[%s3 + $0x60] sm:$0xff]
        %v1024 = vld [vmem:[%s3 + $0x68] sm:$0xff]
        %v1025 = vld [vmem:[%s3 + $0x70] sm:$0xff]
        %v1026 = vld [vmem:[%s3 + $0x78] sm:$0xff]
        %v1027 = vld [vmem:[%s3 + $0x80] sm:$0xff]
        %v1028 = vld [vmem:[%s3 + $0x88] sm:$0xff]
        %v1029 = vld [vmem:[%s3 + $0x90] sm:$0xff]
        %v1030 = vld [vmem:[%s3 + $0x98] sm:$0xff]
        %v1031 = vld [vmem:[%s3 + $0xa0] sm:$0xff]
        %v1032 = vld [vmem:[%s3 + $0xa8] sm:$0xff]
        %v1033 = vld [vmem:[%s3 + $0xb0] sm:$0xff]
        %v1034 = vld [vmem:[%s3 + $0xb8] sm:$0xff]
        %v1035 = vld [vmem:[%s3 + $0xc0] sm:$0xff]
        %v1036 = vld [vmem:[%s3 + $0xc8] sm:$0xff]
        %v1037 = vld [vmem:[%s3 + $0xd0] sm:$0xff]
        %v1038 = vld [vmem:[%s3 + $0xd8] sm:$0xff]
        %v1039 = vld [vmem:[%s3 + $0xe0] sm:$0xff]
        %v1040 = vld [vmem:[%s3 + $0xe8] sm:$0xff]
        %v1041 = vld [vmem:[%s3 + $0xf0] sm:$0xff]
        %v1042 = vld [vmem:[%s3 + $0xf8] sm:$0xff]
        %v1043 = vld [vmem:[%s3 + $0x100] sm:$0xff]
        %v1044 = vld [vmem:[%s3 + $0x108] sm:$0xff]
        %v1045 = vld [vmem:[%s3 + $0x110] sm:$0xff]
        %v1046 = vld [vmem:[%s3 + $0x118] sm:$0xff]
        %v1047 = vld [vmem:[%s3 + $0x120] sm:$0xff]
        %v1048 = vld [vmem:[%s3 + $0x128] sm:$0xff]
        %v1049 = vld [vmem:[%s3 + $0x130] sm:$0xff]
        %v1050 = vld [vmem:[%s3 + $0x138] sm:$0xff]
        %v1051 = vld [vmem:[%s3 + $0x140] sm:$0xff]
        %v1052 = vld [vmem:[%s3 + $0x148] sm:$0xff]
        %v1053 = vld [vmem:[%s3 + $0x150] sm:$0xff]
        %v1054 = vld [vmem:[%s3 + $0x158] sm:$0xff]
        %v1055 = vld [vmem:[%s3 + $0x160] sm:$0xff]
        %v1056 = vld [vmem:[%s3 + $0x168] sm:$0xff]
        %v1057 = vld [vmem:[%s3 + $0x170] sm:$0xff]
        %v1058 = vld [vmem:[%s3 + $0x178] sm:$0xff]
        %v1059 = vld [vmem:[%s3 + $0x180] sm:$0xff]
        %v1060 = vld [vmem:[%s3 + $0x188] sm:$0xff]
        %v1061 = vld [vmem:[%s3 + $0x190] sm:$0xff]
        %v1062 = vld [vmem:[%s3 + $0x198] sm:$0xff]
        %v1063 = vld [vmem:[%s3 + $0x1a0] sm:$0xff]
        %v1064 = vld [vmem:[%s3 + $0x1a8] sm:$0xff]
        %v1065 = vld [vmem:[%s3 + $0x1b0] sm:$0xff]
        %v1066 = vld [vmem:[%s3 + $0x1b8] sm:$0xff]
        %v1067 = vld [vmem:[%s3 + $0x1c0] sm:$0xff]
        %v1068 = vld [vmem:[%s3 + $0x1c8] sm:$0xff]
        %v1069 = vld [vmem:[%s3 + $0x1d0] sm:$0xff]
        %v1070 = vld [vmem:[%s3 + $0x1d8] sm:$0xff]
        %v1071 = vld [vmem:[%s3 + $0x1e0] sm:$0xff]
        %v1072 = vld [vmem:[%s3 + $0x1e8] sm:$0xff]
        %v1073 = vld [vmem:[%s3 + $0x1f0] sm:$0xff]
        %v1074 = vld [vmem:[%s3 + $0x1f8] sm:$0xff]
        %v1075 = vld [vmem:[%s3 + $0x200] sm:$0xff]
        %v1076 = vld [vmem:[%s3 + $0x208] sm:$0xff]
        %v1077 = vld [vmem:[%s3 + $0x210] sm:$0xff]
        %v1078 = vld [vmem:[%s3 + $0x218] sm:$0xff]
        %v1079 = vld [vmem:[%s3 + $0x220] sm:$0xff]
        %v1080 = vld [vmem:[%s3 + $0x228] sm:$0xff]
        %v1081 = vld [vmem:[%s3 + $0x230] sm:$0xff]
        %v1082 = vld [vmem:[%s3 + $0x238] sm:$0xff]
        %v1083 = vld [vmem:[%s3 + $0x240] sm:$0xff]
        %v1084 = vld [vmem:[%s3 + $0x248] sm:$0xff]
        %v1085 = vld [vmem:[%s3 + $0x250] sm:$0xff]
        %v1086 = vld [vmem:[%s3 + $0x258] sm:$0xff]
        %v1087 = vld [vmem:[%s3 + $0x260] sm:$0xff]
        %v1088 = vld [vmem:[%s3 + $0x268] sm:$0xff]
        %v1089 = vld [vmem:[%s3 + $0x270] sm:$0xff]
        %v1090 = vld [vmem:[%s3 + $0x278] sm:$0xff]
        %v1091 = vld [vmem:[%s3 + $0x280] sm:$0xff]
        %v1092 = vld [vmem:[%s3 + $0x288] sm:$0xff]
        %v1093 = vld [vmem:[%s3 + $0x290] sm:$0xff]
        %v1094 = vld [vmem:[%s3 + $0x298] sm:$0xff]
        %v1095 = vld [vmem:[%s3 + $0x2a0] sm:$0xff]
        %v1096 = vld [vmem:[%s3 + $0x2a8] sm:$0xff]
        %v1097 = vld [vmem:[%s3 + $0x2b0] sm:$0xff]
        %v1098 = vld [vmem:[%s3 + $0x2b8] sm:$0xff]
        %v1099 = vld [vmem:[%s3 + $0x2c0] sm:$0xff]
        %v1100 = vld [vmem:[%s3 + $0x2c8] sm:$0xff]
        %v1101 = vld [vmem:[%s3 + $0x2d0] sm:$0xff]
        %v1102 = vld [vmem:[%s3 + $0x2d8] sm:$0xff]
        %v1103 = vld [vmem:[%s3 + $0x2e0] sm:$0xff]
        %v1104 = vld [vmem:[%s3 + $0x2e8] sm:$0xff]
        %v1105 = vld [vmem:[%s3 + $0x2f0] sm:$0xff]
        %v1106 = vld [vmem:[%s3 + $0x2f8] sm:$0xff]
        %v1107 = vld [vmem:[%s3 + $0x300] sm:$0xff]
        %v1108 = vld [vmem:[%s3 + $0x308] sm:$0xff]
        %v1109 = vld [vmem:[%s3 + $0x310] sm:$0xff]
        %v1110 = vld [vmem:[%s3 + $0x318] sm:$0xff]
        %v1111 = vld [vmem:[%s3 + $0x320] sm:$0xff]
        %v1112 = vld [vmem:[%s3 + $0x328] sm:$0xff]
        %v1113 = vld [vmem:[%s3 + $0x330] sm:$0xff]
        %v1114 = vld [vmem:[%s3 + $0x338] sm:$0xff]
        %v1115 = vld [vmem:[%s3 + $0x340] sm:$0xff]
        %v1116 = vld [vmem:[%s3 + $0x348] sm:$0xff]
        %v1117 = vld [vmem:[%s3 + $0x350] sm:$0xff]
        %v1118 = vld [vmem:[%s3 + $0x358] sm:$0xff]
        %v1119 = vld [vmem:[%s3 + $0x360] sm:$0xff]
        %v1120 = vld [vmem:[%s3 + $0x368] sm:$0xff]
        %v1121 = vld [vmem:[%s3 + $0x370] sm:$0xff]
        %v1122 = vld [vmem:[%s3 + $0x378] sm:$0xff]
        %v1123 = vld [vmem:[%s3 + $0x380] sm:$0xff]
        %v1124 = vld [vmem:[%s3 + $0x388] sm:$0xff]
        %v1125 = vld [vmem:[%s3 + $0x390] sm:$0xff]
        %v1126 = vld [vmem:[%s3 + $0x398] sm:$0xff]
        %v1127 = vld [vmem:[%s3 + $0x3a0] sm:$0xff]
        %v1128 = vld [vmem:[%s3 + $0x3a8] sm:$0xff]
        %v1129 = vld [vmem:[%s3 + $0x3b0] sm:$0xff]
        %v1130 = vld [vmem:[%s3 + $0x3b8] sm:$0xff]
        %v1131 = vld [vmem:[%s3 + $0x3c0] sm:$0xff]
        %v1132 = vld [vmem:[%s3 + $0x3c8] sm:$0xff]
        %v1133 = vld [vmem:[%s3 + $0x3d0] sm:$0xff]
        %v1134 = vld [vmem:[%s3 + $0x3d8] sm:$0xff]
        %v1135 = vld [vmem:[%s3 + $0x3e0] sm:$0xff]
        %v1136 = vld [vmem:[%s3 + $0x3e8] sm:$0xff]
        %v1137 = vld [vmem:[%s3 + $0x3f0] sm:$0xff]
        %v1138 = vld [vmem:[%s3 + $0x3f8] sm:$0xff]
        %v1139 = vld [vmem:[%s4] sm:$0x3]
        %v1140 = vld [vmem:[%s4 + $0x2] sm:$0x3]
        %v1141 = vld [vmem:[%s5] sm:$0xff]
        %v1142 = vld [vmem:[%s5 + $0x8] sm:$0xff]
        %v1143 = vld [vmem:[%s5 + $0x10] sm:$0xff]
        %v1144 = vld [vmem:[%s5 + $0x18] sm:$0xff]
        %v1145 = vld [vmem:[%s5 + $0x20] sm:$0xff]
        %v1146 = vld [vmem:[%s5 + $0x28] sm:$0xff]
        %v1147 = vld [vmem:[%s5 + $0x30] sm:$0xff]
        %v1148 = vld [vmem:[%s5 + $0x38] sm:$0xff]
        %v1149 = vld [vmem:[%s5 + $0x40] sm:$0xff]
        %v1150 = vld [vmem:[%s5 + $0x48] sm:$0xff]
        %v1151 = vld [vmem:[%s5 + $0x50] sm:$0xff]
        %v1152 = vld [vmem:[%s5 + $0x58] sm:$0xff]
        %v1153 = vld [vmem:[%s5 + $0x60] sm:$0xff]
        %v1154 = vld [vmem:[%s5 + $0x68] sm:$0xff]
        %v1155 = vld [vmem:[%s5 + $0x70] sm:$0xff]
        %v1156 = vld [vmem:[%s5 + $0x78] sm:$0xff]
        %v1157 = vld [vmem:[%s5 + $0x80] sm:$0xff]
        %v1158 = vld [vmem:[%s5 + $0x88] sm:$0xff]
        %v1159 = vld [vmem:[%s5 + $0x90] sm:$0xff]
        %v1160 = vld [vmem:[%s5 + $0x98] sm:$0xff]
        %v1161 = vld [vmem:[%s5 + $0xa0] sm:$0xff]
        %v1162 = vld [vmem:[%s5 + $0xa8] sm:$0xff]
        %v1163 = vld [vmem:[%s5 + $0xb0] sm:$0xff]
        %v1164 = vld [vmem:[%s5 + $0xb8] sm:$0xff]
        %v1165 = vld [vmem:[%s5 + $0xc0] sm:$0xff]
        %v1166 = vld [vmem:[%s5 + $0xc8] sm:$0xff]
        %v1167 = vld [vmem:[%s5 + $0xd0] sm:$0xff]
        %v1168 = vld [vmem:[%s5 + $0xd8] sm:$0xff]
        %v1169 = vld [vmem:[%s5 + $0xe0] sm:$0xff]
        %v1170 = vld [vmem:[%s5 + $0xe8] sm:$0xff]
        %v1171 = vld [vmem:[%s5 + $0xf0] sm:$0xff]
        %v1172 = vld [vmem:[%s5 + $0xf8] sm:$0xff]
        %v1173 = vld [vmem:[%s5 + $0x100] sm:$0xff]
        %v1174 = vld [vmem:[%s5 + $0x108] sm:$0xff]
        %v1175 = vld [vmem:[%s5 + $0x110] sm:$0xff]
        %v1176 = vld [vmem:[%s5 + $0x118] sm:$0xff]
        %v1177 = vld [vmem:[%s5 + $0x120] sm:$0xff]
        %v1178 = vld [vmem:[%s5 + $0x128] sm:$0xff]
        %v1179 = vld [vmem:[%s5 + $0x130] sm:$0xff]
        %v1180 = vld [vmem:[%s5 + $0x138] sm:$0xff]
        %v1181 = vld [vmem:[%s5 + $0x140] sm:$0xff]
        %v1182 = vld [vmem:[%s5 + $0x148] sm:$0xff]
        %v1183 = vld [vmem:[%s5 + $0x150] sm:$0xff]
        %v1184 = vld [vmem:[%s5 + $0x158] sm:$0xff]
        %v1185 = vld [vmem:[%s5 + $0x160] sm:$0xff]
        %v1186 = vld [vmem:[%s5 + $0x168] sm:$0xff]
        %v1187 = vld [vmem:[%s5 + $0x170] sm:$0xff]
        %v1188 = vld [vmem:[%s5 + $0x178] sm:$0xff]
        %v1189 = vld [vmem:[%s5 + $0x180] sm:$0xff]
        %v1190 = vld [vmem:[%s5 + $0x188] sm:$0xff]
        %v1191 = vld [vmem:[%s5 + $0x190] sm:$0xff]
        %v1192 = vld [vmem:[%s5 + $0x198] sm:$0xff]
        %v1193 = vld [vmem:[%s5 + $0x1a0] sm:$0xff]
        %v1194 = vld [vmem:[%s5 + $0x1a8] sm:$0xff]
        %v1195 = vld [vmem:[%s5 + $0x1b0] sm:$0xff]
        %v1196 = vld [vmem:[%s5 + $0x1b8] sm:$0xff]
        %v1197 = vld [vmem:[%s5 + $0x1c0] sm:$0xff]
        %v1198 = vld [vmem:[%s5 + $0x1c8] sm:$0xff]
        %v1199 = vld [vmem:[%s5 + $0x1d0] sm:$0xff]
        %v1200 = vld [vmem:[%s5 + $0x1d8] sm:$0xff]
        %v1201 = vld [vmem:[%s5 + $0x1e0] sm:$0xff]
        %v1202 = vld [vmem:[%s5 + $0x1e8] sm:$0xff]
        %v1203 = vld [vmem:[%s5 + $0x1f0] sm:$0xff]
        %v1204 = vld [vmem:[%s5 + $0x1f8] sm:$0xff]
        %v1205 = vld [vmem:[%s5 + $0x200] sm:$0xff]
        %v1206 = vld [vmem:[%s5 + $0x208] sm:$0xff]
        %v1207 = vld [vmem:[%s5 + $0x210] sm:$0xff]
        %v1208 = vld [vmem:[%s5 + $0x218] sm:$0xff]
        %v1209 = vld [vmem:[%s5 + $0x220] sm:$0xff]
        %v1210 = vld [vmem:[%s5 + $0x228] sm:$0xff]
        %v1211 = vld [vmem:[%s5 + $0x230] sm:$0xff]
        %v1212 = vld [vmem:[%s5 + $0x238] sm:$0xff]
        %v1213 = vld [vmem:[%s5 + $0x240] sm:$0xff]
        %v1214 = vld [vmem:[%s5 + $0x248] sm:$0xff]
        %v1215 = vld [vmem:[%s5 + $0x250] sm:$0xff]
        %v1216 = vld [vmem:[%s5 + $0x258] sm:$0xff]
        %v1217 = vld [vmem:[%s5 + $0x260] sm:$0xff]
        %v1218 = vld [vmem:[%s5 + $0x268] sm:$0xff]
        %v1219 = vld [vmem:[%s5 + $0x270] sm:$0xff]
        %v1220 = vld [vmem:[%s5 + $0x278] sm:$0xff]
        %v1221 = vld [vmem:[%s5 + $0x280] sm:$0xff]
        %v1222 = vld [vmem:[%s5 + $0x288] sm:$0xff]
        %v1223 = vld [vmem:[%s5 + $0x290] sm:$0xff]
        %v1224 = vld [vmem:[%s5 + $0x298] sm:$0xff]
        %v1225 = vld [vmem:[%s5 + $0x2a0] sm:$0xff]
        %v1226 = vld [vmem:[%s5 + $0x2a8] sm:$0xff]
        %v1227 = vld [vmem:[%s5 + $0x2b0] sm:$0xff]
        %v1228 = vld [vmem:[%s5 + $0x2b8] sm:$0xff]
        %v1229 = vld [vmem:[%s5 + $0x2c0] sm:$0xff]
        %v1230 = vld [vmem:[%s5 + $0x2c8] sm:$0xff]
        %v1231 = vld [vmem:[%s5 + $0x2d0] sm:$0xff]
        %v1232 = vld [vmem:[%s5 + $0x2d8] sm:$0xff]
        %v1233 = vld [vmem:[%s5 + $0x2e0] sm:$0xff]
        %v1234 = vld [vmem:[%s5 + $0x2e8] sm:$0xff]
        %v1235 = vld [vmem:[%s5 + $0x2f0] sm:$0xff]
        %v1236 = vld [vmem:[%s5 + $0x2f8] sm:$0xff]
        %v1237 = vld [vmem:[%s5 + $0x300] sm:$0xff]
        %v1238 = vld [vmem:[%s5 + $0x308] sm:$0xff]
        %v1239 = vld [vmem:[%s5 + $0x310] sm:$0xff]
        %v1240 = vld [vmem:[%s5 + $0x318] sm:$0xff]
        %v1241 = vld [vmem:[%s5 + $0x320] sm:$0xff]
        %v1242 = vld [vmem:[%s5 + $0x328] sm:$0xff]
        %v1243 = vld [vmem:[%s5 + $0x330] sm:$0xff]
        %v1244 = vld [vmem:[%s5 + $0x338] sm:$0xff]
        %v1245 = vld [vmem:[%s5 + $0x340] sm:$0xff]
        %v1246 = vld [vmem:[%s5 + $0x348] sm:$0xff]
        %v1247 = vld [vmem:[%s5 + $0x350] sm:$0xff]
        %v1248 = vld [vmem:[%s5 + $0x358] sm:$0xff]
        %v1249 = vld [vmem:[%s5 + $0x360] sm:$0xff]
        %v1250 = vld [vmem:[%s5 + $0x368] sm:$0xff]
        %v1251 = vld [vmem:[%s5 + $0x370] sm:$0xff]
        %v1252 = vld [vmem:[%s5 + $0x378] sm:$0xff]
        %v1253 = vld [vmem:[%s5 + $0x380] sm:$0xff]
        %v1254 = vld [vmem:[%s5 + $0x388] sm:$0xff]
        %v1255 = vld [vmem:[%s5 + $0x390] sm:$0xff]
        %v1256 = vld [vmem:[%s5 + $0x398] sm:$0xff]
        %v1257 = vld [vmem:[%s5 + $0x3a0] sm:$0xff]
        %v1258 = vld [vmem:[%s5 + $0x3a8] sm:$0xff]
        %v1259 = vld [vmem:[%s5 + $0x3b0] sm:$0xff]
        %v1260 = vld [vmem:[%s5 + $0x3b8] sm:$0xff]
        %v1261 = vld [vmem:[%s5 + $0x3c0] sm:$0xff]
        %v1262 = vld [vmem:[%s5 + $0x3c8] sm:$0xff]
        %v1263 = vld [vmem:[%s5 + $0x3d0] sm:$0xff]
        %v1264 = vld [vmem:[%s5 + $0x3d8] sm:$0xff]
        %v1265 = vld [vmem:[%s5 + $0x3e0] sm:$0xff]
        %v1266 = vld [vmem:[%s5 + $0x3e8] sm:$0xff]
        %v1267 = vld [vmem:[%s5 + $0x3f0] sm:$0xff]
        %v1268 = vld [vmem:[%s5 + $0x3f8] sm:$0xff]
        %v1269 = vld [vmem:[%s6] sm:$0x3]
        %v1270 = vld [vmem:[%s6 + $0x2] sm:$0x3]
        %v1272 = vlaneseq
        %v1273 = vshrl.u32 %v1272, 7
        %v1274 = vsub.s32 0, %v1273
        %v1275 = vrot.slane %v1009, %v1274
        %v1276 = vlaneseq
        %v1277 = vshrl.u32 %v1276, 7
        %v1278 = vsub.s32 1, %v1277
        %v1279 = vrot.slane %v1009, %v1278
        %1283 = vset.pattern.permute.xlu0 0
        %1284 = vperm.xlu0 %1283, %v879
        %v1285 = vpop.permute.xlu0 %1284
        %1288 = vset.pattern.permute.xlu0 0
        %1289 = vperm.xlu0 %1288, %v880
        %v1290 = vpop.permute.xlu0 %1289
        %1293 = vset.pattern.permute.xlu0 0
        %1294 = vperm.xlu0 %1293, %v881
        %v1295 = vpop.permute.xlu0 %1294
        %1298 = vset.pattern.permute.xlu0 0
        %1299 = vperm.xlu0 %1298, %v882
        %v1300 = vpop.permute.xlu0 %1299
        %1303 = vset.pattern.permute.xlu0 0
        %1304 = vperm.xlu0 %1303, %v883
        %v1305 = vpop.permute.xlu0 %1304
        %1308 = vset.pattern.permute.xlu0 0
        %1309 = vperm.xlu0 %1308, %v884
        %v1310 = vpop.permute.xlu0 %1309
        %1313 = vset.pattern.permute.xlu0 0
        %1314 = vperm.xlu0 %1313, %v885
        %v1315 = vpop.permute.xlu0 %1314
        %1318 = vset.pattern.permute.xlu0 0
        %1319 = vperm.xlu0 %1318, %v886
        %v1320 = vpop.permute.xlu0 %1319
        %1323 = vset.pattern.permute.xlu0 0
        %1324 = vperm.xlu0 %1323, %v887
        %v1325 = vpop.permute.xlu0 %1324
        %1328 = vset.pattern.permute.xlu0 0
        %1329 = vperm.xlu0 %1328, %v888
        %v1330 = vpop.permute.xlu0 %1329
        %1333 = vset.pattern.permute.xlu0 0
        %1334 = vperm.xlu0 %1333, %v889
        %v1335 = vpop.permute.xlu0 %1334
        %1338 = vset.pattern.permute.xlu0 0
        %1339 = vperm.xlu0 %1338, %v890
        %v1340 = vpop.permute.xlu0 %1339
        %1343 = vset.pattern.permute.xlu0 0
        %1344 = vperm.xlu0 %1343, %v891
        %v1345 = vpop.permute.xlu0 %1344
        %1348 = vset.pattern.permute.xlu0 0
        %1349 = vperm.xlu0 %1348, %v892
        %v1350 = vpop.permute.xlu0 %1349
        %1353 = vset.pattern.permute.xlu0 0
        %1354 = vperm.xlu0 %1353, %v893
        %v1355 = vpop.permute.xlu0 %1354
        %1358 = vset.pattern.permute.xlu0 0
        %1359 = vperm.xlu0 %1358, %v894
        %v1360 = vpop.permute.xlu0 %1359
        %1363 = vset.pattern.permute.xlu0 0
        %1364 = vperm.xlu0 %1363, %v895
        %v1365 = vpop.permute.xlu0 %1364
        %1368 = vset.pattern.permute.xlu0 0
        %1369 = vperm.xlu0 %1368, %v896
        %v1370 = vpop.permute.xlu0 %1369
        %1373 = vset.pattern.permute.xlu0 0
        %1374 = vperm.xlu0 %1373, %v897
        %v1375 = vpop.permute.xlu0 %1374
        %1378 = vset.pattern.permute.xlu0 0
        %1379 = vperm.xlu0 %1378, %v898
        %v1380 = vpop.permute.xlu0 %1379
        %1383 = vset.pattern.permute.xlu0 0
        %1384 = vperm.xlu0 %1383, %v899
        %v1385 = vpop.permute.xlu0 %1384
        %1388 = vset.pattern.permute.xlu0 0
        %1389 = vperm.xlu0 %1388, %v900
        %v1390 = vpop.permute.xlu0 %1389
        %1393 = vset.pattern.permute.xlu0 0
        %1394 = vperm.xlu0 %1393, %v901
        %v1395 = vpop.permute.xlu0 %1394
        %1398 = vset.pattern.permute.xlu0 0
        %1399 = vperm.xlu0 %1398, %v902
        %v1400 = vpop.permute.xlu0 %1399
        %1403 = vset.pattern.permute.xlu0 0
        %1404 = vperm.xlu0 %1403, %v903
        %v1405 = vpop.permute.xlu0 %1404
        %1408 = vset.pattern.permute.xlu0 0
        %1409 = vperm.xlu0 %1408, %v904
        %v1410 = vpop.permute.xlu0 %1409
        %1413 = vset.pattern.permute.xlu0 0
        %1414 = vperm.xlu0 %1413, %v905
        %v1415 = vpop.permute.xlu0 %1414
        %1418 = vset.pattern.permute.xlu0 0
        %1419 = vperm.xlu0 %1418, %v906
        %v1420 = vpop.permute.xlu0 %1419
        %1423 = vset.pattern.permute.xlu0 0
        %1424 = vperm.xlu0 %1423, %v907
        %v1425 = vpop.permute.xlu0 %1424
        %1428 = vset.pattern.permute.xlu0 0
        %1429 = vperm.xlu0 %1428, %v908
        %v1430 = vpop.permute.xlu0 %1429
        %1433 = vset.pattern.permute.xlu0 0
        %1434 = vperm.xlu0 %1433, %v909
        %v1435 = vpop.permute.xlu0 %1434
        %1438 = vset.pattern.permute.xlu0 0
        %1439 = vperm.xlu0 %1438, %v910
        %v1440 = vpop.permute.xlu0 %1439
        %1443 = vset.pattern.permute.xlu0 0
        %1444 = vperm.xlu0 %1443, %v911
        %v1445 = vpop.permute.xlu0 %1444
        %1448 = vset.pattern.permute.xlu0 0
        %1449 = vperm.xlu0 %1448, %v912
        %v1450 = vpop.permute.xlu0 %1449
        %1453 = vset.pattern.permute.xlu0 0
        %1454 = vperm.xlu0 %1453, %v913
        %v1455 = vpop.permute.xlu0 %1454
        %1458 = vset.pattern.permute.xlu0 0
        %1459 = vperm.xlu0 %1458, %v914
        %v1460 = vpop.permute.xlu0 %1459
        %1463 = vset.pattern.permute.xlu0 0
        %1464 = vperm.xlu0 %1463, %v915
        %v1465 = vpop.permute.xlu0 %1464
        %1468 = vset.pattern.permute.xlu0 0
        %1469 = vperm.xlu0 %1468, %v916
        %v1470 = vpop.permute.xlu0 %1469
        %1473 = vset.pattern.permute.xlu0 0
        %1474 = vperm.xlu0 %1473, %v917
        %v1475 = vpop.permute.xlu0 %1474
        %1478 = vset.pattern.permute.xlu0 0
        %1479 = vperm.xlu0 %1478, %v918
        %v1480 = vpop.permute.xlu0 %1479
        %1483 = vset.pattern.permute.xlu0 0
        %1484 = vperm.xlu0 %1483, %v919
        %v1485 = vpop.permute.xlu0 %1484
        %1488 = vset.pattern.permute.xlu0 0
        %1489 = vperm.xlu0 %1488, %v920
        %v1490 = vpop.permute.xlu0 %1489
        %1493 = vset.pattern.permute.xlu0 0
        %1494 = vperm.xlu0 %1493, %v921
        %v1495 = vpop.permute.xlu0 %1494
        %1498 = vset.pattern.permute.xlu0 0
        %1499 = vperm.xlu0 %1498, %v922
        %v1500 = vpop.permute.xlu0 %1499
        %1503 = vset.pattern.permute.xlu0 0
        %1504 = vperm.xlu0 %1503, %v923
        %v1505 = vpop.permute.xlu0 %1504
        %1508 = vset.pattern.permute.xlu0 0
        %1509 = vperm.xlu0 %1508, %v924
        %v1510 = vpop.permute.xlu0 %1509
        %1513 = vset.pattern.permute.xlu0 0
        %1514 = vperm.xlu0 %1513, %v925
        %v1515 = vpop.permute.xlu0 %1514
        %1518 = vset.pattern.permute.xlu0 0
        %1519 = vperm.xlu0 %1518, %v926
        %v1520 = vpop.permute.xlu0 %1519
        %1523 = vset.pattern.permute.xlu0 0
        %1524 = vperm.xlu0 %1523, %v927
        %v1525 = vpop.permute.xlu0 %1524
        %1528 = vset.pattern.permute.xlu0 0
        %1529 = vperm.xlu0 %1528, %v928
        %v1530 = vpop.permute.xlu0 %1529
        %1533 = vset.pattern.permute.xlu0 0
        %1534 = vperm.xlu0 %1533, %v929
        %v1535 = vpop.permute.xlu0 %1534
        %1538 = vset.pattern.permute.xlu0 0
        %1539 = vperm.xlu0 %1538, %v930
        %v1540 = vpop.permute.xlu0 %1539
        %1543 = vset.pattern.permute.xlu0 0
        %1544 = vperm.xlu0 %1543, %v931
        %v1545 = vpop.permute.xlu0 %1544
        %1548 = vset.pattern.permute.xlu0 0
        %1549 = vperm.xlu0 %1548, %v932
        %v1550 = vpop.permute.xlu0 %1549
        %1553 = vset.pattern.permute.xlu0 0
        %1554 = vperm.xlu0 %1553, %v933
        %v1555 = vpop.permute.xlu0 %1554
        %1558 = vset.pattern.permute.xlu0 0
        %1559 = vperm.xlu0 %1558, %v934
        %v1560 = vpop.permute.xlu0 %1559
        %1563 = vset.pattern.permute.xlu0 0
        %1564 = vperm.xlu0 %1563, %v935
        %v1565 = vpop.permute.xlu0 %1564
        %1568 = vset.pattern.permute.xlu0 0
        %1569 = vperm.xlu0 %1568, %v936
        %v1570 = vpop.permute.xlu0 %1569
        %1573 = vset.pattern.permute.xlu0 0
        %1574 = vperm.xlu0 %1573, %v937
        %v1575 = vpop.permute.xlu0 %1574
        %1578 = vset.pattern.permute.xlu0 0
        %1579 = vperm.xlu0 %1578, %v938
        %v1580 = vpop.permute.xlu0 %1579
        %1583 = vset.pattern.permute.xlu0 0
        %1584 = vperm.xlu0 %1583, %v939
        %v1585 = vpop.permute.xlu0 %1584
        %1588 = vset.pattern.permute.xlu0 0
        %1589 = vperm.xlu0 %1588, %v940
        %v1590 = vpop.permute.xlu0 %1589
        %1593 = vset.pattern.permute.xlu0 0
        %1594 = vperm.xlu0 %1593, %v941
        %v1595 = vpop.permute.xlu0 %1594
        %1598 = vset.pattern.permute.xlu0 0
        %1599 = vperm.xlu0 %1598, %v942
        %v1600 = vpop.permute.xlu0 %1599
        %v1603 = vlaneseq
        %v1604 = vshrl.u32 %v1603, 7
        %v1605 = vsub.s32 0, %v1604
        %v1606 = vrot.slane %v1007, %v1605
        %v1607 = vlaneseq
        %v1608 = vshrl.u32 %v1607, 7
        %v1609 = vsub.s32 2, %v1608
        %v1610 = vrot.slane %v1007, %v1609
        %v1613 = vlaneseq
        %v1614 = vshrl.u32 %v1613, 7
        %v1615 = vsub.s32 0, %v1614
        %v1616 = vrot.slane %v1606, %v1615
        %v1617 = vlaneseq
        %v1618 = vshrl.u32 %v1617, 7
        %v1619 = vsub.s32 0, %v1618
        %v1620 = vrot.slane %v1610, %v1619
        %v1621 = vmul.f32 %v1285, %v1616
        %v1622 = vmul.f32 %v1285, %v1620
        %v1623 = vmul.f32 %v1290, %v1616
        %v1624 = vmul.f32 %v1290, %v1620
        %v1625 = vmul.f32 %v1295, %v1616
        %v1626 = vmul.f32 %v1295, %v1620
        %v1627 = vmul.f32 %v1300, %v1616
        %v1628 = vmul.f32 %v1300, %v1620
        %v1629 = vmul.f32 %v1305, %v1616
        %v1630 = vmul.f32 %v1305, %v1620
        %v1631 = vmul.f32 %v1310, %v1616
        %v1632 = vmul.f32 %v1310, %v1620
        %v1633 = vmul.f32 %v1315, %v1616
        %v1634 = vmul.f32 %v1315, %v1620
        %v1635 = vmul.f32 %v1320, %v1616
        %v1636 = vmul.f32 %v1320, %v1620
        %v1637 = vmul.f32 %v1325, %v1616
        %v1638 = vmul.f32 %v1325, %v1620
        %v1639 = vmul.f32 %v1330, %v1616
        %v1640 = vmul.f32 %v1330, %v1620
        %v1641 = vmul.f32 %v1335, %v1616
        %v1642 = vmul.f32 %v1335, %v1620
        %v1643 = vmul.f32 %v1340, %v1616
        %v1644 = vmul.f32 %v1340, %v1620
        %v1645 = vmul.f32 %v1345, %v1616
        %v1646 = vmul.f32 %v1345, %v1620
        %v1647 = vmul.f32 %v1350, %v1616
        %v1648 = vmul.f32 %v1350, %v1620
        %v1649 = vmul.f32 %v1355, %v1616
        %v1650 = vmul.f32 %v1355, %v1620
        %v1651 = vmul.f32 %v1360, %v1616
        %v1652 = vmul.f32 %v1360, %v1620
        %v1653 = vmul.f32 %v1365, %v1616
        %v1654 = vmul.f32 %v1365, %v1620
        %v1655 = vmul.f32 %v1370, %v1616
        %v1656 = vmul.f32 %v1370, %v1620
        %v1657 = vmul.f32 %v1375, %v1616
        %v1658 = vmul.f32 %v1375, %v1620
        %v1659 = vmul.f32 %v1380, %v1616
        %v1660 = vmul.f32 %v1380, %v1620
        %v1661 = vmul.f32 %v1385, %v1616
        %v1662 = vmul.f32 %v1385, %v1620
        %v1663 = vmul.f32 %v1390, %v1616
        %v1664 = vmul.f32 %v1390, %v1620
        %v1665 = vmul.f32 %v1395, %v1616
        %v1666 = vmul.f32 %v1395, %v1620
        %v1667 = vmul.f32 %v1400, %v1616
        %v1668 = vmul.f32 %v1400, %v1620
        %v1669 = vmul.f32 %v1405, %v1616
        %v1670 = vmul.f32 %v1405, %v1620
        %v1671 = vmul.f32 %v1410, %v1616
        %v1672 = vmul.f32 %v1410, %v1620
        %v1673 = vmul.f32 %v1415, %v1616
        %v1674 = vmul.f32 %v1415, %v1620
        %v1675 = vmul.f32 %v1420, %v1616
        %v1676 = vmul.f32 %v1420, %v1620
        %v1677 = vmul.f32 %v1425, %v1616
        %v1678 = vmul.f32 %v1425, %v1620
        %v1679 = vmul.f32 %v1430, %v1616
        %v1680 = vmul.f32 %v1430, %v1620
        %v1681 = vmul.f32 %v1435, %v1616
        %v1682 = vmul.f32 %v1435, %v1620
        %v1683 = vmul.f32 %v1440, %v1616
        %v1684 = vmul.f32 %v1440, %v1620
        %v1685 = vmul.f32 %v1445, %v1616
        %v1686 = vmul.f32 %v1445, %v1620
        %v1687 = vmul.f32 %v1450, %v1616
        %v1688 = vmul.f32 %v1450, %v1620
        %v1689 = vmul.f32 %v1455, %v1616
        %v1690 = vmul.f32 %v1455, %v1620
        %v1691 = vmul.f32 %v1460, %v1616
        %v1692 = vmul.f32 %v1460, %v1620
        %v1693 = vmul.f32 %v1465, %v1616
        %v1694 = vmul.f32 %v1465, %v1620
        %v1695 = vmul.f32 %v1470, %v1616
        %v1696 = vmul.f32 %v1470, %v1620
        %v1697 = vmul.f32 %v1475, %v1616
        %v1698 = vmul.f32 %v1475, %v1620
        %v1699 = vmul.f32 %v1480, %v1616
        %v1700 = vmul.f32 %v1480, %v1620
        %v1701 = vmul.f32 %v1485, %v1616
        %v1702 = vmul.f32 %v1485, %v1620
        %v1703 = vmul.f32 %v1490, %v1616
        %v1704 = vmul.f32 %v1490, %v1620
        %v1705 = vmul.f32 %v1495, %v1616
        %v1706 = vmul.f32 %v1495, %v1620
        %v1707 = vmul.f32 %v1500, %v1616
        %v1708 = vmul.f32 %v1500, %v1620
        %v1709 = vmul.f32 %v1505, %v1616
        %v1710 = vmul.f32 %v1505, %v1620
        %v1711 = vmul.f32 %v1510, %v1616
        %v1712 = vmul.f32 %v1510, %v1620
        %v1713 = vmul.f32 %v1515, %v1616
        %v1714 = vmul.f32 %v1515, %v1620
        %v1715 = vmul.f32 %v1520, %v1616
        %v1716 = vmul.f32 %v1520, %v1620
        %v1717 = vmul.f32 %v1525, %v1616
        %v1718 = vmul.f32 %v1525, %v1620
        %v1719 = vmul.f32 %v1530, %v1616
        %v1720 = vmul.f32 %v1530, %v1620
        %v1721 = vmul.f32 %v1535, %v1616
        %v1722 = vmul.f32 %v1535, %v1620
        %v1723 = vmul.f32 %v1540, %v1616
        %v1724 = vmul.f32 %v1540, %v1620
        %v1725 = vmul.f32 %v1545, %v1616
        %v1726 = vmul.f32 %v1545, %v1620
        %v1727 = vmul.f32 %v1550, %v1616
        %v1728 = vmul.f32 %v1550, %v1620
        %v1729 = vmul.f32 %v1555, %v1616
        %v1730 = vmul.f32 %v1555, %v1620
        %v1731 = vmul.f32 %v1560, %v1616
        %v1732 = vmul.f32 %v1560, %v1620
        %v1733 = vmul.f32 %v1565, %v1616
        %v1734 = vmul.f32 %v1565, %v1620
        %v1735 = vmul.f32 %v1570, %v1616
        %v1736 = vmul.f32 %v1570, %v1620
        %v1737 = vmul.f32 %v1575, %v1616
        %v1738 = vmul.f32 %v1575, %v1620
        %v1739 = vmul.f32 %v1580, %v1616
        %v1740 = vmul.f32 %v1580, %v1620
        %v1741 = vmul.f32 %v1585, %v1616
        %v1742 = vmul.f32 %v1585, %v1620
        %v1743 = vmul.f32 %v1590, %v1616
        %v1744 = vmul.f32 %v1590, %v1620
        %v1745 = vmul.f32 %v1595, %v1616
        %v1746 = vmul.f32 %v1595, %v1620
        %v1747 = vmul.f32 %v1600, %v1616
        %v1748 = vmul.f32 %v1600, %v1620
        %v1749 = vadd.f32 %v1275, %v1621
        %v1750 = vadd.f32 %v1279, %v1622
        %v1751 = vadd.f32 %v1275, %v1623
        %v1752 = vadd.f32 %v1279, %v1624
        %v1753 = vadd.f32 %v1275, %v1625
        %v1754 = vadd.f32 %v1279, %v1626
        %v1755 = vadd.f32 %v1275, %v1627
        %v1756 = vadd.f32 %v1279, %v1628
        %v1757 = vadd.f32 %v1275, %v1629
        %v1758 = vadd.f32 %v1279, %v1630
        %v1759 = vadd.f32 %v1275, %v1631
        %v1760 = vadd.f32 %v1279, %v1632
        %v1761 = vadd.f32 %v1275, %v1633
        %v1762 = vadd.f32 %v1279, %v1634
        %v1763 = vadd.f32 %v1275, %v1635
        %v1764 = vadd.f32 %v1279, %v1636
        %v1765 = vadd.f32 %v1275, %v1637
        %v1766 = vadd.f32 %v1279, %v1638
        %v1767 = vadd.f32 %v1275, %v1639
        %v1768 = vadd.f32 %v1279, %v1640
        %v1769 = vadd.f32 %v1275, %v1641
        %v1770 = vadd.f32 %v1279, %v1642
        %v1771 = vadd.f32 %v1275, %v1643
        %v1772 = vadd.f32 %v1279, %v1644
        %v1773 = vadd.f32 %v1275, %v1645
        %v1774 = vadd.f32 %v1279, %v1646
        %v1775 = vadd.f32 %v1275, %v1647
        %v1776 = vadd.f32 %v1279, %v1648
        %v1777 = vadd.f32 %v1275, %v1649
        %v1778 = vadd.f32 %v1279, %v1650
        %v1779 = vadd.f32 %v1275, %v1651
        %v1780 = vadd.f32 %v1279, %v1652
        %v1781 = vadd.f32 %v1275, %v1653
        %v1782 = vadd.f32 %v1279, %v1654
        %v1783 = vadd.f32 %v1275, %v1655
        %v1784 = vadd.f32 %v1279, %v1656
        %v1785 = vadd.f32 %v1275, %v1657
        %v1786 = vadd.f32 %v1279, %v1658
        %v1787 = vadd.f32 %v1275, %v1659
        %v1788 = vadd.f32 %v1279, %v1660
        %v1789 = vadd.f32 %v1275, %v1661
        %v1790 = vadd.f32 %v1279, %v1662
        %v1791 = vadd.f32 %v1275, %v1663
        %v1792 = vadd.f32 %v1279, %v1664
        %v1793 = vadd.f32 %v1275, %v1665
        %v1794 = vadd.f32 %v1279, %v1666
        %v1795 = vadd.f32 %v1275, %v1667
        %v1796 = vadd.f32 %v1279, %v1668
        %v1797 = vadd.f32 %v1275, %v1669
        %v1798 = vadd.f32 %v1279, %v1670
        %v1799 = vadd.f32 %v1275, %v1671
        %v1800 = vadd.f32 %v1279, %v1672
        %v1801 = vadd.f32 %v1275, %v1673
        %v1802 = vadd.f32 %v1279, %v1674
        %v1803 = vadd.f32 %v1275, %v1675
        %v1804 = vadd.f32 %v1279, %v1676
        %v1805 = vadd.f32 %v1275, %v1677
        %v1806 = vadd.f32 %v1279, %v1678
        %v1807 = vadd.f32 %v1275, %v1679
        %v1808 = vadd.f32 %v1279, %v1680
        %v1809 = vadd.f32 %v1275, %v1681
        %v1810 = vadd.f32 %v1279, %v1682
        %v1811 = vadd.f32 %v1275, %v1683
        %v1812 = vadd.f32 %v1279, %v1684
        %v1813 = vadd.f32 %v1275, %v1685
        %v1814 = vadd.f32 %v1279, %v1686
        %v1815 = vadd.f32 %v1275, %v1687
        %v1816 = vadd.f32 %v1279, %v1688
        %v1817 = vadd.f32 %v1275, %v1689
        %v1818 = vadd.f32 %v1279, %v1690
        %v1819 = vadd.f32 %v1275, %v1691
        %v1820 = vadd.f32 %v1279, %v1692
        %v1821 = vadd.f32 %v1275, %v1693
        %v1822 = vadd.f32 %v1279, %v1694
        %v1823 = vadd.f32 %v1275, %v1695
        %v1824 = vadd.f32 %v1279, %v1696
        %v1825 = vadd.f32 %v1275, %v1697
        %v1826 = vadd.f32 %v1279, %v1698
        %v1827 = vadd.f32 %v1275, %v1699
        %v1828 = vadd.f32 %v1279, %v1700
        %v1829 = vadd.f32 %v1275, %v1701
        %v1830 = vadd.f32 %v1279, %v1702
        %v1831 = vadd.f32 %v1275, %v1703
        %v1832 = vadd.f32 %v1279, %v1704
        %v1833 = vadd.f32 %v1275, %v1705
        %v1834 = vadd.f32 %v1279, %v1706
        %v1835 = vadd.f32 %v1275, %v1707
        %v1836 = vadd.f32 %v1279, %v1708
        %v1837 = vadd.f32 %v1275, %v1709
        %v1838 = vadd.f32 %v1279, %v1710
        %v1839 = vadd.f32 %v1275, %v1711
        %v1840 = vadd.f32 %v1279, %v1712
        %v1841 = vadd.f32 %v1275, %v1713
        %v1842 = vadd.f32 %v1279, %v1714
        %v1843 = vadd.f32 %v1275, %v1715
        %v1844 = vadd.f32 %v1279, %v1716
        %v1845 = vadd.f32 %v1275, %v1717
        %v1846 = vadd.f32 %v1279, %v1718
        %v1847 = vadd.f32 %v1275, %v1719
        %v1848 = vadd.f32 %v1279, %v1720
        %v1849 = vadd.f32 %v1275, %v1721
        %v1850 = vadd.f32 %v1279, %v1722
        %v1851 = vadd.f32 %v1275, %v1723
        %v1852 = vadd.f32 %v1279, %v1724
        %v1853 = vadd.f32 %v1275, %v1725
        %v1854 = vadd.f32 %v1279, %v1726
        %v1855 = vadd.f32 %v1275, %v1727
        %v1856 = vadd.f32 %v1279, %v1728
        %v1857 = vadd.f32 %v1275, %v1729
        %v1858 = vadd.f32 %v1279, %v1730
        %v1859 = vadd.f32 %v1275, %v1731
        %v1860 = vadd.f32 %v1279, %v1732
        %v1861 = vadd.f32 %v1275, %v1733
        %v1862 = vadd.f32 %v1279, %v1734
        %v1863 = vadd.f32 %v1275, %v1735
        %v1864 = vadd.f32 %v1279, %v1736
        %v1865 = vadd.f32 %v1275, %v1737
        %v1866 = vadd.f32 %v1279, %v1738
        %v1867 = vadd.f32 %v1275, %v1739
        %v1868 = vadd.f32 %v1279, %v1740
        %v1869 = vadd.f32 %v1275, %v1741
        %v1870 = vadd.f32 %v1279, %v1742
        %v1871 = vadd.f32 %v1275, %v1743
        %v1872 = vadd.f32 %v1279, %v1744
        %v1873 = vadd.f32 %v1275, %v1745
        %v1874 = vadd.f32 %v1279, %v1746
        %v1875 = vadd.f32 %v1275, %v1747
        %v1876 = vadd.f32 %v1279, %v1748
        %1877 = vset.pattern.permute.xlu0 1
        %1878 = vperm.xlu0 %1877, %v879
        %v1879 = vpop.permute.xlu0 %1878
        %1881 = vset.pattern.permute.xlu0 1
        %1882 = vperm.xlu0 %1881, %v880
        %v1883 = vpop.permute.xlu0 %1882
        %1885 = vset.pattern.permute.xlu0 1
        %1886 = vperm.xlu0 %1885, %v881
        %v1887 = vpop.permute.xlu0 %1886
        %1889 = vset.pattern.permute.xlu0 1
        %1890 = vperm.xlu0 %1889, %v882
        %v1891 = vpop.permute.xlu0 %1890
        %1893 = vset.pattern.permute.xlu0 1
        %1894 = vperm.xlu0 %1893, %v883
        %v1895 = vpop.permute.xlu0 %1894
        %1897 = vset.pattern.permute.xlu0 1
        %1898 = vperm.xlu0 %1897, %v884
        %v1899 = vpop.permute.xlu0 %1898
        %1901 = vset.pattern.permute.xlu0 1
        %1902 = vperm.xlu0 %1901, %v885
        %v1903 = vpop.permute.xlu0 %1902
        %1905 = vset.pattern.permute.xlu0 1
        %1906 = vperm.xlu0 %1905, %v886
        %v1907 = vpop.permute.xlu0 %1906
        %1909 = vset.pattern.permute.xlu0 1
        %1910 = vperm.xlu0 %1909, %v887
        %v1911 = vpop.permute.xlu0 %1910
        %1913 = vset.pattern.permute.xlu0 1
        %1914 = vperm.xlu0 %1913, %v888
        %v1915 = vpop.permute.xlu0 %1914
        %1917 = vset.pattern.permute.xlu0 1
        %1918 = vperm.xlu0 %1917, %v889
        %v1919 = vpop.permute.xlu0 %1918
        %1921 = vset.pattern.permute.xlu0 1
        %1922 = vperm.xlu0 %1921, %v890
        %v1923 = vpop.permute.xlu0 %1922
        %1925 = vset.pattern.permute.xlu0 1
        %1926 = vperm.xlu0 %1925, %v891
        %v1927 = vpop.permute.xlu0 %1926
        %1929 = vset.pattern.permute.xlu0 1
        %1930 = vperm.xlu0 %1929, %v892
        %v1931 = vpop.permute.xlu0 %1930
        %1933 = vset.pattern.permute.xlu0 1
        %1934 = vperm.xlu0 %1933, %v893
        %v1935 = vpop.permute.xlu0 %1934
        %1937 = vset.pattern.permute.xlu0 1
        %1938 = vperm.xlu0 %1937, %v894
        %v1939 = vpop.permute.xlu0 %1938
        %1941 = vset.pattern.permute.xlu0 1
        %1942 = vperm.xlu0 %1941, %v895
        %v1943 = vpop.permute.xlu0 %1942
        %1945 = vset.pattern.permute.xlu0 1
        %1946 = vperm.xlu0 %1945, %v896
        %v1947 = vpop.permute.xlu0 %1946
        %1949 = vset.pattern.permute.xlu0 1
        %1950 = vperm.xlu0 %1949, %v897
        %v1951 = vpop.permute.xlu0 %1950
        %1953 = vset.pattern.permute.xlu0 1
        %1954 = vperm.xlu0 %1953, %v898
        %v1955 = vpop.permute.xlu0 %1954
        %1957 = vset.pattern.permute.xlu0 1
        %1958 = vperm.xlu0 %1957, %v899
        %v1959 = vpop.permute.xlu0 %1958
        %1961 = vset.pattern.permute.xlu0 1
        %1962 = vperm.xlu0 %1961, %v900
        %v1963 = vpop.permute.xlu0 %1962
        %1965 = vset.pattern.permute.xlu0 1
        %1966 = vperm.xlu0 %1965, %v901
        %v1967 = vpop.permute.xlu0 %1966
        %1969 = vset.pattern.permute.xlu0 1
        %1970 = vperm.xlu0 %1969, %v902
        %v1971 = vpop.permute.xlu0 %1970
        %1973 = vset.pattern.permute.xlu0 1
        %1974 = vperm.xlu0 %1973, %v903
        %v1975 = vpop.permute.xlu0 %1974
        %1977 = vset.pattern.permute.xlu0 1
        %1978 = vperm.xlu0 %1977, %v904
        %v1979 = vpop.permute.xlu0 %1978
        %1981 = vset.pattern.permute.xlu0 1
        %1982 = vperm.xlu0 %1981, %v905
        %v1983 = vpop.permute.xlu0 %1982
        %1985 = vset.pattern.permute.xlu0 1
        %1986 = vperm.xlu0 %1985, %v906
        %v1987 = vpop.permute.xlu0 %1986
        %1989 = vset.pattern.permute.xlu0 1
        %1990 = vperm.xlu0 %1989, %v907
        %v1991 = vpop.permute.xlu0 %1990
        %1993 = vset.pattern.permute.xlu0 1
        %1994 = vperm.xlu0 %1993, %v908
        %v1995 = vpop.permute.xlu0 %1994
        %1997 = vset.pattern.permute.xlu0 1
        %1998 = vperm.xlu0 %1997, %v909
        %v1999 = vpop.permute.xlu0 %1998
        %2001 = vset.pattern.permute.xlu0 1
        %2002 = vperm.xlu0 %2001, %v910
        %v2003 = vpop.permute.xlu0 %2002
        %2005 = vset.pattern.permute.xlu0 1
        %2006 = vperm.xlu0 %2005, %v911
        %v2007 = vpop.permute.xlu0 %2006
        %2009 = vset.pattern.permute.xlu0 1
        %2010 = vperm.xlu0 %2009, %v912
        %v2011 = vpop.permute.xlu0 %2010
        %2013 = vset.pattern.permute.xlu0 1
        %2014 = vperm.xlu0 %2013, %v913
        %v2015 = vpop.permute.xlu0 %2014
        %2017 = vset.pattern.permute.xlu0 1
        %2018 = vperm.xlu0 %2017, %v914
        %v2019 = vpop.permute.xlu0 %2018
        %2021 = vset.pattern.permute.xlu0 1
        %2022 = vperm.xlu0 %2021, %v915
        %v2023 = vpop.permute.xlu0 %2022
        %2025 = vset.pattern.permute.xlu0 1
        %2026 = vperm.xlu0 %2025, %v916
        %v2027 = vpop.permute.xlu0 %2026
        %2029 = vset.pattern.permute.xlu0 1
        %2030 = vperm.xlu0 %2029, %v917
        %v2031 = vpop.permute.xlu0 %2030
        %2033 = vset.pattern.permute.xlu0 1
        %2034 = vperm.xlu0 %2033, %v918
        %v2035 = vpop.permute.xlu0 %2034
        %2037 = vset.pattern.permute.xlu0 1
        %2038 = vperm.xlu0 %2037, %v919
        %v2039 = vpop.permute.xlu0 %2038
        %2041 = vset.pattern.permute.xlu0 1
        %2042 = vperm.xlu0 %2041, %v920
        %v2043 = vpop.permute.xlu0 %2042
        %2045 = vset.pattern.permute.xlu0 1
        %2046 = vperm.xlu0 %2045, %v921
        %v2047 = vpop.permute.xlu0 %2046
        %2049 = vset.pattern.permute.xlu0 1
        %2050 = vperm.xlu0 %2049, %v922
        %v2051 = vpop.permute.xlu0 %2050
        %2053 = vset.pattern.permute.xlu0 1
        %2054 = vperm.xlu0 %2053, %v923
        %v2055 = vpop.permute.xlu0 %2054
        %2057 = vset.pattern.permute.xlu0 1
        %2058 = vperm.xlu0 %2057, %v924
        %v2059 = vpop.permute.xlu0 %2058
        %2061 = vset.pattern.permute.xlu0 1
        %2062 = vperm.xlu0 %2061, %v925
        %v2063 = vpop.permute.xlu0 %2062
        %2065 = vset.pattern.permute.xlu0 1
        %2066 = vperm.xlu0 %2065, %v926
        %v2067 = vpop.permute.xlu0 %2066
        %2069 = vset.pattern.permute.xlu0 1
        %2070 = vperm.xlu0 %2069, %v927
        %v2071 = vpop.permute.xlu0 %2070
        %2073 = vset.pattern.permute.xlu0 1
        %2074 = vperm.xlu0 %2073, %v928
        %v2075 = vpop.permute.xlu0 %2074
        %2077 = vset.pattern.permute.xlu0 1
        %2078 = vperm.xlu0 %2077, %v929
        %v2079 = vpop.permute.xlu0 %2078
        %2081 = vset.pattern.permute.xlu0 1
        %2082 = vperm.xlu0 %2081, %v930
        %v2083 = vpop.permute.xlu0 %2082
        %2085 = vset.pattern.permute.xlu0 1
        %2086 = vperm.xlu0 %2085, %v931
        %v2087 = vpop.permute.xlu0 %2086
        %2089 = vset.pattern.permute.xlu0 1
        %2090 = vperm.xlu0 %2089, %v932
        %v2091 = vpop.permute.xlu0 %2090
        %2093 = vset.pattern.permute.xlu0 1
        %2094 = vperm.xlu0 %2093, %v933
        %v2095 = vpop.permute.xlu0 %2094
        %2097 = vset.pattern.permute.xlu0 1
        %2098 = vperm.xlu0 %2097, %v934
        %v2099 = vpop.permute.xlu0 %2098
        %2101 = vset.pattern.permute.xlu0 1
        %2102 = vperm.xlu0 %2101, %v935
        %v2103 = vpop.permute.xlu0 %2102
        %2105 = vset.pattern.permute.xlu0 1
        %2106 = vperm.xlu0 %2105, %v936
        %v2107 = vpop.permute.xlu0 %2106
        %2109 = vset.pattern.permute.xlu0 1
        %2110 = vperm.xlu0 %2109, %v937
        %v2111 = vpop.permute.xlu0 %2110
        %2113 = vset.pattern.permute.xlu0 1
        %2114 = vperm.xlu0 %2113, %v938
        %v2115 = vpop.permute.xlu0 %2114
        %2117 = vset.pattern.permute.xlu0 1
        %2118 = vperm.xlu0 %2117, %v939
        %v2119 = vpop.permute.xlu0 %2118
        %2121 = vset.pattern.permute.xlu0 1
        %2122 = vperm.xlu0 %2121, %v940
        %v2123 = vpop.permute.xlu0 %2122
        %2125 = vset.pattern.permute.xlu0 1
        %2126 = vperm.xlu0 %2125, %v941
        %v2127 = vpop.permute.xlu0 %2126
        %2129 = vset.pattern.permute.xlu0 1
        %2130 = vperm.xlu0 %2129, %v942
        %v2131 = vpop.permute.xlu0 %2130
        %v2133 = vlaneseq
        %v2134 = vshrl.u32 %v2133, 7
        %v2135 = vsub.s32 1, %v2134
        %v2136 = vrot.slane %v1007, %v2135
        %v2137 = vlaneseq
        %v2138 = vshrl.u32 %v2137, 7
        %v2139 = vsub.s32 3, %v2138
        %v2140 = vrot.slane %v1007, %v2139
        %v2143 = vlaneseq
        %v2144 = vshrl.u32 %v2143, 7
        %v2145 = vsub.s32 1, %v2144
        %v2146 = vrot.slane %v2136, %v2145
        %v2147 = vlaneseq
        %v2148 = vshrl.u32 %v2147, 7
        %v2149 = vsub.s32 1, %v2148
        %v2150 = vrot.slane %v2140, %v2149
        %v2151 = vmul.f32 %v1879, %v2146
        %v2152 = vmul.f32 %v1879, %v2150
        %v2153 = vmul.f32 %v1883, %v2146
        %v2154 = vmul.f32 %v1883, %v2150
        %v2155 = vmul.f32 %v1887, %v2146
        %v2156 = vmul.f32 %v1887, %v2150
        %v2157 = vmul.f32 %v1891, %v2146
        %v2158 = vmul.f32 %v1891, %v2150
        %v2159 = vmul.f32 %v1895, %v2146
        %v2160 = vmul.f32 %v1895, %v2150
        %v2161 = vmul.f32 %v1899, %v2146
        %v2162 = vmul.f32 %v1899, %v2150
        %v2163 = vmul.f32 %v1903, %v2146
        %v2164 = vmul.f32 %v1903, %v2150
        %v2165 = vmul.f32 %v1907, %v2146
        %v2166 = vmul.f32 %v1907, %v2150
        %v2167 = vmul.f32 %v1911, %v2146
        %v2168 = vmul.f32 %v1911, %v2150
        %v2169 = vmul.f32 %v1915, %v2146
        %v2170 = vmul.f32 %v1915, %v2150
        %v2171 = vmul.f32 %v1919, %v2146
        %v2172 = vmul.f32 %v1919, %v2150
        %v2173 = vmul.f32 %v1923, %v2146
        %v2174 = vmul.f32 %v1923, %v2150
        %v2175 = vmul.f32 %v1927, %v2146
        %v2176 = vmul.f32 %v1927, %v2150
        %v2177 = vmul.f32 %v1931, %v2146
        %v2178 = vmul.f32 %v1931, %v2150
        %v2179 = vmul.f32 %v1935, %v2146
        %v2180 = vmul.f32 %v1935, %v2150
        %v2181 = vmul.f32 %v1939, %v2146
        %v2182 = vmul.f32 %v1939, %v2150
        %v2183 = vmul.f32 %v1943, %v2146
        %v2184 = vmul.f32 %v1943, %v2150
        %v2185 = vmul.f32 %v1947, %v2146
        %v2186 = vmul.f32 %v1947, %v2150
        %v2187 = vmul.f32 %v1951, %v2146
        %v2188 = vmul.f32 %v1951, %v2150
        %v2189 = vmul.f32 %v1955, %v2146
        %v2190 = vmul.f32 %v1955, %v2150
        %v2191 = vmul.f32 %v1959, %v2146
        %v2192 = vmul.f32 %v1959, %v2150
        %v2193 = vmul.f32 %v1963, %v2146
        %v2194 = vmul.f32 %v1963, %v2150
        %v2195 = vmul.f32 %v1967, %v2146
        %v2196 = vmul.f32 %v1967, %v2150
        %v2197 = vmul.f32 %v1971, %v2146
        %v2198 = vmul.f32 %v1971, %v2150
        %v2199 = vmul.f32 %v1975, %v2146
        %v2200 = vmul.f32 %v1975, %v2150
        %v2201 = vmul.f32 %v1979, %v2146
        %v2202 = vmul.f32 %v1979, %v2150
        %v2203 = vmul.f32 %v1983, %v2146
        %v2204 = vmul.f32 %v1983, %v2150
        %v2205 = vmul.f32 %v1987, %v2146
        %v2206 = vmul.f32 %v1987, %v2150
        %v2207 = vmul.f32 %v1991, %v2146
        %v2208 = vmul.f32 %v1991, %v2150
        %v2209 = vmul.f32 %v1995, %v2146
        %v2210 = vmul.f32 %v1995, %v2150
        %v2211 = vmul.f32 %v1999, %v2146
        %v2212 = vmul.f32 %v1999, %v2150
        %v2213 = vmul.f32 %v2003, %v2146
        %v2214 = vmul.f32 %v2003, %v2150
        %v2215 = vmul.f32 %v2007, %v2146
        %v2216 = vmul.f32 %v2007, %v2150
        %v2217 = vmul.f32 %v2011, %v2146
        %v2218 = vmul.f32 %v2011, %v2150
        %v2219 = vmul.f32 %v2015, %v2146
        %v2220 = vmul.f32 %v2015, %v2150
        %v2221 = vmul.f32 %v2019, %v2146
        %v2222 = vmul.f32 %v2019, %v2150
        %v2223 = vmul.f32 %v2023, %v2146
        %v2224 = vmul.f32 %v2023, %v2150
        %v2225 = vmul.f32 %v2027, %v2146
        %v2226 = vmul.f32 %v2027, %v2150
        %v2227 = vmul.f32 %v2031, %v2146
        %v2228 = vmul.f32 %v2031, %v2150
        %v2229 = vmul.f32 %v2035, %v2146
        %v2230 = vmul.f32 %v2035, %v2150
        %v2231 = vmul.f32 %v2039, %v2146
        %v2232 = vmul.f32 %v2039, %v2150
        %v2233 = vmul.f32 %v2043, %v2146
        %v2234 = vmul.f32 %v2043, %v2150
        %v2235 = vmul.f32 %v2047, %v2146
        %v2236 = vmul.f32 %v2047, %v2150
        %v2237 = vmul.f32 %v2051, %v2146
        %v2238 = vmul.f32 %v2051, %v2150
        %v2239 = vmul.f32 %v2055, %v2146
        %v2240 = vmul.f32 %v2055, %v2150
        %v2241 = vmul.f32 %v2059, %v2146
        %v2242 = vmul.f32 %v2059, %v2150
        %v2243 = vmul.f32 %v2063, %v2146
        %v2244 = vmul.f32 %v2063, %v2150
        %v2245 = vmul.f32 %v2067, %v2146
        %v2246 = vmul.f32 %v2067, %v2150
        %v2247 = vmul.f32 %v2071, %v2146
        %v2248 = vmul.f32 %v2071, %v2150
        %v2249 = vmul.f32 %v2075, %v2146
        %v2250 = vmul.f32 %v2075, %v2150
        %v2251 = vmul.f32 %v2079, %v2146
        %v2252 = vmul.f32 %v2079, %v2150
        %v2253 = vmul.f32 %v2083, %v2146
        %v2254 = vmul.f32 %v2083, %v2150
        %v2255 = vmul.f32 %v2087, %v2146
        %v2256 = vmul.f32 %v2087, %v2150
        %v2257 = vmul.f32 %v2091, %v2146
        %v2258 = vmul.f32 %v2091, %v2150
        %v2259 = vmul.f32 %v2095, %v2146
        %v2260 = vmul.f32 %v2095, %v2150
        %v2261 = vmul.f32 %v2099, %v2146
        %v2262 = vmul.f32 %v2099, %v2150
        %v2263 = vmul.f32 %v2103, %v2146
        %v2264 = vmul.f32 %v2103, %v2150
        %v2265 = vmul.f32 %v2107, %v2146
        %v2266 = vmul.f32 %v2107, %v2150
        %v2267 = vmul.f32 %v2111, %v2146
        %v2268 = vmul.f32 %v2111, %v2150
        %v2269 = vmul.f32 %v2115, %v2146
        %v2270 = vmul.f32 %v2115, %v2150
        %v2271 = vmul.f32 %v2119, %v2146
        %v2272 = vmul.f32 %v2119, %v2150
        %v2273 = vmul.f32 %v2123, %v2146
        %v2274 = vmul.f32 %v2123, %v2150
        %v2275 = vmul.f32 %v2127, %v2146
        %v2276 = vmul.f32 %v2127, %v2150
        %v2277 = vmul.f32 %v2131, %v2146
        %v2278 = vmul.f32 %v2131, %v2150
        %v2279 = vadd.f32 %v1749, %v2151
        %v2280 = vadd.f32 %v1750, %v2152
        %v2281 = vadd.f32 %v1751, %v2153
        %v2282 = vadd.f32 %v1752, %v2154
        %v2283 = vadd.f32 %v1753, %v2155
        %v2284 = vadd.f32 %v1754, %v2156
        %v2285 = vadd.f32 %v1755, %v2157
        %v2286 = vadd.f32 %v1756, %v2158
        %v2287 = vadd.f32 %v1757, %v2159
        %v2288 = vadd.f32 %v1758, %v2160
        %v2289 = vadd.f32 %v1759, %v2161
        %v2290 = vadd.f32 %v1760, %v2162
        %v2291 = vadd.f32 %v1761, %v2163
        %v2292 = vadd.f32 %v1762, %v2164
        %v2293 = vadd.f32 %v1763, %v2165
        %v2294 = vadd.f32 %v1764, %v2166
        %v2295 = vadd.f32 %v1765, %v2167
        %v2296 = vadd.f32 %v1766, %v2168
        %v2297 = vadd.f32 %v1767, %v2169
        %v2298 = vadd.f32 %v1768, %v2170
        %v2299 = vadd.f32 %v1769, %v2171
        %v2300 = vadd.f32 %v1770, %v2172
        %v2301 = vadd.f32 %v1771, %v2173
        %v2302 = vadd.f32 %v1772, %v2174
        %v2303 = vadd.f32 %v1773, %v2175
        %v2304 = vadd.f32 %v1774, %v2176
        %v2305 = vadd.f32 %v1775, %v2177
        %v2306 = vadd.f32 %v1776, %v2178
        %v2307 = vadd.f32 %v1777, %v2179
        %v2308 = vadd.f32 %v1778, %v2180
        %v2309 = vadd.f32 %v1779, %v2181
        %v2310 = vadd.f32 %v1780, %v2182
        %v2311 = vadd.f32 %v1781, %v2183
        %v2312 = vadd.f32 %v1782, %v2184
        %v2313 = vadd.f32 %v1783, %v2185
        %v2314 = vadd.f32 %v1784, %v2186
        %v2315 = vadd.f32 %v1785, %v2187
        %v2316 = vadd.f32 %v1786, %v2188
        %v2317 = vadd.f32 %v1787, %v2189
        %v2318 = vadd.f32 %v1788, %v2190
        %v2319 = vadd.f32 %v1789, %v2191
        %v2320 = vadd.f32 %v1790, %v2192
        %v2321 = vadd.f32 %v1791, %v2193
        %v2322 = vadd.f32 %v1792, %v2194
        %v2323 = vadd.f32 %v1793, %v2195
        %v2324 = vadd.f32 %v1794, %v2196
        %v2325 = vadd.f32 %v1795, %v2197
        %v2326 = vadd.f32 %v1796, %v2198
        %v2327 = vadd.f32 %v1797, %v2199
        %v2328 = vadd.f32 %v1798, %v2200
        %v2329 = vadd.f32 %v1799, %v2201
        %v2330 = vadd.f32 %v1800, %v2202
        %v2331 = vadd.f32 %v1801, %v2203
        %v2332 = vadd.f32 %v1802, %v2204
        %v2333 = vadd.f32 %v1803, %v2205
        %v2334 = vadd.f32 %v1804, %v2206
        %v2335 = vadd.f32 %v1805, %v2207
        %v2336 = vadd.f32 %v1806, %v2208
        %v2337 = vadd.f32 %v1807, %v2209
        %v2338 = vadd.f32 %v1808, %v2210
        %v2339 = vadd.f32 %v1809, %v2211
        %v2340 = vadd.f32 %v1810, %v2212
        %v2341 = vadd.f32 %v1811, %v2213
        %v2342 = vadd.f32 %v1812, %v2214
        %v2343 = vadd.f32 %v1813, %v2215
        %v2344 = vadd.f32 %v1814, %v2216
        %v2345 = vadd.f32 %v1815, %v2217
        %v2346 = vadd.f32 %v1816, %v2218
        %v2347 = vadd.f32 %v1817, %v2219
        %v2348 = vadd.f32 %v1818, %v2220
        %v2349 = vadd.f32 %v1819, %v2221
        %v2350 = vadd.f32 %v1820, %v2222
        %v2351 = vadd.f32 %v1821, %v2223
        %v2352 = vadd.f32 %v1822, %v2224
        %v2353 = vadd.f32 %v1823, %v2225
        %v2354 = vadd.f32 %v1824, %v2226
        %v2355 = vadd.f32 %v1825, %v2227
        %v2356 = vadd.f32 %v1826, %v2228
        %v2357 = vadd.f32 %v1827, %v2229
        %v2358 = vadd.f32 %v1828, %v2230
        %v2359 = vadd.f32 %v1829, %v2231
        %v2360 = vadd.f32 %v1830, %v2232
        %v2361 = vadd.f32 %v1831, %v2233
        %v2362 = vadd.f32 %v1832, %v2234
        %v2363 = vadd.f32 %v1833, %v2235
        %v2364 = vadd.f32 %v1834, %v2236
        %v2365 = vadd.f32 %v1835, %v2237
        %v2366 = vadd.f32 %v1836, %v2238
        %v2367 = vadd.f32 %v1837, %v2239
        %v2368 = vadd.f32 %v1838, %v2240
        %v2369 = vadd.f32 %v1839, %v2241
        %v2370 = vadd.f32 %v1840, %v2242
        %v2371 = vadd.f32 %v1841, %v2243
        %v2372 = vadd.f32 %v1842, %v2244
        %v2373 = vadd.f32 %v1843, %v2245
        %v2374 = vadd.f32 %v1844, %v2246
        %v2375 = vadd.f32 %v1845, %v2247
        %v2376 = vadd.f32 %v1846, %v2248
        %v2377 = vadd.f32 %v1847, %v2249
        %v2378 = vadd.f32 %v1848, %v2250
        %v2379 = vadd.f32 %v1849, %v2251
        %v2380 = vadd.f32 %v1850, %v2252
        %v2381 = vadd.f32 %v1851, %v2253
        %v2382 = vadd.f32 %v1852, %v2254
        %v2383 = vadd.f32 %v1853, %v2255
        %v2384 = vadd.f32 %v1854, %v2256
        %v2385 = vadd.f32 %v1855, %v2257
        %v2386 = vadd.f32 %v1856, %v2258
        %v2387 = vadd.f32 %v1857, %v2259
        %v2388 = vadd.f32 %v1858, %v2260
        %v2389 = vadd.f32 %v1859, %v2261
        %v2390 = vadd.f32 %v1860, %v2262
        %v2391 = vadd.f32 %v1861, %v2263
        %v2392 = vadd.f32 %v1862, %v2264
        %v2393 = vadd.f32 %v1863, %v2265
        %v2394 = vadd.f32 %v1864, %v2266
        %v2395 = vadd.f32 %v1865, %v2267
        %v2396 = vadd.f32 %v1866, %v2268
        %v2397 = vadd.f32 %v1867, %v2269
        %v2398 = vadd.f32 %v1868, %v2270
        %v2399 = vadd.f32 %v1869, %v2271
        %v2400 = vadd.f32 %v1870, %v2272
        %v2401 = vadd.f32 %v1871, %v2273
        %v2402 = vadd.f32 %v1872, %v2274
        %v2403 = vadd.f32 %v1873, %v2275
        %v2404 = vadd.f32 %v1874, %v2276
        %v2405 = vadd.f32 %v1875, %v2277
        %v2406 = vadd.f32 %v1876, %v2278
        %v2408 = vlaneseq
        %v2409 = vshrl.u32 %v2408, 7
        %v2410 = vsub.s32 0, %v2409
        %v2411 = vrot.slane %v1139, %v2410
        %v2412 = vlaneseq
        %v2413 = vshrl.u32 %v2412, 7
        %v2414 = vsub.s32 1, %v2413
        %v2415 = vrot.slane %v1139, %v2414
        %2418 = vmatprep.subr.mxu0 %v1042
        %2419 = vmatpush1.msra.mxu0 %v1041
        %2420 = vmatprep.subr.mxu0 %v1040
        %2421 = vmatpush1.msra.mxu0 %v1039
        %2422 = vmatprep.subr.mxu0 %v1038
        %2423 = vmatpush1.msra.mxu0 %v1037
        %2424 = vmatprep.subr.mxu0 %v1036
        %2425 = vmatpush1.msra.mxu0 %v1035
        %2426 = vmatprep.subr.mxu0 %v1034
        %2427 = vmatpush1.msra.mxu0 %v1033
        %2428 = vmatprep.subr.mxu0 %v1032
        %2429 = vmatpush1.msra.mxu0 %v1031
        %2430 = vmatprep.subr.mxu0 %v1030
        %2431 = vmatpush1.msra.mxu0 %v1029
        %2432 = vmatprep.subr.mxu0 %v1028
        %2433 = vmatpush1.msra.mxu0 %v1027
        %2434 = vmatprep.subr.mxu0 %v1026
        %2435 = vmatpush1.msra.mxu0 %v1025
        %2436 = vmatprep.subr.mxu0 %v1024
        %2437 = vmatpush1.msra.mxu0 %v1023
        %2438 = vmatprep.subr.mxu0 %v1022
        %2439 = vmatpush1.msra.mxu0 %v1021
        %2440 = vmatprep.subr.mxu0 %v1020
        %2441 = vmatpush1.msra.mxu0 %v1019
        %2442 = vmatprep.subr.mxu0 %v1018
        %2443 = vmatpush1.msra.mxu0 %v1017
        %2444 = vmatprep.subr.mxu0 %v1016
        %2445 = vmatpush1.msra.mxu0 %v1015
        %2446 = vmatprep.subr.mxu0 %v1014
        %2447 = vmatpush1.msra.mxu0 %v1013
        %2448 = vmatprep.subr.mxu0 %v1012
        %2449 = vmatpush1.msra.mxu0 %v1011
        %2450 = vmatprep.subr.mxu0 %v1074
        %2451 = vmatpush2.msra.mxu0 %v1073
        %2452 = vmatprep.subr.mxu0 %v1072
        %2453 = vmatpush2.msra.mxu0 %v1071
        %2454 = vmatprep.subr.mxu0 %v1070
        %2455 = vmatpush2.msra.mxu0 %v1069
        %2456 = vmatprep.subr.mxu0 %v1068
        %2457 = vmatpush2.msra.mxu0 %v1067
        %2458 = vmatprep.subr.mxu0 %v1066
        %2459 = vmatpush2.msra.mxu0 %v1065
        %2460 = vmatprep.subr.mxu0 %v1064
        %2461 = vmatpush2.msra.mxu0 %v1063
        %2462 = vmatprep.subr.mxu0 %v1062
        %2463 = vmatpush2.msra.mxu0 %v1061
        %2464 = vmatprep.subr.mxu0 %v1060
        %2465 = vmatpush2.msra.mxu0 %v1059
        %2466 = vmatprep.subr.mxu0 %v1058
        %2467 = vmatpush2.msra.mxu0 %v1057
        %2468 = vmatprep.subr.mxu0 %v1056
        %2469 = vmatpush2.msra.mxu0 %v1055
        %2470 = vmatprep.subr.mxu0 %v1054
        %2471 = vmatpush2.msra.mxu0 %v1053
        %2472 = vmatprep.subr.mxu0 %v1052
        %2473 = vmatpush2.msra.mxu0 %v1051
        %2474 = vmatprep.subr.mxu0 %v1050
        %2475 = vmatpush2.msra.mxu0 %v1049
        %2476 = vmatprep.subr.mxu0 %v1048
        %2477 = vmatpush2.msra.mxu0 %v1047
        %2478 = vmatprep.subr.mxu0 %v1046
        %2479 = vmatpush2.msra.mxu0 %v1045
        %2480 = vmatprep.subr.mxu0 %v1044
        %2481 = vmatpush2.msra.mxu0 %v1043
        %2482 = vmatprep.mubr.f32.mxu0 %v2280
        %2483 = vmatmul.mubr.f32.gmra.mxu0 %v2279
        %v2484 = vpop.f32.mrf.mxu0
        %v2485 = vadd.f32 %v2411, %v2484
        %v2486 = vpop.f32.mrf.mxu0
        %v2487 = vadd.f32 %v2415, %v2486
        %2488 = vmatprep.mubr.f32.mxu0 %v2282
        %2489 = vmatmul.mubr.f32.gmra.mxu0 %v2281
        %v2490 = vpop.f32.mrf.mxu0
        %v2491 = vadd.f32 %v2411, %v2490
        %v2492 = vpop.f32.mrf.mxu0
        %v2493 = vadd.f32 %v2415, %v2492
        %2494 = vmatprep.mubr.f32.mxu0 %v2284
        %2495 = vmatmul.mubr.f32.gmra.mxu0 %v2283
        %v2496 = vpop.f32.mrf.mxu0
        %v2497 = vadd.f32 %v2411, %v2496
        %v2498 = vpop.f32.mrf.mxu0
        %v2499 = vadd.f32 %v2415, %v2498
        %2500 = vmatprep.mubr.f32.mxu0 %v2286
        %2501 = vmatmul.mubr.f32.gmra.mxu0 %v2285
        %v2502 = vpop.f32.mrf.mxu0
        %v2503 = vadd.f32 %v2411, %v2502
        %v2504 = vpop.f32.mrf.mxu0
        %v2505 = vadd.f32 %v2415, %v2504
        %2506 = vmatprep.mubr.f32.mxu0 %v2288
        %2507 = vmatmul.mubr.f32.gmra.mxu0 %v2287
        %v2508 = vpop.f32.mrf.mxu0
        %v2509 = vadd.f32 %v2411, %v2508
        %v2510 = vpop.f32.mrf.mxu0
        %v2511 = vadd.f32 %v2415, %v2510
        %2512 = vmatprep.mubr.f32.mxu0 %v2290
        %2513 = vmatmul.mubr.f32.gmra.mxu0 %v2289
        %v2514 = vpop.f32.mrf.mxu0
        %v2515 = vadd.f32 %v2411, %v2514
        %v2516 = vpop.f32.mrf.mxu0
        %v2517 = vadd.f32 %v2415, %v2516
        %2518 = vmatprep.mubr.f32.mxu0 %v2292
        %2519 = vmatmul.mubr.f32.gmra.mxu0 %v2291
        %v2520 = vpop.f32.mrf.mxu0
        %v2521 = vadd.f32 %v2411, %v2520
        %v2522 = vpop.f32.mrf.mxu0
        %v2523 = vadd.f32 %v2415, %v2522
        %2524 = vmatprep.mubr.f32.mxu0 %v2294
        %2525 = vmatmul.mubr.f32.gmra.mxu0 %v2293
        %v2526 = vpop.f32.mrf.mxu0
        %v2527 = vadd.f32 %v2411, %v2526
        %v2528 = vpop.f32.mrf.mxu0
        %v2529 = vadd.f32 %v2415, %v2528
        %2530 = vmatprep.mubr.f32.mxu0 %v2296
        %2531 = vmatmul.mubr.f32.gmra.mxu0 %v2295
        %v2532 = vpop.f32.mrf.mxu0
        %v2533 = vadd.f32 %v2411, %v2532
        %v2534 = vpop.f32.mrf.mxu0
        %v2535 = vadd.f32 %v2415, %v2534
        %2536 = vmatprep.mubr.f32.mxu0 %v2298
        %2537 = vmatmul.mubr.f32.gmra.mxu0 %v2297
        %v2538 = vpop.f32.mrf.mxu0
        %v2539 = vadd.f32 %v2411, %v2538
        %v2540 = vpop.f32.mrf.mxu0
        %v2541 = vadd.f32 %v2415, %v2540
        %2542 = vmatprep.mubr.f32.mxu0 %v2300
        %2543 = vmatmul.mubr.f32.gmra.mxu0 %v2299
        %v2544 = vpop.f32.mrf.mxu0
        %v2545 = vadd.f32 %v2411, %v2544
        %v2546 = vpop.f32.mrf.mxu0
        %v2547 = vadd.f32 %v2415, %v2546
        %2548 = vmatprep.mubr.f32.mxu0 %v2302
        %2549 = vmatmul.mubr.f32.gmra.mxu0 %v2301
        %v2550 = vpop.f32.mrf.mxu0
        %v2551 = vadd.f32 %v2411, %v2550
        %v2552 = vpop.f32.mrf.mxu0
        %v2553 = vadd.f32 %v2415, %v2552
        %2554 = vmatprep.mubr.f32.mxu0 %v2304
        %2555 = vmatmul.mubr.f32.gmra.mxu0 %v2303
        %v2556 = vpop.f32.mrf.mxu0
        %v2557 = vadd.f32 %v2411, %v2556
        %v2558 = vpop.f32.mrf.mxu0
        %v2559 = vadd.f32 %v2415, %v2558
        %2560 = vmatprep.mubr.f32.mxu0 %v2306
        %2561 = vmatmul.mubr.f32.gmra.mxu0 %v2305
        %v2562 = vpop.f32.mrf.mxu0
        %v2563 = vadd.f32 %v2411, %v2562
        %v2564 = vpop.f32.mrf.mxu0
        %v2565 = vadd.f32 %v2415, %v2564
        %2566 = vmatprep.mubr.f32.mxu0 %v2308
        %2567 = vmatmul.mubr.f32.gmra.mxu0 %v2307
        %v2568 = vpop.f32.mrf.mxu0
        %v2569 = vadd.f32 %v2411, %v2568
        %v2570 = vpop.f32.mrf.mxu0
        %v2571 = vadd.f32 %v2415, %v2570
        %2572 = vmatprep.mubr.f32.mxu0 %v2310
        %2573 = vmatmul.mubr.f32.gmra.mxu0 %v2309
        %v2574 = vpop.f32.mrf.mxu0
        %v2575 = vadd.f32 %v2411, %v2574
        %v2576 = vpop.f32.mrf.mxu0
        %v2577 = vadd.f32 %v2415, %v2576
        %2578 = vmatprep.mubr.f32.mxu0 %v2312
        %2579 = vmatmul.mubr.f32.gmra.mxu0 %v2311
        %v2580 = vpop.f32.mrf.mxu0
        %v2581 = vadd.f32 %v2411, %v2580
        %v2582 = vpop.f32.mrf.mxu0
        %v2583 = vadd.f32 %v2415, %v2582
        %2584 = vmatprep.mubr.f32.mxu0 %v2314
        %2585 = vmatmul.mubr.f32.gmra.mxu0 %v2313
        %v2586 = vpop.f32.mrf.mxu0
        %v2587 = vadd.f32 %v2411, %v2586
        %v2588 = vpop.f32.mrf.mxu0
        %v2589 = vadd.f32 %v2415, %v2588
        %2590 = vmatprep.mubr.f32.mxu0 %v2316
        %2591 = vmatmul.mubr.f32.gmra.mxu0 %v2315
        %v2592 = vpop.f32.mrf.mxu0
        %v2593 = vadd.f32 %v2411, %v2592
        %v2594 = vpop.f32.mrf.mxu0
        %v2595 = vadd.f32 %v2415, %v2594
        %2596 = vmatprep.mubr.f32.mxu0 %v2318
        %2597 = vmatmul.mubr.f32.gmra.mxu0 %v2317
        %v2598 = vpop.f32.mrf.mxu0
        %v2599 = vadd.f32 %v2411, %v2598
        %v2600 = vpop.f32.mrf.mxu0
        %v2601 = vadd.f32 %v2415, %v2600
        %2602 = vmatprep.mubr.f32.mxu0 %v2320
        %2603 = vmatmul.mubr.f32.gmra.mxu0 %v2319
        %v2604 = vpop.f32.mrf.mxu0
        %v2605 = vadd.f32 %v2411, %v2604
        %v2606 = vpop.f32.mrf.mxu0
        %v2607 = vadd.f32 %v2415, %v2606
        %2608 = vmatprep.mubr.f32.mxu0 %v2322
        %2609 = vmatmul.mubr.f32.gmra.mxu0 %v2321
        %v2610 = vpop.f32.mrf.mxu0
        %v2611 = vadd.f32 %v2411, %v2610
        %v2612 = vpop.f32.mrf.mxu0
        %v2613 = vadd.f32 %v2415, %v2612
        %2614 = vmatprep.mubr.f32.mxu0 %v2324
        %2615 = vmatmul.mubr.f32.gmra.mxu0 %v2323
        %v2616 = vpop.f32.mrf.mxu0
        %v2617 = vadd.f32 %v2411, %v2616
        %v2618 = vpop.f32.mrf.mxu0
        %v2619 = vadd.f32 %v2415, %v2618
        %2620 = vmatprep.mubr.f32.mxu0 %v2326
        %2621 = vmatmul.mubr.f32.gmra.mxu0 %v2325
        %v2622 = vpop.f32.mrf.mxu0
        %v2623 = vadd.f32 %v2411, %v2622
        %v2624 = vpop.f32.mrf.mxu0
        %v2625 = vadd.f32 %v2415, %v2624
        %2626 = vmatprep.mubr.f32.mxu0 %v2328
        %2627 = vmatmul.mubr.f32.gmra.mxu0 %v2327
        %v2628 = vpop.f32.mrf.mxu0
        %v2629 = vadd.f32 %v2411, %v2628
        %v2630 = vpop.f32.mrf.mxu0
        %v2631 = vadd.f32 %v2415, %v2630
        %2632 = vmatprep.mubr.f32.mxu0 %v2330
        %2633 = vmatmul.mubr.f32.gmra.mxu0 %v2329
        %v2634 = vpop.f32.mrf.mxu0
        %v2635 = vadd.f32 %v2411, %v2634
        %v2636 = vpop.f32.mrf.mxu0
        %v2637 = vadd.f32 %v2415, %v2636
        %2638 = vmatprep.mubr.f32.mxu0 %v2332
        %2639 = vmatmul.mubr.f32.gmra.mxu0 %v2331
        %v2640 = vpop.f32.mrf.mxu0
        %v2641 = vadd.f32 %v2411, %v2640
        %v2642 = vpop.f32.mrf.mxu0
        %v2643 = vadd.f32 %v2415, %v2642
        %2644 = vmatprep.mubr.f32.mxu0 %v2334
        %2645 = vmatmul.mubr.f32.gmra.mxu0 %v2333
        %v2646 = vpop.f32.mrf.mxu0
        %v2647 = vadd.f32 %v2411, %v2646
        %v2648 = vpop.f32.mrf.mxu0
        %v2649 = vadd.f32 %v2415, %v2648
        %2650 = vmatprep.mubr.f32.mxu0 %v2336
        %2651 = vmatmul.mubr.f32.gmra.mxu0 %v2335
        %v2652 = vpop.f32.mrf.mxu0
        %v2653 = vadd.f32 %v2411, %v2652
        %v2654 = vpop.f32.mrf.mxu0
        %v2655 = vadd.f32 %v2415, %v2654
        %2656 = vmatprep.mubr.f32.mxu0 %v2338
        %2657 = vmatmul.mubr.f32.gmra.mxu0 %v2337
        %v2658 = vpop.f32.mrf.mxu0
        %v2659 = vadd.f32 %v2411, %v2658
        %v2660 = vpop.f32.mrf.mxu0
        %v2661 = vadd.f32 %v2415, %v2660
        %2662 = vmatprep.mubr.f32.mxu0 %v2340
        %2663 = vmatmul.mubr.f32.gmra.mxu0 %v2339
        %v2664 = vpop.f32.mrf.mxu0
        %v2665 = vadd.f32 %v2411, %v2664
        %v2666 = vpop.f32.mrf.mxu0
        %v2667 = vadd.f32 %v2415, %v2666
        %2668 = vmatprep.mubr.f32.mxu0 %v2342
        %2669 = vmatmul.mubr.f32.gmra.mxu0 %v2341
        %v2670 = vpop.f32.mrf.mxu0
        %v2671 = vadd.f32 %v2411, %v2670
        %v2672 = vpop.f32.mrf.mxu0
        %v2673 = vadd.f32 %v2415, %v2672
        %2674 = vmatprep.mubr.f32.mxu0 %v2344
        %2675 = vmatmul.mubr.f32.gmra.mxu0 %v2343
        %v2676 = vpop.f32.mrf.mxu0
        %v2677 = vadd.f32 %v2411, %v2676
        %v2678 = vpop.f32.mrf.mxu0
        %v2679 = vadd.f32 %v2415, %v2678
        %2680 = vmatprep.mubr.f32.mxu0 %v2346
        %2681 = vmatmul.mubr.f32.gmra.mxu0 %v2345
        %v2682 = vpop.f32.mrf.mxu0
        %v2683 = vadd.f32 %v2411, %v2682
        %v2684 = vpop.f32.mrf.mxu0
        %v2685 = vadd.f32 %v2415, %v2684
        %2686 = vmatprep.mubr.f32.mxu0 %v2348
        %2687 = vmatmul.mubr.f32.gmra.mxu0 %v2347
        %v2688 = vpop.f32.mrf.mxu0
        %v2689 = vadd.f32 %v2411, %v2688
        %v2690 = vpop.f32.mrf.mxu0
        %v2691 = vadd.f32 %v2415, %v2690
        %2692 = vmatprep.mubr.f32.mxu0 %v2350
        %2693 = vmatmul.mubr.f32.gmra.mxu0 %v2349
        %v2694 = vpop.f32.mrf.mxu0
        %v2695 = vadd.f32 %v2411, %v2694
        %v2696 = vpop.f32.mrf.mxu0
        %v2697 = vadd.f32 %v2415, %v2696
        %2698 = vmatprep.mubr.f32.mxu0 %v2352
        %2699 = vmatmul.mubr.f32.gmra.mxu0 %v2351
        %v2700 = vpop.f32.mrf.mxu0
        %v2701 = vadd.f32 %v2411, %v2700
        %v2702 = vpop.f32.mrf.mxu0
        %v2703 = vadd.f32 %v2415, %v2702
        %2704 = vmatprep.mubr.f32.mxu0 %v2354
        %2705 = vmatmul.mubr.f32.gmra.mxu0 %v2353
        %v2706 = vpop.f32.mrf.mxu0
        %v2707 = vadd.f32 %v2411, %v2706
        %v2708 = vpop.f32.mrf.mxu0
        %v2709 = vadd.f32 %v2415, %v2708
        %2710 = vmatprep.mubr.f32.mxu0 %v2356
        %2711 = vmatmul.mubr.f32.gmra.mxu0 %v2355
        %v2712 = vpop.f32.mrf.mxu0
        %v2713 = vadd.f32 %v2411, %v2712
        %v2714 = vpop.f32.mrf.mxu0
        %v2715 = vadd.f32 %v2415, %v2714
        %2716 = vmatprep.mubr.f32.mxu0 %v2358
        %2717 = vmatmul.mubr.f32.gmra.mxu0 %v2357
        %v2718 = vpop.f32.mrf.mxu0
        %v2719 = vadd.f32 %v2411, %v2718
        %v2720 = vpop.f32.mrf.mxu0
        %v2721 = vadd.f32 %v2415, %v2720
        %2722 = vmatprep.mubr.f32.mxu0 %v2360
        %2723 = vmatmul.mubr.f32.gmra.mxu0 %v2359
        %v2724 = vpop.f32.mrf.mxu0
        %v2725 = vadd.f32 %v2411, %v2724
        %v2726 = vpop.f32.mrf.mxu0
        %v2727 = vadd.f32 %v2415, %v2726
        %2728 = vmatprep.mubr.f32.mxu0 %v2362
        %2729 = vmatmul.mubr.f32.gmra.mxu0 %v2361
        %v2730 = vpop.f32.mrf.mxu0
        %v2731 = vadd.f32 %v2411, %v2730
        %v2732 = vpop.f32.mrf.mxu0
        %v2733 = vadd.f32 %v2415, %v2732
        %2734 = vmatprep.mubr.f32.mxu0 %v2364
        %2735 = vmatmul.mubr.f32.gmra.mxu0 %v2363
        %v2736 = vpop.f32.mrf.mxu0
        %v2737 = vadd.f32 %v2411, %v2736
        %v2738 = vpop.f32.mrf.mxu0
        %v2739 = vadd.f32 %v2415, %v2738
        %2740 = vmatprep.mubr.f32.mxu0 %v2366
        %2741 = vmatmul.mubr.f32.gmra.mxu0 %v2365
        %v2742 = vpop.f32.mrf.mxu0
        %v2743 = vadd.f32 %v2411, %v2742
        %v2744 = vpop.f32.mrf.mxu0
        %v2745 = vadd.f32 %v2415, %v2744
        %2746 = vmatprep.mubr.f32.mxu0 %v2368
        %2747 = vmatmul.mubr.f32.gmra.mxu0 %v2367
        %v2748 = vpop.f32.mrf.mxu0
        %v2749 = vadd.f32 %v2411, %v2748
        %v2750 = vpop.f32.mrf.mxu0
        %v2751 = vadd.f32 %v2415, %v2750
        %2752 = vmatprep.mubr.f32.mxu0 %v2370
        %2753 = vmatmul.mubr.f32.gmra.mxu0 %v2369
        %v2754 = vpop.f32.mrf.mxu0
        %v2755 = vadd.f32 %v2411, %v2754
        %v2756 = vpop.f32.mrf.mxu0
        %v2757 = vadd.f32 %v2415, %v2756
        %2758 = vmatprep.mubr.f32.mxu0 %v2372
        %2759 = vmatmul.mubr.f32.gmra.mxu0 %v2371
        %v2760 = vpop.f32.mrf.mxu0
        %v2761 = vadd.f32 %v2411, %v2760
        %v2762 = vpop.f32.mrf.mxu0
        %v2763 = vadd.f32 %v2415, %v2762
        %2764 = vmatprep.mubr.f32.mxu0 %v2374
        %2765 = vmatmul.mubr.f32.gmra.mxu0 %v2373
        %v2766 = vpop.f32.mrf.mxu0
        %v2767 = vadd.f32 %v2411, %v2766
        %v2768 = vpop.f32.mrf.mxu0
        %v2769 = vadd.f32 %v2415, %v2768
        %2770 = vmatprep.mubr.f32.mxu0 %v2376
        %2771 = vmatmul.mubr.f32.gmra.mxu0 %v2375
        %v2772 = vpop.f32.mrf.mxu0
        %v2773 = vadd.f32 %v2411, %v2772
        %v2774 = vpop.f32.mrf.mxu0
        %v2775 = vadd.f32 %v2415, %v2774
        %2776 = vmatprep.mubr.f32.mxu0 %v2378
        %2777 = vmatmul.mubr.f32.gmra.mxu0 %v2377
        %v2778 = vpop.f32.mrf.mxu0
        %v2779 = vadd.f32 %v2411, %v2778
        %v2780 = vpop.f32.mrf.mxu0
        %v2781 = vadd.f32 %v2415, %v2780
        %2782 = vmatprep.mubr.f32.mxu0 %v2380
        %2783 = vmatmul.mubr.f32.gmra.mxu0 %v2379
        %v2784 = vpop.f32.mrf.mxu0
        %v2785 = vadd.f32 %v2411, %v2784
        %v2786 = vpop.f32.mrf.mxu0
        %v2787 = vadd.f32 %v2415, %v2786
        %2788 = vmatprep.mubr.f32.mxu0 %v2382
        %2789 = vmatmul.mubr.f32.gmra.mxu0 %v2381
        %v2790 = vpop.f32.mrf.mxu0
        %v2791 = vadd.f32 %v2411, %v2790
        %v2792 = vpop.f32.mrf.mxu0
        %v2793 = vadd.f32 %v2415, %v2792
        %2794 = vmatprep.mubr.f32.mxu0 %v2384
        %2795 = vmatmul.mubr.f32.gmra.mxu0 %v2383
        %v2796 = vpop.f32.mrf.mxu0
        %v2797 = vadd.f32 %v2411, %v2796
        %v2798 = vpop.f32.mrf.mxu0
        %v2799 = vadd.f32 %v2415, %v2798
        %2800 = vmatprep.mubr.f32.mxu0 %v2386
        %2801 = vmatmul.mubr.f32.gmra.mxu0 %v2385
        %v2802 = vpop.f32.mrf.mxu0
        %v2803 = vadd.f32 %v2411, %v2802
        %v2804 = vpop.f32.mrf.mxu0
        %v2805 = vadd.f32 %v2415, %v2804
        %2806 = vmatprep.mubr.f32.mxu0 %v2388
        %2807 = vmatmul.mubr.f32.gmra.mxu0 %v2387
        %v2808 = vpop.f32.mrf.mxu0
        %v2809 = vadd.f32 %v2411, %v2808
        %v2810 = vpop.f32.mrf.mxu0
        %v2811 = vadd.f32 %v2415, %v2810
        %2812 = vmatprep.mubr.f32.mxu0 %v2390
        %2813 = vmatmul.mubr.f32.gmra.mxu0 %v2389
        %v2814 = vpop.f32.mrf.mxu0
        %v2815 = vadd.f32 %v2411, %v2814
        %v2816 = vpop.f32.mrf.mxu0
        %v2817 = vadd.f32 %v2415, %v2816
        %2818 = vmatprep.mubr.f32.mxu0 %v2392
        %2819 = vmatmul.mubr.f32.gmra.mxu0 %v2391
        %v2820 = vpop.f32.mrf.mxu0
        %v2821 = vadd.f32 %v2411, %v2820
        %v2822 = vpop.f32.mrf.mxu0
        %v2823 = vadd.f32 %v2415, %v2822
        %2824 = vmatprep.mubr.f32.mxu0 %v2394
        %2825 = vmatmul.mubr.f32.gmra.mxu0 %v2393
        %v2826 = vpop.f32.mrf.mxu0
        %v2827 = vadd.f32 %v2411, %v2826
        %v2828 = vpop.f32.mrf.mxu0
        %v2829 = vadd.f32 %v2415, %v2828
        %2830 = vmatprep.mubr.f32.mxu0 %v2396
        %2831 = vmatmul.mubr.f32.gmra.mxu0 %v2395
        %v2832 = vpop.f32.mrf.mxu0
        %v2833 = vadd.f32 %v2411, %v2832
        %v2834 = vpop.f32.mrf.mxu0
        %v2835 = vadd.f32 %v2415, %v2834
        %2836 = vmatprep.mubr.f32.mxu0 %v2398
        %2837 = vmatmul.mubr.f32.gmra.mxu0 %v2397
        %v2838 = vpop.f32.mrf.mxu0
        %v2839 = vadd.f32 %v2411, %v2838
        %v2840 = vpop.f32.mrf.mxu0
        %v2841 = vadd.f32 %v2415, %v2840
        %2842 = vmatprep.mubr.f32.mxu0 %v2400
        %2843 = vmatmul.mubr.f32.gmra.mxu0 %v2399
        %v2844 = vpop.f32.mrf.mxu0
        %v2845 = vadd.f32 %v2411, %v2844
        %v2846 = vpop.f32.mrf.mxu0
        %v2847 = vadd.f32 %v2415, %v2846
        %2848 = vmatprep.mubr.f32.mxu0 %v2402
        %2849 = vmatmul.mubr.f32.gmra.mxu0 %v2401
        %v2850 = vpop.f32.mrf.mxu0
        %v2851 = vadd.f32 %v2411, %v2850
        %v2852 = vpop.f32.mrf.mxu0
        %v2853 = vadd.f32 %v2415, %v2852
        %2854 = vmatprep.mubr.f32.mxu0 %v2404
        %2855 = vmatmul.mubr.f32.gmra.mxu0 %v2403
        %v2856 = vpop.f32.mrf.mxu0
        %v2857 = vadd.f32 %v2411, %v2856
        %v2858 = vpop.f32.mrf.mxu0
        %v2859 = vadd.f32 %v2415, %v2858
        %2860 = vmatprep.mubr.f32.mxu0 %v2406
        %2861 = vmatmul.mubr.f32.gmra.mxu0 %v2405
        %v2862 = vpop.f32.mrf.mxu0
        %v2863 = vadd.f32 %v2411, %v2862
        %v2864 = vpop.f32.mrf.mxu0
        %v2865 = vadd.f32 %v2415, %v2864
        %2866 = vdwg.mxu0
        %v2867 = vmax.f32 %v2485, 0.0
        %v2868 = vmax.f32 %v2487, 0.0
        %v2869 = vmax.f32 %v2491, 0.0
        %v2870 = vmax.f32 %v2493, 0.0
        %v2871 = vmax.f32 %v2497, 0.0
        %v2872 = vmax.f32 %v2499, 0.0
        %v2873 = vmax.f32 %v2503, 0.0
        %v2874 = vmax.f32 %v2505, 0.0
        %v2875 = vmax.f32 %v2509, 0.0
        %v2876 = vmax.f32 %v2511, 0.0
        %v2877 = vmax.f32 %v2515, 0.0
        %v2878 = vmax.f32 %v2517, 0.0
        %v2879 = vmax.f32 %v2521, 0.0
        %v2880 = vmax.f32 %v2523, 0.0
        %v2881 = vmax.f32 %v2527, 0.0
        %v2882 = vmax.f32 %v2529, 0.0
        %v2883 = vmax.f32 %v2533, 0.0
        %v2884 = vmax.f32 %v2535, 0.0
        %v2885 = vmax.f32 %v2539, 0.0
        %v2886 = vmax.f32 %v2541, 0.0
        %v2887 = vmax.f32 %v2545, 0.0
        %v2888 = vmax.f32 %v2547, 0.0
        %v2889 = vmax.f32 %v2551, 0.0
        %v2890 = vmax.f32 %v2553, 0.0
        %v2891 = vmax.f32 %v2557, 0.0
        %v2892 = vmax.f32 %v2559, 0.0
        %v2893 = vmax.f32 %v2563, 0.0
        %v2894 = vmax.f32 %v2565, 0.0
        %v2895 = vmax.f32 %v2569, 0.0
        %v2896 = vmax.f32 %v2571, 0.0
        %v2897 = vmax.f32 %v2575, 0.0
        %v2898 = vmax.f32 %v2577, 0.0
        %v2899 = vmax.f32 %v2581, 0.0
        %v2900 = vmax.f32 %v2583, 0.0
        %v2901 = vmax.f32 %v2587, 0.0
        %v2902 = vmax.f32 %v2589, 0.0
        %v2903 = vmax.f32 %v2593, 0.0
        %v2904 = vmax.f32 %v2595, 0.0
        %v2905 = vmax.f32 %v2599, 0.0
        %v2906 = vmax.f32 %v2601, 0.0
        %v2907 = vmax.f32 %v2605, 0.0
        %v2908 = vmax.f32 %v2607, 0.0
        %v2909 = vmax.f32 %v2611, 0.0
        %v2910 = vmax.f32 %v2613, 0.0
        %v2911 = vmax.f32 %v2617, 0.0
        %v2912 = vmax.f32 %v2619, 0.0
        %v2913 = vmax.f32 %v2623, 0.0
        %v2914 = vmax.f32 %v2625, 0.0
        %v2915 = vmax.f32 %v2629, 0.0
        %v2916 = vmax.f32 %v2631, 0.0
        %v2917 = vmax.f32 %v2635, 0.0
        %v2918 = vmax.f32 %v2637, 0.0
        %v2919 = vmax.f32 %v2641, 0.0
        %v2920 = vmax.f32 %v2643, 0.0
        %v2921 = vmax.f32 %v2647, 0.0
        %v2922 = vmax.f32 %v2649, 0.0
        %v2923 = vmax.f32 %v2653, 0.0
        %v2924 = vmax.f32 %v2655, 0.0
        %v2925 = vmax.f32 %v2659, 0.0
        %v2926 = vmax.f32 %v2661, 0.0
        %v2927 = vmax.f32 %v2665, 0.0
        %v2928 = vmax.f32 %v2667, 0.0
        %v2929 = vmax.f32 %v2671, 0.0
        %v2930 = vmax.f32 %v2673, 0.0
        %v2931 = vmax.f32 %v2677, 0.0
        %v2932 = vmax.f32 %v2679, 0.0
        %v2933 = vmax.f32 %v2683, 0.0
        %v2934 = vmax.f32 %v2685, 0.0
        %v2935 = vmax.f32 %v2689, 0.0
        %v2936 = vmax.f32 %v2691, 0.0
        %v2937 = vmax.f32 %v2695, 0.0
        %v2938 = vmax.f32 %v2697, 0.0
        %v2939 = vmax.f32 %v2701, 0.0
        %v2940 = vmax.f32 %v2703, 0.0
        %v2941 = vmax.f32 %v2707, 0.0
        %v2942 = vmax.f32 %v2709, 0.0
        %v2943 = vmax.f32 %v2713, 0.0
        %v2944 = vmax.f32 %v2715, 0.0
        %v2945 = vmax.f32 %v2719, 0.0
        %v2946 = vmax.f32 %v2721, 0.0
        %v2947 = vmax.f32 %v2725, 0.0
        %v2948 = vmax.f32 %v2727, 0.0
        %v2949 = vmax.f32 %v2731, 0.0
        %v2950 = vmax.f32 %v2733, 0.0
        %v2951 = vmax.f32 %v2737, 0.0
        %v2952 = vmax.f32 %v2739, 0.0
        %v2953 = vmax.f32 %v2743, 0.0
        %v2954 = vmax.f32 %v2745, 0.0
        %v2955 = vmax.f32 %v2749, 0.0
        %v2956 = vmax.f32 %v2751, 0.0
        %v2957 = vmax.f32 %v2755, 0.0
        %v2958 = vmax.f32 %v2757, 0.0
        %v2959 = vmax.f32 %v2761, 0.0
        %v2960 = vmax.f32 %v2763, 0.0
        %v2961 = vmax.f32 %v2767, 0.0
        %v2962 = vmax.f32 %v2769, 0.0
        %v2963 = vmax.f32 %v2773, 0.0
        %v2964 = vmax.f32 %v2775, 0.0
        %v2965 = vmax.f32 %v2779, 0.0
        %v2966 = vmax.f32 %v2781, 0.0
        %v2967 = vmax.f32 %v2785, 0.0
        %v2968 = vmax.f32 %v2787, 0.0
        %v2969 = vmax.f32 %v2791, 0.0
        %v2970 = vmax.f32 %v2793, 0.0
        %v2971 = vmax.f32 %v2797, 0.0
        %v2972 = vmax.f32 %v2799, 0.0
        %v2973 = vmax.f32 %v2803, 0.0
        %v2974 = vmax.f32 %v2805, 0.0
        %v2975 = vmax.f32 %v2809, 0.0
        %v2976 = vmax.f32 %v2811, 0.0
        %v2977 = vmax.f32 %v2815, 0.0
        %v2978 = vmax.f32 %v2817, 0.0
        %v2979 = vmax.f32 %v2821, 0.0
        %v2980 = vmax.f32 %v2823, 0.0
        %v2981 = vmax.f32 %v2827, 0.0
        %v2982 = vmax.f32 %v2829, 0.0
        %v2983 = vmax.f32 %v2833, 0.0
        %v2984 = vmax.f32 %v2835, 0.0
        %v2985 = vmax.f32 %v2839, 0.0
        %v2986 = vmax.f32 %v2841, 0.0
        %v2987 = vmax.f32 %v2845, 0.0
        %v2988 = vmax.f32 %v2847, 0.0
        %v2989 = vmax.f32 %v2851, 0.0
        %v2990 = vmax.f32 %v2853, 0.0
        %v2991 = vmax.f32 %v2857, 0.0
        %v2992 = vmax.f32 %v2859, 0.0
        %v2993 = vmax.f32 %v2863, 0.0
        %v2994 = vmax.f32 %v2865, 0.0
        %v2996 = vlaneseq
        %v2997 = vshrl.u32 %v2996, 7
        %v2998 = vsub.s32 0, %v2997
        %v2999 = vrot.slane %v1140, %v2998
        %v3000 = vlaneseq
        %v3001 = vshrl.u32 %v3000, 7
        %v3002 = vsub.s32 1, %v3001
        %v3003 = vrot.slane %v1140, %v3002
        %3006 = vmatprep.subr.mxu0 %v1106
        %3007 = vmatpush1.msra.mxu0 %v1105
        %3008 = vmatprep.subr.mxu0 %v1104
        %3009 = vmatpush1.msra.mxu0 %v1103
        %3010 = vmatprep.subr.mxu0 %v1102
        %3011 = vmatpush1.msra.mxu0 %v1101
        %3012 = vmatprep.subr.mxu0 %v1100
        %3013 = vmatpush1.msra.mxu0 %v1099
        %3014 = vmatprep.subr.mxu0 %v1098
        %3015 = vmatpush1.msra.mxu0 %v1097
        %3016 = vmatprep.subr.mxu0 %v1096
        %3017 = vmatpush1.msra.mxu0 %v1095
        %3018 = vmatprep.subr.mxu0 %v1094
        %3019 = vmatpush1.msra.mxu0 %v1093
        %3020 = vmatprep.subr.mxu0 %v1092
        %3021 = vmatpush1.msra.mxu0 %v1091
        %3022 = vmatprep.subr.mxu0 %v1090
        %3023 = vmatpush1.msra.mxu0 %v1089
        %3024 = vmatprep.subr.mxu0 %v1088
        %3025 = vmatpush1.msra.mxu0 %v1087
        %3026 = vmatprep.subr.mxu0 %v1086
        %3027 = vmatpush1.msra.mxu0 %v1085
        %3028 = vmatprep.subr.mxu0 %v1084
        %3029 = vmatpush1.msra.mxu0 %v1083
        %3030 = vmatprep.subr.mxu0 %v1082
        %3031 = vmatpush1.msra.mxu0 %v1081
        %3032 = vmatprep.subr.mxu0 %v1080
        %3033 = vmatpush1.msra.mxu0 %v1079
        %3034 = vmatprep.subr.mxu0 %v1078
        %3035 = vmatpush1.msra.mxu0 %v1077
        %3036 = vmatprep.subr.mxu0 %v1076
        %3037 = vmatpush1.msra.mxu0 %v1075
        %3038 = vmatprep.subr.mxu0 %v1138
        %3039 = vmatpush2.msra.mxu0 %v1137
        %3040 = vmatprep.subr.mxu0 %v1136
        %3041 = vmatpush2.msra.mxu0 %v1135
        %3042 = vmatprep.subr.mxu0 %v1134
        %3043 = vmatpush2.msra.mxu0 %v1133
        %3044 = vmatprep.subr.mxu0 %v1132
        %3045 = vmatpush2.msra.mxu0 %v1131
        %3046 = vmatprep.subr.mxu0 %v1130
        %3047 = vmatpush2.msra.mxu0 %v1129
        %3048 = vmatprep.subr.mxu0 %v1128
        %3049 = vmatpush2.msra.mxu0 %v1127
        %3050 = vmatprep.subr.mxu0 %v1126
        %3051 = vmatpush2.msra.mxu0 %v1125
        %3052 = vmatprep.subr.mxu0 %v1124
        %3053 = vmatpush2.msra.mxu0 %v1123
        %3054 = vmatprep.subr.mxu0 %v1122
        %3055 = vmatpush2.msra.mxu0 %v1121
        %3056 = vmatprep.subr.mxu0 %v1120
        %3057 = vmatpush2.msra.mxu0 %v1119
        %3058 = vmatprep.subr.mxu0 %v1118
        %3059 = vmatpush2.msra.mxu0 %v1117
        %3060 = vmatprep.subr.mxu0 %v1116
        %3061 = vmatpush2.msra.mxu0 %v1115
        %3062 = vmatprep.subr.mxu0 %v1114
        %3063 = vmatpush2.msra.mxu0 %v1113
        %3064 = vmatprep.subr.mxu0 %v1112
        %3065 = vmatpush2.msra.mxu0 %v1111
        %3066 = vmatprep.subr.mxu0 %v1110
        %3067 = vmatpush2.msra.mxu0 %v1109
        %3068 = vmatprep.subr.mxu0 %v1108
        %3069 = vmatpush2.msra.mxu0 %v1107
        %3070 = vmatprep.mubr.f32.mxu0 %v2868
        %3071 = vmatmul.mubr.f32.gmra.mxu0 %v2867
        %v3072 = vpop.f32.mrf.mxu0
        %v3073 = vadd.f32 %v2999, %v3072
        %v3074 = vpop.f32.mrf.mxu0
        %v3075 = vadd.f32 %v3003, %v3074
        %3076 = vmatprep.mubr.f32.mxu0 %v2870
        %3077 = vmatmul.mubr.f32.gmra.mxu0 %v2869
        %v3078 = vpop.f32.mrf.mxu0
        %v3079 = vadd.f32 %v2999, %v3078
        %v3080 = vpop.f32.mrf.mxu0
        %v3081 = vadd.f32 %v3003, %v3080
        %3082 = vmatprep.mubr.f32.mxu0 %v2872
        %3083 = vmatmul.mubr.f32.gmra.mxu0 %v2871
        %v3084 = vpop.f32.mrf.mxu0
        %v3085 = vadd.f32 %v2999, %v3084
        %v3086 = vpop.f32.mrf.mxu0
        %v3087 = vadd.f32 %v3003, %v3086
        %3088 = vmatprep.mubr.f32.mxu0 %v2874
        %3089 = vmatmul.mubr.f32.gmra.mxu0 %v2873
        %v3090 = vpop.f32.mrf.mxu0
        %v3091 = vadd.f32 %v2999, %v3090
        %v3092 = vpop.f32.mrf.mxu0
        %v3093 = vadd.f32 %v3003, %v3092
        %3094 = vmatprep.mubr.f32.mxu0 %v2876
        %3095 = vmatmul.mubr.f32.gmra.mxu0 %v2875
        %v3096 = vpop.f32.mrf.mxu0
        %v3097 = vadd.f32 %v2999, %v3096
        %v3098 = vpop.f32.mrf.mxu0
        %v3099 = vadd.f32 %v3003, %v3098
        %3100 = vmatprep.mubr.f32.mxu0 %v2878
        %3101 = vmatmul.mubr.f32.gmra.mxu0 %v2877
        %v3102 = vpop.f32.mrf.mxu0
        %v3103 = vadd.f32 %v2999, %v3102
        %v3104 = vpop.f32.mrf.mxu0
        %v3105 = vadd.f32 %v3003, %v3104
        %3106 = vmatprep.mubr.f32.mxu0 %v2880
        %3107 = vmatmul.mubr.f32.gmra.mxu0 %v2879
        %v3108 = vpop.f32.mrf.mxu0
        %v3109 = vadd.f32 %v2999, %v3108
        %v3110 = vpop.f32.mrf.mxu0
        %v3111 = vadd.f32 %v3003, %v3110
        %3112 = vmatprep.mubr.f32.mxu0 %v2882
        %3113 = vmatmul.mubr.f32.gmra.mxu0 %v2881
        %v3114 = vpop.f32.mrf.mxu0
        %v3115 = vadd.f32 %v2999, %v3114
        %v3116 = vpop.f32.mrf.mxu0
        %v3117 = vadd.f32 %v3003, %v3116
        %3118 = vmatprep.mubr.f32.mxu0 %v2884
        %3119 = vmatmul.mubr.f32.gmra.mxu0 %v2883
        %v3120 = vpop.f32.mrf.mxu0
        %v3121 = vadd.f32 %v2999, %v3120
        %v3122 = vpop.f32.mrf.mxu0
        %v3123 = vadd.f32 %v3003, %v3122
        %3124 = vmatprep.mubr.f32.mxu0 %v2886
        %3125 = vmatmul.mubr.f32.gmra.mxu0 %v2885
        %v3126 = vpop.f32.mrf.mxu0
        %v3127 = vadd.f32 %v2999, %v3126
        %v3128 = vpop.f32.mrf.mxu0
        %v3129 = vadd.f32 %v3003, %v3128
        %3130 = vmatprep.mubr.f32.mxu0 %v2888
        %3131 = vmatmul.mubr.f32.gmra.mxu0 %v2887
        %v3132 = vpop.f32.mrf.mxu0
        %v3133 = vadd.f32 %v2999, %v3132
        %v3134 = vpop.f32.mrf.mxu0
        %v3135 = vadd.f32 %v3003, %v3134
        %3136 = vmatprep.mubr.f32.mxu0 %v2890
        %3137 = vmatmul.mubr.f32.gmra.mxu0 %v2889
        %v3138 = vpop.f32.mrf.mxu0
        %v3139 = vadd.f32 %v2999, %v3138
        %v3140 = vpop.f32.mrf.mxu0
        %v3141 = vadd.f32 %v3003, %v3140
        %3142 = vmatprep.mubr.f32.mxu0 %v2892
        %3143 = vmatmul.mubr.f32.gmra.mxu0 %v2891
        %v3144 = vpop.f32.mrf.mxu0
        %v3145 = vadd.f32 %v2999, %v3144
        %v3146 = vpop.f32.mrf.mxu0
        %v3147 = vadd.f32 %v3003, %v3146
        %3148 = vmatprep.mubr.f32.mxu0 %v2894
        %3149 = vmatmul.mubr.f32.gmra.mxu0 %v2893
        %v3150 = vpop.f32.mrf.mxu0
        %v3151 = vadd.f32 %v2999, %v3150
        %v3152 = vpop.f32.mrf.mxu0
        %v3153 = vadd.f32 %v3003, %v3152
        %3154 = vmatprep.mubr.f32.mxu0 %v2896
        %3155 = vmatmul.mubr.f32.gmra.mxu0 %v2895
        %v3156 = vpop.f32.mrf.mxu0
        %v3157 = vadd.f32 %v2999, %v3156
        %v3158 = vpop.f32.mrf.mxu0
        %v3159 = vadd.f32 %v3003, %v3158
        %3160 = vmatprep.mubr.f32.mxu0 %v2898
        %3161 = vmatmul.mubr.f32.gmra.mxu0 %v2897
        %v3162 = vpop.f32.mrf.mxu0
        %v3163 = vadd.f32 %v2999, %v3162
        %v3164 = vpop.f32.mrf.mxu0
        %v3165 = vadd.f32 %v3003, %v3164
        %3166 = vmatprep.mubr.f32.mxu0 %v2900
        %3167 = vmatmul.mubr.f32.gmra.mxu0 %v2899
        %v3168 = vpop.f32.mrf.mxu0
        %v3169 = vadd.f32 %v2999, %v3168
        %v3170 = vpop.f32.mrf.mxu0
        %v3171 = vadd.f32 %v3003, %v3170
        %3172 = vmatprep.mubr.f32.mxu0 %v2902
        %3173 = vmatmul.mubr.f32.gmra.mxu0 %v2901
        %v3174 = vpop.f32.mrf.mxu0
        %v3175 = vadd.f32 %v2999, %v3174
        %v3176 = vpop.f32.mrf.mxu0
        %v3177 = vadd.f32 %v3003, %v3176
        %3178 = vmatprep.mubr.f32.mxu0 %v2904
        %3179 = vmatmul.mubr.f32.gmra.mxu0 %v2903
        %v3180 = vpop.f32.mrf.mxu0
        %v3181 = vadd.f32 %v2999, %v3180
        %v3182 = vpop.f32.mrf.mxu0
        %v3183 = vadd.f32 %v3003, %v3182
        %3184 = vmatprep.mubr.f32.mxu0 %v2906
        %3185 = vmatmul.mubr.f32.gmra.mxu0 %v2905
        %v3186 = vpop.f32.mrf.mxu0
        %v3187 = vadd.f32 %v2999, %v3186
        %v3188 = vpop.f32.mrf.mxu0
        %v3189 = vadd.f32 %v3003, %v3188
        %3190 = vmatprep.mubr.f32.mxu0 %v2908
        %3191 = vmatmul.mubr.f32.gmra.mxu0 %v2907
        %v3192 = vpop.f32.mrf.mxu0
        %v3193 = vadd.f32 %v2999, %v3192
        %v3194 = vpop.f32.mrf.mxu0
        %v3195 = vadd.f32 %v3003, %v3194
        %3196 = vmatprep.mubr.f32.mxu0 %v2910
        %3197 = vmatmul.mubr.f32.gmra.mxu0 %v2909
        %v3198 = vpop.f32.mrf.mxu0
        %v3199 = vadd.f32 %v2999, %v3198
        %v3200 = vpop.f32.mrf.mxu0
        %v3201 = vadd.f32 %v3003, %v3200
        %3202 = vmatprep.mubr.f32.mxu0 %v2912
        %3203 = vmatmul.mubr.f32.gmra.mxu0 %v2911
        %v3204 = vpop.f32.mrf.mxu0
        %v3205 = vadd.f32 %v2999, %v3204
        %v3206 = vpop.f32.mrf.mxu0
        %v3207 = vadd.f32 %v3003, %v3206
        %3208 = vmatprep.mubr.f32.mxu0 %v2914
        %3209 = vmatmul.mubr.f32.gmra.mxu0 %v2913
        %v3210 = vpop.f32.mrf.mxu0
        %v3211 = vadd.f32 %v2999, %v3210
        %v3212 = vpop.f32.mrf.mxu0
        %v3213 = vadd.f32 %v3003, %v3212
        %3214 = vmatprep.mubr.f32.mxu0 %v2916
        %3215 = vmatmul.mubr.f32.gmra.mxu0 %v2915
        %v3216 = vpop.f32.mrf.mxu0
        %v3217 = vadd.f32 %v2999, %v3216
        %v3218 = vpop.f32.mrf.mxu0
        %v3219 = vadd.f32 %v3003, %v3218
        %3220 = vmatprep.mubr.f32.mxu0 %v2918
        %3221 = vmatmul.mubr.f32.gmra.mxu0 %v2917
        %v3222 = vpop.f32.mrf.mxu0
        %v3223 = vadd.f32 %v2999, %v3222
        %v3224 = vpop.f32.mrf.mxu0
        %v3225 = vadd.f32 %v3003, %v3224
        %3226 = vmatprep.mubr.f32.mxu0 %v2920
        %3227 = vmatmul.mubr.f32.gmra.mxu0 %v2919
        %v3228 = vpop.f32.mrf.mxu0
        %v3229 = vadd.f32 %v2999, %v3228
        %v3230 = vpop.f32.mrf.mxu0
        %v3231 = vadd.f32 %v3003, %v3230
        %3232 = vmatprep.mubr.f32.mxu0 %v2922
        %3233 = vmatmul.mubr.f32.gmra.mxu0 %v2921
        %v3234 = vpop.f32.mrf.mxu0
        %v3235 = vadd.f32 %v2999, %v3234
        %v3236 = vpop.f32.mrf.mxu0
        %v3237 = vadd.f32 %v3003, %v3236
        %3238 = vmatprep.mubr.f32.mxu0 %v2924
        %3239 = vmatmul.mubr.f32.gmra.mxu0 %v2923
        %v3240 = vpop.f32.mrf.mxu0
        %v3241 = vadd.f32 %v2999, %v3240
        %v3242 = vpop.f32.mrf.mxu0
        %v3243 = vadd.f32 %v3003, %v3242
        %3244 = vmatprep.mubr.f32.mxu0 %v2926
        %3245 = vmatmul.mubr.f32.gmra.mxu0 %v2925
        %v3246 = vpop.f32.mrf.mxu0
        %v3247 = vadd.f32 %v2999, %v3246
        %v3248 = vpop.f32.mrf.mxu0
        %v3249 = vadd.f32 %v3003, %v3248
        %3250 = vmatprep.mubr.f32.mxu0 %v2928
        %3251 = vmatmul.mubr.f32.gmra.mxu0 %v2927
        %v3252 = vpop.f32.mrf.mxu0
        %v3253 = vadd.f32 %v2999, %v3252
        %v3254 = vpop.f32.mrf.mxu0
        %v3255 = vadd.f32 %v3003, %v3254
        %3256 = vmatprep.mubr.f32.mxu0 %v2930
        %3257 = vmatmul.mubr.f32.gmra.mxu0 %v2929
        %v3258 = vpop.f32.mrf.mxu0
        %v3259 = vadd.f32 %v2999, %v3258
        %v3260 = vpop.f32.mrf.mxu0
        %v3261 = vadd.f32 %v3003, %v3260
        %3262 = vmatprep.mubr.f32.mxu0 %v2932
        %3263 = vmatmul.mubr.f32.gmra.mxu0 %v2931
        %v3264 = vpop.f32.mrf.mxu0
        %v3265 = vadd.f32 %v2999, %v3264
        %v3266 = vpop.f32.mrf.mxu0
        %v3267 = vadd.f32 %v3003, %v3266
        %3268 = vmatprep.mubr.f32.mxu0 %v2934
        %3269 = vmatmul.mubr.f32.gmra.mxu0 %v2933
        %v3270 = vpop.f32.mrf.mxu0
        %v3271 = vadd.f32 %v2999, %v3270
        %v3272 = vpop.f32.mrf.mxu0
        %v3273 = vadd.f32 %v3003, %v3272
        %3274 = vmatprep.mubr.f32.mxu0 %v2936
        %3275 = vmatmul.mubr.f32.gmra.mxu0 %v2935
        %v3276 = vpop.f32.mrf.mxu0
        %v3277 = vadd.f32 %v2999, %v3276
        %v3278 = vpop.f32.mrf.mxu0
        %v3279 = vadd.f32 %v3003, %v3278
        %3280 = vmatprep.mubr.f32.mxu0 %v2938
        %3281 = vmatmul.mubr.f32.gmra.mxu0 %v2937
        %v3282 = vpop.f32.mrf.mxu0
        %v3283 = vadd.f32 %v2999, %v3282
        %v3284 = vpop.f32.mrf.mxu0
        %v3285 = vadd.f32 %v3003, %v3284
        %3286 = vmatprep.mubr.f32.mxu0 %v2940
        %3287 = vmatmul.mubr.f32.gmra.mxu0 %v2939
        %v3288 = vpop.f32.mrf.mxu0
        %v3289 = vadd.f32 %v2999, %v3288
        %v3290 = vpop.f32.mrf.mxu0
        %v3291 = vadd.f32 %v3003, %v3290
        %3292 = vmatprep.mubr.f32.mxu0 %v2942
        %3293 = vmatmul.mubr.f32.gmra.mxu0 %v2941
        %v3294 = vpop.f32.mrf.mxu0
        %v3295 = vadd.f32 %v2999, %v3294
        %v3296 = vpop.f32.mrf.mxu0
        %v3297 = vadd.f32 %v3003, %v3296
        %3298 = vmatprep.mubr.f32.mxu0 %v2944
        %3299 = vmatmul.mubr.f32.gmra.mxu0 %v2943
        %v3300 = vpop.f32.mrf.mxu0
        %v3301 = vadd.f32 %v2999, %v3300
        %v3302 = vpop.f32.mrf.mxu0
        %v3303 = vadd.f32 %v3003, %v3302
        %3304 = vmatprep.mubr.f32.mxu0 %v2946
        %3305 = vmatmul.mubr.f32.gmra.mxu0 %v2945
        %v3306 = vpop.f32.mrf.mxu0
        %v3307 = vadd.f32 %v2999, %v3306
        %v3308 = vpop.f32.mrf.mxu0
        %v3309 = vadd.f32 %v3003, %v3308
        %3310 = vmatprep.mubr.f32.mxu0 %v2948
        %3311 = vmatmul.mubr.f32.gmra.mxu0 %v2947
        %v3312 = vpop.f32.mrf.mxu0
        %v3313 = vadd.f32 %v2999, %v3312
        %v3314 = vpop.f32.mrf.mxu0
        %v3315 = vadd.f32 %v3003, %v3314
        %3316 = vmatprep.mubr.f32.mxu0 %v2950
        %3317 = vmatmul.mubr.f32.gmra.mxu0 %v2949
        %v3318 = vpop.f32.mrf.mxu0
        %v3319 = vadd.f32 %v2999, %v3318
        %v3320 = vpop.f32.mrf.mxu0
        %v3321 = vadd.f32 %v3003, %v3320
        %3322 = vmatprep.mubr.f32.mxu0 %v2952
        %3323 = vmatmul.mubr.f32.gmra.mxu0 %v2951
        %v3324 = vpop.f32.mrf.mxu0
        %v3325 = vadd.f32 %v2999, %v3324
        %v3326 = vpop.f32.mrf.mxu0
        %v3327 = vadd.f32 %v3003, %v3326
        %3328 = vmatprep.mubr.f32.mxu0 %v2954
        %3329 = vmatmul.mubr.f32.gmra.mxu0 %v2953
        %v3330 = vpop.f32.mrf.mxu0
        %v3331 = vadd.f32 %v2999, %v3330
        %v3332 = vpop.f32.mrf.mxu0
        %v3333 = vadd.f32 %v3003, %v3332
        %3334 = vmatprep.mubr.f32.mxu0 %v2956
        %3335 = vmatmul.mubr.f32.gmra.mxu0 %v2955
        %v3336 = vpop.f32.mrf.mxu0
        %v3337 = vadd.f32 %v2999, %v3336
        %v3338 = vpop.f32.mrf.mxu0
        %v3339 = vadd.f32 %v3003, %v3338
        %3340 = vmatprep.mubr.f32.mxu0 %v2958
        %3341 = vmatmul.mubr.f32.gmra.mxu0 %v2957
        %v3342 = vpop.f32.mrf.mxu0
        %v3343 = vadd.f32 %v2999, %v3342
        %v3344 = vpop.f32.mrf.mxu0
        %v3345 = vadd.f32 %v3003, %v3344
        %3346 = vmatprep.mubr.f32.mxu0 %v2960
        %3347 = vmatmul.mubr.f32.gmra.mxu0 %v2959
        %v3348 = vpop.f32.mrf.mxu0
        %v3349 = vadd.f32 %v2999, %v3348
        %v3350 = vpop.f32.mrf.mxu0
        %v3351 = vadd.f32 %v3003, %v3350
        %3352 = vmatprep.mubr.f32.mxu0 %v2962
        %3353 = vmatmul.mubr.f32.gmra.mxu0 %v2961
        %v3354 = vpop.f32.mrf.mxu0
        %v3355 = vadd.f32 %v2999, %v3354
        %v3356 = vpop.f32.mrf.mxu0
        %v3357 = vadd.f32 %v3003, %v3356
        %3358 = vmatprep.mubr.f32.mxu0 %v2964
        %3359 = vmatmul.mubr.f32.gmra.mxu0 %v2963
        %v3360 = vpop.f32.mrf.mxu0
        %v3361 = vadd.f32 %v2999, %v3360
        %v3362 = vpop.f32.mrf.mxu0
        %v3363 = vadd.f32 %v3003, %v3362
        %3364 = vmatprep.mubr.f32.mxu0 %v2966
        %3365 = vmatmul.mubr.f32.gmra.mxu0 %v2965
        %v3366 = vpop.f32.mrf.mxu0
        %v3367 = vadd.f32 %v2999, %v3366
        %v3368 = vpop.f32.mrf.mxu0
        %v3369 = vadd.f32 %v3003, %v3368
        %3370 = vmatprep.mubr.f32.mxu0 %v2968
        %3371 = vmatmul.mubr.f32.gmra.mxu0 %v2967
        %v3372 = vpop.f32.mrf.mxu0
        %v3373 = vadd.f32 %v2999, %v3372
        %v3374 = vpop.f32.mrf.mxu0
        %v3375 = vadd.f32 %v3003, %v3374
        %3376 = vmatprep.mubr.f32.mxu0 %v2970
        %3377 = vmatmul.mubr.f32.gmra.mxu0 %v2969
        %v3378 = vpop.f32.mrf.mxu0
        %v3379 = vadd.f32 %v2999, %v3378
        %v3380 = vpop.f32.mrf.mxu0
        %v3381 = vadd.f32 %v3003, %v3380
        %3382 = vmatprep.mubr.f32.mxu0 %v2972
        %3383 = vmatmul.mubr.f32.gmra.mxu0 %v2971
        %v3384 = vpop.f32.mrf.mxu0
        %v3385 = vadd.f32 %v2999, %v3384
        %v3386 = vpop.f32.mrf.mxu0
        %v3387 = vadd.f32 %v3003, %v3386
        %3388 = vmatprep.mubr.f32.mxu0 %v2974
        %3389 = vmatmul.mubr.f32.gmra.mxu0 %v2973
        %v3390 = vpop.f32.mrf.mxu0
        %v3391 = vadd.f32 %v2999, %v3390
        %v3392 = vpop.f32.mrf.mxu0
        %v3393 = vadd.f32 %v3003, %v3392
        %3394 = vmatprep.mubr.f32.mxu0 %v2976
        %3395 = vmatmul.mubr.f32.gmra.mxu0 %v2975
        %v3396 = vpop.f32.mrf.mxu0
        %v3397 = vadd.f32 %v2999, %v3396
        %v3398 = vpop.f32.mrf.mxu0
        %v3399 = vadd.f32 %v3003, %v3398
        %3400 = vmatprep.mubr.f32.mxu0 %v2978
        %3401 = vmatmul.mubr.f32.gmra.mxu0 %v2977
        %v3402 = vpop.f32.mrf.mxu0
        %v3403 = vadd.f32 %v2999, %v3402
        %v3404 = vpop.f32.mrf.mxu0
        %v3405 = vadd.f32 %v3003, %v3404
        %3406 = vmatprep.mubr.f32.mxu0 %v2980
        %3407 = vmatmul.mubr.f32.gmra.mxu0 %v2979
        %v3408 = vpop.f32.mrf.mxu0
        %v3409 = vadd.f32 %v2999, %v3408
        %v3410 = vpop.f32.mrf.mxu0
        %v3411 = vadd.f32 %v3003, %v3410
        %3412 = vmatprep.mubr.f32.mxu0 %v2982
        %3413 = vmatmul.mubr.f32.gmra.mxu0 %v2981
        %v3414 = vpop.f32.mrf.mxu0
        %v3415 = vadd.f32 %v2999, %v3414
        %v3416 = vpop.f32.mrf.mxu0
        %v3417 = vadd.f32 %v3003, %v3416
        %3418 = vmatprep.mubr.f32.mxu0 %v2984
        %3419 = vmatmul.mubr.f32.gmra.mxu0 %v2983
        %v3420 = vpop.f32.mrf.mxu0
        %v3421 = vadd.f32 %v2999, %v3420
        %v3422 = vpop.f32.mrf.mxu0
        %v3423 = vadd.f32 %v3003, %v3422
        %3424 = vmatprep.mubr.f32.mxu0 %v2986
        %3425 = vmatmul.mubr.f32.gmra.mxu0 %v2985
        %v3426 = vpop.f32.mrf.mxu0
        %v3427 = vadd.f32 %v2999, %v3426
        %v3428 = vpop.f32.mrf.mxu0
        %v3429 = vadd.f32 %v3003, %v3428
        %3430 = vmatprep.mubr.f32.mxu0 %v2988
        %3431 = vmatmul.mubr.f32.gmra.mxu0 %v2987
        %v3432 = vpop.f32.mrf.mxu0
        %v3433 = vadd.f32 %v2999, %v3432
        %v3434 = vpop.f32.mrf.mxu0
        %v3435 = vadd.f32 %v3003, %v3434
        %3436 = vmatprep.mubr.f32.mxu0 %v2990
        %3437 = vmatmul.mubr.f32.gmra.mxu0 %v2989
        %v3438 = vpop.f32.mrf.mxu0
        %v3439 = vadd.f32 %v2999, %v3438
        %v3440 = vpop.f32.mrf.mxu0
        %v3441 = vadd.f32 %v3003, %v3440
        %3442 = vmatprep.mubr.f32.mxu0 %v2992
        %3443 = vmatmul.mubr.f32.gmra.mxu0 %v2991
        %v3444 = vpop.f32.mrf.mxu0
        %v3445 = vadd.f32 %v2999, %v3444
        %v3446 = vpop.f32.mrf.mxu0
        %v3447 = vadd.f32 %v3003, %v3446
        %3448 = vmatprep.mubr.f32.mxu0 %v2994
        %3449 = vmatmul.mubr.f32.gmra.mxu0 %v2993
        %v3450 = vpop.f32.mrf.mxu0
        %v3451 = vadd.f32 %v2999, %v3450
        %v3452 = vpop.f32.mrf.mxu0
        %v3453 = vadd.f32 %v3003, %v3452
        %3454 = vdwg.mxu0
        %v3455 = vmax.f32 %v3073, 0.0
        %v3456 = vmax.f32 %v3075, 0.0
        %v3457 = vmax.f32 %v3079, 0.0
        %v3458 = vmax.f32 %v3081, 0.0
        %v3459 = vmax.f32 %v3085, 0.0
        %v3460 = vmax.f32 %v3087, 0.0
        %v3461 = vmax.f32 %v3091, 0.0
        %v3462 = vmax.f32 %v3093, 0.0
        %v3463 = vmax.f32 %v3097, 0.0
        %v3464 = vmax.f32 %v3099, 0.0
        %v3465 = vmax.f32 %v3103, 0.0
        %v3466 = vmax.f32 %v3105, 0.0
        %v3467 = vmax.f32 %v3109, 0.0
        %v3468 = vmax.f32 %v3111, 0.0
        %v3469 = vmax.f32 %v3115, 0.0
        %v3470 = vmax.f32 %v3117, 0.0
        %v3471 = vmax.f32 %v3121, 0.0
        %v3472 = vmax.f32 %v3123, 0.0
        %v3473 = vmax.f32 %v3127, 0.0
        %v3474 = vmax.f32 %v3129, 0.0
        %v3475 = vmax.f32 %v3133, 0.0
        %v3476 = vmax.f32 %v3135, 0.0
        %v3477 = vmax.f32 %v3139, 0.0
        %v3478 = vmax.f32 %v3141, 0.0
        %v3479 = vmax.f32 %v3145, 0.0
        %v3480 = vmax.f32 %v3147, 0.0
        %v3481 = vmax.f32 %v3151, 0.0
        %v3482 = vmax.f32 %v3153, 0.0
        %v3483 = vmax.f32 %v3157, 0.0
        %v3484 = vmax.f32 %v3159, 0.0
        %v3485 = vmax.f32 %v3163, 0.0
        %v3486 = vmax.f32 %v3165, 0.0
        %v3487 = vmax.f32 %v3169, 0.0
        %v3488 = vmax.f32 %v3171, 0.0
        %v3489 = vmax.f32 %v3175, 0.0
        %v3490 = vmax.f32 %v3177, 0.0
        %v3491 = vmax.f32 %v3181, 0.0
        %v3492 = vmax.f32 %v3183, 0.0
        %v3493 = vmax.f32 %v3187, 0.0
        %v3494 = vmax.f32 %v3189, 0.0
        %v3495 = vmax.f32 %v3193, 0.0
        %v3496 = vmax.f32 %v3195, 0.0
        %v3497 = vmax.f32 %v3199, 0.0
        %v3498 = vmax.f32 %v3201, 0.0
        %v3499 = vmax.f32 %v3205, 0.0
        %v3500 = vmax.f32 %v3207, 0.0
        %v3501 = vmax.f32 %v3211, 0.0
        %v3502 = vmax.f32 %v3213, 0.0
        %v3503 = vmax.f32 %v3217, 0.0
        %v3504 = vmax.f32 %v3219, 0.0
        %v3505 = vmax.f32 %v3223, 0.0
        %v3506 = vmax.f32 %v3225, 0.0
        %v3507 = vmax.f32 %v3229, 0.0
        %v3508 = vmax.f32 %v3231, 0.0
        %v3509 = vmax.f32 %v3235, 0.0
        %v3510 = vmax.f32 %v3237, 0.0
        %v3511 = vmax.f32 %v3241, 0.0
        %v3512 = vmax.f32 %v3243, 0.0
        %v3513 = vmax.f32 %v3247, 0.0
        %v3514 = vmax.f32 %v3249, 0.0
        %v3515 = vmax.f32 %v3253, 0.0
        %v3516 = vmax.f32 %v3255, 0.0
        %v3517 = vmax.f32 %v3259, 0.0
        %v3518 = vmax.f32 %v3261, 0.0
        %v3519 = vmax.f32 %v3265, 0.0
        %v3520 = vmax.f32 %v3267, 0.0
        %v3521 = vmax.f32 %v3271, 0.0
        %v3522 = vmax.f32 %v3273, 0.0
        %v3523 = vmax.f32 %v3277, 0.0
        %v3524 = vmax.f32 %v3279, 0.0
        %v3525 = vmax.f32 %v3283, 0.0
        %v3526 = vmax.f32 %v3285, 0.0
        %v3527 = vmax.f32 %v3289, 0.0
        %v3528 = vmax.f32 %v3291, 0.0
        %v3529 = vmax.f32 %v3295, 0.0
        %v3530 = vmax.f32 %v3297, 0.0
        %v3531 = vmax.f32 %v3301, 0.0
        %v3532 = vmax.f32 %v3303, 0.0
        %v3533 = vmax.f32 %v3307, 0.0
        %v3534 = vmax.f32 %v3309, 0.0
        %v3535 = vmax.f32 %v3313, 0.0
        %v3536 = vmax.f32 %v3315, 0.0
        %v3537 = vmax.f32 %v3319, 0.0
        %v3538 = vmax.f32 %v3321, 0.0
        %v3539 = vmax.f32 %v3325, 0.0
        %v3540 = vmax.f32 %v3327, 0.0
        %v3541 = vmax.f32 %v3331, 0.0
        %v3542 = vmax.f32 %v3333, 0.0
        %v3543 = vmax.f32 %v3337, 0.0
        %v3544 = vmax.f32 %v3339, 0.0
        %v3545 = vmax.f32 %v3343, 0.0
        %v3546 = vmax.f32 %v3345, 0.0
        %v3547 = vmax.f32 %v3349, 0.0
        %v3548 = vmax.f32 %v3351, 0.0
        %v3549 = vmax.f32 %v3355, 0.0
        %v3550 = vmax.f32 %v3357, 0.0
        %v3551 = vmax.f32 %v3361, 0.0
        %v3552 = vmax.f32 %v3363, 0.0
        %v3553 = vmax.f32 %v3367, 0.0
        %v3554 = vmax.f32 %v3369, 0.0
        %v3555 = vmax.f32 %v3373, 0.0
        %v3556 = vmax.f32 %v3375, 0.0
        %v3557 = vmax.f32 %v3379, 0.0
        %v3558 = vmax.f32 %v3381, 0.0
        %v3559 = vmax.f32 %v3385, 0.0
        %v3560 = vmax.f32 %v3387, 0.0
        %v3561 = vmax.f32 %v3391, 0.0
        %v3562 = vmax.f32 %v3393, 0.0
        %v3563 = vmax.f32 %v3397, 0.0
        %v3564 = vmax.f32 %v3399, 0.0
        %v3565 = vmax.f32 %v3403, 0.0
        %v3566 = vmax.f32 %v3405, 0.0
        %v3567 = vmax.f32 %v3409, 0.0
        %v3568 = vmax.f32 %v3411, 0.0
        %v3569 = vmax.f32 %v3415, 0.0
        %v3570 = vmax.f32 %v3417, 0.0
        %v3571 = vmax.f32 %v3421, 0.0
        %v3572 = vmax.f32 %v3423, 0.0
        %v3573 = vmax.f32 %v3427, 0.0
        %v3574 = vmax.f32 %v3429, 0.0
        %v3575 = vmax.f32 %v3433, 0.0
        %v3576 = vmax.f32 %v3435, 0.0
        %v3577 = vmax.f32 %v3439, 0.0
        %v3578 = vmax.f32 %v3441, 0.0
        %v3579 = vmax.f32 %v3445, 0.0
        %v3580 = vmax.f32 %v3447, 0.0
        %v3581 = vmax.f32 %v3451, 0.0
        %v3582 = vmax.f32 %v3453, 0.0
        %v3584 = vlaneseq
        %v3585 = vshrl.u32 %v3584, 7
        %v3586 = vsub.s32 0, %v3585
        %v3587 = vrot.slane %v1010, %v3586
        %v3588 = vlaneseq
        %v3589 = vshrl.u32 %v3588, 7
        %v3590 = vsub.s32 1, %v3589
        %v3591 = vrot.slane %v1010, %v3590
        %3595 = vset.pattern.permute.xlu0 0
        %3596 = vperm.xlu0 %3595, %v943
        %v3597 = vpop.permute.xlu0 %3596
        %3600 = vset.pattern.permute.xlu0 0
        %3601 = vperm.xlu0 %3600, %v944
        %v3602 = vpop.permute.xlu0 %3601
        %3605 = vset.pattern.permute.xlu0 0
        %3606 = vperm.xlu0 %3605, %v945
        %v3607 = vpop.permute.xlu0 %3606
        %3610 = vset.pattern.permute.xlu0 0
        %3611 = vperm.xlu0 %3610, %v946
        %v3612 = vpop.permute.xlu0 %3611
        %3615 = vset.pattern.permute.xlu0 0
        %3616 = vperm.xlu0 %3615, %v947
        %v3617 = vpop.permute.xlu0 %3616
        %3620 = vset.pattern.permute.xlu0 0
        %3621 = vperm.xlu0 %3620, %v948
        %v3622 = vpop.permute.xlu0 %3621
        %3625 = vset.pattern.permute.xlu0 0
        %3626 = vperm.xlu0 %3625, %v949
        %v3627 = vpop.permute.xlu0 %3626
        %3630 = vset.pattern.permute.xlu0 0
        %3631 = vperm.xlu0 %3630, %v950
        %v3632 = vpop.permute.xlu0 %3631
        %3635 = vset.pattern.permute.xlu0 0
        %3636 = vperm.xlu0 %3635, %v951
        %v3637 = vpop.permute.xlu0 %3636
        %3640 = vset.pattern.permute.xlu0 0
        %3641 = vperm.xlu0 %3640, %v952
        %v3642 = vpop.permute.xlu0 %3641
        %3645 = vset.pattern.permute.xlu0 0
        %3646 = vperm.xlu0 %3645, %v953
        %v3647 = vpop.permute.xlu0 %3646
        %3650 = vset.pattern.permute.xlu0 0
        %3651 = vperm.xlu0 %3650, %v954
        %v3652 = vpop.permute.xlu0 %3651
        %3655 = vset.pattern.permute.xlu0 0
        %3656 = vperm.xlu0 %3655, %v955
        %v3657 = vpop.permute.xlu0 %3656
        %3660 = vset.pattern.permute.xlu0 0
        %3661 = vperm.xlu0 %3660, %v956
        %v3662 = vpop.permute.xlu0 %3661
        %3665 = vset.pattern.permute.xlu0 0
        %3666 = vperm.xlu0 %3665, %v957
        %v3667 = vpop.permute.xlu0 %3666
        %3670 = vset.pattern.permute.xlu0 0
        %3671 = vperm.xlu0 %3670, %v958
        %v3672 = vpop.permute.xlu0 %3671
        %3675 = vset.pattern.permute.xlu0 0
        %3676 = vperm.xlu0 %3675, %v959
        %v3677 = vpop.permute.xlu0 %3676
        %3680 = vset.pattern.permute.xlu0 0
        %3681 = vperm.xlu0 %3680, %v960
        %v3682 = vpop.permute.xlu0 %3681
        %3685 = vset.pattern.permute.xlu0 0
        %3686 = vperm.xlu0 %3685, %v961
        %v3687 = vpop.permute.xlu0 %3686
        %3690 = vset.pattern.permute.xlu0 0
        %3691 = vperm.xlu0 %3690, %v962
        %v3692 = vpop.permute.xlu0 %3691
        %3695 = vset.pattern.permute.xlu0 0
        %3696 = vperm.xlu0 %3695, %v963
        %v3697 = vpop.permute.xlu0 %3696
        %3700 = vset.pattern.permute.xlu0 0
        %3701 = vperm.xlu0 %3700, %v964
        %v3702 = vpop.permute.xlu0 %3701
        %3705 = vset.pattern.permute.xlu0 0
        %3706 = vperm.xlu0 %3705, %v965
        %v3707 = vpop.permute.xlu0 %3706
        %3710 = vset.pattern.permute.xlu0 0
        %3711 = vperm.xlu0 %3710, %v966
        %v3712 = vpop.permute.xlu0 %3711
        %3715 = vset.pattern.permute.xlu0 0
        %3716 = vperm.xlu0 %3715, %v967
        %v3717 = vpop.permute.xlu0 %3716
        %3720 = vset.pattern.permute.xlu0 0
        %3721 = vperm.xlu0 %3720, %v968
        %v3722 = vpop.permute.xlu0 %3721
        %3725 = vset.pattern.permute.xlu0 0
        %3726 = vperm.xlu0 %3725, %v969
        %v3727 = vpop.permute.xlu0 %3726
        %3730 = vset.pattern.permute.xlu0 0
        %3731 = vperm.xlu0 %3730, %v970
        %v3732 = vpop.permute.xlu0 %3731
        %3735 = vset.pattern.permute.xlu0 0
        %3736 = vperm.xlu0 %3735, %v971
        %v3737 = vpop.permute.xlu0 %3736
        %3740 = vset.pattern.permute.xlu0 0
        %3741 = vperm.xlu0 %3740, %v972
        %v3742 = vpop.permute.xlu0 %3741
        %3745 = vset.pattern.permute.xlu0 0
        %3746 = vperm.xlu0 %3745, %v973
        %v3747 = vpop.permute.xlu0 %3746
        %3750 = vset.pattern.permute.xlu0 0
        %3751 = vperm.xlu0 %3750, %v974
        %v3752 = vpop.permute.xlu0 %3751
        %3755 = vset.pattern.permute.xlu0 0
        %3756 = vperm.xlu0 %3755, %v975
        %v3757 = vpop.permute.xlu0 %3756
        %3760 = vset.pattern.permute.xlu0 0
        %3761 = vperm.xlu0 %3760, %v976
        %v3762 = vpop.permute.xlu0 %3761
        %3765 = vset.pattern.permute.xlu0 0
        %3766 = vperm.xlu0 %3765, %v977
        %v3767 = vpop.permute.xlu0 %3766
        %3770 = vset.pattern.permute.xlu0 0
        %3771 = vperm.xlu0 %3770, %v978
        %v3772 = vpop.permute.xlu0 %3771
        %3775 = vset.pattern.permute.xlu0 0
        %3776 = vperm.xlu0 %3775, %v979
        %v3777 = vpop.permute.xlu0 %3776
        %3780 = vset.pattern.permute.xlu0 0
        %3781 = vperm.xlu0 %3780, %v980
        %v3782 = vpop.permute.xlu0 %3781
        %3785 = vset.pattern.permute.xlu0 0
        %3786 = vperm.xlu0 %3785, %v981
        %v3787 = vpop.permute.xlu0 %3786
        %3790 = vset.pattern.permute.xlu0 0
        %3791 = vperm.xlu0 %3790, %v982
        %v3792 = vpop.permute.xlu0 %3791
        %3795 = vset.pattern.permute.xlu0 0
        %3796 = vperm.xlu0 %3795, %v983
        %v3797 = vpop.permute.xlu0 %3796
        %3800 = vset.pattern.permute.xlu0 0
        %3801 = vperm.xlu0 %3800, %v984
        %v3802 = vpop.permute.xlu0 %3801
        %3805 = vset.pattern.permute.xlu0 0
        %3806 = vperm.xlu0 %3805, %v985
        %v3807 = vpop.permute.xlu0 %3806
        %3810 = vset.pattern.permute.xlu0 0
        %3811 = vperm.xlu0 %3810, %v986
        %v3812 = vpop.permute.xlu0 %3811
        %3815 = vset.pattern.permute.xlu0 0
        %3816 = vperm.xlu0 %3815, %v987
        %v3817 = vpop.permute.xlu0 %3816
        %3820 = vset.pattern.permute.xlu0 0
        %3821 = vperm.xlu0 %3820, %v988
        %v3822 = vpop.permute.xlu0 %3821
        %3825 = vset.pattern.permute.xlu0 0
        %3826 = vperm.xlu0 %3825, %v989
        %v3827 = vpop.permute.xlu0 %3826
        %3830 = vset.pattern.permute.xlu0 0
        %3831 = vperm.xlu0 %3830, %v990
        %v3832 = vpop.permute.xlu0 %3831
        %3835 = vset.pattern.permute.xlu0 0
        %3836 = vperm.xlu0 %3835, %v991
        %v3837 = vpop.permute.xlu0 %3836
        %3840 = vset.pattern.permute.xlu0 0
        %3841 = vperm.xlu0 %3840, %v992
        %v3842 = vpop.permute.xlu0 %3841
        %3845 = vset.pattern.permute.xlu0 0
        %3846 = vperm.xlu0 %3845, %v993
        %v3847 = vpop.permute.xlu0 %3846
        %3850 = vset.pattern.permute.xlu0 0
        %3851 = vperm.xlu0 %3850, %v994
        %v3852 = vpop.permute.xlu0 %3851
        %3855 = vset.pattern.permute.xlu0 0
        %3856 = vperm.xlu0 %3855, %v995
        %v3857 = vpop.permute.xlu0 %3856
        %3860 = vset.pattern.permute.xlu0 0
        %3861 = vperm.xlu0 %3860, %v996
        %v3862 = vpop.permute.xlu0 %3861
        %3865 = vset.pattern.permute.xlu0 0
        %3866 = vperm.xlu0 %3865, %v997
        %v3867 = vpop.permute.xlu0 %3866
        %3870 = vset.pattern.permute.xlu0 0
        %3871 = vperm.xlu0 %3870, %v998
        %v3872 = vpop.permute.xlu0 %3871
        %3875 = vset.pattern.permute.xlu0 0
        %3876 = vperm.xlu0 %3875, %v999
        %v3877 = vpop.permute.xlu0 %3876
        %3880 = vset.pattern.permute.xlu0 0
        %3881 = vperm.xlu0 %3880, %v1000
        %v3882 = vpop.permute.xlu0 %3881
        %3885 = vset.pattern.permute.xlu0 0
        %3886 = vperm.xlu0 %3885, %v1001
        %v3887 = vpop.permute.xlu0 %3886
        %3890 = vset.pattern.permute.xlu0 0
        %3891 = vperm.xlu0 %3890, %v1002
        %v3892 = vpop.permute.xlu0 %3891
        %3895 = vset.pattern.permute.xlu0 0
        %3896 = vperm.xlu0 %3895, %v1003
        %v3897 = vpop.permute.xlu0 %3896
        %3900 = vset.pattern.permute.xlu0 0
        %3901 = vperm.xlu0 %3900, %v1004
        %v3902 = vpop.permute.xlu0 %3901
        %3905 = vset.pattern.permute.xlu0 0
        %3906 = vperm.xlu0 %3905, %v1005
        %v3907 = vpop.permute.xlu0 %3906
        %3910 = vset.pattern.permute.xlu0 0
        %3911 = vperm.xlu0 %3910, %v1006
        %v3912 = vpop.permute.xlu0 %3911
        %v3915 = vlaneseq
        %v3916 = vshrl.u32 %v3915, 7
        %v3917 = vsub.s32 0, %v3916
        %v3918 = vrot.slane %v1008, %v3917
        %v3919 = vlaneseq
        %v3920 = vshrl.u32 %v3919, 7
        %v3921 = vsub.s32 2, %v3920
        %v3922 = vrot.slane %v1008, %v3921
        %v3925 = vlaneseq
        %v3926 = vshrl.u32 %v3925, 7
        %v3927 = vsub.s32 0, %v3926
        %v3928 = vrot.slane %v3918, %v3927
        %v3929 = vlaneseq
        %v3930 = vshrl.u32 %v3929, 7
        %v3931 = vsub.s32 0, %v3930
        %v3932 = vrot.slane %v3922, %v3931
        %v3933 = vmul.f32 %v3597, %v3928
        %v3934 = vmul.f32 %v3597, %v3932
        %v3935 = vmul.f32 %v3602, %v3928
        %v3936 = vmul.f32 %v3602, %v3932
        %v3937 = vmul.f32 %v3607, %v3928
        %v3938 = vmul.f32 %v3607, %v3932
        %v3939 = vmul.f32 %v3612, %v3928
        %v3940 = vmul.f32 %v3612, %v3932
        %v3941 = vmul.f32 %v3617, %v3928
        %v3942 = vmul.f32 %v3617, %v3932
        %v3943 = vmul.f32 %v3622, %v3928
        %v3944 = vmul.f32 %v3622, %v3932
        %v3945 = vmul.f32 %v3627, %v3928
        %v3946 = vmul.f32 %v3627, %v3932
        %v3947 = vmul.f32 %v3632, %v3928
        %v3948 = vmul.f32 %v3632, %v3932
        %v3949 = vmul.f32 %v3637, %v3928
        %v3950 = vmul.f32 %v3637, %v3932
        %v3951 = vmul.f32 %v3642, %v3928
        %v3952 = vmul.f32 %v3642, %v3932
        %v3953 = vmul.f32 %v3647, %v3928
        %v3954 = vmul.f32 %v3647, %v3932
        %v3955 = vmul.f32 %v3652, %v3928
        %v3956 = vmul.f32 %v3652, %v3932
        %v3957 = vmul.f32 %v3657, %v3928
        %v3958 = vmul.f32 %v3657, %v3932
        %v3959 = vmul.f32 %v3662, %v3928
        %v3960 = vmul.f32 %v3662, %v3932
        %v3961 = vmul.f32 %v3667, %v3928
        %v3962 = vmul.f32 %v3667, %v3932
        %v3963 = vmul.f32 %v3672, %v3928
        %v3964 = vmul.f32 %v3672, %v3932
        %v3965 = vmul.f32 %v3677, %v3928
        %v3966 = vmul.f32 %v3677, %v3932
        %v3967 = vmul.f32 %v3682, %v3928
        %v3968 = vmul.f32 %v3682, %v3932
        %v3969 = vmul.f32 %v3687, %v3928
        %v3970 = vmul.f32 %v3687, %v3932
        %v3971 = vmul.f32 %v3692, %v3928
        %v3972 = vmul.f32 %v3692, %v3932
        %v3973 = vmul.f32 %v3697, %v3928
        %v3974 = vmul.f32 %v3697, %v3932
        %v3975 = vmul.f32 %v3702, %v3928
        %v3976 = vmul.f32 %v3702, %v3932
        %v3977 = vmul.f32 %v3707, %v3928
        %v3978 = vmul.f32 %v3707, %v3932
        %v3979 = vmul.f32 %v3712, %v3928
        %v3980 = vmul.f32 %v3712, %v3932
        %v3981 = vmul.f32 %v3717, %v3928
        %v3982 = vmul.f32 %v3717, %v3932
        %v3983 = vmul.f32 %v3722, %v3928
        %v3984 = vmul.f32 %v3722, %v3932
        %v3985 = vmul.f32 %v3727, %v3928
        %v3986 = vmul.f32 %v3727, %v3932
        %v3987 = vmul.f32 %v3732, %v3928
        %v3988 = vmul.f32 %v3732, %v3932
        %v3989 = vmul.f32 %v3737, %v3928
        %v3990 = vmul.f32 %v3737, %v3932
        %v3991 = vmul.f32 %v3742, %v3928
        %v3992 = vmul.f32 %v3742, %v3932
        %v3993 = vmul.f32 %v3747, %v3928
        %v3994 = vmul.f32 %v3747, %v3932
        %v3995 = vmul.f32 %v3752, %v3928
        %v3996 = vmul.f32 %v3752, %v3932
        %v3997 = vmul.f32 %v3757, %v3928
        %v3998 = vmul.f32 %v3757, %v3932
        %v3999 = vmul.f32 %v3762, %v3928
        %v4000 = vmul.f32 %v3762, %v3932
        %v4001 = vmul.f32 %v3767, %v3928
        %v4002 = vmul.f32 %v3767, %v3932
        %v4003 = vmul.f32 %v3772, %v3928
        %v4004 = vmul.f32 %v3772, %v3932
        %v4005 = vmul.f32 %v3777, %v3928
        %v4006 = vmul.f32 %v3777, %v3932
        %v4007 = vmul.f32 %v3782, %v3928
        %v4008 = vmul.f32 %v3782, %v3932
        %v4009 = vmul.f32 %v3787, %v3928
        %v4010 = vmul.f32 %v3787, %v3932
        %v4011 = vmul.f32 %v3792, %v3928
        %v4012 = vmul.f32 %v3792, %v3932
        %v4013 = vmul.f32 %v3797, %v3928
        %v4014 = vmul.f32 %v3797, %v3932
        %v4015 = vmul.f32 %v3802, %v3928
        %v4016 = vmul.f32 %v3802, %v3932
        %v4017 = vmul.f32 %v3807, %v3928
        %v4018 = vmul.f32 %v3807, %v3932
        %v4019 = vmul.f32 %v3812, %v3928
        %v4020 = vmul.f32 %v3812, %v3932
        %v4021 = vmul.f32 %v3817, %v3928
        %v4022 = vmul.f32 %v3817, %v3932
        %v4023 = vmul.f32 %v3822, %v3928
        %v4024 = vmul.f32 %v3822, %v3932
        %v4025 = vmul.f32 %v3827, %v3928
        %v4026 = vmul.f32 %v3827, %v3932
        %v4027 = vmul.f32 %v3832, %v3928
        %v4028 = vmul.f32 %v3832, %v3932
        %v4029 = vmul.f32 %v3837, %v3928
        %v4030 = vmul.f32 %v3837, %v3932
        %v4031 = vmul.f32 %v3842, %v3928
        %v4032 = vmul.f32 %v3842, %v3932
        %v4033 = vmul.f32 %v3847, %v3928
        %v4034 = vmul.f32 %v3847, %v3932
        %v4035 = vmul.f32 %v3852, %v3928
        %v4036 = vmul.f32 %v3852, %v3932
        %v4037 = vmul.f32 %v3857, %v3928
        %v4038 = vmul.f32 %v3857, %v3932
        %v4039 = vmul.f32 %v3862, %v3928
        %v4040 = vmul.f32 %v3862, %v3932
        %v4041 = vmul.f32 %v3867, %v3928
        %v4042 = vmul.f32 %v3867, %v3932
        %v4043 = vmul.f32 %v3872, %v3928
        %v4044 = vmul.f32 %v3872, %v3932
        %v4045 = vmul.f32 %v3877, %v3928
        %v4046 = vmul.f32 %v3877, %v3932
        %v4047 = vmul.f32 %v3882, %v3928
        %v4048 = vmul.f32 %v3882, %v3932
        %v4049 = vmul.f32 %v3887, %v3928
        %v4050 = vmul.f32 %v3887, %v3932
        %v4051 = vmul.f32 %v3892, %v3928
        %v4052 = vmul.f32 %v3892, %v3932
        %v4053 = vmul.f32 %v3897, %v3928
        %v4054 = vmul.f32 %v3897, %v3932
        %v4055 = vmul.f32 %v3902, %v3928
        %v4056 = vmul.f32 %v3902, %v3932
        %v4057 = vmul.f32 %v3907, %v3928
        %v4058 = vmul.f32 %v3907, %v3932
        %v4059 = vmul.f32 %v3912, %v3928
        %v4060 = vmul.f32 %v3912, %v3932
        %v4061 = vadd.f32 %v3587, %v3933
        %v4062 = vadd.f32 %v3591, %v3934
        %v4063 = vadd.f32 %v3587, %v3935
        %v4064 = vadd.f32 %v3591, %v3936
        %v4065 = vadd.f32 %v3587, %v3937
        %v4066 = vadd.f32 %v3591, %v3938
        %v4067 = vadd.f32 %v3587, %v3939
        %v4068 = vadd.f32 %v3591, %v3940
        %v4069 = vadd.f32 %v3587, %v3941
        %v4070 = vadd.f32 %v3591, %v3942
        %v4071 = vadd.f32 %v3587, %v3943
        %v4072 = vadd.f32 %v3591, %v3944
        %v4073 = vadd.f32 %v3587, %v3945
        %v4074 = vadd.f32 %v3591, %v3946
        %v4075 = vadd.f32 %v3587, %v3947
        %v4076 = vadd.f32 %v3591, %v3948
        %v4077 = vadd.f32 %v3587, %v3949
        %v4078 = vadd.f32 %v3591, %v3950
        %v4079 = vadd.f32 %v3587, %v3951
        %v4080 = vadd.f32 %v3591, %v3952
        %v4081 = vadd.f32 %v3587, %v3953
        %v4082 = vadd.f32 %v3591, %v3954
        %v4083 = vadd.f32 %v3587, %v3955
        %v4084 = vadd.f32 %v3591, %v3956
        %v4085 = vadd.f32 %v3587, %v3957
        %v4086 = vadd.f32 %v3591, %v3958
        %v4087 = vadd.f32 %v3587, %v3959
        %v4088 = vadd.f32 %v3591, %v3960
        %v4089 = vadd.f32 %v3587, %v3961
        %v4090 = vadd.f32 %v3591, %v3962
        %v4091 = vadd.f32 %v3587, %v3963
        %v4092 = vadd.f32 %v3591, %v3964
        %v4093 = vadd.f32 %v3587, %v3965
        %v4094 = vadd.f32 %v3591, %v3966
        %v4095 = vadd.f32 %v3587, %v3967
        %v4096 = vadd.f32 %v3591, %v3968
        %v4097 = vadd.f32 %v3587, %v3969
        %v4098 = vadd.f32 %v3591, %v3970
        %v4099 = vadd.f32 %v3587, %v3971
        %v4100 = vadd.f32 %v3591, %v3972
        %v4101 = vadd.f32 %v3587, %v3973
        %v4102 = vadd.f32 %v3591, %v3974
        %v4103 = vadd.f32 %v3587, %v3975
        %v4104 = vadd.f32 %v3591, %v3976
        %v4105 = vadd.f32 %v3587, %v3977
        %v4106 = vadd.f32 %v3591, %v3978
        %v4107 = vadd.f32 %v3587, %v3979
        %v4108 = vadd.f32 %v3591, %v3980
        %v4109 = vadd.f32 %v3587, %v3981
        %v4110 = vadd.f32 %v3591, %v3982
        %v4111 = vadd.f32 %v3587, %v3983
        %v4112 = vadd.f32 %v3591, %v3984
        %v4113 = vadd.f32 %v3587, %v3985
        %v4114 = vadd.f32 %v3591, %v3986
        %v4115 = vadd.f32 %v3587, %v3987
        %v4116 = vadd.f32 %v3591, %v3988
        %v4117 = vadd.f32 %v3587, %v3989
        %v4118 = vadd.f32 %v3591, %v3990
        %v4119 = vadd.f32 %v3587, %v3991
        %v4120 = vadd.f32 %v3591, %v3992
        %v4121 = vadd.f32 %v3587, %v3993
        %v4122 = vadd.f32 %v3591, %v3994
        %v4123 = vadd.f32 %v3587, %v3995
        %v4124 = vadd.f32 %v3591, %v3996
        %v4125 = vadd.f32 %v3587, %v3997
        %v4126 = vadd.f32 %v3591, %v3998
        %v4127 = vadd.f32 %v3587, %v3999
        %v4128 = vadd.f32 %v3591, %v4000
        %v4129 = vadd.f32 %v3587, %v4001
        %v4130 = vadd.f32 %v3591, %v4002
        %v4131 = vadd.f32 %v3587, %v4003
        %v4132 = vadd.f32 %v3591, %v4004
        %v4133 = vadd.f32 %v3587, %v4005
        %v4134 = vadd.f32 %v3591, %v4006
        %v4135 = vadd.f32 %v3587, %v4007
        %v4136 = vadd.f32 %v3591, %v4008
        %v4137 = vadd.f32 %v3587, %v4009
        %v4138 = vadd.f32 %v3591, %v4010
        %v4139 = vadd.f32 %v3587, %v4011
        %v4140 = vadd.f32 %v3591, %v4012
        %v4141 = vadd.f32 %v3587, %v4013
        %v4142 = vadd.f32 %v3591, %v4014
        %v4143 = vadd.f32 %v3587, %v4015
        %v4144 = vadd.f32 %v3591, %v4016
        %v4145 = vadd.f32 %v3587, %v4017
        %v4146 = vadd.f32 %v3591, %v4018
        %v4147 = vadd.f32 %v3587, %v4019
        %v4148 = vadd.f32 %v3591, %v4020
        %v4149 = vadd.f32 %v3587, %v4021
        %v4150 = vadd.f32 %v3591, %v4022
        %v4151 = vadd.f32 %v3587, %v4023
        %v4152 = vadd.f32 %v3591, %v4024
        %v4153 = vadd.f32 %v3587, %v4025
        %v4154 = vadd.f32 %v3591, %v4026
        %v4155 = vadd.f32 %v3587, %v4027
        %v4156 = vadd.f32 %v3591, %v4028
        %v4157 = vadd.f32 %v3587, %v4029
        %v4158 = vadd.f32 %v3591, %v4030
        %v4159 = vadd.f32 %v3587, %v4031
        %v4160 = vadd.f32 %v3591, %v4032
        %v4161 = vadd.f32 %v3587, %v4033
        %v4162 = vadd.f32 %v3591, %v4034
        %v4163 = vadd.f32 %v3587, %v4035
        %v4164 = vadd.f32 %v3591, %v4036
        %v4165 = vadd.f32 %v3587, %v4037
        %v4166 = vadd.f32 %v3591, %v4038
        %v4167 = vadd.f32 %v3587, %v4039
        %v4168 = vadd.f32 %v3591, %v4040
        %v4169 = vadd.f32 %v3587, %v4041
        %v4170 = vadd.f32 %v3591, %v4042
        %v4171 = vadd.f32 %v3587, %v4043
        %v4172 = vadd.f32 %v3591, %v4044
        %v4173 = vadd.f32 %v3587, %v4045
        %v4174 = vadd.f32 %v3591, %v4046
        %v4175 = vadd.f32 %v3587, %v4047
        %v4176 = vadd.f32 %v3591, %v4048
        %v4177 = vadd.f32 %v3587, %v4049
        %v4178 = vadd.f32 %v3591, %v4050
        %v4179 = vadd.f32 %v3587, %v4051
        %v4180 = vadd.f32 %v3591, %v4052
        %v4181 = vadd.f32 %v3587, %v4053
        %v4182 = vadd.f32 %v3591, %v4054
        %v4183 = vadd.f32 %v3587, %v4055
        %v4184 = vadd.f32 %v3591, %v4056
        %v4185 = vadd.f32 %v3587, %v4057
        %v4186 = vadd.f32 %v3591, %v4058
        %v4187 = vadd.f32 %v3587, %v4059
        %v4188 = vadd.f32 %v3591, %v4060
        %4189 = vset.pattern.permute.xlu0 1
        %4190 = vperm.xlu0 %4189, %v943
        %v4191 = vpop.permute.xlu0 %4190
        %4193 = vset.pattern.permute.xlu0 1
        %4194 = vperm.xlu0 %4193, %v944
        %v4195 = vpop.permute.xlu0 %4194
        %4197 = vset.pattern.permute.xlu0 1
        %4198 = vperm.xlu0 %4197, %v945
        %v4199 = vpop.permute.xlu0 %4198
        %4201 = vset.pattern.permute.xlu0 1
        %4202 = vperm.xlu0 %4201, %v946
        %v4203 = vpop.permute.xlu0 %4202
        %4205 = vset.pattern.permute.xlu0 1
        %4206 = vperm.xlu0 %4205, %v947
        %v4207 = vpop.permute.xlu0 %4206
        %4209 = vset.pattern.permute.xlu0 1
        %4210 = vperm.xlu0 %4209, %v948
        %v4211 = vpop.permute.xlu0 %4210
        %4213 = vset.pattern.permute.xlu0 1
        %4214 = vperm.xlu0 %4213, %v949
        %v4215 = vpop.permute.xlu0 %4214
        %4217 = vset.pattern.permute.xlu0 1
        %4218 = vperm.xlu0 %4217, %v950
        %v4219 = vpop.permute.xlu0 %4218
        %4221 = vset.pattern.permute.xlu0 1
        %4222 = vperm.xlu0 %4221, %v951
        %v4223 = vpop.permute.xlu0 %4222
        %4225 = vset.pattern.permute.xlu0 1
        %4226 = vperm.xlu0 %4225, %v952
        %v4227 = vpop.permute.xlu0 %4226
        %4229 = vset.pattern.permute.xlu0 1
        %4230 = vperm.xlu0 %4229, %v953
        %v4231 = vpop.permute.xlu0 %4230
        %4233 = vset.pattern.permute.xlu0 1
        %4234 = vperm.xlu0 %4233, %v954
        %v4235 = vpop.permute.xlu0 %4234
        %4237 = vset.pattern.permute.xlu0 1
        %4238 = vperm.xlu0 %4237, %v955
        %v4239 = vpop.permute.xlu0 %4238
        %4241 = vset.pattern.permute.xlu0 1
        %4242 = vperm.xlu0 %4241, %v956
        %v4243 = vpop.permute.xlu0 %4242
        %4245 = vset.pattern.permute.xlu0 1
        %4246 = vperm.xlu0 %4245, %v957
        %v4247 = vpop.permute.xlu0 %4246
        %4249 = vset.pattern.permute.xlu0 1
        %4250 = vperm.xlu0 %4249, %v958
        %v4251 = vpop.permute.xlu0 %4250
        %4253 = vset.pattern.permute.xlu0 1
        %4254 = vperm.xlu0 %4253, %v959
        %v4255 = vpop.permute.xlu0 %4254
        %4257 = vset.pattern.permute.xlu0 1
        %4258 = vperm.xlu0 %4257, %v960
        %v4259 = vpop.permute.xlu0 %4258
        %4261 = vset.pattern.permute.xlu0 1
        %4262 = vperm.xlu0 %4261, %v961
        %v4263 = vpop.permute.xlu0 %4262
        %4265 = vset.pattern.permute.xlu0 1
        %4266 = vperm.xlu0 %4265, %v962
        %v4267 = vpop.permute.xlu0 %4266
        %4269 = vset.pattern.permute.xlu0 1
        %4270 = vperm.xlu0 %4269, %v963
        %v4271 = vpop.permute.xlu0 %4270
        %4273 = vset.pattern.permute.xlu0 1
        %4274 = vperm.xlu0 %4273, %v964
        %v4275 = vpop.permute.xlu0 %4274
        %4277 = vset.pattern.permute.xlu0 1
        %4278 = vperm.xlu0 %4277, %v965
        %v4279 = vpop.permute.xlu0 %4278
        %4281 = vset.pattern.permute.xlu0 1
        %4282 = vperm.xlu0 %4281, %v966
        %v4283 = vpop.permute.xlu0 %4282
        %4285 = vset.pattern.permute.xlu0 1
        %4286 = vperm.xlu0 %4285, %v967
        %v4287 = vpop.permute.xlu0 %4286
        %4289 = vset.pattern.permute.xlu0 1
        %4290 = vperm.xlu0 %4289, %v968
        %v4291 = vpop.permute.xlu0 %4290
        %4293 = vset.pattern.permute.xlu0 1
        %4294 = vperm.xlu0 %4293, %v969
        %v4295 = vpop.permute.xlu0 %4294
        %4297 = vset.pattern.permute.xlu0 1
        %4298 = vperm.xlu0 %4297, %v970
        %v4299 = vpop.permute.xlu0 %4298
        %4301 = vset.pattern.permute.xlu0 1
        %4302 = vperm.xlu0 %4301, %v971
        %v4303 = vpop.permute.xlu0 %4302
        %4305 = vset.pattern.permute.xlu0 1
        %4306 = vperm.xlu0 %4305, %v972
        %v4307 = vpop.permute.xlu0 %4306
        %4309 = vset.pattern.permute.xlu0 1
        %4310 = vperm.xlu0 %4309, %v973
        %v4311 = vpop.permute.xlu0 %4310
        %4313 = vset.pattern.permute.xlu0 1
        %4314 = vperm.xlu0 %4313, %v974
        %v4315 = vpop.permute.xlu0 %4314
        %4317 = vset.pattern.permute.xlu0 1
        %4318 = vperm.xlu0 %4317, %v975
        %v4319 = vpop.permute.xlu0 %4318
        %4321 = vset.pattern.permute.xlu0 1
        %4322 = vperm.xlu0 %4321, %v976
        %v4323 = vpop.permute.xlu0 %4322
        %4325 = vset.pattern.permute.xlu0 1
        %4326 = vperm.xlu0 %4325, %v977
        %v4327 = vpop.permute.xlu0 %4326
        %4329 = vset.pattern.permute.xlu0 1
        %4330 = vperm.xlu0 %4329, %v978
        %v4331 = vpop.permute.xlu0 %4330
        %4333 = vset.pattern.permute.xlu0 1
        %4334 = vperm.xlu0 %4333, %v979
        %v4335 = vpop.permute.xlu0 %4334
        %4337 = vset.pattern.permute.xlu0 1
        %4338 = vperm.xlu0 %4337, %v980
        %v4339 = vpop.permute.xlu0 %4338
        %4341 = vset.pattern.permute.xlu0 1
        %4342 = vperm.xlu0 %4341, %v981
        %v4343 = vpop.permute.xlu0 %4342
        %4345 = vset.pattern.permute.xlu0 1
        %4346 = vperm.xlu0 %4345, %v982
        %v4347 = vpop.permute.xlu0 %4346
        %4349 = vset.pattern.permute.xlu0 1
        %4350 = vperm.xlu0 %4349, %v983
        %v4351 = vpop.permute.xlu0 %4350
        %4353 = vset.pattern.permute.xlu0 1
        %4354 = vperm.xlu0 %4353, %v984
        %v4355 = vpop.permute.xlu0 %4354
        %4357 = vset.pattern.permute.xlu0 1
        %4358 = vperm.xlu0 %4357, %v985
        %v4359 = vpop.permute.xlu0 %4358
        %4361 = vset.pattern.permute.xlu0 1
        %4362 = vperm.xlu0 %4361, %v986
        %v4363 = vpop.permute.xlu0 %4362
        %4365 = vset.pattern.permute.xlu0 1
        %4366 = vperm.xlu0 %4365, %v987
        %v4367 = vpop.permute.xlu0 %4366
        %4369 = vset.pattern.permute.xlu0 1
        %4370 = vperm.xlu0 %4369, %v988
        %v4371 = vpop.permute.xlu0 %4370
        %4373 = vset.pattern.permute.xlu0 1
        %4374 = vperm.xlu0 %4373, %v989
        %v4375 = vpop.permute.xlu0 %4374
        %4377 = vset.pattern.permute.xlu0 1
        %4378 = vperm.xlu0 %4377, %v990
        %v4379 = vpop.permute.xlu0 %4378
        %4381 = vset.pattern.permute.xlu0 1
        %4382 = vperm.xlu0 %4381, %v991
        %v4383 = vpop.permute.xlu0 %4382
        %4385 = vset.pattern.permute.xlu0 1
        %4386 = vperm.xlu0 %4385, %v992
        %v4387 = vpop.permute.xlu0 %4386
        %4389 = vset.pattern.permute.xlu0 1
        %4390 = vperm.xlu0 %4389, %v993
        %v4391 = vpop.permute.xlu0 %4390
        %4393 = vset.pattern.permute.xlu0 1
        %4394 = vperm.xlu0 %4393, %v994
        %v4395 = vpop.permute.xlu0 %4394
        %4397 = vset.pattern.permute.xlu0 1
        %4398 = vperm.xlu0 %4397, %v995
        %v4399 = vpop.permute.xlu0 %4398
        %4401 = vset.pattern.permute.xlu0 1
        %4402 = vperm.xlu0 %4401, %v996
        %v4403 = vpop.permute.xlu0 %4402
        %4405 = vset.pattern.permute.xlu0 1
        %4406 = vperm.xlu0 %4405, %v997
        %v4407 = vpop.permute.xlu0 %4406
        %4409 = vset.pattern.permute.xlu0 1
        %4410 = vperm.xlu0 %4409, %v998
        %v4411 = vpop.permute.xlu0 %4410
        %4413 = vset.pattern.permute.xlu0 1
        %4414 = vperm.xlu0 %4413, %v999
        %v4415 = vpop.permute.xlu0 %4414
        %4417 = vset.pattern.permute.xlu0 1
        %4418 = vperm.xlu0 %4417, %v1000
        %v4419 = vpop.permute.xlu0 %4418
        %4421 = vset.pattern.permute.xlu0 1
        %4422 = vperm.xlu0 %4421, %v1001
        %v4423 = vpop.permute.xlu0 %4422
        %4425 = vset.pattern.permute.xlu0 1
        %4426 = vperm.xlu0 %4425, %v1002
        %v4427 = vpop.permute.xlu0 %4426
        %4429 = vset.pattern.permute.xlu0 1
        %4430 = vperm.xlu0 %4429, %v1003
        %v4431 = vpop.permute.xlu0 %4430
        %4433 = vset.pattern.permute.xlu0 1
        %4434 = vperm.xlu0 %4433, %v1004
        %v4435 = vpop.permute.xlu0 %4434
        %4437 = vset.pattern.permute.xlu0 1
        %4438 = vperm.xlu0 %4437, %v1005
        %v4439 = vpop.permute.xlu0 %4438
        %4441 = vset.pattern.permute.xlu0 1
        %4442 = vperm.xlu0 %4441, %v1006
        %v4443 = vpop.permute.xlu0 %4442
        %v4445 = vlaneseq
        %v4446 = vshrl.u32 %v4445, 7
        %v4447 = vsub.s32 1, %v4446
        %v4448 = vrot.slane %v1008, %v4447
        %v4449 = vlaneseq
        %v4450 = vshrl.u32 %v4449, 7
        %v4451 = vsub.s32 3, %v4450
        %v4452 = vrot.slane %v1008, %v4451
        %v4455 = vlaneseq
        %v4456 = vshrl.u32 %v4455, 7
        %v4457 = vsub.s32 1, %v4456
        %v4458 = vrot.slane %v4448, %v4457
        %v4459 = vlaneseq
        %v4460 = vshrl.u32 %v4459, 7
        %v4461 = vsub.s32 1, %v4460
        %v4462 = vrot.slane %v4452, %v4461
        %v4463 = vmul.f32 %v4191, %v4458
        %v4464 = vmul.f32 %v4191, %v4462
        %v4465 = vmul.f32 %v4195, %v4458
        %v4466 = vmul.f32 %v4195, %v4462
        %v4467 = vmul.f32 %v4199, %v4458
        %v4468 = vmul.f32 %v4199, %v4462
        %v4469 = vmul.f32 %v4203, %v4458
        %v4470 = vmul.f32 %v4203, %v4462
        %v4471 = vmul.f32 %v4207, %v4458
        %v4472 = vmul.f32 %v4207, %v4462
        %v4473 = vmul.f32 %v4211, %v4458
        %v4474 = vmul.f32 %v4211, %v4462
        %v4475 = vmul.f32 %v4215, %v4458
        %v4476 = vmul.f32 %v4215, %v4462
        %v4477 = vmul.f32 %v4219, %v4458
        %v4478 = vmul.f32 %v4219, %v4462
        %v4479 = vmul.f32 %v4223, %v4458
        %v4480 = vmul.f32 %v4223, %v4462
        %v4481 = vmul.f32 %v4227, %v4458
        %v4482 = vmul.f32 %v4227, %v4462
        %v4483 = vmul.f32 %v4231, %v4458
        %v4484 = vmul.f32 %v4231, %v4462
        %v4485 = vmul.f32 %v4235, %v4458
        %v4486 = vmul.f32 %v4235, %v4462
        %v4487 = vmul.f32 %v4239, %v4458
        %v4488 = vmul.f32 %v4239, %v4462
        %v4489 = vmul.f32 %v4243, %v4458
        %v4490 = vmul.f32 %v4243, %v4462
        %v4491 = vmul.f32 %v4247, %v4458
        %v4492 = vmul.f32 %v4247, %v4462
        %v4493 = vmul.f32 %v4251, %v4458
        %v4494 = vmul.f32 %v4251, %v4462
        %v4495 = vmul.f32 %v4255, %v4458
        %v4496 = vmul.f32 %v4255, %v4462
        %v4497 = vmul.f32 %v4259, %v4458
        %v4498 = vmul.f32 %v4259, %v4462
        %v4499 = vmul.f32 %v4263, %v4458
        %v4500 = vmul.f32 %v4263, %v4462
        %v4501 = vmul.f32 %v4267, %v4458
        %v4502 = vmul.f32 %v4267, %v4462
        %v4503 = vmul.f32 %v4271, %v4458
        %v4504 = vmul.f32 %v4271, %v4462
        %v4505 = vmul.f32 %v4275, %v4458
        %v4506 = vmul.f32 %v4275, %v4462
        %v4507 = vmul.f32 %v4279, %v4458
        %v4508 = vmul.f32 %v4279, %v4462
        %v4509 = vmul.f32 %v4283, %v4458
        %v4510 = vmul.f32 %v4283, %v4462
        %v4511 = vmul.f32 %v4287, %v4458
        %v4512 = vmul.f32 %v4287, %v4462
        %v4513 = vmul.f32 %v4291, %v4458
        %v4514 = vmul.f32 %v4291, %v4462
        %v4515 = vmul.f32 %v4295, %v4458
        %v4516 = vmul.f32 %v4295, %v4462
        %v4517 = vmul.f32 %v4299, %v4458
        %v4518 = vmul.f32 %v4299, %v4462
        %v4519 = vmul.f32 %v4303, %v4458
        %v4520 = vmul.f32 %v4303, %v4462
        %v4521 = vmul.f32 %v4307, %v4458
        %v4522 = vmul.f32 %v4307, %v4462
        %v4523 = vmul.f32 %v4311, %v4458
        %v4524 = vmul.f32 %v4311, %v4462
        %v4525 = vmul.f32 %v4315, %v4458
        %v4526 = vmul.f32 %v4315, %v4462
        %v4527 = vmul.f32 %v4319, %v4458
        %v4528 = vmul.f32 %v4319, %v4462
        %v4529 = vmul.f32 %v4323, %v4458
        %v4530 = vmul.f32 %v4323, %v4462
        %v4531 = vmul.f32 %v4327, %v4458
        %v4532 = vmul.f32 %v4327, %v4462
        %v4533 = vmul.f32 %v4331, %v4458
        %v4534 = vmul.f32 %v4331, %v4462
        %v4535 = vmul.f32 %v4335, %v4458
        %v4536 = vmul.f32 %v4335, %v4462
        %v4537 = vmul.f32 %v4339, %v4458
        %v4538 = vmul.f32 %v4339, %v4462
        %v4539 = vmul.f32 %v4343, %v4458
        %v4540 = vmul.f32 %v4343, %v4462
        %v4541 = vmul.f32 %v4347, %v4458
        %v4542 = vmul.f32 %v4347, %v4462
        %v4543 = vmul.f32 %v4351, %v4458
        %v4544 = vmul.f32 %v4351, %v4462
        %v4545 = vmul.f32 %v4355, %v4458
        %v4546 = vmul.f32 %v4355, %v4462
        %v4547 = vmul.f32 %v4359, %v4458
        %v4548 = vmul.f32 %v4359, %v4462
        %v4549 = vmul.f32 %v4363, %v4458
        %v4550 = vmul.f32 %v4363, %v4462
        %v4551 = vmul.f32 %v4367, %v4458
        %v4552 = vmul.f32 %v4367, %v4462
        %v4553 = vmul.f32 %v4371, %v4458
        %v4554 = vmul.f32 %v4371, %v4462
        %v4555 = vmul.f32 %v4375, %v4458
        %v4556 = vmul.f32 %v4375, %v4462
        %v4557 = vmul.f32 %v4379, %v4458
        %v4558 = vmul.f32 %v4379, %v4462
        %v4559 = vmul.f32 %v4383, %v4458
        %v4560 = vmul.f32 %v4383, %v4462
        %v4561 = vmul.f32 %v4387, %v4458
        %v4562 = vmul.f32 %v4387, %v4462
        %v4563 = vmul.f32 %v4391, %v4458
        %v4564 = vmul.f32 %v4391, %v4462
        %v4565 = vmul.f32 %v4395, %v4458
        %v4566 = vmul.f32 %v4395, %v4462
        %v4567 = vmul.f32 %v4399, %v4458
        %v4568 = vmul.f32 %v4399, %v4462
        %v4569 = vmul.f32 %v4403, %v4458
        %v4570 = vmul.f32 %v4403, %v4462
        %v4571 = vmul.f32 %v4407, %v4458
        %v4572 = vmul.f32 %v4407, %v4462
        %v4573 = vmul.f32 %v4411, %v4458
        %v4574 = vmul.f32 %v4411, %v4462
        %v4575 = vmul.f32 %v4415, %v4458
        %v4576 = vmul.f32 %v4415, %v4462
        %v4577 = vmul.f32 %v4419, %v4458
        %v4578 = vmul.f32 %v4419, %v4462
        %v4579 = vmul.f32 %v4423, %v4458
        %v4580 = vmul.f32 %v4423, %v4462
        %v4581 = vmul.f32 %v4427, %v4458
        %v4582 = vmul.f32 %v4427, %v4462
        %v4583 = vmul.f32 %v4431, %v4458
        %v4584 = vmul.f32 %v4431, %v4462
        %v4585 = vmul.f32 %v4435, %v4458
        %v4586 = vmul.f32 %v4435, %v4462
        %v4587 = vmul.f32 %v4439, %v4458
        %v4588 = vmul.f32 %v4439, %v4462
        %v4589 = vmul.f32 %v4443, %v4458
        %v4590 = vmul.f32 %v4443, %v4462
        %v4591 = vadd.f32 %v4061, %v4463
        %v4592 = vadd.f32 %v4062, %v4464
        %v4593 = vadd.f32 %v4063, %v4465
        %v4594 = vadd.f32 %v4064, %v4466
        %v4595 = vadd.f32 %v4065, %v4467
        %v4596 = vadd.f32 %v4066, %v4468
        %v4597 = vadd.f32 %v4067, %v4469
        %v4598 = vadd.f32 %v4068, %v4470
        %v4599 = vadd.f32 %v4069, %v4471
        %v4600 = vadd.f32 %v4070, %v4472
        %v4601 = vadd.f32 %v4071, %v4473
        %v4602 = vadd.f32 %v4072, %v4474
        %v4603 = vadd.f32 %v4073, %v4475
        %v4604 = vadd.f32 %v4074, %v4476
        %v4605 = vadd.f32 %v4075, %v4477
        %v4606 = vadd.f32 %v4076, %v4478
        %v4607 = vadd.f32 %v4077, %v4479
        %v4608 = vadd.f32 %v4078, %v4480
        %v4609 = vadd.f32 %v4079, %v4481
        %v4610 = vadd.f32 %v4080, %v4482
        %v4611 = vadd.f32 %v4081, %v4483
        %v4612 = vadd.f32 %v4082, %v4484
        %v4613 = vadd.f32 %v4083, %v4485
        %v4614 = vadd.f32 %v4084, %v4486
        %v4615 = vadd.f32 %v4085, %v4487
        %v4616 = vadd.f32 %v4086, %v4488
        %v4617 = vadd.f32 %v4087, %v4489
        %v4618 = vadd.f32 %v4088, %v4490
        %v4619 = vadd.f32 %v4089, %v4491
        %v4620 = vadd.f32 %v4090, %v4492
        %v4621 = vadd.f32 %v4091, %v4493
        %v4622 = vadd.f32 %v4092, %v4494
        %v4623 = vadd.f32 %v4093, %v4495
        %v4624 = vadd.f32 %v4094, %v4496
        %v4625 = vadd.f32 %v4095, %v4497
        %v4626 = vadd.f32 %v4096, %v4498
        %v4627 = vadd.f32 %v4097, %v4499
        %v4628 = vadd.f32 %v4098, %v4500
        %v4629 = vadd.f32 %v4099, %v4501
        %v4630 = vadd.f32 %v4100, %v4502
        %v4631 = vadd.f32 %v4101, %v4503
        %v4632 = vadd.f32 %v4102, %v4504
        %v4633 = vadd.f32 %v4103, %v4505
        %v4634 = vadd.f32 %v4104, %v4506
        %v4635 = vadd.f32 %v4105, %v4507
        %v4636 = vadd.f32 %v4106, %v4508
        %v4637 = vadd.f32 %v4107, %v4509
        %v4638 = vadd.f32 %v4108, %v4510
        %v4639 = vadd.f32 %v4109, %v4511
        %v4640 = vadd.f32 %v4110, %v4512
        %v4641 = vadd.f32 %v4111, %v4513
        %v4642 = vadd.f32 %v4112, %v4514
        %v4643 = vadd.f32 %v4113, %v4515
        %v4644 = vadd.f32 %v4114, %v4516
        %v4645 = vadd.f32 %v4115, %v4517
        %v4646 = vadd.f32 %v4116, %v4518
        %v4647 = vadd.f32 %v4117, %v4519
        %v4648 = vadd.f32 %v4118, %v4520
        %v4649 = vadd.f32 %v4119, %v4521
        %v4650 = vadd.f32 %v4120, %v4522
        %v4651 = vadd.f32 %v4121, %v4523
        %v4652 = vadd.f32 %v4122, %v4524
        %v4653 = vadd.f32 %v4123, %v4525
        %v4654 = vadd.f32 %v4124, %v4526
        %v4655 = vadd.f32 %v4125, %v4527
        %v4656 = vadd.f32 %v4126, %v4528
        %v4657 = vadd.f32 %v4127, %v4529
        %v4658 = vadd.f32 %v4128, %v4530
        %v4659 = vadd.f32 %v4129, %v4531
        %v4660 = vadd.f32 %v4130, %v4532
        %v4661 = vadd.f32 %v4131, %v4533
        %v4662 = vadd.f32 %v4132, %v4534
        %v4663 = vadd.f32 %v4133, %v4535
        %v4664 = vadd.f32 %v4134, %v4536
        %v4665 = vadd.f32 %v4135, %v4537
        %v4666 = vadd.f32 %v4136, %v4538
        %v4667 = vadd.f32 %v4137, %v4539
        %v4668 = vadd.f32 %v4138, %v4540
        %v4669 = vadd.f32 %v4139, %v4541
        %v4670 = vadd.f32 %v4140, %v4542
        %v4671 = vadd.f32 %v4141, %v4543
        %v4672 = vadd.f32 %v4142, %v4544
        %v4673 = vadd.f32 %v4143, %v4545
        %v4674 = vadd.f32 %v4144, %v4546
        %v4675 = vadd.f32 %v4145, %v4547
        %v4676 = vadd.f32 %v4146, %v4548
        %v4677 = vadd.f32 %v4147, %v4549
        %v4678 = vadd.f32 %v4148, %v4550
        %v4679 = vadd.f32 %v4149, %v4551
        %v4680 = vadd.f32 %v4150, %v4552
        %v4681 = vadd.f32 %v4151, %v4553
        %v4682 = vadd.f32 %v4152, %v4554
        %v4683 = vadd.f32 %v4153, %v4555
        %v4684 = vadd.f32 %v4154, %v4556
        %v4685 = vadd.f32 %v4155, %v4557
        %v4686 = vadd.f32 %v4156, %v4558
        %v4687 = vadd.f32 %v4157, %v4559
        %v4688 = vadd.f32 %v4158, %v4560
        %v4689 = vadd.f32 %v4159, %v4561
        %v4690 = vadd.f32 %v4160, %v4562
        %v4691 = vadd.f32 %v4161, %v4563
        %v4692 = vadd.f32 %v4162, %v4564
        %v4693 = vadd.f32 %v4163, %v4565
        %v4694 = vadd.f32 %v4164, %v4566
        %v4695 = vadd.f32 %v4165, %v4567
        %v4696 = vadd.f32 %v4166, %v4568
        %v4697 = vadd.f32 %v4167, %v4569
        %v4698 = vadd.f32 %v4168, %v4570
        %v4699 = vadd.f32 %v4169, %v4571
        %v4700 = vadd.f32 %v4170, %v4572
        %v4701 = vadd.f32 %v4171, %v4573
        %v4702 = vadd.f32 %v4172, %v4574
        %v4703 = vadd.f32 %v4173, %v4575
        %v4704 = vadd.f32 %v4174, %v4576
        %v4705 = vadd.f32 %v4175, %v4577
        %v4706 = vadd.f32 %v4176, %v4578
        %v4707 = vadd.f32 %v4177, %v4579
        %v4708 = vadd.f32 %v4178, %v4580
        %v4709 = vadd.f32 %v4179, %v4581
        %v4710 = vadd.f32 %v4180, %v4582
        %v4711 = vadd.f32 %v4181, %v4583
        %v4712 = vadd.f32 %v4182, %v4584
        %v4713 = vadd.f32 %v4183, %v4585
        %v4714 = vadd.f32 %v4184, %v4586
        %v4715 = vadd.f32 %v4185, %v4587
        %v4716 = vadd.f32 %v4186, %v4588
        %v4717 = vadd.f32 %v4187, %v4589
        %v4718 = vadd.f32 %v4188, %v4590
        %4719 = vmatprep.subr.mxu0 %v1042
        %4720 = vmatpush1.msra.mxu0 %v1041
        %4721 = vmatprep.subr.mxu0 %v1040
        %4722 = vmatpush1.msra.mxu0 %v1039
        %4723 = vmatprep.subr.mxu0 %v1038
        %4724 = vmatpush1.msra.mxu0 %v1037
        %4725 = vmatprep.subr.mxu0 %v1036
        %4726 = vmatpush1.msra.mxu0 %v1035
        %4727 = vmatprep.subr.mxu0 %v1034
        %4728 = vmatpush1.msra.mxu0 %v1033
        %4729 = vmatprep.subr.mxu0 %v1032
        %4730 = vmatpush1.msra.mxu0 %v1031
        %4731 = vmatprep.subr.mxu0 %v1030
        %4732 = vmatpush1.msra.mxu0 %v1029
        %4733 = vmatprep.subr.mxu0 %v1028
        %4734 = vmatpush1.msra.mxu0 %v1027
        %4735 = vmatprep.subr.mxu0 %v1026
        %4736 = vmatpush1.msra.mxu0 %v1025
        %4737 = vmatprep.subr.mxu0 %v1024
        %4738 = vmatpush1.msra.mxu0 %v1023
        %4739 = vmatprep.subr.mxu0 %v1022
        %4740 = vmatpush1.msra.mxu0 %v1021
        %4741 = vmatprep.subr.mxu0 %v1020
        %4742 = vmatpush1.msra.mxu0 %v1019
        %4743 = vmatprep.subr.mxu0 %v1018
        %4744 = vmatpush1.msra.mxu0 %v1017
        %4745 = vmatprep.subr.mxu0 %v1016
        %4746 = vmatpush1.msra.mxu0 %v1015
        %4747 = vmatprep.subr.mxu0 %v1014
        %4748 = vmatpush1.msra.mxu0 %v1013
        %4749 = vmatprep.subr.mxu0 %v1012
        %4750 = vmatpush1.msra.mxu0 %v1011
        %4751 = vmatprep.subr.mxu0 %v1074
        %4752 = vmatpush2.msra.mxu0 %v1073
        %4753 = vmatprep.subr.mxu0 %v1072
        %4754 = vmatpush2.msra.mxu0 %v1071
        %4755 = vmatprep.subr.mxu0 %v1070
        %4756 = vmatpush2.msra.mxu0 %v1069
        %4757 = vmatprep.subr.mxu0 %v1068
        %4758 = vmatpush2.msra.mxu0 %v1067
        %4759 = vmatprep.subr.mxu0 %v1066
        %4760 = vmatpush2.msra.mxu0 %v1065
        %4761 = vmatprep.subr.mxu0 %v1064
        %4762 = vmatpush2.msra.mxu0 %v1063
        %4763 = vmatprep.subr.mxu0 %v1062
        %4764 = vmatpush2.msra.mxu0 %v1061
        %4765 = vmatprep.subr.mxu0 %v1060
        %4766 = vmatpush2.msra.mxu0 %v1059
        %4767 = vmatprep.subr.mxu0 %v1058
        %4768 = vmatpush2.msra.mxu0 %v1057
        %4769 = vmatprep.subr.mxu0 %v1056
        %4770 = vmatpush2.msra.mxu0 %v1055
        %4771 = vmatprep.subr.mxu0 %v1054
        %4772 = vmatpush2.msra.mxu0 %v1053
        %4773 = vmatprep.subr.mxu0 %v1052
        %4774 = vmatpush2.msra.mxu0 %v1051
        %4775 = vmatprep.subr.mxu0 %v1050
        %4776 = vmatpush2.msra.mxu0 %v1049
        %4777 = vmatprep.subr.mxu0 %v1048
        %4778 = vmatpush2.msra.mxu0 %v1047
        %4779 = vmatprep.subr.mxu0 %v1046
        %4780 = vmatpush2.msra.mxu0 %v1045
        %4781 = vmatprep.subr.mxu0 %v1044
        %4782 = vmatpush2.msra.mxu0 %v1043
        %4783 = vmatprep.mubr.f32.mxu0 %v4592
        %4784 = vmatmul.mubr.f32.gmra.mxu0 %v4591
        %v4785 = vpop.f32.mrf.mxu0
        %v4786 = vadd.f32 %v2411, %v4785
        %v4787 = vpop.f32.mrf.mxu0
        %v4788 = vadd.f32 %v2415, %v4787
        %4789 = vmatprep.mubr.f32.mxu0 %v4594
        %4790 = vmatmul.mubr.f32.gmra.mxu0 %v4593
        %v4791 = vpop.f32.mrf.mxu0
        %v4792 = vadd.f32 %v2411, %v4791
        %v4793 = vpop.f32.mrf.mxu0
        %v4794 = vadd.f32 %v2415, %v4793
        %4795 = vmatprep.mubr.f32.mxu0 %v4596
        %4796 = vmatmul.mubr.f32.gmra.mxu0 %v4595
        %v4797 = vpop.f32.mrf.mxu0
        %v4798 = vadd.f32 %v2411, %v4797
        %v4799 = vpop.f32.mrf.mxu0
        %v4800 = vadd.f32 %v2415, %v4799
        %4801 = vmatprep.mubr.f32.mxu0 %v4598
        %4802 = vmatmul.mubr.f32.gmra.mxu0 %v4597
        %v4803 = vpop.f32.mrf.mxu0
        %v4804 = vadd.f32 %v2411, %v4803
        %v4805 = vpop.f32.mrf.mxu0
        %v4806 = vadd.f32 %v2415, %v4805
        %4807 = vmatprep.mubr.f32.mxu0 %v4600
        %4808 = vmatmul.mubr.f32.gmra.mxu0 %v4599
        %v4809 = vpop.f32.mrf.mxu0
        %v4810 = vadd.f32 %v2411, %v4809
        %v4811 = vpop.f32.mrf.mxu0
        %v4812 = vadd.f32 %v2415, %v4811
        %4813 = vmatprep.mubr.f32.mxu0 %v4602
        %4814 = vmatmul.mubr.f32.gmra.mxu0 %v4601
        %v4815 = vpop.f32.mrf.mxu0
        %v4816 = vadd.f32 %v2411, %v4815
        %v4817 = vpop.f32.mrf.mxu0
        %v4818 = vadd.f32 %v2415, %v4817
        %4819 = vmatprep.mubr.f32.mxu0 %v4604
        %4820 = vmatmul.mubr.f32.gmra.mxu0 %v4603
        %v4821 = vpop.f32.mrf.mxu0
        %v4822 = vadd.f32 %v2411, %v4821
        %v4823 = vpop.f32.mrf.mxu0
        %v4824 = vadd.f32 %v2415, %v4823
        %4825 = vmatprep.mubr.f32.mxu0 %v4606
        %4826 = vmatmul.mubr.f32.gmra.mxu0 %v4605
        %v4827 = vpop.f32.mrf.mxu0
        %v4828 = vadd.f32 %v2411, %v4827
        %v4829 = vpop.f32.mrf.mxu0
        %v4830 = vadd.f32 %v2415, %v4829
        %4831 = vmatprep.mubr.f32.mxu0 %v4608
        %4832 = vmatmul.mubr.f32.gmra.mxu0 %v4607
        %v4833 = vpop.f32.mrf.mxu0
        %v4834 = vadd.f32 %v2411, %v4833
        %v4835 = vpop.f32.mrf.mxu0
        %v4836 = vadd.f32 %v2415, %v4835
        %4837 = vmatprep.mubr.f32.mxu0 %v4610
        %4838 = vmatmul.mubr.f32.gmra.mxu0 %v4609
        %v4839 = vpop.f32.mrf.mxu0
        %v4840 = vadd.f32 %v2411, %v4839
        %v4841 = vpop.f32.mrf.mxu0
        %v4842 = vadd.f32 %v2415, %v4841
        %4843 = vmatprep.mubr.f32.mxu0 %v4612
        %4844 = vmatmul.mubr.f32.gmra.mxu0 %v4611
        %v4845 = vpop.f32.mrf.mxu0
        %v4846 = vadd.f32 %v2411, %v4845
        %v4847 = vpop.f32.mrf.mxu0
        %v4848 = vadd.f32 %v2415, %v4847
        %4849 = vmatprep.mubr.f32.mxu0 %v4614
        %4850 = vmatmul.mubr.f32.gmra.mxu0 %v4613
        %v4851 = vpop.f32.mrf.mxu0
        %v4852 = vadd.f32 %v2411, %v4851
        %v4853 = vpop.f32.mrf.mxu0
        %v4854 = vadd.f32 %v2415, %v4853
        %4855 = vmatprep.mubr.f32.mxu0 %v4616
        %4856 = vmatmul.mubr.f32.gmra.mxu0 %v4615
        %v4857 = vpop.f32.mrf.mxu0
        %v4858 = vadd.f32 %v2411, %v4857
        %v4859 = vpop.f32.mrf.mxu0
        %v4860 = vadd.f32 %v2415, %v4859
        %4861 = vmatprep.mubr.f32.mxu0 %v4618
        %4862 = vmatmul.mubr.f32.gmra.mxu0 %v4617
        %v4863 = vpop.f32.mrf.mxu0
        %v4864 = vadd.f32 %v2411, %v4863
        %v4865 = vpop.f32.mrf.mxu0
        %v4866 = vadd.f32 %v2415, %v4865
        %4867 = vmatprep.mubr.f32.mxu0 %v4620
        %4868 = vmatmul.mubr.f32.gmra.mxu0 %v4619
        %v4869 = vpop.f32.mrf.mxu0
        %v4870 = vadd.f32 %v2411, %v4869
        %v4871 = vpop.f32.mrf.mxu0
        %v4872 = vadd.f32 %v2415, %v4871
        %4873 = vmatprep.mubr.f32.mxu0 %v4622
        %4874 = vmatmul.mubr.f32.gmra.mxu0 %v4621
        %v4875 = vpop.f32.mrf.mxu0
        %v4876 = vadd.f32 %v2411, %v4875
        %v4877 = vpop.f32.mrf.mxu0
        %v4878 = vadd.f32 %v2415, %v4877
        %4879 = vmatprep.mubr.f32.mxu0 %v4624
        %4880 = vmatmul.mubr.f32.gmra.mxu0 %v4623
        %v4881 = vpop.f32.mrf.mxu0
        %v4882 = vadd.f32 %v2411, %v4881
        %v4883 = vpop.f32.mrf.mxu0
        %v4884 = vadd.f32 %v2415, %v4883
        %4885 = vmatprep.mubr.f32.mxu0 %v4626
        %4886 = vmatmul.mubr.f32.gmra.mxu0 %v4625
        %v4887 = vpop.f32.mrf.mxu0
        %v4888 = vadd.f32 %v2411, %v4887
        %v4889 = vpop.f32.mrf.mxu0
        %v4890 = vadd.f32 %v2415, %v4889
        %4891 = vmatprep.mubr.f32.mxu0 %v4628
        %4892 = vmatmul.mubr.f32.gmra.mxu0 %v4627
        %v4893 = vpop.f32.mrf.mxu0
        %v4894 = vadd.f32 %v2411, %v4893
        %v4895 = vpop.f32.mrf.mxu0
        %v4896 = vadd.f32 %v2415, %v4895
        %4897 = vmatprep.mubr.f32.mxu0 %v4630
        %4898 = vmatmul.mubr.f32.gmra.mxu0 %v4629
        %v4899 = vpop.f32.mrf.mxu0
        %v4900 = vadd.f32 %v2411, %v4899
        %v4901 = vpop.f32.mrf.mxu0
        %v4902 = vadd.f32 %v2415, %v4901
        %4903 = vmatprep.mubr.f32.mxu0 %v4632
        %4904 = vmatmul.mubr.f32.gmra.mxu0 %v4631
        %v4905 = vpop.f32.mrf.mxu0
        %v4906 = vadd.f32 %v2411, %v4905
        %v4907 = vpop.f32.mrf.mxu0
        %v4908 = vadd.f32 %v2415, %v4907
        %4909 = vmatprep.mubr.f32.mxu0 %v4634
        %4910 = vmatmul.mubr.f32.gmra.mxu0 %v4633
        %v4911 = vpop.f32.mrf.mxu0
        %v4912 = vadd.f32 %v2411, %v4911
        %v4913 = vpop.f32.mrf.mxu0
        %v4914 = vadd.f32 %v2415, %v4913
        %4915 = vmatprep.mubr.f32.mxu0 %v4636
        %4916 = vmatmul.mubr.f32.gmra.mxu0 %v4635
        %v4917 = vpop.f32.mrf.mxu0
        %v4918 = vadd.f32 %v2411, %v4917
        %v4919 = vpop.f32.mrf.mxu0
        %v4920 = vadd.f32 %v2415, %v4919
        %4921 = vmatprep.mubr.f32.mxu0 %v4638
        %4922 = vmatmul.mubr.f32.gmra.mxu0 %v4637
        %v4923 = vpop.f32.mrf.mxu0
        %v4924 = vadd.f32 %v2411, %v4923
        %v4925 = vpop.f32.mrf.mxu0
        %v4926 = vadd.f32 %v2415, %v4925
        %4927 = vmatprep.mubr.f32.mxu0 %v4640
        %4928 = vmatmul.mubr.f32.gmra.mxu0 %v4639
        %v4929 = vpop.f32.mrf.mxu0
        %v4930 = vadd.f32 %v2411, %v4929
        %v4931 = vpop.f32.mrf.mxu0
        %v4932 = vadd.f32 %v2415, %v4931
        %4933 = vmatprep.mubr.f32.mxu0 %v4642
        %4934 = vmatmul.mubr.f32.gmra.mxu0 %v4641
        %v4935 = vpop.f32.mrf.mxu0
        %v4936 = vadd.f32 %v2411, %v4935
        %v4937 = vpop.f32.mrf.mxu0
        %v4938 = vadd.f32 %v2415, %v4937
        %4939 = vmatprep.mubr.f32.mxu0 %v4644
        %4940 = vmatmul.mubr.f32.gmra.mxu0 %v4643
        %v4941 = vpop.f32.mrf.mxu0
        %v4942 = vadd.f32 %v2411, %v4941
        %v4943 = vpop.f32.mrf.mxu0
        %v4944 = vadd.f32 %v2415, %v4943
        %4945 = vmatprep.mubr.f32.mxu0 %v4646
        %4946 = vmatmul.mubr.f32.gmra.mxu0 %v4645
        %v4947 = vpop.f32.mrf.mxu0
        %v4948 = vadd.f32 %v2411, %v4947
        %v4949 = vpop.f32.mrf.mxu0
        %v4950 = vadd.f32 %v2415, %v4949
        %4951 = vmatprep.mubr.f32.mxu0 %v4648
        %4952 = vmatmul.mubr.f32.gmra.mxu0 %v4647
        %v4953 = vpop.f32.mrf.mxu0
        %v4954 = vadd.f32 %v2411, %v4953
        %v4955 = vpop.f32.mrf.mxu0
        %v4956 = vadd.f32 %v2415, %v4955
        %4957 = vmatprep.mubr.f32.mxu0 %v4650
        %4958 = vmatmul.mubr.f32.gmra.mxu0 %v4649
        %v4959 = vpop.f32.mrf.mxu0
        %v4960 = vadd.f32 %v2411, %v4959
        %v4961 = vpop.f32.mrf.mxu0
        %v4962 = vadd.f32 %v2415, %v4961
        %4963 = vmatprep.mubr.f32.mxu0 %v4652
        %4964 = vmatmul.mubr.f32.gmra.mxu0 %v4651
        %v4965 = vpop.f32.mrf.mxu0
        %v4966 = vadd.f32 %v2411, %v4965
        %v4967 = vpop.f32.mrf.mxu0
        %v4968 = vadd.f32 %v2415, %v4967
        %4969 = vmatprep.mubr.f32.mxu0 %v4654
        %4970 = vmatmul.mubr.f32.gmra.mxu0 %v4653
        %v4971 = vpop.f32.mrf.mxu0
        %v4972 = vadd.f32 %v2411, %v4971
        %v4973 = vpop.f32.mrf.mxu0
        %v4974 = vadd.f32 %v2415, %v4973
        %4975 = vmatprep.mubr.f32.mxu0 %v4656
        %4976 = vmatmul.mubr.f32.gmra.mxu0 %v4655
        %v4977 = vpop.f32.mrf.mxu0
        %v4978 = vadd.f32 %v2411, %v4977
        %v4979 = vpop.f32.mrf.mxu0
        %v4980 = vadd.f32 %v2415, %v4979
        %4981 = vmatprep.mubr.f32.mxu0 %v4658
        %4982 = vmatmul.mubr.f32.gmra.mxu0 %v4657
        %v4983 = vpop.f32.mrf.mxu0
        %v4984 = vadd.f32 %v2411, %v4983
        %v4985 = vpop.f32.mrf.mxu0
        %v4986 = vadd.f32 %v2415, %v4985
        %4987 = vmatprep.mubr.f32.mxu0 %v4660
        %4988 = vmatmul.mubr.f32.gmra.mxu0 %v4659
        %v4989 = vpop.f32.mrf.mxu0
        %v4990 = vadd.f32 %v2411, %v4989
        %v4991 = vpop.f32.mrf.mxu0
        %v4992 = vadd.f32 %v2415, %v4991
        %4993 = vmatprep.mubr.f32.mxu0 %v4662
        %4994 = vmatmul.mubr.f32.gmra.mxu0 %v4661
        %v4995 = vpop.f32.mrf.mxu0
        %v4996 = vadd.f32 %v2411, %v4995
        %v4997 = vpop.f32.mrf.mxu0
        %v4998 = vadd.f32 %v2415, %v4997
        %4999 = vmatprep.mubr.f32.mxu0 %v4664
        %5000 = vmatmul.mubr.f32.gmra.mxu0 %v4663
        %v5001 = vpop.f32.mrf.mxu0
        %v5002 = vadd.f32 %v2411, %v5001
        %v5003 = vpop.f32.mrf.mxu0
        %v5004 = vadd.f32 %v2415, %v5003
        %5005 = vmatprep.mubr.f32.mxu0 %v4666
        %5006 = vmatmul.mubr.f32.gmra.mxu0 %v4665
        %v5007 = vpop.f32.mrf.mxu0
        %v5008 = vadd.f32 %v2411, %v5007
        %v5009 = vpop.f32.mrf.mxu0
        %v5010 = vadd.f32 %v2415, %v5009
        %5011 = vmatprep.mubr.f32.mxu0 %v4668
        %5012 = vmatmul.mubr.f32.gmra.mxu0 %v4667
        %v5013 = vpop.f32.mrf.mxu0
        %v5014 = vadd.f32 %v2411, %v5013
        %v5015 = vpop.f32.mrf.mxu0
        %v5016 = vadd.f32 %v2415, %v5015
        %5017 = vmatprep.mubr.f32.mxu0 %v4670
        %5018 = vmatmul.mubr.f32.gmra.mxu0 %v4669
        %v5019 = vpop.f32.mrf.mxu0
        %v5020 = vadd.f32 %v2411, %v5019
        %v5021 = vpop.f32.mrf.mxu0
        %v5022 = vadd.f32 %v2415, %v5021
        %5023 = vmatprep.mubr.f32.mxu0 %v4672
        %5024 = vmatmul.mubr.f32.gmra.mxu0 %v4671
        %v5025 = vpop.f32.mrf.mxu0
        %v5026 = vadd.f32 %v2411, %v5025
        %v5027 = vpop.f32.mrf.mxu0
        %v5028 = vadd.f32 %v2415, %v5027
        %5029 = vmatprep.mubr.f32.mxu0 %v4674
        %5030 = vmatmul.mubr.f32.gmra.mxu0 %v4673
        %v5031 = vpop.f32.mrf.mxu0
        %v5032 = vadd.f32 %v2411, %v5031
        %v5033 = vpop.f32.mrf.mxu0
        %v5034 = vadd.f32 %v2415, %v5033
        %5035 = vmatprep.mubr.f32.mxu0 %v4676
        %5036 = vmatmul.mubr.f32.gmra.mxu0 %v4675
        %v5037 = vpop.f32.mrf.mxu0
        %v5038 = vadd.f32 %v2411, %v5037
        %v5039 = vpop.f32.mrf.mxu0
        %v5040 = vadd.f32 %v2415, %v5039
        %5041 = vmatprep.mubr.f32.mxu0 %v4678
        %5042 = vmatmul.mubr.f32.gmra.mxu0 %v4677
        %v5043 = vpop.f32.mrf.mxu0
        %v5044 = vadd.f32 %v2411, %v5043
        %v5045 = vpop.f32.mrf.mxu0
        %v5046 = vadd.f32 %v2415, %v5045
        %5047 = vmatprep.mubr.f32.mxu0 %v4680
        %5048 = vmatmul.mubr.f32.gmra.mxu0 %v4679
        %v5049 = vpop.f32.mrf.mxu0
        %v5050 = vadd.f32 %v2411, %v5049
        %v5051 = vpop.f32.mrf.mxu0
        %v5052 = vadd.f32 %v2415, %v5051
        %5053 = vmatprep.mubr.f32.mxu0 %v4682
        %5054 = vmatmul.mubr.f32.gmra.mxu0 %v4681
        %v5055 = vpop.f32.mrf.mxu0
        %v5056 = vadd.f32 %v2411, %v5055
        %v5057 = vpop.f32.mrf.mxu0
        %v5058 = vadd.f32 %v2415, %v5057
        %5059 = vmatprep.mubr.f32.mxu0 %v4684
        %5060 = vmatmul.mubr.f32.gmra.mxu0 %v4683
        %v5061 = vpop.f32.mrf.mxu0
        %v5062 = vadd.f32 %v2411, %v5061
        %v5063 = vpop.f32.mrf.mxu0
        %v5064 = vadd.f32 %v2415, %v5063
        %5065 = vmatprep.mubr.f32.mxu0 %v4686
        %5066 = vmatmul.mubr.f32.gmra.mxu0 %v4685
        %v5067 = vpop.f32.mrf.mxu0
        %v5068 = vadd.f32 %v2411, %v5067
        %v5069 = vpop.f32.mrf.mxu0
        %v5070 = vadd.f32 %v2415, %v5069
        %5071 = vmatprep.mubr.f32.mxu0 %v4688
        %5072 = vmatmul.mubr.f32.gmra.mxu0 %v4687
        %v5073 = vpop.f32.mrf.mxu0
        %v5074 = vadd.f32 %v2411, %v5073
        %v5075 = vpop.f32.mrf.mxu0
        %v5076 = vadd.f32 %v2415, %v5075
        %5077 = vmatprep.mubr.f32.mxu0 %v4690
        %5078 = vmatmul.mubr.f32.gmra.mxu0 %v4689
        %v5079 = vpop.f32.mrf.mxu0
        %v5080 = vadd.f32 %v2411, %v5079
        %v5081 = vpop.f32.mrf.mxu0
        %v5082 = vadd.f32 %v2415, %v5081
        %5083 = vmatprep.mubr.f32.mxu0 %v4692
        %5084 = vmatmul.mubr.f32.gmra.mxu0 %v4691
        %v5085 = vpop.f32.mrf.mxu0
        %v5086 = vadd.f32 %v2411, %v5085
        %v5087 = vpop.f32.mrf.mxu0
        %v5088 = vadd.f32 %v2415, %v5087
        %5089 = vmatprep.mubr.f32.mxu0 %v4694
        %5090 = vmatmul.mubr.f32.gmra.mxu0 %v4693
        %v5091 = vpop.f32.mrf.mxu0
        %v5092 = vadd.f32 %v2411, %v5091
        %v5093 = vpop.f32.mrf.mxu0
        %v5094 = vadd.f32 %v2415, %v5093
        %5095 = vmatprep.mubr.f32.mxu0 %v4696
        %5096 = vmatmul.mubr.f32.gmra.mxu0 %v4695
        %v5097 = vpop.f32.mrf.mxu0
        %v5098 = vadd.f32 %v2411, %v5097
        %v5099 = vpop.f32.mrf.mxu0
        %v5100 = vadd.f32 %v2415, %v5099
        %5101 = vmatprep.mubr.f32.mxu0 %v4698
        %5102 = vmatmul.mubr.f32.gmra.mxu0 %v4697
        %v5103 = vpop.f32.mrf.mxu0
        %v5104 = vadd.f32 %v2411, %v5103
        %v5105 = vpop.f32.mrf.mxu0
        %v5106 = vadd.f32 %v2415, %v5105
        %5107 = vmatprep.mubr.f32.mxu0 %v4700
        %5108 = vmatmul.mubr.f32.gmra.mxu0 %v4699
        %v5109 = vpop.f32.mrf.mxu0
        %v5110 = vadd.f32 %v2411, %v5109
        %v5111 = vpop.f32.mrf.mxu0
        %v5112 = vadd.f32 %v2415, %v5111
        %5113 = vmatprep.mubr.f32.mxu0 %v4702
        %5114 = vmatmul.mubr.f32.gmra.mxu0 %v4701
        %v5115 = vpop.f32.mrf.mxu0
        %v5116 = vadd.f32 %v2411, %v5115
        %v5117 = vpop.f32.mrf.mxu0
        %v5118 = vadd.f32 %v2415, %v5117
        %5119 = vmatprep.mubr.f32.mxu0 %v4704
        %5120 = vmatmul.mubr.f32.gmra.mxu0 %v4703
        %v5121 = vpop.f32.mrf.mxu0
        %v5122 = vadd.f32 %v2411, %v5121
        %v5123 = vpop.f32.mrf.mxu0
        %v5124 = vadd.f32 %v2415, %v5123
        %5125 = vmatprep.mubr.f32.mxu0 %v4706
        %5126 = vmatmul.mubr.f32.gmra.mxu0 %v4705
        %v5127 = vpop.f32.mrf.mxu0
        %v5128 = vadd.f32 %v2411, %v5127
        %v5129 = vpop.f32.mrf.mxu0
        %v5130 = vadd.f32 %v2415, %v5129
        %5131 = vmatprep.mubr.f32.mxu0 %v4708
        %5132 = vmatmul.mubr.f32.gmra.mxu0 %v4707
        %v5133 = vpop.f32.mrf.mxu0
        %v5134 = vadd.f32 %v2411, %v5133
        %v5135 = vpop.f32.mrf.mxu0
        %v5136 = vadd.f32 %v2415, %v5135
        %5137 = vmatprep.mubr.f32.mxu0 %v4710
        %5138 = vmatmul.mubr.f32.gmra.mxu0 %v4709
        %v5139 = vpop.f32.mrf.mxu0
        %v5140 = vadd.f32 %v2411, %v5139
        %v5141 = vpop.f32.mrf.mxu0
        %v5142 = vadd.f32 %v2415, %v5141
        %5143 = vmatprep.mubr.f32.mxu0 %v4712
        %5144 = vmatmul.mubr.f32.gmra.mxu0 %v4711
        %v5145 = vpop.f32.mrf.mxu0
        %v5146 = vadd.f32 %v2411, %v5145
        %v5147 = vpop.f32.mrf.mxu0
        %v5148 = vadd.f32 %v2415, %v5147
        %5149 = vmatprep.mubr.f32.mxu0 %v4714
        %5150 = vmatmul.mubr.f32.gmra.mxu0 %v4713
        %v5151 = vpop.f32.mrf.mxu0
        %v5152 = vadd.f32 %v2411, %v5151
        %v5153 = vpop.f32.mrf.mxu0
        %v5154 = vadd.f32 %v2415, %v5153
        %5155 = vmatprep.mubr.f32.mxu0 %v4716
        %5156 = vmatmul.mubr.f32.gmra.mxu0 %v4715
        %v5157 = vpop.f32.mrf.mxu0
        %v5158 = vadd.f32 %v2411, %v5157
        %v5159 = vpop.f32.mrf.mxu0
        %v5160 = vadd.f32 %v2415, %v5159
        %5161 = vmatprep.mubr.f32.mxu0 %v4718
        %5162 = vmatmul.mubr.f32.gmra.mxu0 %v4717
        %v5163 = vpop.f32.mrf.mxu0
        %v5164 = vadd.f32 %v2411, %v5163
        %v5165 = vpop.f32.mrf.mxu0
        %v5166 = vadd.f32 %v2415, %v5165
        %5167 = vdwg.mxu0
        %v5168 = vmax.f32 %v4786, 0.0
        %v5169 = vmax.f32 %v4788, 0.0
        %v5170 = vmax.f32 %v4792, 0.0
        %v5171 = vmax.f32 %v4794, 0.0
        %v5172 = vmax.f32 %v4798, 0.0
        %v5173 = vmax.f32 %v4800, 0.0
        %v5174 = vmax.f32 %v4804, 0.0
        %v5175 = vmax.f32 %v4806, 0.0
        %v5176 = vmax.f32 %v4810, 0.0
        %v5177 = vmax.f32 %v4812, 0.0
        %v5178 = vmax.f32 %v4816, 0.0
        %v5179 = vmax.f32 %v4818, 0.0
        %v5180 = vmax.f32 %v4822, 0.0
        %v5181 = vmax.f32 %v4824, 0.0
        %v5182 = vmax.f32 %v4828, 0.0
        %v5183 = vmax.f32 %v4830, 0.0
        %v5184 = vmax.f32 %v4834, 0.0
        %v5185 = vmax.f32 %v4836, 0.0
        %v5186 = vmax.f32 %v4840, 0.0
        %v5187 = vmax.f32 %v4842, 0.0
        %v5188 = vmax.f32 %v4846, 0.0
        %v5189 = vmax.f32 %v4848, 0.0
        %v5190 = vmax.f32 %v4852, 0.0
        %v5191 = vmax.f32 %v4854, 0.0
        %v5192 = vmax.f32 %v4858, 0.0
        %v5193 = vmax.f32 %v4860, 0.0
        %v5194 = vmax.f32 %v4864, 0.0
        %v5195 = vmax.f32 %v4866, 0.0
        %v5196 = vmax.f32 %v4870, 0.0
        %v5197 = vmax.f32 %v4872, 0.0
        %v5198 = vmax.f32 %v4876, 0.0
        %v5199 = vmax.f32 %v4878, 0.0
        %v5200 = vmax.f32 %v4882, 0.0
        %v5201 = vmax.f32 %v4884, 0.0
        %v5202 = vmax.f32 %v4888, 0.0
        %v5203 = vmax.f32 %v4890, 0.0
        %v5204 = vmax.f32 %v4894, 0.0
        %v5205 = vmax.f32 %v4896, 0.0
        %v5206 = vmax.f32 %v4900, 0.0
        %v5207 = vmax.f32 %v4902, 0.0
        %v5208 = vmax.f32 %v4906, 0.0
        %v5209 = vmax.f32 %v4908, 0.0
        %v5210 = vmax.f32 %v4912, 0.0
        %v5211 = vmax.f32 %v4914, 0.0
        %v5212 = vmax.f32 %v4918, 0.0
        %v5213 = vmax.f32 %v4920, 0.0
        %v5214 = vmax.f32 %v4924, 0.0
        %v5215 = vmax.f32 %v4926, 0.0
        %v5216 = vmax.f32 %v4930, 0.0
        %v5217 = vmax.f32 %v4932, 0.0
        %v5218 = vmax.f32 %v4936, 0.0
        %v5219 = vmax.f32 %v4938, 0.0
        %v5220 = vmax.f32 %v4942, 0.0
        %v5221 = vmax.f32 %v4944, 0.0
        %v5222 = vmax.f32 %v4948, 0.0
        %v5223 = vmax.f32 %v4950, 0.0
        %v5224 = vmax.f32 %v4954, 0.0
        %v5225 = vmax.f32 %v4956, 0.0
        %v5226 = vmax.f32 %v4960, 0.0
        %v5227 = vmax.f32 %v4962, 0.0
        %v5228 = vmax.f32 %v4966, 0.0
        %v5229 = vmax.f32 %v4968, 0.0
        %v5230 = vmax.f32 %v4972, 0.0
        %v5231 = vmax.f32 %v4974, 0.0
        %v5232 = vmax.f32 %v4978, 0.0
        %v5233 = vmax.f32 %v4980, 0.0
        %v5234 = vmax.f32 %v4984, 0.0
        %v5235 = vmax.f32 %v4986, 0.0
        %v5236 = vmax.f32 %v4990, 0.0
        %v5237 = vmax.f32 %v4992, 0.0
        %v5238 = vmax.f32 %v4996, 0.0
        %v5239 = vmax.f32 %v4998, 0.0
        %v5240 = vmax.f32 %v5002, 0.0
        %v5241 = vmax.f32 %v5004, 0.0
        %v5242 = vmax.f32 %v5008, 0.0
        %v5243 = vmax.f32 %v5010, 0.0
        %v5244 = vmax.f32 %v5014, 0.0
        %v5245 = vmax.f32 %v5016, 0.0
        %v5246 = vmax.f32 %v5020, 0.0
        %v5247 = vmax.f32 %v5022, 0.0
        %v5248 = vmax.f32 %v5026, 0.0
        %v5249 = vmax.f32 %v5028, 0.0
        %v5250 = vmax.f32 %v5032, 0.0
        %v5251 = vmax.f32 %v5034, 0.0
        %v5252 = vmax.f32 %v5038, 0.0
        %v5253 = vmax.f32 %v5040, 0.0
        %v5254 = vmax.f32 %v5044, 0.0
        %v5255 = vmax.f32 %v5046, 0.0
        %v5256 = vmax.f32 %v5050, 0.0
        %v5257 = vmax.f32 %v5052, 0.0
        %v5258 = vmax.f32 %v5056, 0.0
        %v5259 = vmax.f32 %v5058, 0.0
        %v5260 = vmax.f32 %v5062, 0.0
        %v5261 = vmax.f32 %v5064, 0.0
        %v5262 = vmax.f32 %v5068, 0.0
        %v5263 = vmax.f32 %v5070, 0.0
        %v5264 = vmax.f32 %v5074, 0.0
        %v5265 = vmax.f32 %v5076, 0.0
        %v5266 = vmax.f32 %v5080, 0.0
        %v5267 = vmax.f32 %v5082, 0.0
        %v5268 = vmax.f32 %v5086, 0.0
        %v5269 = vmax.f32 %v5088, 0.0
        %v5270 = vmax.f32 %v5092, 0.0
        %v5271 = vmax.f32 %v5094, 0.0
        %v5272 = vmax.f32 %v5098, 0.0
        %v5273 = vmax.f32 %v5100, 0.0
        %v5274 = vmax.f32 %v5104, 0.0
        %v5275 = vmax.f32 %v5106, 0.0
        %v5276 = vmax.f32 %v5110, 0.0
        %v5277 = vmax.f32 %v5112, 0.0
        %v5278 = vmax.f32 %v5116, 0.0
        %v5279 = vmax.f32 %v5118, 0.0
        %v5280 = vmax.f32 %v5122, 0.0
        %v5281 = vmax.f32 %v5124, 0.0
        %v5282 = vmax.f32 %v5128, 0.0
        %v5283 = vmax.f32 %v5130, 0.0
        %v5284 = vmax.f32 %v5134, 0.0
        %v5285 = vmax.f32 %v5136, 0.0
        %v5286 = vmax.f32 %v5140, 0.0
        %v5287 = vmax.f32 %v5142, 0.0
        %v5288 = vmax.f32 %v5146, 0.0
        %v5289 = vmax.f32 %v5148, 0.0
        %v5290 = vmax.f32 %v5152, 0.0
        %v5291 = vmax.f32 %v5154, 0.0
        %v5292 = vmax.f32 %v5158, 0.0
        %v5293 = vmax.f32 %v5160, 0.0
        %v5294 = vmax.f32 %v5164, 0.0
        %v5295 = vmax.f32 %v5166, 0.0
        %5296 = vmatprep.subr.mxu0 %v1106
        %5297 = vmatpush1.msra.mxu0 %v1105
        %5298 = vmatprep.subr.mxu0 %v1104
        %5299 = vmatpush1.msra.mxu0 %v1103
        %5300 = vmatprep.subr.mxu0 %v1102
        %5301 = vmatpush1.msra.mxu0 %v1101
        %5302 = vmatprep.subr.mxu0 %v1100
        %5303 = vmatpush1.msra.mxu0 %v1099
        %5304 = vmatprep.subr.mxu0 %v1098
        %5305 = vmatpush1.msra.mxu0 %v1097
        %5306 = vmatprep.subr.mxu0 %v1096
        %5307 = vmatpush1.msra.mxu0 %v1095
        %5308 = vmatprep.subr.mxu0 %v1094
        %5309 = vmatpush1.msra.mxu0 %v1093
        %5310 = vmatprep.subr.mxu0 %v1092
        %5311 = vmatpush1.msra.mxu0 %v1091
        %5312 = vmatprep.subr.mxu0 %v1090
        %5313 = vmatpush1.msra.mxu0 %v1089
        %5314 = vmatprep.subr.mxu0 %v1088
        %5315 = vmatpush1.msra.mxu0 %v1087
        %5316 = vmatprep.subr.mxu0 %v1086
        %5317 = vmatpush1.msra.mxu0 %v1085
        %5318 = vmatprep.subr.mxu0 %v1084
        %5319 = vmatpush1.msra.mxu0 %v1083
        %5320 = vmatprep.subr.mxu0 %v1082
        %5321 = vmatpush1.msra.mxu0 %v1081
        %5322 = vmatprep.subr.mxu0 %v1080
        %5323 = vmatpush1.msra.mxu0 %v1079
        %5324 = vmatprep.subr.mxu0 %v1078
        %5325 = vmatpush1.msra.mxu0 %v1077
        %5326 = vmatprep.subr.mxu0 %v1076
        %5327 = vmatpush1.msra.mxu0 %v1075
        %5328 = vmatprep.subr.mxu0 %v1138
        %5329 = vmatpush2.msra.mxu0 %v1137
        %5330 = vmatprep.subr.mxu0 %v1136
        %5331 = vmatpush2.msra.mxu0 %v1135
        %5332 = vmatprep.subr.mxu0 %v1134
        %5333 = vmatpush2.msra.mxu0 %v1133
        %5334 = vmatprep.subr.mxu0 %v1132
        %5335 = vmatpush2.msra.mxu0 %v1131
        %5336 = vmatprep.subr.mxu0 %v1130
        %5337 = vmatpush2.msra.mxu0 %v1129
        %5338 = vmatprep.subr.mxu0 %v1128
        %5339 = vmatpush2.msra.mxu0 %v1127
        %5340 = vmatprep.subr.mxu0 %v1126
        %5341 = vmatpush2.msra.mxu0 %v1125
        %5342 = vmatprep.subr.mxu0 %v1124
        %5343 = vmatpush2.msra.mxu0 %v1123
        %5344 = vmatprep.subr.mxu0 %v1122
        %5345 = vmatpush2.msra.mxu0 %v1121
        %5346 = vmatprep.subr.mxu0 %v1120
        %5347 = vmatpush2.msra.mxu0 %v1119
        %5348 = vmatprep.subr.mxu0 %v1118
        %5349 = vmatpush2.msra.mxu0 %v1117
        %5350 = vmatprep.subr.mxu0 %v1116
        %5351 = vmatpush2.msra.mxu0 %v1115
        %5352 = vmatprep.subr.mxu0 %v1114
        %5353 = vmatpush2.msra.mxu0 %v1113
        %5354 = vmatprep.subr.mxu0 %v1112
        %5355 = vmatpush2.msra.mxu0 %v1111
        %5356 = vmatprep.subr.mxu0 %v1110
        %5357 = vmatpush2.msra.mxu0 %v1109
        %5358 = vmatprep.subr.mxu0 %v1108
        %5359 = vmatpush2.msra.mxu0 %v1107
        %5360 = vmatprep.mubr.f32.mxu0 %v5169
        %5361 = vmatmul.mubr.f32.gmra.mxu0 %v5168
        %v5362 = vpop.f32.mrf.mxu0
        %v5363 = vadd.f32 %v2999, %v5362
        %v5364 = vpop.f32.mrf.mxu0
        %v5365 = vadd.f32 %v3003, %v5364
        %5366 = vmatprep.mubr.f32.mxu0 %v5171
        %5367 = vmatmul.mubr.f32.gmra.mxu0 %v5170
        %v5368 = vpop.f32.mrf.mxu0
        %v5369 = vadd.f32 %v2999, %v5368
        %v5370 = vpop.f32.mrf.mxu0
        %v5371 = vadd.f32 %v3003, %v5370
        %5372 = vmatprep.mubr.f32.mxu0 %v5173
        %5373 = vmatmul.mubr.f32.gmra.mxu0 %v5172
        %v5374 = vpop.f32.mrf.mxu0
        %v5375 = vadd.f32 %v2999, %v5374
        %v5376 = vpop.f32.mrf.mxu0
        %v5377 = vadd.f32 %v3003, %v5376
        %5378 = vmatprep.mubr.f32.mxu0 %v5175
        %5379 = vmatmul.mubr.f32.gmra.mxu0 %v5174
        %v5380 = vpop.f32.mrf.mxu0
        %v5381 = vadd.f32 %v2999, %v5380
        %v5382 = vpop.f32.mrf.mxu0
        %v5383 = vadd.f32 %v3003, %v5382
        %5384 = vmatprep.mubr.f32.mxu0 %v5177
        %5385 = vmatmul.mubr.f32.gmra.mxu0 %v5176
        %v5386 = vpop.f32.mrf.mxu0
        %v5387 = vadd.f32 %v2999, %v5386
        %v5388 = vpop.f32.mrf.mxu0
        %v5389 = vadd.f32 %v3003, %v5388
        %5390 = vmatprep.mubr.f32.mxu0 %v5179
        %5391 = vmatmul.mubr.f32.gmra.mxu0 %v5178
        %v5392 = vpop.f32.mrf.mxu0
        %v5393 = vadd.f32 %v2999, %v5392
        %v5394 = vpop.f32.mrf.mxu0
        %v5395 = vadd.f32 %v3003, %v5394
        %5396 = vmatprep.mubr.f32.mxu0 %v5181
        %5397 = vmatmul.mubr.f32.gmra.mxu0 %v5180
        %v5398 = vpop.f32.mrf.mxu0
        %v5399 = vadd.f32 %v2999, %v5398
        %v5400 = vpop.f32.mrf.mxu0
        %v5401 = vadd.f32 %v3003, %v5400
        %5402 = vmatprep.mubr.f32.mxu0 %v5183
        %5403 = vmatmul.mubr.f32.gmra.mxu0 %v5182
        %v5404 = vpop.f32.mrf.mxu0
        %v5405 = vadd.f32 %v2999, %v5404
        %v5406 = vpop.f32.mrf.mxu0
        %v5407 = vadd.f32 %v3003, %v5406
        %5408 = vmatprep.mubr.f32.mxu0 %v5185
        %5409 = vmatmul.mubr.f32.gmra.mxu0 %v5184
        %v5410 = vpop.f32.mrf.mxu0
        %v5411 = vadd.f32 %v2999, %v5410
        %v5412 = vpop.f32.mrf.mxu0
        %v5413 = vadd.f32 %v3003, %v5412
        %5414 = vmatprep.mubr.f32.mxu0 %v5187
        %5415 = vmatmul.mubr.f32.gmra.mxu0 %v5186
        %v5416 = vpop.f32.mrf.mxu0
        %v5417 = vadd.f32 %v2999, %v5416
        %v5418 = vpop.f32.mrf.mxu0
        %v5419 = vadd.f32 %v3003, %v5418
        %5420 = vmatprep.mubr.f32.mxu0 %v5189
        %5421 = vmatmul.mubr.f32.gmra.mxu0 %v5188
        %v5422 = vpop.f32.mrf.mxu0
        %v5423 = vadd.f32 %v2999, %v5422
        %v5424 = vpop.f32.mrf.mxu0
        %v5425 = vadd.f32 %v3003, %v5424
        %5426 = vmatprep.mubr.f32.mxu0 %v5191
        %5427 = vmatmul.mubr.f32.gmra.mxu0 %v5190
        %v5428 = vpop.f32.mrf.mxu0
        %v5429 = vadd.f32 %v2999, %v5428
        %v5430 = vpop.f32.mrf.mxu0
        %v5431 = vadd.f32 %v3003, %v5430
        %5432 = vmatprep.mubr.f32.mxu0 %v5193
        %5433 = vmatmul.mubr.f32.gmra.mxu0 %v5192
        %v5434 = vpop.f32.mrf.mxu0
        %v5435 = vadd.f32 %v2999, %v5434
        %v5436 = vpop.f32.mrf.mxu0
        %v5437 = vadd.f32 %v3003, %v5436
        %5438 = vmatprep.mubr.f32.mxu0 %v5195
        %5439 = vmatmul.mubr.f32.gmra.mxu0 %v5194
        %v5440 = vpop.f32.mrf.mxu0
        %v5441 = vadd.f32 %v2999, %v5440
        %v5442 = vpop.f32.mrf.mxu0
        %v5443 = vadd.f32 %v3003, %v5442
        %5444 = vmatprep.mubr.f32.mxu0 %v5197
        %5445 = vmatmul.mubr.f32.gmra.mxu0 %v5196
        %v5446 = vpop.f32.mrf.mxu0
        %v5447 = vadd.f32 %v2999, %v5446
        %v5448 = vpop.f32.mrf.mxu0
        %v5449 = vadd.f32 %v3003, %v5448
        %5450 = vmatprep.mubr.f32.mxu0 %v5199
        %5451 = vmatmul.mubr.f32.gmra.mxu0 %v5198
        %v5452 = vpop.f32.mrf.mxu0
        %v5453 = vadd.f32 %v2999, %v5452
        %v5454 = vpop.f32.mrf.mxu0
        %v5455 = vadd.f32 %v3003, %v5454
        %5456 = vmatprep.mubr.f32.mxu0 %v5201
        %5457 = vmatmul.mubr.f32.gmra.mxu0 %v5200
        %v5458 = vpop.f32.mrf.mxu0
        %v5459 = vadd.f32 %v2999, %v5458
        %v5460 = vpop.f32.mrf.mxu0
        %v5461 = vadd.f32 %v3003, %v5460
        %5462 = vmatprep.mubr.f32.mxu0 %v5203
        %5463 = vmatmul.mubr.f32.gmra.mxu0 %v5202
        %v5464 = vpop.f32.mrf.mxu0
        %v5465 = vadd.f32 %v2999, %v5464
        %v5466 = vpop.f32.mrf.mxu0
        %v5467 = vadd.f32 %v3003, %v5466
        %5468 = vmatprep.mubr.f32.mxu0 %v5205
        %5469 = vmatmul.mubr.f32.gmra.mxu0 %v5204
        %v5470 = vpop.f32.mrf.mxu0
        %v5471 = vadd.f32 %v2999, %v5470
        %v5472 = vpop.f32.mrf.mxu0
        %v5473 = vadd.f32 %v3003, %v5472
        %5474 = vmatprep.mubr.f32.mxu0 %v5207
        %5475 = vmatmul.mubr.f32.gmra.mxu0 %v5206
        %v5476 = vpop.f32.mrf.mxu0
        %v5477 = vadd.f32 %v2999, %v5476
        %v5478 = vpop.f32.mrf.mxu0
        %v5479 = vadd.f32 %v3003, %v5478
        %5480 = vmatprep.mubr.f32.mxu0 %v5209
        %5481 = vmatmul.mubr.f32.gmra.mxu0 %v5208
        %v5482 = vpop.f32.mrf.mxu0
        %v5483 = vadd.f32 %v2999, %v5482
        %v5484 = vpop.f32.mrf.mxu0
        %v5485 = vadd.f32 %v3003, %v5484
        %5486 = vmatprep.mubr.f32.mxu0 %v5211
        %5487 = vmatmul.mubr.f32.gmra.mxu0 %v5210
        %v5488 = vpop.f32.mrf.mxu0
        %v5489 = vadd.f32 %v2999, %v5488
        %v5490 = vpop.f32.mrf.mxu0
        %v5491 = vadd.f32 %v3003, %v5490
        %5492 = vmatprep.mubr.f32.mxu0 %v5213
        %5493 = vmatmul.mubr.f32.gmra.mxu0 %v5212
        %v5494 = vpop.f32.mrf.mxu0
        %v5495 = vadd.f32 %v2999, %v5494
        %v5496 = vpop.f32.mrf.mxu0
        %v5497 = vadd.f32 %v3003, %v5496
        %5498 = vmatprep.mubr.f32.mxu0 %v5215
        %5499 = vmatmul.mubr.f32.gmra.mxu0 %v5214
        %v5500 = vpop.f32.mrf.mxu0
        %v5501 = vadd.f32 %v2999, %v5500
        %v5502 = vpop.f32.mrf.mxu0
        %v5503 = vadd.f32 %v3003, %v5502
        %5504 = vmatprep.mubr.f32.mxu0 %v5217
        %5505 = vmatmul.mubr.f32.gmra.mxu0 %v5216
        %v5506 = vpop.f32.mrf.mxu0
        %v5507 = vadd.f32 %v2999, %v5506
        %v5508 = vpop.f32.mrf.mxu0
        %v5509 = vadd.f32 %v3003, %v5508
        %5510 = vmatprep.mubr.f32.mxu0 %v5219
        %5511 = vmatmul.mubr.f32.gmra.mxu0 %v5218
        %v5512 = vpop.f32.mrf.mxu0
        %v5513 = vadd.f32 %v2999, %v5512
        %v5514 = vpop.f32.mrf.mxu0
        %v5515 = vadd.f32 %v3003, %v5514
        %5516 = vmatprep.mubr.f32.mxu0 %v5221
        %5517 = vmatmul.mubr.f32.gmra.mxu0 %v5220
        %v5518 = vpop.f32.mrf.mxu0
        %v5519 = vadd.f32 %v2999, %v5518
        %v5520 = vpop.f32.mrf.mxu0
        %v5521 = vadd.f32 %v3003, %v5520
        %5522 = vmatprep.mubr.f32.mxu0 %v5223
        %5523 = vmatmul.mubr.f32.gmra.mxu0 %v5222
        %v5524 = vpop.f32.mrf.mxu0
        %v5525 = vadd.f32 %v2999, %v5524
        %v5526 = vpop.f32.mrf.mxu0
        %v5527 = vadd.f32 %v3003, %v5526
        %5528 = vmatprep.mubr.f32.mxu0 %v5225
        %5529 = vmatmul.mubr.f32.gmra.mxu0 %v5224
        %v5530 = vpop.f32.mrf.mxu0
        %v5531 = vadd.f32 %v2999, %v5530
        %v5532 = vpop.f32.mrf.mxu0
        %v5533 = vadd.f32 %v3003, %v5532
        %5534 = vmatprep.mubr.f32.mxu0 %v5227
        %5535 = vmatmul.mubr.f32.gmra.mxu0 %v5226
        %v5536 = vpop.f32.mrf.mxu0
        %v5537 = vadd.f32 %v2999, %v5536
        %v5538 = vpop.f32.mrf.mxu0
        %v5539 = vadd.f32 %v3003, %v5538
        %5540 = vmatprep.mubr.f32.mxu0 %v5229
        %5541 = vmatmul.mubr.f32.gmra.mxu0 %v5228
        %v5542 = vpop.f32.mrf.mxu0
        %v5543 = vadd.f32 %v2999, %v5542
        %v5544 = vpop.f32.mrf.mxu0
        %v5545 = vadd.f32 %v3003, %v5544
        %5546 = vmatprep.mubr.f32.mxu0 %v5231
        %5547 = vmatmul.mubr.f32.gmra.mxu0 %v5230
        %v5548 = vpop.f32.mrf.mxu0
        %v5549 = vadd.f32 %v2999, %v5548
        %v5550 = vpop.f32.mrf.mxu0
        %v5551 = vadd.f32 %v3003, %v5550
        %5552 = vmatprep.mubr.f32.mxu0 %v5233
        %5553 = vmatmul.mubr.f32.gmra.mxu0 %v5232
        %v5554 = vpop.f32.mrf.mxu0
        %v5555 = vadd.f32 %v2999, %v5554
        %v5556 = vpop.f32.mrf.mxu0
        %v5557 = vadd.f32 %v3003, %v5556
        %5558 = vmatprep.mubr.f32.mxu0 %v5235
        %5559 = vmatmul.mubr.f32.gmra.mxu0 %v5234
        %v5560 = vpop.f32.mrf.mxu0
        %v5561 = vadd.f32 %v2999, %v5560
        %v5562 = vpop.f32.mrf.mxu0
        %v5563 = vadd.f32 %v3003, %v5562
        %5564 = vmatprep.mubr.f32.mxu0 %v5237
        %5565 = vmatmul.mubr.f32.gmra.mxu0 %v5236
        %v5566 = vpop.f32.mrf.mxu0
        %v5567 = vadd.f32 %v2999, %v5566
        %v5568 = vpop.f32.mrf.mxu0
        %v5569 = vadd.f32 %v3003, %v5568
        %5570 = vmatprep.mubr.f32.mxu0 %v5239
        %5571 = vmatmul.mubr.f32.gmra.mxu0 %v5238
        %v5572 = vpop.f32.mrf.mxu0
        %v5573 = vadd.f32 %v2999, %v5572
        %v5574 = vpop.f32.mrf.mxu0
        %v5575 = vadd.f32 %v3003, %v5574
        %5576 = vmatprep.mubr.f32.mxu0 %v5241
        %5577 = vmatmul.mubr.f32.gmra.mxu0 %v5240
        %v5578 = vpop.f32.mrf.mxu0
        %v5579 = vadd.f32 %v2999, %v5578
        %v5580 = vpop.f32.mrf.mxu0
        %v5581 = vadd.f32 %v3003, %v5580
        %5582 = vmatprep.mubr.f32.mxu0 %v5243
        %5583 = vmatmul.mubr.f32.gmra.mxu0 %v5242
        %v5584 = vpop.f32.mrf.mxu0
        %v5585 = vadd.f32 %v2999, %v5584
        %v5586 = vpop.f32.mrf.mxu0
        %v5587 = vadd.f32 %v3003, %v5586
        %5588 = vmatprep.mubr.f32.mxu0 %v5245
        %5589 = vmatmul.mubr.f32.gmra.mxu0 %v5244
        %v5590 = vpop.f32.mrf.mxu0
        %v5591 = vadd.f32 %v2999, %v5590
        %v5592 = vpop.f32.mrf.mxu0
        %v5593 = vadd.f32 %v3003, %v5592
        %5594 = vmatprep.mubr.f32.mxu0 %v5247
        %5595 = vmatmul.mubr.f32.gmra.mxu0 %v5246
        %v5596 = vpop.f32.mrf.mxu0
        %v5597 = vadd.f32 %v2999, %v5596
        %v5598 = vpop.f32.mrf.mxu0
        %v5599 = vadd.f32 %v3003, %v5598
        %5600 = vmatprep.mubr.f32.mxu0 %v5249
        %5601 = vmatmul.mubr.f32.gmra.mxu0 %v5248
        %v5602 = vpop.f32.mrf.mxu0
        %v5603 = vadd.f32 %v2999, %v5602
        %v5604 = vpop.f32.mrf.mxu0
        %v5605 = vadd.f32 %v3003, %v5604
        %5606 = vmatprep.mubr.f32.mxu0 %v5251
        %5607 = vmatmul.mubr.f32.gmra.mxu0 %v5250
        %v5608 = vpop.f32.mrf.mxu0
        %v5609 = vadd.f32 %v2999, %v5608
        %v5610 = vpop.f32.mrf.mxu0
        %v5611 = vadd.f32 %v3003, %v5610
        %5612 = vmatprep.mubr.f32.mxu0 %v5253
        %5613 = vmatmul.mubr.f32.gmra.mxu0 %v5252
        %v5614 = vpop.f32.mrf.mxu0
        %v5615 = vadd.f32 %v2999, %v5614
        %v5616 = vpop.f32.mrf.mxu0
        %v5617 = vadd.f32 %v3003, %v5616
        %5618 = vmatprep.mubr.f32.mxu0 %v5255
        %5619 = vmatmul.mubr.f32.gmra.mxu0 %v5254
        %v5620 = vpop.f32.mrf.mxu0
        %v5621 = vadd.f32 %v2999, %v5620
        %v5622 = vpop.f32.mrf.mxu0
        %v5623 = vadd.f32 %v3003, %v5622
        %5624 = vmatprep.mubr.f32.mxu0 %v5257
        %5625 = vmatmul.mubr.f32.gmra.mxu0 %v5256
        %v5626 = vpop.f32.mrf.mxu0
        %v5627 = vadd.f32 %v2999, %v5626
        %v5628 = vpop.f32.mrf.mxu0
        %v5629 = vadd.f32 %v3003, %v5628
        %5630 = vmatprep.mubr.f32.mxu0 %v5259
        %5631 = vmatmul.mubr.f32.gmra.mxu0 %v5258
        %v5632 = vpop.f32.mrf.mxu0
        %v5633 = vadd.f32 %v2999, %v5632
        %v5634 = vpop.f32.mrf.mxu0
        %v5635 = vadd.f32 %v3003, %v5634
        %5636 = vmatprep.mubr.f32.mxu0 %v5261
        %5637 = vmatmul.mubr.f32.gmra.mxu0 %v5260
        %v5638 = vpop.f32.mrf.mxu0
        %v5639 = vadd.f32 %v2999, %v5638
        %v5640 = vpop.f32.mrf.mxu0
        %v5641 = vadd.f32 %v3003, %v5640
        %5642 = vmatprep.mubr.f32.mxu0 %v5263
        %5643 = vmatmul.mubr.f32.gmra.mxu0 %v5262
        %v5644 = vpop.f32.mrf.mxu0
        %v5645 = vadd.f32 %v2999, %v5644
        %v5646 = vpop.f32.mrf.mxu0
        %v5647 = vadd.f32 %v3003, %v5646
        %5648 = vmatprep.mubr.f32.mxu0 %v5265
        %5649 = vmatmul.mubr.f32.gmra.mxu0 %v5264
        %v5650 = vpop.f32.mrf.mxu0
        %v5651 = vadd.f32 %v2999, %v5650
        %v5652 = vpop.f32.mrf.mxu0
        %v5653 = vadd.f32 %v3003, %v5652
        %5654 = vmatprep.mubr.f32.mxu0 %v5267
        %5655 = vmatmul.mubr.f32.gmra.mxu0 %v5266
        %v5656 = vpop.f32.mrf.mxu0
        %v5657 = vadd.f32 %v2999, %v5656
        %v5658 = vpop.f32.mrf.mxu0
        %v5659 = vadd.f32 %v3003, %v5658
        %5660 = vmatprep.mubr.f32.mxu0 %v5269
        %5661 = vmatmul.mubr.f32.gmra.mxu0 %v5268
        %v5662 = vpop.f32.mrf.mxu0
        %v5663 = vadd.f32 %v2999, %v5662
        %v5664 = vpop.f32.mrf.mxu0
        %v5665 = vadd.f32 %v3003, %v5664
        %5666 = vmatprep.mubr.f32.mxu0 %v5271
        %5667 = vmatmul.mubr.f32.gmra.mxu0 %v5270
        %v5668 = vpop.f32.mrf.mxu0
        %v5669 = vadd.f32 %v2999, %v5668
        %v5670 = vpop.f32.mrf.mxu0
        %v5671 = vadd.f32 %v3003, %v5670
        %5672 = vmatprep.mubr.f32.mxu0 %v5273
        %5673 = vmatmul.mubr.f32.gmra.mxu0 %v5272
        %v5674 = vpop.f32.mrf.mxu0
        %v5675 = vadd.f32 %v2999, %v5674
        %v5676 = vpop.f32.mrf.mxu0
        %v5677 = vadd.f32 %v3003, %v5676
        %5678 = vmatprep.mubr.f32.mxu0 %v5275
        %5679 = vmatmul.mubr.f32.gmra.mxu0 %v5274
        %v5680 = vpop.f32.mrf.mxu0
        %v5681 = vadd.f32 %v2999, %v5680
        %v5682 = vpop.f32.mrf.mxu0
        %v5683 = vadd.f32 %v3003, %v5682
        %5684 = vmatprep.mubr.f32.mxu0 %v5277
        %5685 = vmatmul.mubr.f32.gmra.mxu0 %v5276
        %v5686 = vpop.f32.mrf.mxu0
        %v5687 = vadd.f32 %v2999, %v5686
        %v5688 = vpop.f32.mrf.mxu0
        %v5689 = vadd.f32 %v3003, %v5688
        %5690 = vmatprep.mubr.f32.mxu0 %v5279
        %5691 = vmatmul.mubr.f32.gmra.mxu0 %v5278
        %v5692 = vpop.f32.mrf.mxu0
        %v5693 = vadd.f32 %v2999, %v5692
        %v5694 = vpop.f32.mrf.mxu0
        %v5695 = vadd.f32 %v3003, %v5694
        %5696 = vmatprep.mubr.f32.mxu0 %v5281
        %5697 = vmatmul.mubr.f32.gmra.mxu0 %v5280
        %v5698 = vpop.f32.mrf.mxu0
        %v5699 = vadd.f32 %v2999, %v5698
        %v5700 = vpop.f32.mrf.mxu0
        %v5701 = vadd.f32 %v3003, %v5700
        %5702 = vmatprep.mubr.f32.mxu0 %v5283
        %5703 = vmatmul.mubr.f32.gmra.mxu0 %v5282
        %v5704 = vpop.f32.mrf.mxu0
        %v5705 = vadd.f32 %v2999, %v5704
        %v5706 = vpop.f32.mrf.mxu0
        %v5707 = vadd.f32 %v3003, %v5706
        %5708 = vmatprep.mubr.f32.mxu0 %v5285
        %5709 = vmatmul.mubr.f32.gmra.mxu0 %v5284
        %v5710 = vpop.f32.mrf.mxu0
        %v5711 = vadd.f32 %v2999, %v5710
        %v5712 = vpop.f32.mrf.mxu0
        %v5713 = vadd.f32 %v3003, %v5712
        %5714 = vmatprep.mubr.f32.mxu0 %v5287
        %5715 = vmatmul.mubr.f32.gmra.mxu0 %v5286
        %v5716 = vpop.f32.mrf.mxu0
        %v5717 = vadd.f32 %v2999, %v5716
        %v5718 = vpop.f32.mrf.mxu0
        %v5719 = vadd.f32 %v3003, %v5718
        %5720 = vmatprep.mubr.f32.mxu0 %v5289
        %5721 = vmatmul.mubr.f32.gmra.mxu0 %v5288
        %v5722 = vpop.f32.mrf.mxu0
        %v5723 = vadd.f32 %v2999, %v5722
        %v5724 = vpop.f32.mrf.mxu0
        %v5725 = vadd.f32 %v3003, %v5724
        %5726 = vmatprep.mubr.f32.mxu0 %v5291
        %5727 = vmatmul.mubr.f32.gmra.mxu0 %v5290
        %v5728 = vpop.f32.mrf.mxu0
        %v5729 = vadd.f32 %v2999, %v5728
        %v5730 = vpop.f32.mrf.mxu0
        %v5731 = vadd.f32 %v3003, %v5730
        %5732 = vmatprep.mubr.f32.mxu0 %v5293
        %5733 = vmatmul.mubr.f32.gmra.mxu0 %v5292
        %v5734 = vpop.f32.mrf.mxu0
        %v5735 = vadd.f32 %v2999, %v5734
        %v5736 = vpop.f32.mrf.mxu0
        %v5737 = vadd.f32 %v3003, %v5736
        %5738 = vmatprep.mubr.f32.mxu0 %v5295
        %5739 = vmatmul.mubr.f32.gmra.mxu0 %v5294
        %v5740 = vpop.f32.mrf.mxu0
        %v5741 = vadd.f32 %v2999, %v5740
        %v5742 = vpop.f32.mrf.mxu0
        %v5743 = vadd.f32 %v3003, %v5742
        %5744 = vdwg.mxu0
        %v5745 = vmax.f32 %v5363, 0.0
        %v5746 = vmax.f32 %v5365, 0.0
        %v5747 = vmax.f32 %v5369, 0.0
        %v5748 = vmax.f32 %v5371, 0.0
        %v5749 = vmax.f32 %v5375, 0.0
        %v5750 = vmax.f32 %v5377, 0.0
        %v5751 = vmax.f32 %v5381, 0.0
        %v5752 = vmax.f32 %v5383, 0.0
        %v5753 = vmax.f32 %v5387, 0.0
        %v5754 = vmax.f32 %v5389, 0.0
        %v5755 = vmax.f32 %v5393, 0.0
        %v5756 = vmax.f32 %v5395, 0.0
        %v5757 = vmax.f32 %v5399, 0.0
        %v5758 = vmax.f32 %v5401, 0.0
        %v5759 = vmax.f32 %v5405, 0.0
        %v5760 = vmax.f32 %v5407, 0.0
        %v5761 = vmax.f32 %v5411, 0.0
        %v5762 = vmax.f32 %v5413, 0.0
        %v5763 = vmax.f32 %v5417, 0.0
        %v5764 = vmax.f32 %v5419, 0.0
        %v5765 = vmax.f32 %v5423, 0.0
        %v5766 = vmax.f32 %v5425, 0.0
        %v5767 = vmax.f32 %v5429, 0.0
        %v5768 = vmax.f32 %v5431, 0.0
        %v5769 = vmax.f32 %v5435, 0.0
        %v5770 = vmax.f32 %v5437, 0.0
        %v5771 = vmax.f32 %v5441, 0.0
        %v5772 = vmax.f32 %v5443, 0.0
        %v5773 = vmax.f32 %v5447, 0.0
        %v5774 = vmax.f32 %v5449, 0.0
        %v5775 = vmax.f32 %v5453, 0.0
        %v5776 = vmax.f32 %v5455, 0.0
        %v5777 = vmax.f32 %v5459, 0.0
        %v5778 = vmax.f32 %v5461, 0.0
        %v5779 = vmax.f32 %v5465, 0.0
        %v5780 = vmax.f32 %v5467, 0.0
        %v5781 = vmax.f32 %v5471, 0.0
        %v5782 = vmax.f32 %v5473, 0.0
        %v5783 = vmax.f32 %v5477, 0.0
        %v5784 = vmax.f32 %v5479, 0.0
        %v5785 = vmax.f32 %v5483, 0.0
        %v5786 = vmax.f32 %v5485, 0.0
        %v5787 = vmax.f32 %v5489, 0.0
        %v5788 = vmax.f32 %v5491, 0.0
        %v5789 = vmax.f32 %v5495, 0.0
        %v5790 = vmax.f32 %v5497, 0.0
        %v5791 = vmax.f32 %v5501, 0.0
        %v5792 = vmax.f32 %v5503, 0.0
        %v5793 = vmax.f32 %v5507, 0.0
        %v5794 = vmax.f32 %v5509, 0.0
        %v5795 = vmax.f32 %v5513, 0.0
        %v5796 = vmax.f32 %v5515, 0.0
        %v5797 = vmax.f32 %v5519, 0.0
        %v5798 = vmax.f32 %v5521, 0.0
        %v5799 = vmax.f32 %v5525, 0.0
        %v5800 = vmax.f32 %v5527, 0.0
        %v5801 = vmax.f32 %v5531, 0.0
        %v5802 = vmax.f32 %v5533, 0.0
        %v5803 = vmax.f32 %v5537, 0.0
        %v5804 = vmax.f32 %v5539, 0.0
        %v5805 = vmax.f32 %v5543, 0.0
        %v5806 = vmax.f32 %v5545, 0.0
        %v5807 = vmax.f32 %v5549, 0.0
        %v5808 = vmax.f32 %v5551, 0.0
        %v5809 = vmax.f32 %v5555, 0.0
        %v5810 = vmax.f32 %v5557, 0.0
        %v5811 = vmax.f32 %v5561, 0.0
        %v5812 = vmax.f32 %v5563, 0.0
        %v5813 = vmax.f32 %v5567, 0.0
        %v5814 = vmax.f32 %v5569, 0.0
        %v5815 = vmax.f32 %v5573, 0.0
        %v5816 = vmax.f32 %v5575, 0.0
        %v5817 = vmax.f32 %v5579, 0.0
        %v5818 = vmax.f32 %v5581, 0.0
        %v5819 = vmax.f32 %v5585, 0.0
        %v5820 = vmax.f32 %v5587, 0.0
        %v5821 = vmax.f32 %v5591, 0.0
        %v5822 = vmax.f32 %v5593, 0.0
        %v5823 = vmax.f32 %v5597, 0.0
        %v5824 = vmax.f32 %v5599, 0.0
        %v5825 = vmax.f32 %v5603, 0.0
        %v5826 = vmax.f32 %v5605, 0.0
        %v5827 = vmax.f32 %v5609, 0.0
        %v5828 = vmax.f32 %v5611, 0.0
        %v5829 = vmax.f32 %v5615, 0.0
        %v5830 = vmax.f32 %v5617, 0.0
        %v5831 = vmax.f32 %v5621, 0.0
        %v5832 = vmax.f32 %v5623, 0.0
        %v5833 = vmax.f32 %v5627, 0.0
        %v5834 = vmax.f32 %v5629, 0.0
        %v5835 = vmax.f32 %v5633, 0.0
        %v5836 = vmax.f32 %v5635, 0.0
        %v5837 = vmax.f32 %v5639, 0.0
        %v5838 = vmax.f32 %v5641, 0.0
        %v5839 = vmax.f32 %v5645, 0.0
        %v5840 = vmax.f32 %v5647, 0.0
        %v5841 = vmax.f32 %v5651, 0.0
        %v5842 = vmax.f32 %v5653, 0.0
        %v5843 = vmax.f32 %v5657, 0.0
        %v5844 = vmax.f32 %v5659, 0.0
        %v5845 = vmax.f32 %v5663, 0.0
        %v5846 = vmax.f32 %v5665, 0.0
        %v5847 = vmax.f32 %v5669, 0.0
        %v5848 = vmax.f32 %v5671, 0.0
        %v5849 = vmax.f32 %v5675, 0.0
        %v5850 = vmax.f32 %v5677, 0.0
        %v5851 = vmax.f32 %v5681, 0.0
        %v5852 = vmax.f32 %v5683, 0.0
        %v5853 = vmax.f32 %v5687, 0.0
        %v5854 = vmax.f32 %v5689, 0.0
        %v5855 = vmax.f32 %v5693, 0.0
        %v5856 = vmax.f32 %v5695, 0.0
        %v5857 = vmax.f32 %v5699, 0.0
        %v5858 = vmax.f32 %v5701, 0.0
        %v5859 = vmax.f32 %v5705, 0.0
        %v5860 = vmax.f32 %v5707, 0.0
        %v5861 = vmax.f32 %v5711, 0.0
        %v5862 = vmax.f32 %v5713, 0.0
        %v5863 = vmax.f32 %v5717, 0.0
        %v5864 = vmax.f32 %v5719, 0.0
        %v5865 = vmax.f32 %v5723, 0.0
        %v5866 = vmax.f32 %v5725, 0.0
        %v5867 = vmax.f32 %v5729, 0.0
        %v5868 = vmax.f32 %v5731, 0.0
        %v5869 = vmax.f32 %v5735, 0.0
        %v5870 = vmax.f32 %v5737, 0.0
        %v5871 = vmax.f32 %v5741, 0.0
        %v5872 = vmax.f32 %v5743, 0.0
        %v5873 = vmul.f32 %v3455, %v5745
        %v5874 = vmul.f32 %v3456, %v5746
        %v5875 = vmul.f32 %v3457, %v5747
        %v5876 = vmul.f32 %v3458, %v5748
        %v5877 = vmul.f32 %v3459, %v5749
        %v5878 = vmul.f32 %v3460, %v5750
        %v5879 = vmul.f32 %v3461, %v5751
        %v5880 = vmul.f32 %v3462, %v5752
        %v5881 = vmul.f32 %v3463, %v5753
        %v5882 = vmul.f32 %v3464, %v5754
        %v5883 = vmul.f32 %v3465, %v5755
        %v5884 = vmul.f32 %v3466, %v5756
        %v5885 = vmul.f32 %v3467, %v5757
        %v5886 = vmul.f32 %v3468, %v5758
        %v5887 = vmul.f32 %v3469, %v5759
        %v5888 = vmul.f32 %v3470, %v5760
        %v5889 = vmul.f32 %v3471, %v5761
        %v5890 = vmul.f32 %v3472, %v5762
        %v5891 = vmul.f32 %v3473, %v5763
        %v5892 = vmul.f32 %v3474, %v5764
        %v5893 = vmul.f32 %v3475, %v5765
        %v5894 = vmul.f32 %v3476, %v5766
        %v5895 = vmul.f32 %v3477, %v5767
        %v5896 = vmul.f32 %v3478, %v5768
        %v5897 = vmul.f32 %v3479, %v5769
        %v5898 = vmul.f32 %v3480, %v5770
        %v5899 = vmul.f32 %v3481, %v5771
        %v5900 = vmul.f32 %v3482, %v5772
        %v5901 = vmul.f32 %v3483, %v5773
        %v5902 = vmul.f32 %v3484, %v5774
        %v5903 = vmul.f32 %v3485, %v5775
        %v5904 = vmul.f32 %v3486, %v5776
        %v5905 = vmul.f32 %v3487, %v5777
        %v5906 = vmul.f32 %v3488, %v5778
        %v5907 = vmul.f32 %v3489, %v5779
        %v5908 = vmul.f32 %v3490, %v5780
        %v5909 = vmul.f32 %v3491, %v5781
        %v5910 = vmul.f32 %v3492, %v5782
        %v5911 = vmul.f32 %v3493, %v5783
        %v5912 = vmul.f32 %v3494, %v5784
        %v5913 = vmul.f32 %v3495, %v5785
        %v5914 = vmul.f32 %v3496, %v5786
        %v5915 = vmul.f32 %v3497, %v5787
        %v5916 = vmul.f32 %v3498, %v5788
        %v5917 = vmul.f32 %v3499, %v5789
        %v5918 = vmul.f32 %v3500, %v5790
        %v5919 = vmul.f32 %v3501, %v5791
        %v5920 = vmul.f32 %v3502, %v5792
        %v5921 = vmul.f32 %v3503, %v5793
        %v5922 = vmul.f32 %v3504, %v5794
        %v5923 = vmul.f32 %v3505, %v5795
        %v5924 = vmul.f32 %v3506, %v5796
        %v5925 = vmul.f32 %v3507, %v5797
        %v5926 = vmul.f32 %v3508, %v5798
        %v5927 = vmul.f32 %v3509, %v5799
        %v5928 = vmul.f32 %v3510, %v5800
        %v5929 = vmul.f32 %v3511, %v5801
        %v5930 = vmul.f32 %v3512, %v5802
        %v5931 = vmul.f32 %v3513, %v5803
        %v5932 = vmul.f32 %v3514, %v5804
        %v5933 = vmul.f32 %v3515, %v5805
        %v5934 = vmul.f32 %v3516, %v5806
        %v5935 = vmul.f32 %v3517, %v5807
        %v5936 = vmul.f32 %v3518, %v5808
        %v5937 = vmul.f32 %v3519, %v5809
        %v5938 = vmul.f32 %v3520, %v5810
        %v5939 = vmul.f32 %v3521, %v5811
        %v5940 = vmul.f32 %v3522, %v5812
        %v5941 = vmul.f32 %v3523, %v5813
        %v5942 = vmul.f32 %v3524, %v5814
        %v5943 = vmul.f32 %v3525, %v5815
        %v5944 = vmul.f32 %v3526, %v5816
        %v5945 = vmul.f32 %v3527, %v5817
        %v5946 = vmul.f32 %v3528, %v5818
        %v5947 = vmul.f32 %v3529, %v5819
        %v5948 = vmul.f32 %v3530, %v5820
        %v5949 = vmul.f32 %v3531, %v5821
        %v5950 = vmul.f32 %v3532, %v5822
        %v5951 = vmul.f32 %v3533, %v5823
        %v5952 = vmul.f32 %v3534, %v5824
        %v5953 = vmul.f32 %v3535, %v5825
        %v5954 = vmul.f32 %v3536, %v5826
        %v5955 = vmul.f32 %v3537, %v5827
        %v5956 = vmul.f32 %v3538, %v5828
        %v5957 = vmul.f32 %v3539, %v5829
        %v5958 = vmul.f32 %v3540, %v5830
        %v5959 = vmul.f32 %v3541, %v5831
        %v5960 = vmul.f32 %v3542, %v5832
        %v5961 = vmul.f32 %v3543, %v5833
        %v5962 = vmul.f32 %v3544, %v5834
        %v5963 = vmul.f32 %v3545, %v5835
        %v5964 = vmul.f32 %v3546, %v5836
        %v5965 = vmul.f32 %v3547, %v5837
        %v5966 = vmul.f32 %v3548, %v5838
        %v5967 = vmul.f32 %v3549, %v5839
        %v5968 = vmul.f32 %v3550, %v5840
        %v5969 = vmul.f32 %v3551, %v5841
        %v5970 = vmul.f32 %v3552, %v5842
        %v5971 = vmul.f32 %v3553, %v5843
        %v5972 = vmul.f32 %v3554, %v5844
        %v5973 = vmul.f32 %v3555, %v5845
        %v5974 = vmul.f32 %v3556, %v5846
        %v5975 = vmul.f32 %v3557, %v5847
        %v5976 = vmul.f32 %v3558, %v5848
        %v5977 = vmul.f32 %v3559, %v5849
        %v5978 = vmul.f32 %v3560, %v5850
        %v5979 = vmul.f32 %v3561, %v5851
        %v5980 = vmul.f32 %v3562, %v5852
        %v5981 = vmul.f32 %v3563, %v5853
        %v5982 = vmul.f32 %v3564, %v5854
        %v5983 = vmul.f32 %v3565, %v5855
        %v5984 = vmul.f32 %v3566, %v5856
        %v5985 = vmul.f32 %v3567, %v5857
        %v5986 = vmul.f32 %v3568, %v5858
        %v5987 = vmul.f32 %v3569, %v5859
        %v5988 = vmul.f32 %v3570, %v5860
        %v5989 = vmul.f32 %v3571, %v5861
        %v5990 = vmul.f32 %v3572, %v5862
        %v5991 = vmul.f32 %v3573, %v5863
        %v5992 = vmul.f32 %v3574, %v5864
        %v5993 = vmul.f32 %v3575, %v5865
        %v5994 = vmul.f32 %v3576, %v5866
        %v5995 = vmul.f32 %v3577, %v5867
        %v5996 = vmul.f32 %v3578, %v5868
        %v5997 = vmul.f32 %v3579, %v5869
        %v5998 = vmul.f32 %v3580, %v5870
        %v5999 = vmul.f32 %v3581, %v5871
        %v6000 = vmul.f32 %v3582, %v5872
        %v6002 = vlaneseq
        %v6003 = vshrl.u32 %v6002, 7
        %v6004 = vsub.s32 0, %v6003
        %v6005 = vrot.slane %v1269, %v6004
        %v6006 = vlaneseq
        %v6007 = vshrl.u32 %v6006, 7
        %v6008 = vsub.s32 1, %v6007
        %v6009 = vrot.slane %v1269, %v6008
        %6012 = vmatprep.subr.mxu0 %v1172
        %6013 = vmatpush1.msra.mxu0 %v1171
        %6014 = vmatprep.subr.mxu0 %v1170
        %6015 = vmatpush1.msra.mxu0 %v1169
        %6016 = vmatprep.subr.mxu0 %v1168
        %6017 = vmatpush1.msra.mxu0 %v1167
        %6018 = vmatprep.subr.mxu0 %v1166
        %6019 = vmatpush1.msra.mxu0 %v1165
        %6020 = vmatprep.subr.mxu0 %v1164
        %6021 = vmatpush1.msra.mxu0 %v1163
        %6022 = vmatprep.subr.mxu0 %v1162
        %6023 = vmatpush1.msra.mxu0 %v1161
        %6024 = vmatprep.subr.mxu0 %v1160
        %6025 = vmatpush1.msra.mxu0 %v1159
        %6026 = vmatprep.subr.mxu0 %v1158
        %6027 = vmatpush1.msra.mxu0 %v1157
        %6028 = vmatprep.subr.mxu0 %v1156
        %6029 = vmatpush1.msra.mxu0 %v1155
        %6030 = vmatprep.subr.mxu0 %v1154
        %6031 = vmatpush1.msra.mxu0 %v1153
        %6032 = vmatprep.subr.mxu0 %v1152
        %6033 = vmatpush1.msra.mxu0 %v1151
        %6034 = vmatprep.subr.mxu0 %v1150
        %6035 = vmatpush1.msra.mxu0 %v1149
        %6036 = vmatprep.subr.mxu0 %v1148
        %6037 = vmatpush1.msra.mxu0 %v1147
        %6038 = vmatprep.subr.mxu0 %v1146
        %6039 = vmatpush1.msra.mxu0 %v1145
        %6040 = vmatprep.subr.mxu0 %v1144
        %6041 = vmatpush1.msra.mxu0 %v1143
        %6042 = vmatprep.subr.mxu0 %v1142
        %6043 = vmatpush1.msra.mxu0 %v1141
        %6044 = vmatprep.subr.mxu0 %v1204
        %6045 = vmatpush2.msra.mxu0 %v1203
        %6046 = vmatprep.subr.mxu0 %v1202
        %6047 = vmatpush2.msra.mxu0 %v1201
        %6048 = vmatprep.subr.mxu0 %v1200
        %6049 = vmatpush2.msra.mxu0 %v1199
        %6050 = vmatprep.subr.mxu0 %v1198
        %6051 = vmatpush2.msra.mxu0 %v1197
        %6052 = vmatprep.subr.mxu0 %v1196
        %6053 = vmatpush2.msra.mxu0 %v1195
        %6054 = vmatprep.subr.mxu0 %v1194
        %6055 = vmatpush2.msra.mxu0 %v1193
        %6056 = vmatprep.subr.mxu0 %v1192
        %6057 = vmatpush2.msra.mxu0 %v1191
        %6058 = vmatprep.subr.mxu0 %v1190
        %6059 = vmatpush2.msra.mxu0 %v1189
        %6060 = vmatprep.subr.mxu0 %v1188
        %6061 = vmatpush2.msra.mxu0 %v1187
        %6062 = vmatprep.subr.mxu0 %v1186
        %6063 = vmatpush2.msra.mxu0 %v1185
        %6064 = vmatprep.subr.mxu0 %v1184
        %6065 = vmatpush2.msra.mxu0 %v1183
        %6066 = vmatprep.subr.mxu0 %v1182
        %6067 = vmatpush2.msra.mxu0 %v1181
        %6068 = vmatprep.subr.mxu0 %v1180
        %6069 = vmatpush2.msra.mxu0 %v1179
        %6070 = vmatprep.subr.mxu0 %v1178
        %6071 = vmatpush2.msra.mxu0 %v1177
        %6072 = vmatprep.subr.mxu0 %v1176
        %6073 = vmatpush2.msra.mxu0 %v1175
        %6074 = vmatprep.subr.mxu0 %v1174
        %6075 = vmatpush2.msra.mxu0 %v1173
        %6076 = vmatprep.mubr.f32.mxu0 %v5874
        %6077 = vmatmul.mubr.f32.gmra.mxu0 %v5873
        %v6078 = vpop.f32.mrf.mxu0
        %v6079 = vadd.f32 %v6005, %v6078
        %v6080 = vpop.f32.mrf.mxu0
        %v6081 = vadd.f32 %v6009, %v6080
        %6082 = vmatprep.mubr.f32.mxu0 %v5876
        %6083 = vmatmul.mubr.f32.gmra.mxu0 %v5875
        %v6084 = vpop.f32.mrf.mxu0
        %v6085 = vadd.f32 %v6005, %v6084
        %v6086 = vpop.f32.mrf.mxu0
        %v6087 = vadd.f32 %v6009, %v6086
        %6088 = vmatprep.mubr.f32.mxu0 %v5878
        %6089 = vmatmul.mubr.f32.gmra.mxu0 %v5877
        %v6090 = vpop.f32.mrf.mxu0
        %v6091 = vadd.f32 %v6005, %v6090
        %v6092 = vpop.f32.mrf.mxu0
        %v6093 = vadd.f32 %v6009, %v6092
        %6094 = vmatprep.mubr.f32.mxu0 %v5880
        %6095 = vmatmul.mubr.f32.gmra.mxu0 %v5879
        %v6096 = vpop.f32.mrf.mxu0
        %v6097 = vadd.f32 %v6005, %v6096
        %v6098 = vpop.f32.mrf.mxu0
        %v6099 = vadd.f32 %v6009, %v6098
        %6100 = vmatprep.mubr.f32.mxu0 %v5882
        %6101 = vmatmul.mubr.f32.gmra.mxu0 %v5881
        %v6102 = vpop.f32.mrf.mxu0
        %v6103 = vadd.f32 %v6005, %v6102
        %v6104 = vpop.f32.mrf.mxu0
        %v6105 = vadd.f32 %v6009, %v6104
        %6106 = vmatprep.mubr.f32.mxu0 %v5884
        %6107 = vmatmul.mubr.f32.gmra.mxu0 %v5883
        %v6108 = vpop.f32.mrf.mxu0
        %v6109 = vadd.f32 %v6005, %v6108
        %v6110 = vpop.f32.mrf.mxu0
        %v6111 = vadd.f32 %v6009, %v6110
        %6112 = vmatprep.mubr.f32.mxu0 %v5886
        %6113 = vmatmul.mubr.f32.gmra.mxu0 %v5885
        %v6114 = vpop.f32.mrf.mxu0
        %v6115 = vadd.f32 %v6005, %v6114
        %v6116 = vpop.f32.mrf.mxu0
        %v6117 = vadd.f32 %v6009, %v6116
        %6118 = vmatprep.mubr.f32.mxu0 %v5888
        %6119 = vmatmul.mubr.f32.gmra.mxu0 %v5887
        %v6120 = vpop.f32.mrf.mxu0
        %v6121 = vadd.f32 %v6005, %v6120
        %v6122 = vpop.f32.mrf.mxu0
        %v6123 = vadd.f32 %v6009, %v6122
        %6124 = vmatprep.mubr.f32.mxu0 %v5890
        %6125 = vmatmul.mubr.f32.gmra.mxu0 %v5889
        %v6126 = vpop.f32.mrf.mxu0
        %v6127 = vadd.f32 %v6005, %v6126
        %v6128 = vpop.f32.mrf.mxu0
        %v6129 = vadd.f32 %v6009, %v6128
        %6130 = vmatprep.mubr.f32.mxu0 %v5892
        %6131 = vmatmul.mubr.f32.gmra.mxu0 %v5891
        %v6132 = vpop.f32.mrf.mxu0
        %v6133 = vadd.f32 %v6005, %v6132
        %v6134 = vpop.f32.mrf.mxu0
        %v6135 = vadd.f32 %v6009, %v6134
        %6136 = vmatprep.mubr.f32.mxu0 %v5894
        %6137 = vmatmul.mubr.f32.gmra.mxu0 %v5893
        %v6138 = vpop.f32.mrf.mxu0
        %v6139 = vadd.f32 %v6005, %v6138
        %v6140 = vpop.f32.mrf.mxu0
        %v6141 = vadd.f32 %v6009, %v6140
        %6142 = vmatprep.mubr.f32.mxu0 %v5896
        %6143 = vmatmul.mubr.f32.gmra.mxu0 %v5895
        %v6144 = vpop.f32.mrf.mxu0
        %v6145 = vadd.f32 %v6005, %v6144
        %v6146 = vpop.f32.mrf.mxu0
        %v6147 = vadd.f32 %v6009, %v6146
        %6148 = vmatprep.mubr.f32.mxu0 %v5898
        %6149 = vmatmul.mubr.f32.gmra.mxu0 %v5897
        %v6150 = vpop.f32.mrf.mxu0
        %v6151 = vadd.f32 %v6005, %v6150
        %v6152 = vpop.f32.mrf.mxu0
        %v6153 = vadd.f32 %v6009, %v6152
        %6154 = vmatprep.mubr.f32.mxu0 %v5900
        %6155 = vmatmul.mubr.f32.gmra.mxu0 %v5899
        %v6156 = vpop.f32.mrf.mxu0
        %v6157 = vadd.f32 %v6005, %v6156
        %v6158 = vpop.f32.mrf.mxu0
        %v6159 = vadd.f32 %v6009, %v6158
        %6160 = vmatprep.mubr.f32.mxu0 %v5902
        %6161 = vmatmul.mubr.f32.gmra.mxu0 %v5901
        %v6162 = vpop.f32.mrf.mxu0
        %v6163 = vadd.f32 %v6005, %v6162
        %v6164 = vpop.f32.mrf.mxu0
        %v6165 = vadd.f32 %v6009, %v6164
        %6166 = vmatprep.mubr.f32.mxu0 %v5904
        %6167 = vmatmul.mubr.f32.gmra.mxu0 %v5903
        %v6168 = vpop.f32.mrf.mxu0
        %v6169 = vadd.f32 %v6005, %v6168
        %v6170 = vpop.f32.mrf.mxu0
        %v6171 = vadd.f32 %v6009, %v6170
        %6172 = vmatprep.mubr.f32.mxu0 %v5906
        %6173 = vmatmul.mubr.f32.gmra.mxu0 %v5905
        %v6174 = vpop.f32.mrf.mxu0
        %v6175 = vadd.f32 %v6005, %v6174
        %v6176 = vpop.f32.mrf.mxu0
        %v6177 = vadd.f32 %v6009, %v6176
        %6178 = vmatprep.mubr.f32.mxu0 %v5908
        %6179 = vmatmul.mubr.f32.gmra.mxu0 %v5907
        %v6180 = vpop.f32.mrf.mxu0
        %v6181 = vadd.f32 %v6005, %v6180
        %v6182 = vpop.f32.mrf.mxu0
        %v6183 = vadd.f32 %v6009, %v6182
        %6184 = vmatprep.mubr.f32.mxu0 %v5910
        %6185 = vmatmul.mubr.f32.gmra.mxu0 %v5909
        %v6186 = vpop.f32.mrf.mxu0
        %v6187 = vadd.f32 %v6005, %v6186
        %v6188 = vpop.f32.mrf.mxu0
        %v6189 = vadd.f32 %v6009, %v6188
        %6190 = vmatprep.mubr.f32.mxu0 %v5912
        %6191 = vmatmul.mubr.f32.gmra.mxu0 %v5911
        %v6192 = vpop.f32.mrf.mxu0
        %v6193 = vadd.f32 %v6005, %v6192
        %v6194 = vpop.f32.mrf.mxu0
        %v6195 = vadd.f32 %v6009, %v6194
        %6196 = vmatprep.mubr.f32.mxu0 %v5914
        %6197 = vmatmul.mubr.f32.gmra.mxu0 %v5913
        %v6198 = vpop.f32.mrf.mxu0
        %v6199 = vadd.f32 %v6005, %v6198
        %v6200 = vpop.f32.mrf.mxu0
        %v6201 = vadd.f32 %v6009, %v6200
        %6202 = vmatprep.mubr.f32.mxu0 %v5916
        %6203 = vmatmul.mubr.f32.gmra.mxu0 %v5915
        %v6204 = vpop.f32.mrf.mxu0
        %v6205 = vadd.f32 %v6005, %v6204
        %v6206 = vpop.f32.mrf.mxu0
        %v6207 = vadd.f32 %v6009, %v6206
        %6208 = vmatprep.mubr.f32.mxu0 %v5918
        %6209 = vmatmul.mubr.f32.gmra.mxu0 %v5917
        %v6210 = vpop.f32.mrf.mxu0
        %v6211 = vadd.f32 %v6005, %v6210
        %v6212 = vpop.f32.mrf.mxu0
        %v6213 = vadd.f32 %v6009, %v6212
        %6214 = vmatprep.mubr.f32.mxu0 %v5920
        %6215 = vmatmul.mubr.f32.gmra.mxu0 %v5919
        %v6216 = vpop.f32.mrf.mxu0
        %v6217 = vadd.f32 %v6005, %v6216
        %v6218 = vpop.f32.mrf.mxu0
        %v6219 = vadd.f32 %v6009, %v6218
        %6220 = vmatprep.mubr.f32.mxu0 %v5922
        %6221 = vmatmul.mubr.f32.gmra.mxu0 %v5921
        %v6222 = vpop.f32.mrf.mxu0
        %v6223 = vadd.f32 %v6005, %v6222
        %v6224 = vpop.f32.mrf.mxu0
        %v6225 = vadd.f32 %v6009, %v6224
        %6226 = vmatprep.mubr.f32.mxu0 %v5924
        %6227 = vmatmul.mubr.f32.gmra.mxu0 %v5923
        %v6228 = vpop.f32.mrf.mxu0
        %v6229 = vadd.f32 %v6005, %v6228
        %v6230 = vpop.f32.mrf.mxu0
        %v6231 = vadd.f32 %v6009, %v6230
        %6232 = vmatprep.mubr.f32.mxu0 %v5926
        %6233 = vmatmul.mubr.f32.gmra.mxu0 %v5925
        %v6234 = vpop.f32.mrf.mxu0
        %v6235 = vadd.f32 %v6005, %v6234
        %v6236 = vpop.f32.mrf.mxu0
        %v6237 = vadd.f32 %v6009, %v6236
        %6238 = vmatprep.mubr.f32.mxu0 %v5928
        %6239 = vmatmul.mubr.f32.gmra.mxu0 %v5927
        %v6240 = vpop.f32.mrf.mxu0
        %v6241 = vadd.f32 %v6005, %v6240
        %v6242 = vpop.f32.mrf.mxu0
        %v6243 = vadd.f32 %v6009, %v6242
        %6244 = vmatprep.mubr.f32.mxu0 %v5930
        %6245 = vmatmul.mubr.f32.gmra.mxu0 %v5929
        %v6246 = vpop.f32.mrf.mxu0
        %v6247 = vadd.f32 %v6005, %v6246
        %v6248 = vpop.f32.mrf.mxu0
        %v6249 = vadd.f32 %v6009, %v6248
        %6250 = vmatprep.mubr.f32.mxu0 %v5932
        %6251 = vmatmul.mubr.f32.gmra.mxu0 %v5931
        %v6252 = vpop.f32.mrf.mxu0
        %v6253 = vadd.f32 %v6005, %v6252
        %v6254 = vpop.f32.mrf.mxu0
        %v6255 = vadd.f32 %v6009, %v6254
        %6256 = vmatprep.mubr.f32.mxu0 %v5934
        %6257 = vmatmul.mubr.f32.gmra.mxu0 %v5933
        %v6258 = vpop.f32.mrf.mxu0
        %v6259 = vadd.f32 %v6005, %v6258
        %v6260 = vpop.f32.mrf.mxu0
        %v6261 = vadd.f32 %v6009, %v6260
        %6262 = vmatprep.mubr.f32.mxu0 %v5936
        %6263 = vmatmul.mubr.f32.gmra.mxu0 %v5935
        %v6264 = vpop.f32.mrf.mxu0
        %v6265 = vadd.f32 %v6005, %v6264
        %v6266 = vpop.f32.mrf.mxu0
        %v6267 = vadd.f32 %v6009, %v6266
        %6268 = vmatprep.mubr.f32.mxu0 %v5938
        %6269 = vmatmul.mubr.f32.gmra.mxu0 %v5937
        %v6270 = vpop.f32.mrf.mxu0
        %v6271 = vadd.f32 %v6005, %v6270
        %v6272 = vpop.f32.mrf.mxu0
        %v6273 = vadd.f32 %v6009, %v6272
        %6274 = vmatprep.mubr.f32.mxu0 %v5940
        %6275 = vmatmul.mubr.f32.gmra.mxu0 %v5939
        %v6276 = vpop.f32.mrf.mxu0
        %v6277 = vadd.f32 %v6005, %v6276
        %v6278 = vpop.f32.mrf.mxu0
        %v6279 = vadd.f32 %v6009, %v6278
        %6280 = vmatprep.mubr.f32.mxu0 %v5942
        %6281 = vmatmul.mubr.f32.gmra.mxu0 %v5941
        %v6282 = vpop.f32.mrf.mxu0
        %v6283 = vadd.f32 %v6005, %v6282
        %v6284 = vpop.f32.mrf.mxu0
        %v6285 = vadd.f32 %v6009, %v6284
        %6286 = vmatprep.mubr.f32.mxu0 %v5944
        %6287 = vmatmul.mubr.f32.gmra.mxu0 %v5943
        %v6288 = vpop.f32.mrf.mxu0
        %v6289 = vadd.f32 %v6005, %v6288
        %v6290 = vpop.f32.mrf.mxu0
        %v6291 = vadd.f32 %v6009, %v6290
        %6292 = vmatprep.mubr.f32.mxu0 %v5946
        %6293 = vmatmul.mubr.f32.gmra.mxu0 %v5945
        %v6294 = vpop.f32.mrf.mxu0
        %v6295 = vadd.f32 %v6005, %v6294
        %v6296 = vpop.f32.mrf.mxu0
        %v6297 = vadd.f32 %v6009, %v6296
        %6298 = vmatprep.mubr.f32.mxu0 %v5948
        %6299 = vmatmul.mubr.f32.gmra.mxu0 %v5947
        %v6300 = vpop.f32.mrf.mxu0
        %v6301 = vadd.f32 %v6005, %v6300
        %v6302 = vpop.f32.mrf.mxu0
        %v6303 = vadd.f32 %v6009, %v6302
        %6304 = vmatprep.mubr.f32.mxu0 %v5950
        %6305 = vmatmul.mubr.f32.gmra.mxu0 %v5949
        %v6306 = vpop.f32.mrf.mxu0
        %v6307 = vadd.f32 %v6005, %v6306
        %v6308 = vpop.f32.mrf.mxu0
        %v6309 = vadd.f32 %v6009, %v6308
        %6310 = vmatprep.mubr.f32.mxu0 %v5952
        %6311 = vmatmul.mubr.f32.gmra.mxu0 %v5951
        %v6312 = vpop.f32.mrf.mxu0
        %v6313 = vadd.f32 %v6005, %v6312
        %v6314 = vpop.f32.mrf.mxu0
        %v6315 = vadd.f32 %v6009, %v6314
        %6316 = vmatprep.mubr.f32.mxu0 %v5954
        %6317 = vmatmul.mubr.f32.gmra.mxu0 %v5953
        %v6318 = vpop.f32.mrf.mxu0
        %v6319 = vadd.f32 %v6005, %v6318
        %v6320 = vpop.f32.mrf.mxu0
        %v6321 = vadd.f32 %v6009, %v6320
        %6322 = vmatprep.mubr.f32.mxu0 %v5956
        %6323 = vmatmul.mubr.f32.gmra.mxu0 %v5955
        %v6324 = vpop.f32.mrf.mxu0
        %v6325 = vadd.f32 %v6005, %v6324
        %v6326 = vpop.f32.mrf.mxu0
        %v6327 = vadd.f32 %v6009, %v6326
        %6328 = vmatprep.mubr.f32.mxu0 %v5958
        %6329 = vmatmul.mubr.f32.gmra.mxu0 %v5957
        %v6330 = vpop.f32.mrf.mxu0
        %v6331 = vadd.f32 %v6005, %v6330
        %v6332 = vpop.f32.mrf.mxu0
        %v6333 = vadd.f32 %v6009, %v6332
        %6334 = vmatprep.mubr.f32.mxu0 %v5960
        %6335 = vmatmul.mubr.f32.gmra.mxu0 %v5959
        %v6336 = vpop.f32.mrf.mxu0
        %v6337 = vadd.f32 %v6005, %v6336
        %v6338 = vpop.f32.mrf.mxu0
        %v6339 = vadd.f32 %v6009, %v6338
        %6340 = vmatprep.mubr.f32.mxu0 %v5962
        %6341 = vmatmul.mubr.f32.gmra.mxu0 %v5961
        %v6342 = vpop.f32.mrf.mxu0
        %v6343 = vadd.f32 %v6005, %v6342
        %v6344 = vpop.f32.mrf.mxu0
        %v6345 = vadd.f32 %v6009, %v6344
        %6346 = vmatprep.mubr.f32.mxu0 %v5964
        %6347 = vmatmul.mubr.f32.gmra.mxu0 %v5963
        %v6348 = vpop.f32.mrf.mxu0
        %v6349 = vadd.f32 %v6005, %v6348
        %v6350 = vpop.f32.mrf.mxu0
        %v6351 = vadd.f32 %v6009, %v6350
        %6352 = vmatprep.mubr.f32.mxu0 %v5966
        %6353 = vmatmul.mubr.f32.gmra.mxu0 %v5965
        %v6354 = vpop.f32.mrf.mxu0
        %v6355 = vadd.f32 %v6005, %v6354
        %v6356 = vpop.f32.mrf.mxu0
        %v6357 = vadd.f32 %v6009, %v6356
        %6358 = vmatprep.mubr.f32.mxu0 %v5968
        %6359 = vmatmul.mubr.f32.gmra.mxu0 %v5967
        %v6360 = vpop.f32.mrf.mxu0
        %v6361 = vadd.f32 %v6005, %v6360
        %v6362 = vpop.f32.mrf.mxu0
        %v6363 = vadd.f32 %v6009, %v6362
        %6364 = vmatprep.mubr.f32.mxu0 %v5970
        %6365 = vmatmul.mubr.f32.gmra.mxu0 %v5969
        %v6366 = vpop.f32.mrf.mxu0
        %v6367 = vadd.f32 %v6005, %v6366
        %v6368 = vpop.f32.mrf.mxu0
        %v6369 = vadd.f32 %v6009, %v6368
        %6370 = vmatprep.mubr.f32.mxu0 %v5972
        %6371 = vmatmul.mubr.f32.gmra.mxu0 %v5971
        %v6372 = vpop.f32.mrf.mxu0
        %v6373 = vadd.f32 %v6005, %v6372
        %v6374 = vpop.f32.mrf.mxu0
        %v6375 = vadd.f32 %v6009, %v6374
        %6376 = vmatprep.mubr.f32.mxu0 %v5974
        %6377 = vmatmul.mubr.f32.gmra.mxu0 %v5973
        %v6378 = vpop.f32.mrf.mxu0
        %v6379 = vadd.f32 %v6005, %v6378
        %v6380 = vpop.f32.mrf.mxu0
        %v6381 = vadd.f32 %v6009, %v6380
        %6382 = vmatprep.mubr.f32.mxu0 %v5976
        %6383 = vmatmul.mubr.f32.gmra.mxu0 %v5975
        %v6384 = vpop.f32.mrf.mxu0
        %v6385 = vadd.f32 %v6005, %v6384
        %v6386 = vpop.f32.mrf.mxu0
        %v6387 = vadd.f32 %v6009, %v6386
        %6388 = vmatprep.mubr.f32.mxu0 %v5978
        %6389 = vmatmul.mubr.f32.gmra.mxu0 %v5977
        %v6390 = vpop.f32.mrf.mxu0
        %v6391 = vadd.f32 %v6005, %v6390
        %v6392 = vpop.f32.mrf.mxu0
        %v6393 = vadd.f32 %v6009, %v6392
        %6394 = vmatprep.mubr.f32.mxu0 %v5980
        %6395 = vmatmul.mubr.f32.gmra.mxu0 %v5979
        %v6396 = vpop.f32.mrf.mxu0
        %v6397 = vadd.f32 %v6005, %v6396
        %v6398 = vpop.f32.mrf.mxu0
        %v6399 = vadd.f32 %v6009, %v6398
        %6400 = vmatprep.mubr.f32.mxu0 %v5982
        %6401 = vmatmul.mubr.f32.gmra.mxu0 %v5981
        %v6402 = vpop.f32.mrf.mxu0
        %v6403 = vadd.f32 %v6005, %v6402
        %v6404 = vpop.f32.mrf.mxu0
        %v6405 = vadd.f32 %v6009, %v6404
        %6406 = vmatprep.mubr.f32.mxu0 %v5984
        %6407 = vmatmul.mubr.f32.gmra.mxu0 %v5983
        %v6408 = vpop.f32.mrf.mxu0
        %v6409 = vadd.f32 %v6005, %v6408
        %v6410 = vpop.f32.mrf.mxu0
        %v6411 = vadd.f32 %v6009, %v6410
        %6412 = vmatprep.mubr.f32.mxu0 %v5986
        %6413 = vmatmul.mubr.f32.gmra.mxu0 %v5985
        %v6414 = vpop.f32.mrf.mxu0
        %v6415 = vadd.f32 %v6005, %v6414
        %v6416 = vpop.f32.mrf.mxu0
        %v6417 = vadd.f32 %v6009, %v6416
        %6418 = vmatprep.mubr.f32.mxu0 %v5988
        %6419 = vmatmul.mubr.f32.gmra.mxu0 %v5987
        %v6420 = vpop.f32.mrf.mxu0
        %v6421 = vadd.f32 %v6005, %v6420
        %v6422 = vpop.f32.mrf.mxu0
        %v6423 = vadd.f32 %v6009, %v6422
        %6424 = vmatprep.mubr.f32.mxu0 %v5990
        %6425 = vmatmul.mubr.f32.gmra.mxu0 %v5989
        %v6426 = vpop.f32.mrf.mxu0
        %v6427 = vadd.f32 %v6005, %v6426
        %v6428 = vpop.f32.mrf.mxu0
        %v6429 = vadd.f32 %v6009, %v6428
        %6430 = vmatprep.mubr.f32.mxu0 %v5992
        %6431 = vmatmul.mubr.f32.gmra.mxu0 %v5991
        %v6432 = vpop.f32.mrf.mxu0
        %v6433 = vadd.f32 %v6005, %v6432
        %v6434 = vpop.f32.mrf.mxu0
        %v6435 = vadd.f32 %v6009, %v6434
        %6436 = vmatprep.mubr.f32.mxu0 %v5994
        %6437 = vmatmul.mubr.f32.gmra.mxu0 %v5993
        %v6438 = vpop.f32.mrf.mxu0
        %v6439 = vadd.f32 %v6005, %v6438
        %v6440 = vpop.f32.mrf.mxu0
        %v6441 = vadd.f32 %v6009, %v6440
        %6442 = vmatprep.mubr.f32.mxu0 %v5996
        %6443 = vmatmul.mubr.f32.gmra.mxu0 %v5995
        %v6444 = vpop.f32.mrf.mxu0
        %v6445 = vadd.f32 %v6005, %v6444
        %v6446 = vpop.f32.mrf.mxu0
        %v6447 = vadd.f32 %v6009, %v6446
        %6448 = vmatprep.mubr.f32.mxu0 %v5998
        %6449 = vmatmul.mubr.f32.gmra.mxu0 %v5997
        %v6450 = vpop.f32.mrf.mxu0
        %v6451 = vadd.f32 %v6005, %v6450
        %v6452 = vpop.f32.mrf.mxu0
        %v6453 = vadd.f32 %v6009, %v6452
        %6454 = vmatprep.mubr.f32.mxu0 %v6000
        %6455 = vmatmul.mubr.f32.gmra.mxu0 %v5999
        %v6456 = vpop.f32.mrf.mxu0
        %v6457 = vadd.f32 %v6005, %v6456
        %v6458 = vpop.f32.mrf.mxu0
        %v6459 = vadd.f32 %v6009, %v6458
        %6460 = vdwg.mxu0
        %v6461 = vmax.f32 %v6079, 0.0
        %v6462 = vmax.f32 %v6081, 0.0
        %v6463 = vmax.f32 %v6085, 0.0
        %v6464 = vmax.f32 %v6087, 0.0
        %v6465 = vmax.f32 %v6091, 0.0
        %v6466 = vmax.f32 %v6093, 0.0
        %v6467 = vmax.f32 %v6097, 0.0
        %v6468 = vmax.f32 %v6099, 0.0
        %v6469 = vmax.f32 %v6103, 0.0
        %v6470 = vmax.f32 %v6105, 0.0
        %v6471 = vmax.f32 %v6109, 0.0
        %v6472 = vmax.f32 %v6111, 0.0
        %v6473 = vmax.f32 %v6115, 0.0
        %v6474 = vmax.f32 %v6117, 0.0
        %v6475 = vmax.f32 %v6121, 0.0
        %v6476 = vmax.f32 %v6123, 0.0
        %v6477 = vmax.f32 %v6127, 0.0
        %v6478 = vmax.f32 %v6129, 0.0
        %v6479 = vmax.f32 %v6133, 0.0
        %v6480 = vmax.f32 %v6135, 0.0
        %v6481 = vmax.f32 %v6139, 0.0
        %v6482 = vmax.f32 %v6141, 0.0
        %v6483 = vmax.f32 %v6145, 0.0
        %v6484 = vmax.f32 %v6147, 0.0
        %v6485 = vmax.f32 %v6151, 0.0
        %v6486 = vmax.f32 %v6153, 0.0
        %v6487 = vmax.f32 %v6157, 0.0
        %v6488 = vmax.f32 %v6159, 0.0
        %v6489 = vmax.f32 %v6163, 0.0
        %v6490 = vmax.f32 %v6165, 0.0
        %v6491 = vmax.f32 %v6169, 0.0
        %v6492 = vmax.f32 %v6171, 0.0
        %v6493 = vmax.f32 %v6175, 0.0
        %v6494 = vmax.f32 %v6177, 0.0
        %v6495 = vmax.f32 %v6181, 0.0
        %v6496 = vmax.f32 %v6183, 0.0
        %v6497 = vmax.f32 %v6187, 0.0
        %v6498 = vmax.f32 %v6189, 0.0
        %v6499 = vmax.f32 %v6193, 0.0
        %v6500 = vmax.f32 %v6195, 0.0
        %v6501 = vmax.f32 %v6199, 0.0
        %v6502 = vmax.f32 %v6201, 0.0
        %v6503 = vmax.f32 %v6205, 0.0
        %v6504 = vmax.f32 %v6207, 0.0
        %v6505 = vmax.f32 %v6211, 0.0
        %v6506 = vmax.f32 %v6213, 0.0
        %v6507 = vmax.f32 %v6217, 0.0
        %v6508 = vmax.f32 %v6219, 0.0
        %v6509 = vmax.f32 %v6223, 0.0
        %v6510 = vmax.f32 %v6225, 0.0
        %v6511 = vmax.f32 %v6229, 0.0
        %v6512 = vmax.f32 %v6231, 0.0
        %v6513 = vmax.f32 %v6235, 0.0
        %v6514 = vmax.f32 %v6237, 0.0
        %v6515 = vmax.f32 %v6241, 0.0
        %v6516 = vmax.f32 %v6243, 0.0
        %v6517 = vmax.f32 %v6247, 0.0
        %v6518 = vmax.f32 %v6249, 0.0
        %v6519 = vmax.f32 %v6253, 0.0
        %v6520 = vmax.f32 %v6255, 0.0
        %v6521 = vmax.f32 %v6259, 0.0
        %v6522 = vmax.f32 %v6261, 0.0
        %v6523 = vmax.f32 %v6265, 0.0
        %v6524 = vmax.f32 %v6267, 0.0
        %v6525 = vmax.f32 %v6271, 0.0
        %v6526 = vmax.f32 %v6273, 0.0
        %v6527 = vmax.f32 %v6277, 0.0
        %v6528 = vmax.f32 %v6279, 0.0
        %v6529 = vmax.f32 %v6283, 0.0
        %v6530 = vmax.f32 %v6285, 0.0
        %v6531 = vmax.f32 %v6289, 0.0
        %v6532 = vmax.f32 %v6291, 0.0
        %v6533 = vmax.f32 %v6295, 0.0
        %v6534 = vmax.f32 %v6297, 0.0
        %v6535 = vmax.f32 %v6301, 0.0
        %v6536 = vmax.f32 %v6303, 0.0
        %v6537 = vmax.f32 %v6307, 0.0
        %v6538 = vmax.f32 %v6309, 0.0
        %v6539 = vmax.f32 %v6313, 0.0
        %v6540 = vmax.f32 %v6315, 0.0
        %v6541 = vmax.f32 %v6319, 0.0
        %v6542 = vmax.f32 %v6321, 0.0
        %v6543 = vmax.f32 %v6325, 0.0
        %v6544 = vmax.f32 %v6327, 0.0
        %v6545 = vmax.f32 %v6331, 0.0
        %v6546 = vmax.f32 %v6333, 0.0
        %v6547 = vmax.f32 %v6337, 0.0
        %v6548 = vmax.f32 %v6339, 0.0
        %v6549 = vmax.f32 %v6343, 0.0
        %v6550 = vmax.f32 %v6345, 0.0
        %v6551 = vmax.f32 %v6349, 0.0
        %v6552 = vmax.f32 %v6351, 0.0
        %v6553 = vmax.f32 %v6355, 0.0
        %v6554 = vmax.f32 %v6357, 0.0
        %v6555 = vmax.f32 %v6361, 0.0
        %v6556 = vmax.f32 %v6363, 0.0
        %v6557 = vmax.f32 %v6367, 0.0
        %v6558 = vmax.f32 %v6369, 0.0
        %v6559 = vmax.f32 %v6373, 0.0
        %v6560 = vmax.f32 %v6375, 0.0
        %v6561 = vmax.f32 %v6379, 0.0
        %v6562 = vmax.f32 %v6381, 0.0
        %v6563 = vmax.f32 %v6385, 0.0
        %v6564 = vmax.f32 %v6387, 0.0
        %v6565 = vmax.f32 %v6391, 0.0
        %v6566 = vmax.f32 %v6393, 0.0
        %v6567 = vmax.f32 %v6397, 0.0
        %v6568 = vmax.f32 %v6399, 0.0
        %v6569 = vmax.f32 %v6403, 0.0
        %v6570 = vmax.f32 %v6405, 0.0
        %v6571 = vmax.f32 %v6409, 0.0
        %v6572 = vmax.f32 %v6411, 0.0
        %v6573 = vmax.f32 %v6415, 0.0
        %v6574 = vmax.f32 %v6417, 0.0
        %v6575 = vmax.f32 %v6421, 0.0
        %v6576 = vmax.f32 %v6423, 0.0
        %v6577 = vmax.f32 %v6427, 0.0
        %v6578 = vmax.f32 %v6429, 0.0
        %v6579 = vmax.f32 %v6433, 0.0
        %v6580 = vmax.f32 %v6435, 0.0
        %v6581 = vmax.f32 %v6439, 0.0
        %v6582 = vmax.f32 %v6441, 0.0
        %v6583 = vmax.f32 %v6445, 0.0
        %v6584 = vmax.f32 %v6447, 0.0
        %v6585 = vmax.f32 %v6451, 0.0
        %v6586 = vmax.f32 %v6453, 0.0
        %v6587 = vmax.f32 %v6457, 0.0
        %v6588 = vmax.f32 %v6459, 0.0
        %v6590 = vlaneseq
        %v6591 = vshrl.u32 %v6590, 7
        %v6592 = vsub.s32 0, %v6591
        %v6593 = vrot.slane %v1270, %v6592
        %v6594 = vlaneseq
        %v6595 = vshrl.u32 %v6594, 7
        %v6596 = vsub.s32 1, %v6595
        %v6597 = vrot.slane %v1270, %v6596
        %6600 = vmatprep.subr.mxu0 %v1236
        %6601 = vmatpush1.msra.mxu0 %v1235
        %6602 = vmatprep.subr.mxu0 %v1234
        %6603 = vmatpush1.msra.mxu0 %v1233
        %6604 = vmatprep.subr.mxu0 %v1232
        %6605 = vmatpush1.msra.mxu0 %v1231
        %6606 = vmatprep.subr.mxu0 %v1230
        %6607 = vmatpush1.msra.mxu0 %v1229
        %6608 = vmatprep.subr.mxu0 %v1228
        %6609 = vmatpush1.msra.mxu0 %v1227
        %6610 = vmatprep.subr.mxu0 %v1226
        %6611 = vmatpush1.msra.mxu0 %v1225
        %6612 = vmatprep.subr.mxu0 %v1224
        %6613 = vmatpush1.msra.mxu0 %v1223
        %6614 = vmatprep.subr.mxu0 %v1222
        %6615 = vmatpush1.msra.mxu0 %v1221
        %6616 = vmatprep.subr.mxu0 %v1220
        %6617 = vmatpush1.msra.mxu0 %v1219
        %6618 = vmatprep.subr.mxu0 %v1218
        %6619 = vmatpush1.msra.mxu0 %v1217
        %6620 = vmatprep.subr.mxu0 %v1216
        %6621 = vmatpush1.msra.mxu0 %v1215
        %6622 = vmatprep.subr.mxu0 %v1214
        %6623 = vmatpush1.msra.mxu0 %v1213
        %6624 = vmatprep.subr.mxu0 %v1212
        %6625 = vmatpush1.msra.mxu0 %v1211
        %6626 = vmatprep.subr.mxu0 %v1210
        %6627 = vmatpush1.msra.mxu0 %v1209
        %6628 = vmatprep.subr.mxu0 %v1208
        %6629 = vmatpush1.msra.mxu0 %v1207
        %6630 = vmatprep.subr.mxu0 %v1206
        %6631 = vmatpush1.msra.mxu0 %v1205
        %6632 = vmatprep.subr.mxu0 %v1268
        %6633 = vmatpush2.msra.mxu0 %v1267
        %6634 = vmatprep.subr.mxu0 %v1266
        %6635 = vmatpush2.msra.mxu0 %v1265
        %6636 = vmatprep.subr.mxu0 %v1264
        %6637 = vmatpush2.msra.mxu0 %v1263
        %6638 = vmatprep.subr.mxu0 %v1262
        %6639 = vmatpush2.msra.mxu0 %v1261
        %6640 = vmatprep.subr.mxu0 %v1260
        %6641 = vmatpush2.msra.mxu0 %v1259
        %6642 = vmatprep.subr.mxu0 %v1258
        %6643 = vmatpush2.msra.mxu0 %v1257
        %6644 = vmatprep.subr.mxu0 %v1256
        %6645 = vmatpush2.msra.mxu0 %v1255
        %6646 = vmatprep.subr.mxu0 %v1254
        %6647 = vmatpush2.msra.mxu0 %v1253
        %6648 = vmatprep.subr.mxu0 %v1252
        %6649 = vmatpush2.msra.mxu0 %v1251
        %6650 = vmatprep.subr.mxu0 %v1250
        %6651 = vmatpush2.msra.mxu0 %v1249
        %6652 = vmatprep.subr.mxu0 %v1248
        %6653 = vmatpush2.msra.mxu0 %v1247
        %6654 = vmatprep.subr.mxu0 %v1246
        %6655 = vmatpush2.msra.mxu0 %v1245
        %6656 = vmatprep.subr.mxu0 %v1244
        %6657 = vmatpush2.msra.mxu0 %v1243
        %6658 = vmatprep.subr.mxu0 %v1242
        %6659 = vmatpush2.msra.mxu0 %v1241
        %6660 = vmatprep.subr.mxu0 %v1240
        %6661 = vmatpush2.msra.mxu0 %v1239
        %6662 = vmatprep.subr.mxu0 %v1238
        %6663 = vmatpush2.msra.mxu0 %v1237
        %6664 = vmatprep.mubr.f32.mxu0 %v6462
        %6665 = vmatmul.mubr.f32.gmra.mxu0 %v6461
        %v6666 = vpop.f32.mrf.mxu0
        %v6667 = vadd.f32 %v6593, %v6666
        %v6668 = vpop.f32.mrf.mxu0
        %v6669 = vadd.f32 %v6597, %v6668
        %6670 = vmatprep.mubr.f32.mxu0 %v6464
        %6671 = vmatmul.mubr.f32.gmra.mxu0 %v6463
        %v6672 = vpop.f32.mrf.mxu0
        %v6673 = vadd.f32 %v6593, %v6672
        %v6674 = vpop.f32.mrf.mxu0
        %v6675 = vadd.f32 %v6597, %v6674
        %6676 = vmatprep.mubr.f32.mxu0 %v6466
        %6677 = vmatmul.mubr.f32.gmra.mxu0 %v6465
        %v6678 = vpop.f32.mrf.mxu0
        %v6679 = vadd.f32 %v6593, %v6678
        %v6680 = vpop.f32.mrf.mxu0
        %v6681 = vadd.f32 %v6597, %v6680
        %6682 = vmatprep.mubr.f32.mxu0 %v6468
        %6683 = vmatmul.mubr.f32.gmra.mxu0 %v6467
        %v6684 = vpop.f32.mrf.mxu0
        %v6685 = vadd.f32 %v6593, %v6684
        %v6686 = vpop.f32.mrf.mxu0
        %v6687 = vadd.f32 %v6597, %v6686
        %6688 = vmatprep.mubr.f32.mxu0 %v6470
        %6689 = vmatmul.mubr.f32.gmra.mxu0 %v6469
        %v6690 = vpop.f32.mrf.mxu0
        %v6691 = vadd.f32 %v6593, %v6690
        %v6692 = vpop.f32.mrf.mxu0
        %v6693 = vadd.f32 %v6597, %v6692
        %6694 = vmatprep.mubr.f32.mxu0 %v6472
        %6695 = vmatmul.mubr.f32.gmra.mxu0 %v6471
        %v6696 = vpop.f32.mrf.mxu0
        %v6697 = vadd.f32 %v6593, %v6696
        %v6698 = vpop.f32.mrf.mxu0
        %v6699 = vadd.f32 %v6597, %v6698
        %6700 = vmatprep.mubr.f32.mxu0 %v6474
        %6701 = vmatmul.mubr.f32.gmra.mxu0 %v6473
        %v6702 = vpop.f32.mrf.mxu0
        %v6703 = vadd.f32 %v6593, %v6702
        %v6704 = vpop.f32.mrf.mxu0
        %v6705 = vadd.f32 %v6597, %v6704
        %6706 = vmatprep.mubr.f32.mxu0 %v6476
        %6707 = vmatmul.mubr.f32.gmra.mxu0 %v6475
        %v6708 = vpop.f32.mrf.mxu0
        %v6709 = vadd.f32 %v6593, %v6708
        %v6710 = vpop.f32.mrf.mxu0
        %v6711 = vadd.f32 %v6597, %v6710
        %6712 = vmatprep.mubr.f32.mxu0 %v6478
        %6713 = vmatmul.mubr.f32.gmra.mxu0 %v6477
        %v6714 = vpop.f32.mrf.mxu0
        %v6715 = vadd.f32 %v6593, %v6714
        %v6716 = vpop.f32.mrf.mxu0
        %v6717 = vadd.f32 %v6597, %v6716
        %6718 = vmatprep.mubr.f32.mxu0 %v6480
        %6719 = vmatmul.mubr.f32.gmra.mxu0 %v6479
        %v6720 = vpop.f32.mrf.mxu0
        %v6721 = vadd.f32 %v6593, %v6720
        %v6722 = vpop.f32.mrf.mxu0
        %v6723 = vadd.f32 %v6597, %v6722
        %6724 = vmatprep.mubr.f32.mxu0 %v6482
        %6725 = vmatmul.mubr.f32.gmra.mxu0 %v6481
        %v6726 = vpop.f32.mrf.mxu0
        %v6727 = vadd.f32 %v6593, %v6726
        %v6728 = vpop.f32.mrf.mxu0
        %v6729 = vadd.f32 %v6597, %v6728
        %6730 = vmatprep.mubr.f32.mxu0 %v6484
        %6731 = vmatmul.mubr.f32.gmra.mxu0 %v6483
        %v6732 = vpop.f32.mrf.mxu0
        %v6733 = vadd.f32 %v6593, %v6732
        %v6734 = vpop.f32.mrf.mxu0
        %v6735 = vadd.f32 %v6597, %v6734
        %6736 = vmatprep.mubr.f32.mxu0 %v6486
        %6737 = vmatmul.mubr.f32.gmra.mxu0 %v6485
        %v6738 = vpop.f32.mrf.mxu0
        %v6739 = vadd.f32 %v6593, %v6738
        %v6740 = vpop.f32.mrf.mxu0
        %v6741 = vadd.f32 %v6597, %v6740
        %6742 = vmatprep.mubr.f32.mxu0 %v6488
        %6743 = vmatmul.mubr.f32.gmra.mxu0 %v6487
        %v6744 = vpop.f32.mrf.mxu0
        %v6745 = vadd.f32 %v6593, %v6744
        %v6746 = vpop.f32.mrf.mxu0
        %v6747 = vadd.f32 %v6597, %v6746
        %6748 = vmatprep.mubr.f32.mxu0 %v6490
        %6749 = vmatmul.mubr.f32.gmra.mxu0 %v6489
        %v6750 = vpop.f32.mrf.mxu0
        %v6751 = vadd.f32 %v6593, %v6750
        %v6752 = vpop.f32.mrf.mxu0
        %v6753 = vadd.f32 %v6597, %v6752
        %6754 = vmatprep.mubr.f32.mxu0 %v6492
        %6755 = vmatmul.mubr.f32.gmra.mxu0 %v6491
        %v6756 = vpop.f32.mrf.mxu0
        %v6757 = vadd.f32 %v6593, %v6756
        %v6758 = vpop.f32.mrf.mxu0
        %v6759 = vadd.f32 %v6597, %v6758
        %6760 = vmatprep.mubr.f32.mxu0 %v6494
        %6761 = vmatmul.mubr.f32.gmra.mxu0 %v6493
        %v6762 = vpop.f32.mrf.mxu0
        %v6763 = vadd.f32 %v6593, %v6762
        %v6764 = vpop.f32.mrf.mxu0
        %v6765 = vadd.f32 %v6597, %v6764
        %6766 = vmatprep.mubr.f32.mxu0 %v6496
        %6767 = vmatmul.mubr.f32.gmra.mxu0 %v6495
        %v6768 = vpop.f32.mrf.mxu0
        %v6769 = vadd.f32 %v6593, %v6768
        %v6770 = vpop.f32.mrf.mxu0
        %v6771 = vadd.f32 %v6597, %v6770
        %6772 = vmatprep.mubr.f32.mxu0 %v6498
        %6773 = vmatmul.mubr.f32.gmra.mxu0 %v6497
        %v6774 = vpop.f32.mrf.mxu0
        %v6775 = vadd.f32 %v6593, %v6774
        %v6776 = vpop.f32.mrf.mxu0
        %v6777 = vadd.f32 %v6597, %v6776
        %6778 = vmatprep.mubr.f32.mxu0 %v6500
        %6779 = vmatmul.mubr.f32.gmra.mxu0 %v6499
        %v6780 = vpop.f32.mrf.mxu0
        %v6781 = vadd.f32 %v6593, %v6780
        %v6782 = vpop.f32.mrf.mxu0
        %v6783 = vadd.f32 %v6597, %v6782
        %6784 = vmatprep.mubr.f32.mxu0 %v6502
        %6785 = vmatmul.mubr.f32.gmra.mxu0 %v6501
        %v6786 = vpop.f32.mrf.mxu0
        %v6787 = vadd.f32 %v6593, %v6786
        %v6788 = vpop.f32.mrf.mxu0
        %v6789 = vadd.f32 %v6597, %v6788
        %6790 = vmatprep.mubr.f32.mxu0 %v6504
        %6791 = vmatmul.mubr.f32.gmra.mxu0 %v6503
        %v6792 = vpop.f32.mrf.mxu0
        %v6793 = vadd.f32 %v6593, %v6792
        %v6794 = vpop.f32.mrf.mxu0
        %v6795 = vadd.f32 %v6597, %v6794
        %6796 = vmatprep.mubr.f32.mxu0 %v6506
        %6797 = vmatmul.mubr.f32.gmra.mxu0 %v6505
        %v6798 = vpop.f32.mrf.mxu0
        %v6799 = vadd.f32 %v6593, %v6798
        %v6800 = vpop.f32.mrf.mxu0
        %v6801 = vadd.f32 %v6597, %v6800
        %6802 = vmatprep.mubr.f32.mxu0 %v6508
        %6803 = vmatmul.mubr.f32.gmra.mxu0 %v6507
        %v6804 = vpop.f32.mrf.mxu0
        %v6805 = vadd.f32 %v6593, %v6804
        %v6806 = vpop.f32.mrf.mxu0
        %v6807 = vadd.f32 %v6597, %v6806
        %6808 = vmatprep.mubr.f32.mxu0 %v6510
        %6809 = vmatmul.mubr.f32.gmra.mxu0 %v6509
        %v6810 = vpop.f32.mrf.mxu0
        %v6811 = vadd.f32 %v6593, %v6810
        %v6812 = vpop.f32.mrf.mxu0
        %v6813 = vadd.f32 %v6597, %v6812
        %6814 = vmatprep.mubr.f32.mxu0 %v6512
        %6815 = vmatmul.mubr.f32.gmra.mxu0 %v6511
        %v6816 = vpop.f32.mrf.mxu0
        %v6817 = vadd.f32 %v6593, %v6816
        %v6818 = vpop.f32.mrf.mxu0
        %v6819 = vadd.f32 %v6597, %v6818
        %6820 = vmatprep.mubr.f32.mxu0 %v6514
        %6821 = vmatmul.mubr.f32.gmra.mxu0 %v6513
        %v6822 = vpop.f32.mrf.mxu0
        %v6823 = vadd.f32 %v6593, %v6822
        %v6824 = vpop.f32.mrf.mxu0
        %v6825 = vadd.f32 %v6597, %v6824
        %6826 = vmatprep.mubr.f32.mxu0 %v6516
        %6827 = vmatmul.mubr.f32.gmra.mxu0 %v6515
        %v6828 = vpop.f32.mrf.mxu0
        %v6829 = vadd.f32 %v6593, %v6828
        %v6830 = vpop.f32.mrf.mxu0
        %v6831 = vadd.f32 %v6597, %v6830
        %6832 = vmatprep.mubr.f32.mxu0 %v6518
        %6833 = vmatmul.mubr.f32.gmra.mxu0 %v6517
        %v6834 = vpop.f32.mrf.mxu0
        %v6835 = vadd.f32 %v6593, %v6834
        %v6836 = vpop.f32.mrf.mxu0
        %v6837 = vadd.f32 %v6597, %v6836
        %6838 = vmatprep.mubr.f32.mxu0 %v6520
        %6839 = vmatmul.mubr.f32.gmra.mxu0 %v6519
        %v6840 = vpop.f32.mrf.mxu0
        %v6841 = vadd.f32 %v6593, %v6840
        %v6842 = vpop.f32.mrf.mxu0
        %v6843 = vadd.f32 %v6597, %v6842
        %6844 = vmatprep.mubr.f32.mxu0 %v6522
        %6845 = vmatmul.mubr.f32.gmra.mxu0 %v6521
        %v6846 = vpop.f32.mrf.mxu0
        %v6847 = vadd.f32 %v6593, %v6846
        %v6848 = vpop.f32.mrf.mxu0
        %v6849 = vadd.f32 %v6597, %v6848
        %6850 = vmatprep.mubr.f32.mxu0 %v6524
        %6851 = vmatmul.mubr.f32.gmra.mxu0 %v6523
        %v6852 = vpop.f32.mrf.mxu0
        %v6853 = vadd.f32 %v6593, %v6852
        %v6854 = vpop.f32.mrf.mxu0
        %v6855 = vadd.f32 %v6597, %v6854
        %6856 = vmatprep.mubr.f32.mxu0 %v6526
        %6857 = vmatmul.mubr.f32.gmra.mxu0 %v6525
        %v6858 = vpop.f32.mrf.mxu0
        %v6859 = vadd.f32 %v6593, %v6858
        %v6860 = vpop.f32.mrf.mxu0
        %v6861 = vadd.f32 %v6597, %v6860
        %6862 = vmatprep.mubr.f32.mxu0 %v6528
        %6863 = vmatmul.mubr.f32.gmra.mxu0 %v6527
        %v6864 = vpop.f32.mrf.mxu0
        %v6865 = vadd.f32 %v6593, %v6864
        %v6866 = vpop.f32.mrf.mxu0
        %v6867 = vadd.f32 %v6597, %v6866
        %6868 = vmatprep.mubr.f32.mxu0 %v6530
        %6869 = vmatmul.mubr.f32.gmra.mxu0 %v6529
        %v6870 = vpop.f32.mrf.mxu0
        %v6871 = vadd.f32 %v6593, %v6870
        %v6872 = vpop.f32.mrf.mxu0
        %v6873 = vadd.f32 %v6597, %v6872
        %6874 = vmatprep.mubr.f32.mxu0 %v6532
        %6875 = vmatmul.mubr.f32.gmra.mxu0 %v6531
        %v6876 = vpop.f32.mrf.mxu0
        %v6877 = vadd.f32 %v6593, %v6876
        %v6878 = vpop.f32.mrf.mxu0
        %v6879 = vadd.f32 %v6597, %v6878
        %6880 = vmatprep.mubr.f32.mxu0 %v6534
        %6881 = vmatmul.mubr.f32.gmra.mxu0 %v6533
        %v6882 = vpop.f32.mrf.mxu0
        %v6883 = vadd.f32 %v6593, %v6882
        %v6884 = vpop.f32.mrf.mxu0
        %v6885 = vadd.f32 %v6597, %v6884
        %6886 = vmatprep.mubr.f32.mxu0 %v6536
        %6887 = vmatmul.mubr.f32.gmra.mxu0 %v6535
        %v6888 = vpop.f32.mrf.mxu0
        %v6889 = vadd.f32 %v6593, %v6888
        %v6890 = vpop.f32.mrf.mxu0
        %v6891 = vadd.f32 %v6597, %v6890
        %6892 = vmatprep.mubr.f32.mxu0 %v6538
        %6893 = vmatmul.mubr.f32.gmra.mxu0 %v6537
        %v6894 = vpop.f32.mrf.mxu0
        %v6895 = vadd.f32 %v6593, %v6894
        %v6896 = vpop.f32.mrf.mxu0
        %v6897 = vadd.f32 %v6597, %v6896
        %6898 = vmatprep.mubr.f32.mxu0 %v6540
        %6899 = vmatmul.mubr.f32.gmra.mxu0 %v6539
        %v6900 = vpop.f32.mrf.mxu0
        %v6901 = vadd.f32 %v6593, %v6900
        %v6902 = vpop.f32.mrf.mxu0
        %v6903 = vadd.f32 %v6597, %v6902
        %6904 = vmatprep.mubr.f32.mxu0 %v6542
        %6905 = vmatmul.mubr.f32.gmra.mxu0 %v6541
        %v6906 = vpop.f32.mrf.mxu0
        %v6907 = vadd.f32 %v6593, %v6906
        %v6908 = vpop.f32.mrf.mxu0
        %v6909 = vadd.f32 %v6597, %v6908
        %6910 = vmatprep.mubr.f32.mxu0 %v6544
        %6911 = vmatmul.mubr.f32.gmra.mxu0 %v6543
        %v6912 = vpop.f32.mrf.mxu0
        %v6913 = vadd.f32 %v6593, %v6912
        %v6914 = vpop.f32.mrf.mxu0
        %v6915 = vadd.f32 %v6597, %v6914
        %6916 = vmatprep.mubr.f32.mxu0 %v6546
        %6917 = vmatmul.mubr.f32.gmra.mxu0 %v6545
        %v6918 = vpop.f32.mrf.mxu0
        %v6919 = vadd.f32 %v6593, %v6918
        %v6920 = vpop.f32.mrf.mxu0
        %v6921 = vadd.f32 %v6597, %v6920
        %6922 = vmatprep.mubr.f32.mxu0 %v6548
        %6923 = vmatmul.mubr.f32.gmra.mxu0 %v6547
        %v6924 = vpop.f32.mrf.mxu0
        %v6925 = vadd.f32 %v6593, %v6924
        %v6926 = vpop.f32.mrf.mxu0
        %v6927 = vadd.f32 %v6597, %v6926
        %6928 = vmatprep.mubr.f32.mxu0 %v6550
        %6929 = vmatmul.mubr.f32.gmra.mxu0 %v6549
        %v6930 = vpop.f32.mrf.mxu0
        %v6931 = vadd.f32 %v6593, %v6930
        %v6932 = vpop.f32.mrf.mxu0
        %v6933 = vadd.f32 %v6597, %v6932
        %6934 = vmatprep.mubr.f32.mxu0 %v6552
        %6935 = vmatmul.mubr.f32.gmra.mxu0 %v6551
        %v6936 = vpop.f32.mrf.mxu0
        %v6937 = vadd.f32 %v6593, %v6936
        %v6938 = vpop.f32.mrf.mxu0
        %v6939 = vadd.f32 %v6597, %v6938
        %6940 = vmatprep.mubr.f32.mxu0 %v6554
        %6941 = vmatmul.mubr.f32.gmra.mxu0 %v6553
        %v6942 = vpop.f32.mrf.mxu0
        %v6943 = vadd.f32 %v6593, %v6942
        %v6944 = vpop.f32.mrf.mxu0
        %v6945 = vadd.f32 %v6597, %v6944
        %6946 = vmatprep.mubr.f32.mxu0 %v6556
        %6947 = vmatmul.mubr.f32.gmra.mxu0 %v6555
        %v6948 = vpop.f32.mrf.mxu0
        %v6949 = vadd.f32 %v6593, %v6948
        %v6950 = vpop.f32.mrf.mxu0
        %v6951 = vadd.f32 %v6597, %v6950
        %6952 = vmatprep.mubr.f32.mxu0 %v6558
        %6953 = vmatmul.mubr.f32.gmra.mxu0 %v6557
        %v6954 = vpop.f32.mrf.mxu0
        %v6955 = vadd.f32 %v6593, %v6954
        %v6956 = vpop.f32.mrf.mxu0
        %v6957 = vadd.f32 %v6597, %v6956
        %6958 = vmatprep.mubr.f32.mxu0 %v6560
        %6959 = vmatmul.mubr.f32.gmra.mxu0 %v6559
        %v6960 = vpop.f32.mrf.mxu0
        %v6961 = vadd.f32 %v6593, %v6960
        %v6962 = vpop.f32.mrf.mxu0
        %v6963 = vadd.f32 %v6597, %v6962
        %6964 = vmatprep.mubr.f32.mxu0 %v6562
        %6965 = vmatmul.mubr.f32.gmra.mxu0 %v6561
        %v6966 = vpop.f32.mrf.mxu0
        %v6967 = vadd.f32 %v6593, %v6966
        %v6968 = vpop.f32.mrf.mxu0
        %v6969 = vadd.f32 %v6597, %v6968
        %6970 = vmatprep.mubr.f32.mxu0 %v6564
        %6971 = vmatmul.mubr.f32.gmra.mxu0 %v6563
        %v6972 = vpop.f32.mrf.mxu0
        %v6973 = vadd.f32 %v6593, %v6972
        %v6974 = vpop.f32.mrf.mxu0
        %v6975 = vadd.f32 %v6597, %v6974
        %6976 = vmatprep.mubr.f32.mxu0 %v6566
        %6977 = vmatmul.mubr.f32.gmra.mxu0 %v6565
        %v6978 = vpop.f32.mrf.mxu0
        %v6979 = vadd.f32 %v6593, %v6978
        %v6980 = vpop.f32.mrf.mxu0
        %v6981 = vadd.f32 %v6597, %v6980
        %6982 = vmatprep.mubr.f32.mxu0 %v6568
        %6983 = vmatmul.mubr.f32.gmra.mxu0 %v6567
        %v6984 = vpop.f32.mrf.mxu0
        %v6985 = vadd.f32 %v6593, %v6984
        %v6986 = vpop.f32.mrf.mxu0
        %v6987 = vadd.f32 %v6597, %v6986
        %6988 = vmatprep.mubr.f32.mxu0 %v6570
        %6989 = vmatmul.mubr.f32.gmra.mxu0 %v6569
        %v6990 = vpop.f32.mrf.mxu0
        %v6991 = vadd.f32 %v6593, %v6990
        %v6992 = vpop.f32.mrf.mxu0
        %v6993 = vadd.f32 %v6597, %v6992
        %6994 = vmatprep.mubr.f32.mxu0 %v6572
        %6995 = vmatmul.mubr.f32.gmra.mxu0 %v6571
        %v6996 = vpop.f32.mrf.mxu0
        %v6997 = vadd.f32 %v6593, %v6996
        %v6998 = vpop.f32.mrf.mxu0
        %v6999 = vadd.f32 %v6597, %v6998
        %7000 = vmatprep.mubr.f32.mxu0 %v6574
        %7001 = vmatmul.mubr.f32.gmra.mxu0 %v6573
        %v7002 = vpop.f32.mrf.mxu0
        %v7003 = vadd.f32 %v6593, %v7002
        %v7004 = vpop.f32.mrf.mxu0
        %v7005 = vadd.f32 %v6597, %v7004
        %7006 = vmatprep.mubr.f32.mxu0 %v6576
        %7007 = vmatmul.mubr.f32.gmra.mxu0 %v6575
        %v7008 = vpop.f32.mrf.mxu0
        %v7009 = vadd.f32 %v6593, %v7008
        %v7010 = vpop.f32.mrf.mxu0
        %v7011 = vadd.f32 %v6597, %v7010
        %7012 = vmatprep.mubr.f32.mxu0 %v6578
        %7013 = vmatmul.mubr.f32.gmra.mxu0 %v6577
        %v7014 = vpop.f32.mrf.mxu0
        %v7015 = vadd.f32 %v6593, %v7014
        %v7016 = vpop.f32.mrf.mxu0
        %v7017 = vadd.f32 %v6597, %v7016
        %7018 = vmatprep.mubr.f32.mxu0 %v6580
        %7019 = vmatmul.mubr.f32.gmra.mxu0 %v6579
        %v7020 = vpop.f32.mrf.mxu0
        %v7021 = vadd.f32 %v6593, %v7020
        %v7022 = vpop.f32.mrf.mxu0
        %v7023 = vadd.f32 %v6597, %v7022
        %7024 = vmatprep.mubr.f32.mxu0 %v6582
        %7025 = vmatmul.mubr.f32.gmra.mxu0 %v6581
        %v7026 = vpop.f32.mrf.mxu0
        %v7027 = vadd.f32 %v6593, %v7026
        %v7028 = vpop.f32.mrf.mxu0
        %v7029 = vadd.f32 %v6597, %v7028
        %7030 = vmatprep.mubr.f32.mxu0 %v6584
        %7031 = vmatmul.mubr.f32.gmra.mxu0 %v6583
        %v7032 = vpop.f32.mrf.mxu0
        %v7033 = vadd.f32 %v6593, %v7032
        %v7034 = vpop.f32.mrf.mxu0
        %v7035 = vadd.f32 %v6597, %v7034
        %7036 = vmatprep.mubr.f32.mxu0 %v6586
        %7037 = vmatmul.mubr.f32.gmra.mxu0 %v6585
        %v7038 = vpop.f32.mrf.mxu0
        %v7039 = vadd.f32 %v6593, %v7038
        %v7040 = vpop.f32.mrf.mxu0
        %v7041 = vadd.f32 %v6597, %v7040
        %7042 = vmatprep.mubr.f32.mxu0 %v6588
        %7043 = vmatmul.mubr.f32.gmra.mxu0 %v6587
        %v7044 = vpop.f32.mrf.mxu0
        %v7045 = vadd.f32 %v6593, %v7044
        %v7046 = vpop.f32.mrf.mxu0
        %v7047 = vadd.f32 %v6597, %v7046
        %7048 = vdwg.mxu0
        %v7049 = vmax.f32 %v6667, 0.0
        %v7050 = vmax.f32 %v6669, 0.0
        %v7051 = vmax.f32 %v6673, 0.0
        %v7052 = vmax.f32 %v6675, 0.0
        %v7053 = vmax.f32 %v6679, 0.0
        %v7054 = vmax.f32 %v6681, 0.0
        %v7055 = vmax.f32 %v6685, 0.0
        %v7056 = vmax.f32 %v6687, 0.0
        %v7057 = vmax.f32 %v6691, 0.0
        %v7058 = vmax.f32 %v6693, 0.0
        %v7059 = vmax.f32 %v6697, 0.0
        %v7060 = vmax.f32 %v6699, 0.0
        %v7061 = vmax.f32 %v6703, 0.0
        %v7062 = vmax.f32 %v6705, 0.0
        %v7063 = vmax.f32 %v6709, 0.0
        %v7064 = vmax.f32 %v6711, 0.0
        %v7065 = vmax.f32 %v6715, 0.0
        %v7066 = vmax.f32 %v6717, 0.0
        %v7067 = vmax.f32 %v6721, 0.0
        %v7068 = vmax.f32 %v6723, 0.0
        %v7069 = vmax.f32 %v6727, 0.0
        %v7070 = vmax.f32 %v6729, 0.0
        %v7071 = vmax.f32 %v6733, 0.0
        %v7072 = vmax.f32 %v6735, 0.0
        %v7073 = vmax.f32 %v6739, 0.0
        %v7074 = vmax.f32 %v6741, 0.0
        %v7075 = vmax.f32 %v6745, 0.0
        %v7076 = vmax.f32 %v6747, 0.0
        %v7077 = vmax.f32 %v6751, 0.0
        %v7078 = vmax.f32 %v6753, 0.0
        %v7079 = vmax.f32 %v6757, 0.0
        %v7080 = vmax.f32 %v6759, 0.0
        %v7081 = vmax.f32 %v6763, 0.0
        %v7082 = vmax.f32 %v6765, 0.0
        %v7083 = vmax.f32 %v6769, 0.0
        %v7084 = vmax.f32 %v6771, 0.0
        %v7085 = vmax.f32 %v6775, 0.0
        %v7086 = vmax.f32 %v6777, 0.0
        %v7087 = vmax.f32 %v6781, 0.0
        %v7088 = vmax.f32 %v6783, 0.0
        %v7089 = vmax.f32 %v6787, 0.0
        %v7090 = vmax.f32 %v6789, 0.0
        %v7091 = vmax.f32 %v6793, 0.0
        %v7092 = vmax.f32 %v6795, 0.0
        %v7093 = vmax.f32 %v6799, 0.0
        %v7094 = vmax.f32 %v6801, 0.0
        %v7095 = vmax.f32 %v6805, 0.0
        %v7096 = vmax.f32 %v6807, 0.0
        %v7097 = vmax.f32 %v6811, 0.0
        %v7098 = vmax.f32 %v6813, 0.0
        %v7099 = vmax.f32 %v6817, 0.0
        %v7100 = vmax.f32 %v6819, 0.0
        %v7101 = vmax.f32 %v6823, 0.0
        %v7102 = vmax.f32 %v6825, 0.0
        %v7103 = vmax.f32 %v6829, 0.0
        %v7104 = vmax.f32 %v6831, 0.0
        %v7105 = vmax.f32 %v6835, 0.0
        %v7106 = vmax.f32 %v6837, 0.0
        %v7107 = vmax.f32 %v6841, 0.0
        %v7108 = vmax.f32 %v6843, 0.0
        %v7109 = vmax.f32 %v6847, 0.0
        %v7110 = vmax.f32 %v6849, 0.0
        %v7111 = vmax.f32 %v6853, 0.0
        %v7112 = vmax.f32 %v6855, 0.0
        %v7113 = vmax.f32 %v6859, 0.0
        %v7114 = vmax.f32 %v6861, 0.0
        %v7115 = vmax.f32 %v6865, 0.0
        %v7116 = vmax.f32 %v6867, 0.0
        %v7117 = vmax.f32 %v6871, 0.0
        %v7118 = vmax.f32 %v6873, 0.0
        %v7119 = vmax.f32 %v6877, 0.0
        %v7120 = vmax.f32 %v6879, 0.0
        %v7121 = vmax.f32 %v6883, 0.0
        %v7122 = vmax.f32 %v6885, 0.0
        %v7123 = vmax.f32 %v6889, 0.0
        %v7124 = vmax.f32 %v6891, 0.0
        %v7125 = vmax.f32 %v6895, 0.0
        %v7126 = vmax.f32 %v6897, 0.0
        %v7127 = vmax.f32 %v6901, 0.0
        %v7128 = vmax.f32 %v6903, 0.0
        %v7129 = vmax.f32 %v6907, 0.0
        %v7130 = vmax.f32 %v6909, 0.0
        %v7131 = vmax.f32 %v6913, 0.0
        %v7132 = vmax.f32 %v6915, 0.0
        %v7133 = vmax.f32 %v6919, 0.0
        %v7134 = vmax.f32 %v6921, 0.0
        %v7135 = vmax.f32 %v6925, 0.0
        %v7136 = vmax.f32 %v6927, 0.0
        %v7137 = vmax.f32 %v6931, 0.0
        %v7138 = vmax.f32 %v6933, 0.0
        %v7139 = vmax.f32 %v6937, 0.0
        %v7140 = vmax.f32 %v6939, 0.0
        %v7141 = vmax.f32 %v6943, 0.0
        %v7142 = vmax.f32 %v6945, 0.0
        %v7143 = vmax.f32 %v6949, 0.0
        %v7144 = vmax.f32 %v6951, 0.0
        %v7145 = vmax.f32 %v6955, 0.0
        %v7146 = vmax.f32 %v6957, 0.0
        %v7147 = vmax.f32 %v6961, 0.0
        %v7148 = vmax.f32 %v6963, 0.0
        %v7149 = vmax.f32 %v6967, 0.0
        %v7150 = vmax.f32 %v6969, 0.0
        %v7151 = vmax.f32 %v6973, 0.0
        %v7152 = vmax.f32 %v6975, 0.0
        %v7153 = vmax.f32 %v6979, 0.0
        %v7154 = vmax.f32 %v6981, 0.0
        %v7155 = vmax.f32 %v6985, 0.0
        %v7156 = vmax.f32 %v6987, 0.0
        %v7157 = vmax.f32 %v6991, 0.0
        %v7158 = vmax.f32 %v6993, 0.0
        %v7159 = vmax.f32 %v6997, 0.0
        %v7160 = vmax.f32 %v6999, 0.0
        %v7161 = vmax.f32 %v7003, 0.0
        %v7162 = vmax.f32 %v7005, 0.0
        %v7163 = vmax.f32 %v7009, 0.0
        %v7164 = vmax.f32 %v7011, 0.0
        %v7165 = vmax.f32 %v7015, 0.0
        %v7166 = vmax.f32 %v7017, 0.0
        %v7167 = vmax.f32 %v7021, 0.0
        %v7168 = vmax.f32 %v7023, 0.0
        %v7169 = vmax.f32 %v7027, 0.0
        %v7170 = vmax.f32 %v7029, 0.0
        %v7171 = vmax.f32 %v7033, 0.0
        %v7172 = vmax.f32 %v7035, 0.0
        %v7173 = vmax.f32 %v7039, 0.0
        %v7174 = vmax.f32 %v7041, 0.0
        %v7175 = vmax.f32 %v7045, 0.0
        %v7176 = vmax.f32 %v7047, 0.0
        %v7177 = vld [vmem:[%s7] sm:$0xff]
        %v7178 = vld [vmem:[%s7 + $0x8] sm:$0xff]
        %v7179 = vld [vmem:[%s7 + $0x10] sm:$0xff]
        %v7180 = vld [vmem:[%s7 + $0x18] sm:$0xff]
        %v7181 = vld [vmem:[%s7 + $0x20] sm:$0xff]
        %v7182 = vld [vmem:[%s7 + $0x28] sm:$0xff]
        %v7183 = vld [vmem:[%s7 + $0x30] sm:$0xff]
        %v7184 = vld [vmem:[%s7 + $0x38] sm:$0xff]
        %v7185 = vld [vmem:[%s7 + $0x40] sm:$0xff]
        %v7186 = vld [vmem:[%s7 + $0x48] sm:$0xff]
        %v7187 = vld [vmem:[%s7 + $0x50] sm:$0xff]
        %v7188 = vld [vmem:[%s7 + $0x58] sm:$0xff]
        %v7189 = vld [vmem:[%s7 + $0x60] sm:$0xff]
        %v7190 = vld [vmem:[%s7 + $0x68] sm:$0xff]
        %v7191 = vld [vmem:[%s7 + $0x70] sm:$0xff]
        %v7192 = vld [vmem:[%s7 + $0x78] sm:$0xff]
        %v7193 = vld [vmem:[%s7 + $0x80] sm:$0xff]
        %v7194 = vld [vmem:[%s7 + $0x88] sm:$0xff]
        %v7195 = vld [vmem:[%s7 + $0x90] sm:$0xff]
        %v7196 = vld [vmem:[%s7 + $0x98] sm:$0xff]
        %v7197 = vld [vmem:[%s7 + $0xa0] sm:$0xff]
        %v7198 = vld [vmem:[%s7 + $0xa8] sm:$0xff]
        %v7199 = vld [vmem:[%s7 + $0xb0] sm:$0xff]
        %v7200 = vld [vmem:[%s7 + $0xb8] sm:$0xff]
        %v7201 = vld [vmem:[%s7 + $0xc0] sm:$0xff]
        %v7202 = vld [vmem:[%s7 + $0xc8] sm:$0xff]
        %v7203 = vld [vmem:[%s7 + $0xd0] sm:$0xff]
        %v7204 = vld [vmem:[%s7 + $0xd8] sm:$0xff]
        %v7205 = vld [vmem:[%s7 + $0xe0] sm:$0xff]
        %v7206 = vld [vmem:[%s7 + $0xe8] sm:$0xff]
        %v7207 = vld [vmem:[%s7 + $0xf0] sm:$0xff]
        %v7208 = vld [vmem:[%s7 + $0xf8] sm:$0xff]
        %v7209 = vld [vmem:[%s8] sm:$0x1]
        %v7211 = vlaneseq
        %v7212 = vshrl.u32 %v7211, 7
        %v7213 = vsub.s32 0, %v7212
        %v7214 = vrot.slane %v7209, %v7213
        %7216 = vmatprep.subr.mxu0 0.0
        %7217 = vmatpush1.msra.mxu0 %v7192
        %7218 = vmatprep.subr.mxu0 0.0
        %7219 = vmatpush1.msra.mxu0 %v7191
        %7220 = vmatprep.subr.mxu0 0.0
        %7221 = vmatpush1.msra.mxu0 %v7190
        %7222 = vmatprep.subr.mxu0 0.0
        %7223 = vmatpush1.msra.mxu0 %v7189
        %7224 = vmatprep.subr.mxu0 0.0
        %7225 = vmatpush1.msra.mxu0 %v7188
        %7226 = vmatprep.subr.mxu0 0.0
        %7227 = vmatpush1.msra.mxu0 %v7187
        %7228 = vmatprep.subr.mxu0 0.0
        %7229 = vmatpush1.msra.mxu0 %v7186
        %7230 = vmatprep.subr.mxu0 0.0
        %7231 = vmatpush1.msra.mxu0 %v7185
        %7232 = vmatprep.subr.mxu0 0.0
        %7233 = vmatpush1.msra.mxu0 %v7184
        %7234 = vmatprep.subr.mxu0 0.0
        %7235 = vmatpush1.msra.mxu0 %v7183
        %7236 = vmatprep.subr.mxu0 0.0
        %7237 = vmatpush1.msra.mxu0 %v7182
        %7238 = vmatprep.subr.mxu0 0.0
        %7239 = vmatpush1.msra.mxu0 %v7181
        %7240 = vmatprep.subr.mxu0 0.0
        %7241 = vmatpush1.msra.mxu0 %v7180
        %7242 = vmatprep.subr.mxu0 0.0
        %7243 = vmatpush1.msra.mxu0 %v7179
        %7244 = vmatprep.subr.mxu0 0.0
        %7245 = vmatpush1.msra.mxu0 %v7178
        %7246 = vmatprep.subr.mxu0 0.0
        %7247 = vmatpush1.msra.mxu0 %v7177
        %7248 = vmatprep.subr.mxu0 0.0
        %7249 = vmatpush2.msra.mxu0 %v7208
        %7250 = vmatprep.subr.mxu0 0.0
        %7251 = vmatpush2.msra.mxu0 %v7207
        %7252 = vmatprep.subr.mxu0 0.0
        %7253 = vmatpush2.msra.mxu0 %v7206
        %7254 = vmatprep.subr.mxu0 0.0
        %7255 = vmatpush2.msra.mxu0 %v7205
        %7256 = vmatprep.subr.mxu0 0.0
        %7257 = vmatpush2.msra.mxu0 %v7204
        %7258 = vmatprep.subr.mxu0 0.0
        %7259 = vmatpush2.msra.mxu0 %v7203
        %7260 = vmatprep.subr.mxu0 0.0
        %7261 = vmatpush2.msra.mxu0 %v7202
        %7262 = vmatprep.subr.mxu0 0.0
        %7263 = vmatpush2.msra.mxu0 %v7201
        %7264 = vmatprep.subr.mxu0 0.0
        %7265 = vmatpush2.msra.mxu0 %v7200
        %7266 = vmatprep.subr.mxu0 0.0
        %7267 = vmatpush2.msra.mxu0 %v7199
        %7268 = vmatprep.subr.mxu0 0.0
        %7269 = vmatpush2.msra.mxu0 %v7198
        %7270 = vmatprep.subr.mxu0 0.0
        %7271 = vmatpush2.msra.mxu0 %v7197
        %7272 = vmatprep.subr.mxu0 0.0
        %7273 = vmatpush2.msra.mxu0 %v7196
        %7274 = vmatprep.subr.mxu0 0.0
        %7275 = vmatpush2.msra.mxu0 %v7195
        %7276 = vmatprep.subr.mxu0 0.0
        %7277 = vmatpush2.msra.mxu0 %v7194
        %7278 = vmatprep.subr.mxu0 0.0
        %7279 = vmatpush2.msra.mxu0 %v7193
        %7280 = vmatprep.mubr.f32.mxu0 %v7050
        %7281 = vmatmul.mubr.f32.gmra.mxu0 %v7049
        %v7282 = vpop.f32.mrf.mxu0
        %v7283 = vadd.f32 %v7214, %v7282
        %v7284 = vpop.f32.mrf.mxu0
        %7285 = vmatprep.mubr.f32.mxu0 %v7052
        %7286 = vmatmul.mubr.f32.gmra.mxu0 %v7051
        %v7287 = vpop.f32.mrf.mxu0
        %v7288 = vadd.f32 %v7214, %v7287
        %v7289 = vpop.f32.mrf.mxu0
        %7290 = vmatprep.mubr.f32.mxu0 %v7054
        %7291 = vmatmul.mubr.f32.gmra.mxu0 %v7053
        %v7292 = vpop.f32.mrf.mxu0
        %v7293 = vadd.f32 %v7214, %v7292
        %v7294 = vpop.f32.mrf.mxu0
        %7295 = vmatprep.mubr.f32.mxu0 %v7056
        %7296 = vmatmul.mubr.f32.gmra.mxu0 %v7055
        %v7297 = vpop.f32.mrf.mxu0
        %v7298 = vadd.f32 %v7214, %v7297
        %v7299 = vpop.f32.mrf.mxu0
        %7300 = vmatprep.mubr.f32.mxu0 %v7058
        %7301 = vmatmul.mubr.f32.gmra.mxu0 %v7057
        %v7302 = vpop.f32.mrf.mxu0
        %v7303 = vadd.f32 %v7214, %v7302
        %v7304 = vpop.f32.mrf.mxu0
        %7305 = vmatprep.mubr.f32.mxu0 %v7060
        %7306 = vmatmul.mubr.f32.gmra.mxu0 %v7059
        %v7307 = vpop.f32.mrf.mxu0
        %v7308 = vadd.f32 %v7214, %v7307
        %v7309 = vpop.f32.mrf.mxu0
        %7310 = vmatprep.mubr.f32.mxu0 %v7062
        %7311 = vmatmul.mubr.f32.gmra.mxu0 %v7061
        %v7312 = vpop.f32.mrf.mxu0
        %v7313 = vadd.f32 %v7214, %v7312
        %v7314 = vpop.f32.mrf.mxu0
        %7315 = vmatprep.mubr.f32.mxu0 %v7064
        %7316 = vmatmul.mubr.f32.gmra.mxu0 %v7063
        %v7317 = vpop.f32.mrf.mxu0
        %v7318 = vadd.f32 %v7214, %v7317
        %v7319 = vpop.f32.mrf.mxu0
        %7320 = vmatprep.mubr.f32.mxu0 %v7066
        %7321 = vmatmul.mubr.f32.gmra.mxu0 %v7065
        %v7322 = vpop.f32.mrf.mxu0
        %v7323 = vadd.f32 %v7214, %v7322
        %v7324 = vpop.f32.mrf.mxu0
        %7325 = vmatprep.mubr.f32.mxu0 %v7068
        %7326 = vmatmul.mubr.f32.gmra.mxu0 %v7067
        %v7327 = vpop.f32.mrf.mxu0
        %v7328 = vadd.f32 %v7214, %v7327
        %v7329 = vpop.f32.mrf.mxu0
        %7330 = vmatprep.mubr.f32.mxu0 %v7070
        %7331 = vmatmul.mubr.f32.gmra.mxu0 %v7069
        %v7332 = vpop.f32.mrf.mxu0
        %v7333 = vadd.f32 %v7214, %v7332
        %v7334 = vpop.f32.mrf.mxu0
        %7335 = vmatprep.mubr.f32.mxu0 %v7072
        %7336 = vmatmul.mubr.f32.gmra.mxu0 %v7071
        %v7337 = vpop.f32.mrf.mxu0
        %v7338 = vadd.f32 %v7214, %v7337
        %v7339 = vpop.f32.mrf.mxu0
        %7340 = vmatprep.mubr.f32.mxu0 %v7074
        %7341 = vmatmul.mubr.f32.gmra.mxu0 %v7073
        %v7342 = vpop.f32.mrf.mxu0
        %v7343 = vadd.f32 %v7214, %v7342
        %v7344 = vpop.f32.mrf.mxu0
        %7345 = vmatprep.mubr.f32.mxu0 %v7076
        %7346 = vmatmul.mubr.f32.gmra.mxu0 %v7075
        %v7347 = vpop.f32.mrf.mxu0
        %v7348 = vadd.f32 %v7214, %v7347
        %v7349 = vpop.f32.mrf.mxu0
        %7350 = vmatprep.mubr.f32.mxu0 %v7078
        %7351 = vmatmul.mubr.f32.gmra.mxu0 %v7077
        %v7352 = vpop.f32.mrf.mxu0
        %v7353 = vadd.f32 %v7214, %v7352
        %v7354 = vpop.f32.mrf.mxu0
        %7355 = vmatprep.mubr.f32.mxu0 %v7080
        %7356 = vmatmul.mubr.f32.gmra.mxu0 %v7079
        %v7357 = vpop.f32.mrf.mxu0
        %v7358 = vadd.f32 %v7214, %v7357
        %v7359 = vpop.f32.mrf.mxu0
        %7360 = vmatprep.mubr.f32.mxu0 %v7082
        %7361 = vmatmul.mubr.f32.gmra.mxu0 %v7081
        %v7362 = vpop.f32.mrf.mxu0
        %v7363 = vadd.f32 %v7214, %v7362
        %v7364 = vpop.f32.mrf.mxu0
        %7365 = vmatprep.mubr.f32.mxu0 %v7084
        %7366 = vmatmul.mubr.f32.gmra.mxu0 %v7083
        %v7367 = vpop.f32.mrf.mxu0
        %v7368 = vadd.f32 %v7214, %v7367
        %v7369 = vpop.f32.mrf.mxu0
        %7370 = vmatprep.mubr.f32.mxu0 %v7086
        %7371 = vmatmul.mubr.f32.gmra.mxu0 %v7085
        %v7372 = vpop.f32.mrf.mxu0
        %v7373 = vadd.f32 %v7214, %v7372
        %v7374 = vpop.f32.mrf.mxu0
        %7375 = vmatprep.mubr.f32.mxu0 %v7088
        %7376 = vmatmul.mubr.f32.gmra.mxu0 %v7087
        %v7377 = vpop.f32.mrf.mxu0
        %v7378 = vadd.f32 %v7214, %v7377
        %v7379 = vpop.f32.mrf.mxu0
        %7380 = vmatprep.mubr.f32.mxu0 %v7090
        %7381 = vmatmul.mubr.f32.gmra.mxu0 %v7089
        %v7382 = vpop.f32.mrf.mxu0
        %v7383 = vadd.f32 %v7214, %v7382
        %v7384 = vpop.f32.mrf.mxu0
        %7385 = vmatprep.mubr.f32.mxu0 %v7092
        %7386 = vmatmul.mubr.f32.gmra.mxu0 %v7091
        %v7387 = vpop.f32.mrf.mxu0
        %v7388 = vadd.f32 %v7214, %v7387
        %v7389 = vpop.f32.mrf.mxu0
        %7390 = vmatprep.mubr.f32.mxu0 %v7094
        %7391 = vmatmul.mubr.f32.gmra.mxu0 %v7093
        %v7392 = vpop.f32.mrf.mxu0
        %v7393 = vadd.f32 %v7214, %v7392
        %v7394 = vpop.f32.mrf.mxu0
        %7395 = vmatprep.mubr.f32.mxu0 %v7096
        %7396 = vmatmul.mubr.f32.gmra.mxu0 %v7095
        %v7397 = vpop.f32.mrf.mxu0
        %v7398 = vadd.f32 %v7214, %v7397
        %v7399 = vpop.f32.mrf.mxu0
        %7400 = vmatprep.mubr.f32.mxu0 %v7098
        %7401 = vmatmul.mubr.f32.gmra.mxu0 %v7097
        %v7402 = vpop.f32.mrf.mxu0
        %v7403 = vadd.f32 %v7214, %v7402
        %v7404 = vpop.f32.mrf.mxu0
        %7405 = vmatprep.mubr.f32.mxu0 %v7100
        %7406 = vmatmul.mubr.f32.gmra.mxu0 %v7099
        %v7407 = vpop.f32.mrf.mxu0
        %v7408 = vadd.f32 %v7214, %v7407
        %v7409 = vpop.f32.mrf.mxu0
        %7410 = vmatprep.mubr.f32.mxu0 %v7102
        %7411 = vmatmul.mubr.f32.gmra.mxu0 %v7101
        %v7412 = vpop.f32.mrf.mxu0
        %v7413 = vadd.f32 %v7214, %v7412
        %v7414 = vpop.f32.mrf.mxu0
        %7415 = vmatprep.mubr.f32.mxu0 %v7104
        %7416 = vmatmul.mubr.f32.gmra.mxu0 %v7103
        %v7417 = vpop.f32.mrf.mxu0
        %v7418 = vadd.f32 %v7214, %v7417
        %v7419 = vpop.f32.mrf.mxu0
        %7420 = vmatprep.mubr.f32.mxu0 %v7106
        %7421 = vmatmul.mubr.f32.gmra.mxu0 %v7105
        %v7422 = vpop.f32.mrf.mxu0
        %v7423 = vadd.f32 %v7214, %v7422
        %v7424 = vpop.f32.mrf.mxu0
        %7425 = vmatprep.mubr.f32.mxu0 %v7108
        %7426 = vmatmul.mubr.f32.gmra.mxu0 %v7107
        %v7427 = vpop.f32.mrf.mxu0
        %v7428 = vadd.f32 %v7214, %v7427
        %v7429 = vpop.f32.mrf.mxu0
        %7430 = vmatprep.mubr.f32.mxu0 %v7110
        %7431 = vmatmul.mubr.f32.gmra.mxu0 %v7109
        %v7432 = vpop.f32.mrf.mxu0
        %v7433 = vadd.f32 %v7214, %v7432
        %v7434 = vpop.f32.mrf.mxu0
        %7435 = vmatprep.mubr.f32.mxu0 %v7112
        %7436 = vmatmul.mubr.f32.gmra.mxu0 %v7111
        %v7437 = vpop.f32.mrf.mxu0
        %v7438 = vadd.f32 %v7214, %v7437
        %v7439 = vpop.f32.mrf.mxu0
        %7440 = vmatprep.mubr.f32.mxu0 %v7114
        %7441 = vmatmul.mubr.f32.gmra.mxu0 %v7113
        %v7442 = vpop.f32.mrf.mxu0
        %v7443 = vadd.f32 %v7214, %v7442
        %v7444 = vpop.f32.mrf.mxu0
        %7445 = vmatprep.mubr.f32.mxu0 %v7116
        %7446 = vmatmul.mubr.f32.gmra.mxu0 %v7115
        %v7447 = vpop.f32.mrf.mxu0
        %v7448 = vadd.f32 %v7214, %v7447
        %v7449 = vpop.f32.mrf.mxu0
        %7450 = vmatprep.mubr.f32.mxu0 %v7118
        %7451 = vmatmul.mubr.f32.gmra.mxu0 %v7117
        %v7452 = vpop.f32.mrf.mxu0
        %v7453 = vadd.f32 %v7214, %v7452
        %v7454 = vpop.f32.mrf.mxu0
        %7455 = vmatprep.mubr.f32.mxu0 %v7120
        %7456 = vmatmul.mubr.f32.gmra.mxu0 %v7119
        %v7457 = vpop.f32.mrf.mxu0
        %v7458 = vadd.f32 %v7214, %v7457
        %v7459 = vpop.f32.mrf.mxu0
        %7460 = vmatprep.mubr.f32.mxu0 %v7122
        %7461 = vmatmul.mubr.f32.gmra.mxu0 %v7121
        %v7462 = vpop.f32.mrf.mxu0
        %v7463 = vadd.f32 %v7214, %v7462
        %v7464 = vpop.f32.mrf.mxu0
        %7465 = vmatprep.mubr.f32.mxu0 %v7124
        %7466 = vmatmul.mubr.f32.gmra.mxu0 %v7123
        %v7467 = vpop.f32.mrf.mxu0
        %v7468 = vadd.f32 %v7214, %v7467
        %v7469 = vpop.f32.mrf.mxu0
        %7470 = vmatprep.mubr.f32.mxu0 %v7126
        %7471 = vmatmul.mubr.f32.gmra.mxu0 %v7125
        %v7472 = vpop.f32.mrf.mxu0
        %v7473 = vadd.f32 %v7214, %v7472
        %v7474 = vpop.f32.mrf.mxu0
        %7475 = vmatprep.mubr.f32.mxu0 %v7128
        %7476 = vmatmul.mubr.f32.gmra.mxu0 %v7127
        %v7477 = vpop.f32.mrf.mxu0
        %v7478 = vadd.f32 %v7214, %v7477
        %v7479 = vpop.f32.mrf.mxu0
        %7480 = vmatprep.mubr.f32.mxu0 %v7130
        %7481 = vmatmul.mubr.f32.gmra.mxu0 %v7129
        %v7482 = vpop.f32.mrf.mxu0
        %v7483 = vadd.f32 %v7214, %v7482
        %v7484 = vpop.f32.mrf.mxu0
        %7485 = vmatprep.mubr.f32.mxu0 %v7132
        %7486 = vmatmul.mubr.f32.gmra.mxu0 %v7131
        %v7487 = vpop.f32.mrf.mxu0
        %v7488 = vadd.f32 %v7214, %v7487
        %v7489 = vpop.f32.mrf.mxu0
        %7490 = vmatprep.mubr.f32.mxu0 %v7134
        %7491 = vmatmul.mubr.f32.gmra.mxu0 %v7133
        %v7492 = vpop.f32.mrf.mxu0
        %v7493 = vadd.f32 %v7214, %v7492
        %v7494 = vpop.f32.mrf.mxu0
        %7495 = vmatprep.mubr.f32.mxu0 %v7136
        %7496 = vmatmul.mubr.f32.gmra.mxu0 %v7135
        %v7497 = vpop.f32.mrf.mxu0
        %v7498 = vadd.f32 %v7214, %v7497
        %v7499 = vpop.f32.mrf.mxu0
        %7500 = vmatprep.mubr.f32.mxu0 %v7138
        %7501 = vmatmul.mubr.f32.gmra.mxu0 %v7137
        %v7502 = vpop.f32.mrf.mxu0
        %v7503 = vadd.f32 %v7214, %v7502
        %v7504 = vpop.f32.mrf.mxu0
        %7505 = vmatprep.mubr.f32.mxu0 %v7140
        %7506 = vmatmul.mubr.f32.gmra.mxu0 %v7139
        %v7507 = vpop.f32.mrf.mxu0
        %v7508 = vadd.f32 %v7214, %v7507
        %v7509 = vpop.f32.mrf.mxu0
        %7510 = vmatprep.mubr.f32.mxu0 %v7142
        %7511 = vmatmul.mubr.f32.gmra.mxu0 %v7141
        %v7512 = vpop.f32.mrf.mxu0
        %v7513 = vadd.f32 %v7214, %v7512
        %v7514 = vpop.f32.mrf.mxu0
        %7515 = vmatprep.mubr.f32.mxu0 %v7144
        %7516 = vmatmul.mubr.f32.gmra.mxu0 %v7143
        %v7517 = vpop.f32.mrf.mxu0
        %v7518 = vadd.f32 %v7214, %v7517
        %v7519 = vpop.f32.mrf.mxu0
        %7520 = vmatprep.mubr.f32.mxu0 %v7146
        %7521 = vmatmul.mubr.f32.gmra.mxu0 %v7145
        %v7522 = vpop.f32.mrf.mxu0
        %v7523 = vadd.f32 %v7214, %v7522
        %v7524 = vpop.f32.mrf.mxu0
        %7525 = vmatprep.mubr.f32.mxu0 %v7148
        %7526 = vmatmul.mubr.f32.gmra.mxu0 %v7147
        %v7527 = vpop.f32.mrf.mxu0
        %v7528 = vadd.f32 %v7214, %v7527
        %v7529 = vpop.f32.mrf.mxu0
        %7530 = vmatprep.mubr.f32.mxu0 %v7150
        %7531 = vmatmul.mubr.f32.gmra.mxu0 %v7149
        %v7532 = vpop.f32.mrf.mxu0
        %v7533 = vadd.f32 %v7214, %v7532
        %v7534 = vpop.f32.mrf.mxu0
        %7535 = vmatprep.mubr.f32.mxu0 %v7152
        %7536 = vmatmul.mubr.f32.gmra.mxu0 %v7151
        %v7537 = vpop.f32.mrf.mxu0
        %v7538 = vadd.f32 %v7214, %v7537
        %v7539 = vpop.f32.mrf.mxu0
        %7540 = vmatprep.mubr.f32.mxu0 %v7154
        %7541 = vmatmul.mubr.f32.gmra.mxu0 %v7153
        %v7542 = vpop.f32.mrf.mxu0
        %v7543 = vadd.f32 %v7214, %v7542
        %v7544 = vpop.f32.mrf.mxu0
        %7545 = vmatprep.mubr.f32.mxu0 %v7156
        %7546 = vmatmul.mubr.f32.gmra.mxu0 %v7155
        %v7547 = vpop.f32.mrf.mxu0
        %v7548 = vadd.f32 %v7214, %v7547
        %v7549 = vpop.f32.mrf.mxu0
        %7550 = vmatprep.mubr.f32.mxu0 %v7158
        %7551 = vmatmul.mubr.f32.gmra.mxu0 %v7157
        %v7552 = vpop.f32.mrf.mxu0
        %v7553 = vadd.f32 %v7214, %v7552
        %v7554 = vpop.f32.mrf.mxu0
        %7555 = vmatprep.mubr.f32.mxu0 %v7160
        %7556 = vmatmul.mubr.f32.gmra.mxu0 %v7159
        %v7557 = vpop.f32.mrf.mxu0
        %v7558 = vadd.f32 %v7214, %v7557
        %v7559 = vpop.f32.mrf.mxu0
        %7560 = vmatprep.mubr.f32.mxu0 %v7162
        %7561 = vmatmul.mubr.f32.gmra.mxu0 %v7161
        %v7562 = vpop.f32.mrf.mxu0
        %v7563 = vadd.f32 %v7214, %v7562
        %v7564 = vpop.f32.mrf.mxu0
        %7565 = vmatprep.mubr.f32.mxu0 %v7164
        %7566 = vmatmul.mubr.f32.gmra.mxu0 %v7163
        %v7567 = vpop.f32.mrf.mxu0
        %v7568 = vadd.f32 %v7214, %v7567
        %v7569 = vpop.f32.mrf.mxu0
        %7570 = vmatprep.mubr.f32.mxu0 %v7166
        %7571 = vmatmul.mubr.f32.gmra.mxu0 %v7165
        %v7572 = vpop.f32.mrf.mxu0
        %v7573 = vadd.f32 %v7214, %v7572
        %v7574 = vpop.f32.mrf.mxu0
        %7575 = vmatprep.mubr.f32.mxu0 %v7168
        %7576 = vmatmul.mubr.f32.gmra.mxu0 %v7167
        %v7577 = vpop.f32.mrf.mxu0
        %v7578 = vadd.f32 %v7214, %v7577
        %v7579 = vpop.f32.mrf.mxu0
        %7580 = vmatprep.mubr.f32.mxu0 %v7170
        %7581 = vmatmul.mubr.f32.gmra.mxu0 %v7169
        %v7582 = vpop.f32.mrf.mxu0
        %v7583 = vadd.f32 %v7214, %v7582
        %v7584 = vpop.f32.mrf.mxu0
        %7585 = vmatprep.mubr.f32.mxu0 %v7172
        %7586 = vmatmul.mubr.f32.gmra.mxu0 %v7171
        %v7587 = vpop.f32.mrf.mxu0
        %v7588 = vadd.f32 %v7214, %v7587
        %v7589 = vpop.f32.mrf.mxu0
        %7590 = vmatprep.mubr.f32.mxu0 %v7174
        %7591 = vmatmul.mubr.f32.gmra.mxu0 %v7173
        %v7592 = vpop.f32.mrf.mxu0
        %v7593 = vadd.f32 %v7214, %v7592
        %v7594 = vpop.f32.mrf.mxu0
        %7595 = vmatprep.mubr.f32.mxu0 %v7176
        %7596 = vmatmul.mubr.f32.gmra.mxu0 %v7175
        %v7597 = vpop.f32.mrf.mxu0
        %v7598 = vadd.f32 %v7214, %v7597
        %v7599 = vpop.f32.mrf.mxu0
        %7600 = vdwg.mxu0
        %vm7601 = vcmask 23552
        %7602 = vst.msk [vmem:[%s877] sm:$0xff] %vm7601, %v7283
        %7603 = vst.msk [vmem:[%s877 + $0x8] sm:$0xff] %vm7601, %v7288
        %7604 = vst.msk [vmem:[%s877 + $0x10] sm:$0xff] %vm7601, %v7293
        %7605 = vst.msk [vmem:[%s877 + $0x18] sm:$0xff] %vm7601, %v7298
        %7606 = vst.msk [vmem:[%s877 + $0x20] sm:$0xff] %vm7601, %v7303
        %7607 = vst.msk [vmem:[%s877 + $0x28] sm:$0xff] %vm7601, %v7308
        %7608 = vst.msk [vmem:[%s877 + $0x30] sm:$0xff] %vm7601, %v7313
        %7609 = vst.msk [vmem:[%s877 + $0x38] sm:$0xff] %vm7601, %v7318
        %7610 = vst.msk [vmem:[%s877 + $0x40] sm:$0xff] %vm7601, %v7323
        %7611 = vst.msk [vmem:[%s877 + $0x48] sm:$0xff] %vm7601, %v7328
        %7612 = vst.msk [vmem:[%s877 + $0x50] sm:$0xff] %vm7601, %v7333
        %7613 = vst.msk [vmem:[%s877 + $0x58] sm:$0xff] %vm7601, %v7338
        %7614 = vst.msk [vmem:[%s877 + $0x60] sm:$0xff] %vm7601, %v7343
        %7615 = vst.msk [vmem:[%s877 + $0x68] sm:$0xff] %vm7601, %v7348
        %7616 = vst.msk [vmem:[%s877 + $0x70] sm:$0xff] %vm7601, %v7353
        %7617 = vst.msk [vmem:[%s877 + $0x78] sm:$0xff] %vm7601, %v7358
        %7618 = vst.msk [vmem:[%s877 + $0x80] sm:$0xff] %vm7601, %v7363
        %7619 = vst.msk [vmem:[%s877 + $0x88] sm:$0xff] %vm7601, %v7368
        %7620 = vst.msk [vmem:[%s877 + $0x90] sm:$0xff] %vm7601, %v7373
        %7621 = vst.msk [vmem:[%s877 + $0x98] sm:$0xff] %vm7601, %v7378
        %7622 = vst.msk [vmem:[%s877 + $0xa0] sm:$0xff] %vm7601, %v7383
        %7623 = vst.msk [vmem:[%s877 + $0xa8] sm:$0xff] %vm7601, %v7388
        %7624 = vst.msk [vmem:[%s877 + $0xb0] sm:$0xff] %vm7601, %v7393
        %7625 = vst.msk [vmem:[%s877 + $0xb8] sm:$0xff] %vm7601, %v7398
        %7626 = vst.msk [vmem:[%s877 + $0xc0] sm:$0xff] %vm7601, %v7403
        %7627 = vst.msk [vmem:[%s877 + $0xc8] sm:$0xff] %vm7601, %v7408
        %7628 = vst.msk [vmem:[%s877 + $0xd0] sm:$0xff] %vm7601, %v7413
        %7629 = vst.msk [vmem:[%s877 + $0xd8] sm:$0xff] %vm7601, %v7418
        %7630 = vst.msk [vmem:[%s877 + $0xe0] sm:$0xff] %vm7601, %v7423
        %7631 = vst.msk [vmem:[%s877 + $0xe8] sm:$0xff] %vm7601, %v7428
        %7632 = vst.msk [vmem:[%s877 + $0xf0] sm:$0xff] %vm7601, %v7433
        %7633 = vst.msk [vmem:[%s877 + $0xf8] sm:$0xff] %vm7601, %v7438
        %7634 = vst.msk [vmem:[%s877 + $0x100] sm:$0xff] %vm7601, %v7443
        %7635 = vst.msk [vmem:[%s877 + $0x108] sm:$0xff] %vm7601, %v7448
        %7636 = vst.msk [vmem:[%s877 + $0x110] sm:$0xff] %vm7601, %v7453
        %7637 = vst.msk [vmem:[%s877 + $0x118] sm:$0xff] %vm7601, %v7458
        %7638 = vst.msk [vmem:[%s877 + $0x120] sm:$0xff] %vm7601, %v7463
        %7639 = vst.msk [vmem:[%s877 + $0x128] sm:$0xff] %vm7601, %v7468
        %7640 = vst.msk [vmem:[%s877 + $0x130] sm:$0xff] %vm7601, %v7473
        %7641 = vst.msk [vmem:[%s877 + $0x138] sm:$0xff] %vm7601, %v7478
        %7642 = vst.msk [vmem:[%s877 + $0x140] sm:$0xff] %vm7601, %v7483
        %7643 = vst.msk [vmem:[%s877 + $0x148] sm:$0xff] %vm7601, %v7488
        %7644 = vst.msk [vmem:[%s877 + $0x150] sm:$0xff] %vm7601, %v7493
        %7645 = vst.msk [vmem:[%s877 + $0x158] sm:$0xff] %vm7601, %v7498
        %7646 = vst.msk [vmem:[%s877 + $0x160] sm:$0xff] %vm7601, %v7503
        %7647 = vst.msk [vmem:[%s877 + $0x168] sm:$0xff] %vm7601, %v7508
        %7648 = vst.msk [vmem:[%s877 + $0x170] sm:$0xff] %vm7601, %v7513
        %7649 = vst.msk [vmem:[%s877 + $0x178] sm:$0xff] %vm7601, %v7518
        %7650 = vst.msk [vmem:[%s877 + $0x180] sm:$0xff] %vm7601, %v7523
        %7651 = vst.msk [vmem:[%s877 + $0x188] sm:$0xff] %vm7601, %v7528
        %7652 = vst.msk [vmem:[%s877 + $0x190] sm:$0xff] %vm7601, %v7533
        %7653 = vst.msk [vmem:[%s877 + $0x198] sm:$0xff] %vm7601, %v7538
        %7654 = vst.msk [vmem:[%s877 + $0x1a0] sm:$0xff] %vm7601, %v7543
        %7655 = vst.msk [vmem:[%s877 + $0x1a8] sm:$0xff] %vm7601, %v7548
        %7656 = vst.msk [vmem:[%s877 + $0x1b0] sm:$0xff] %vm7601, %v7553
        %7657 = vst.msk [vmem:[%s877 + $0x1b8] sm:$0xff] %vm7601, %v7558
        %7658 = vst.msk [vmem:[%s877 + $0x1c0] sm:$0xff] %vm7601, %v7563
        %7659 = vst.msk [vmem:[%s877 + $0x1c8] sm:$0xff] %vm7601, %v7568
        %7660 = vst.msk [vmem:[%s877 + $0x1d0] sm:$0xff] %vm7601, %v7573
        %7661 = vst.msk [vmem:[%s877 + $0x1d8] sm:$0xff] %vm7601, %v7578
        %7662 = vst.msk [vmem:[%s877 + $0x1e0] sm:$0xff] %vm7601, %v7583
        %7663 = vst.msk [vmem:[%s877 + $0x1e8] sm:$0xff] %vm7601, %v7588
        %7664 = vst.msk [vmem:[%s877 + $0x1f0] sm:$0xff] %vm7601, %v7593
        %7665 = vst.msk [vmem:[%s877 + $0x1f8] sm:$0xff] %vm7601, %v7598
        %s7666 = smul.u32 64, %s20
        %p7667 = scmp.lt.s32.totalorder %s7666, 255
        %s7668 = scalar_select %p7667, %s7666, 255
        %s7669 = smul.addr %s7668, 8
        %s7670 = scalar_lea.vmem %s9, %s7669
        // Predicated region
        $region95: #{tpu_custom_call.1} parent=89 // pred_check
          %p7671 = pneg %p232
        $region96: #{tpu_custom_call.1} parent=89 // pred_check_branch
          %7673 = sbr.rel (%p7671) target = $region98
        $region97: #{tpu_custom_call.1} parent=89 // pred_region
          %s7674 = smul.u32 64, %s20
        $region98: #{tpu_custom_call.1} parent=89 // pred_fallthru
          _
      $region90: #{tpu_custom_call.1} parent=5 // pred_fallthru
        _
      %p7675 = scmp.le.s32.totalorder 2, %s15
      // Predicated region
      $region99: #{tpu_custom_call.1} parent=5 // pred_check
        %p7676 = pneg %p7675
      $region100: #{tpu_custom_call.1} parent=5 // pred_check_branch
        %7678 = sbr.rel (%p7676) target = $region102
      $region101: #{tpu_custom_call.1} parent=5 // pred_region
        %s7679 = ssub.s32 %s15, 2
        // Predicated region
        $region103: #{tpu_custom_call.1} parent=101 // pred_check
          %p7680 = pneg %p238
        $region104: #{tpu_custom_call.1} parent=101 // pred_check_branch
          %7682 = sbr.rel (%p7680) target = $region106
        $region105: #{tpu_custom_call.1} parent=101 // pred_region
          %s7683 = smul.u32 64, %s21
          %p7684 = scmp.lt.s32.totalorder %s7683, 255
          %s7685 = scalar_select %p7684, %s7683, 255
          %s7686 = smul.addr %s7685, 8
          %s7687 = scalar_lea.vmem %s9, %s7686
        $region106: #{tpu_custom_call.1} parent=101 // pred_fallthru
          _
      $region102: #{tpu_custom_call.1} parent=5 // pred_fallthru
        _
    $region6: #{tpu_custom_call.1} parent=1 // loop_footer
      %s19 = sadd.s32 1, %s15
    $region7: #{tpu_custom_call.1} parent=1 // loop_footer_branch
      %14 = sbr.rel target = $region3
    $region8: #{tpu_custom_call.1} parent=1 // loop_exit
      _

</llo_original>
